<compile_context>
chip_gen: v5e
topology: v5e:2x2
jax: 0.10.0
libtpu: 0.0.40
codegen_flags: <defaults>
</compile_context>

<pallas_src>
import jax
import jax.numpy as jnp
from jax.experimental import pallas as pl
from jax.experimental.pallas import tpu as pltpu

INPUT_SIZE = 32
HIDDEN_SIZE = 32
NUM_LAYERS = 2          # module default
TAPE_DEPTH = 8
SEQ_LEN = 20            # must be >= TAPE_DEPTH (asserted in the torch module)
BATCH = 1               # the torch forward only works for batch == 1 (.squeeze())


# --------------------------------------------------------------------------
# Pallas kernel
# --------------------------------------------------------------------------
def lstmn_pallas(xs, kp, *, tape_depth, hidden):
    S, B, In = xs.shape
    assert B == 1
    assert S >= tape_depth
    H = hidden
    T = tape_depth
    H4 = 4 * H
    n2 = S - T   # number of phase-2 (attention) steps
    bf = jnp.bfloat16
    f32 = jnp.float32

    def kernel(x_ref, wih0t_ref, whh0t_ref, b0_ref, wih1t_ref, whh1t_ref,
               b1_ref, whd_ref, wxt_ref, whtd_ref, v_ref,
               out_ref,
               tape_h_ref, tape_c_ref, tape_g_ref, gx0_ref, xa_ref):

        def gates(g, c_prev):
            # one sigmoid + one tanh over the full 4H-lane slab, then slice
            sg = jax.nn.sigmoid(g)
            tg = jnp.tanh(g)
            i = sg[:, 0:H]
            f = sg[:, H:2 * H]
            gg = tg[:, 2 * H:3 * H]
            o = sg[:, 3 * H:4 * H]
            cn = f * c_prev + i * gg
            return o * jnp.tanh(cn), cn

        def gates_zero_c(g):
            # c_prev == 0  =>  the forget-gate term vanishes
            sg = jax.nn.sigmoid(g)
            tg = jnp.tanh(g)
            i = sg[:, 0:H]
            gg = tg[:, 2 * H:3 * H]
            o = sg[:, 3 * H:4 * H]
            cn = i * gg
            return o * jnp.tanh(cn), cn

        # ---------- hoisted, batched input-only work (off the serial chain) --
        x_bf = x_ref[...].astype(bf)                                          # (S, In)
        gx0 = jnp.dot(x_bf, wih0t_ref[...],
                      preferred_element_type=f32) + b0_ref[...]               # (S, 4H)
        xa = jnp.dot(x_bf, wxt_ref[...], preferred_element_type=f32)          # (S, 2H)
        gx0_ref[...] = gx0            # stage in VMEM; phase 2 re-loads one row per step
        xa_ref[...] = xa

        # ---------- phase 1: first T steps, fully batched ----------
        # The PyTorch module never updates prev_hidden/cell_tape in its first
        # loop, so every step starts from zero state -> steps are independent.
        h0_all, c0_all = gates_zero_c(gx0[0:T, :])                            # (T, H)
        g1_all = (jnp.dot(h0_all.astype(bf), wih1t_ref[...],
                          preferred_element_type=f32) + b1_ref[...])          # (T, 4H)
        h1_all, c1_all = gates_zero_c(g1_all)

        tape_h_ref[:, 0:H] = h0_all
        tape_h_ref[:, H:2 * H] = h1_all
        tape_c_ref[:, 0:H] = c0_all
        tape_c_ref[:, H:2 * H] = c1_all
        # pre-multiplied recurrent tape: [h0_tape @ W_hh0^T | h1_tape @ W_hh1^T]
        tape_g_ref[:, 0:H4] = jnp.dot(h0_all.astype(bf), whh0t_ref[...],
                                      preferred_element_type=f32)
        tape_g_ref[:, H4:2 * H4] = jnp.dot(h1_all.astype(bf), whh1t_ref[...],
                                           preferred_element_type=f32)

        # direct output writes: phase-1 rows now, zeros for the tail; phase-2
        # rows overwrite [0, n2) below (PyTorch row-index re-use).
        out_ref[0:T, :] = h1_all
        if S > T:
            out_ref[T:S, :] = jnp.zeros((S - T, H), f32)

        # ---------- phase 2: serial attention + LSTM recurrence (unrolled) ---
        att_h = jnp.zeros((1, 2 * H), f32)   # "prev_hidden_tape", lane-packed
        for idx in range(n2):
            s = T + idx
            tp_h = tape_h_ref[...]                                            # (T, 2H)

            # tape attention, both layers lane-packed
            a = jnp.tanh(whd_ref[...] * tp_h + xa_ref[s:s + 1, :]
                         + whtd_ref[...] * att_h)                             # (T, 2H)
            prod = a * v_ref[...]
            l0 = jnp.sum(prod[:, 0:H], axis=1, keepdims=True)                 # (T, 1)
            l1 = jnp.sum(prod[:, H:2 * H], axis=1, keepdims=True)             # (T, 1)
            lg = jnp.concatenate([l0, l1], axis=1)                            # (T, 2)
            # logits are tanh-bounded (|lg| <= sum|v|): skip max-subtraction
            e = jnp.exp(lg)
            alpha = e * pl.reciprocal(jnp.sum(e, axis=0, keepdims=True),
                                      approx=True)                            # (T, 2)

            a0b = jnp.broadcast_to(alpha[:, 0:1], (T, H4))                    # (T, 4H)
            a1b = jnp.broadcast_to(alpha[:, 1:2], (T, H4))
            aw8 = jnp.concatenate([a0b, a1b], axis=1)                         # (T, 8H)
            aw2 = jnp.concatenate([a0b[:, 0:H], a1b[:, 0:H]], axis=1)         # (T, 2H)

            # recurrent gate terms straight from the pre-multiplied tape
            # (equals [att_h0 @ W_hh0^T | att_h1 @ W_hh1^T] by linearity)
            g_rec = jnp.sum(aw8 * tape_g_ref[...], axis=0, keepdims=True)     # (1, 8H)
            att_c = jnp.sum(aw2 * tape_c_ref[...], axis=0, keepdims=True)     # (1, 2H)
            att_h = jnp.sum(aw2 * tp_h, axis=0, keepdims=True)                # (1, 2H) -> next step only

            # two-layer LSTM cell, one step
            g0 = gx0_ref[s:s + 1, :] + g_rec[:, 0:H4]
            h0n, c0n = gates(g0, att_c[:, 0:H])
            g1 = (jnp.dot(h0n.astype(bf), wih1t_ref[...],
                          preferred_element_type=f32)
                  + g_rec[:, H4:2 * H4] + b1_ref[...])
            h1n, c1n = gates(g1, att_c[:, H:2 * H])

            # circular-buffer tape update: attention (softmax + weighted sum
            # over tape rows) is permutation-invariant, so overwriting the
            # oldest slot is equivalent to the PyTorch shift-and-append.
            slot = idx % T                                                    # static
            tape_h_ref[slot:slot + 1, 0:H] = h0n
            tape_h_ref[slot:slot + 1, H:2 * H] = h1n
            tape_c_ref[slot:slot + 1, 0:H] = c0n
            tape_c_ref[slot:slot + 1, H:2 * H] = c1n
            # off-critical-path: refresh the pre-multiplied row for next step
            tape_g_ref[slot:slot + 1, 0:H4] = jnp.dot(
                h0n.astype(bf), whh0t_ref[...], preferred_element_type=f32)
            tape_g_ref[slot:slot + 1, H4:2 * H4] = jnp.dot(
                h1n.astype(bf), whh1t_ref[...], preferred_element_type=f32)

            # row index restarts at 0 (PyTorch index re-use) — direct store
            out_ref[idx:idx + 1, :] = h1n

    x_flat = xs.reshape(S, In)
    return pl.pallas_call(
        kernel,
        out_shape=jax.ShapeDtypeStruct((S, H), jnp.float32),
        scratch_shapes=[
            pltpu.VMEM((T, 2 * H), jnp.float32),   # hidden tape (both layers)
            pltpu.VMEM((T, 2 * H), jnp.float32),   # cell tape   (both layers)
            pltpu.VMEM((T, 4 * H * NUM_LAYERS), jnp.float32),  # pre-multiplied recurrent tape
            pltpu.VMEM((S, 4 * H), jnp.float32),   # staged gx0 (x @ W_ih0^T + b0)
            pltpu.VMEM((S, 2 * H), jnp.float32),   # staged x attention projections
        ],
    )(x_flat,
      kp["w_ih0_t"], kp["w_hh0_t"], kp["b0"],
      kp["w_ih1_t"], kp["w_hh1_t"], kp["b1"],
      kp["wh_diag"], kp["wxt"], kp["wht_diag"], kp["v"])


# --------------------------------------------------------------------------
# Pure-JAX reference (mirrors the PyTorch forward, eval mode)
# --------------------------------------------------------------------------
def lstmn_reference(xs, raw, *, tape_depth, hidden):
    S = xs.shape[0]
    H, T, L = hidden, tape_depth, NUM_LAYERS
    x_all = xs[:, 0, :]                                   # (S, In), batch == 1
    P = jax.lax.Precision.HIGHEST

    def cell(inp, h, c, wih, whh, bih, bhh):
        g = (jnp.dot(inp, wih.T, precision=P) + bih
             + jnp.dot(h, whh.T, precision=P) + bhh)
        i = jax.nn.sigmoid(g[:, 0:H]); f = jax.nn.sigmoid(g[:, H:2 * H])
        gg = jnp.tanh(g[:, 2 * H:3 * H]); o = jax.nn.sigmoid(g[:, 3 * H:4 * H])
        cn = f * c + i * gg
        return o * jnp.tanh(cn), cn

    def lstm_step(x, ph, pc):
        h0, c0 = cell(x, ph[0], pc[0], raw["w_ih0"], raw["w_hh0"],
                      raw["b_ih0"], raw["b_hh0"])
        h1, c1 = cell(h0, ph[1], pc[1], raw["w_ih1"], raw["w_hh1"],
                      raw["b_ih1"], raw["b_hh1"])
        return jnp.stack([h0, h1]), jnp.stack([c0, c1])   # (L, 1, H)

    tape_h = jnp.zeros((T, L, 1, H), jnp.float32)
    tape_c = jnp.zeros((T, L, 1, H), jnp.float32)
    prev_h = jnp.zeros((L, 1, H), jnp.float32)
    prev_c = jnp.zeros((L, 1, H), jnp.float32)
    cum = jnp.zeros((S, H), jnp.float32)

    for s in range(T):
        hs, cs = lstm_step(x_all[s:s + 1], prev_h, prev_c)
        tape_h = tape_h.at[s].set(hs)
        tape_c = tape_c.at[s].set(cs)
        cum = cum.at[s].set(hs[-1, 0])

    wh_diag = jnp.stack([jnp.diag(raw["attn_wh"][l]) for l in range(L)])
    wht_diag = jnp.stack([jnp.diag(raw["attn_wht"][l]) for l in range(L)])

    for idx in range(S - T):
        x = x_all[T + idx: T + idx + 1]                              # (1, In)
        hidden_attn = wh_diag[None, :, None, :] * tape_h             # (T,L,1,H)
        x_attn = jnp.einsum("ijk,lk->ilj", raw["attn_wx"], x, precision=P)
        ht_attn = wht_diag[:, None, :] * prev_h                      # (L,1,H)
        a = jnp.tanh(hidden_attn + x_attn[None] + ht_attn[None])
        logits = jnp.einsum("ijkl,jl->ijk", a, raw["attn_v"])        # (T,L,1)
        alpha = jax.nn.softmax(logits, axis=0)
        prev_h = jnp.einsum("ijk,ijkl->jkl", alpha, tape_h)
        prev_c = jnp.einsum("ijk,ijkl->jkl", alpha, tape_c)
        hs, cs = lstm_step(x, prev_h, prev_c)
        tape_h = jnp.concatenate([tape_h[1:], hs[None]], axis=0)
        tape_c = jnp.concatenate([tape_c[1:], cs[None]], axis=0)
        cum = cum.at[idx].set(hs[-1, 0])                             # index re-use, as in torch
    return cum


# --------------------------------------------------------------------------
# Deterministic parameter construction
# --------------------------------------------------------------------------
def make_params(key):
    H, In, L = HIDDEN_SIZE, INPUT_SIZE, NUM_LAYERS
    ks = jax.random.split(key, 13)
    sc = 1.0 / (H ** 0.5)
    bf = jnp.bfloat16

    def rnd(k, shape, scale=sc):
        return jax.random.normal(k, shape, jnp.float32) * scale

    raw = dict(
        w_ih0=rnd(ks[0], (4 * H, In)), w_hh0=rnd(ks[1], (4 * H, H)),
        b_ih0=rnd(ks[2], (4 * H,)),    b_hh0=rnd(ks[3], (4 * H,)),
        w_ih1=rnd(ks[4], (4 * H, H)),  w_hh1=rnd(ks[5], (4 * H, H)),
        b_ih1=rnd(ks[6], (4 * H,)),    b_hh1=rnd(ks[7], (4 * H,)),
        attn_wh=rnd(ks[8], (L, H, H)),
        attn_wx=rnd(ks[9], (L, H, In)),
        attn_wht=rnd(ks[10], (L, H, H)),
        attn_v=rnd(ks[11], (L, H)),
    )

    wh_diag = jnp.concatenate(
        [jnp.diag(raw["attn_wh"][l]) for l in range(L)]).reshape(1, L * H)
    wht_diag = jnp.concatenate(
        [jnp.diag(raw["attn_wht"][l]) for l in range(L)]).reshape(1, L * H)

    # Kernel-side packing: matmul weights pre-cast to bf16 (single MXU pass,
    # f32 accumulation in-kernel); biases / elementwise attention params f32.
    kp = dict(
        w_ih0_t=raw["w_ih0"].T.astype(bf),                             # (In, 4H)
        w_hh0_t=raw["w_hh0"].T.astype(bf),                             # (H, 4H)
        w_ih1_t=raw["w_ih1"].T.astype(bf),                             # (H, 4H)
        w_hh1_t=raw["w_hh1"].T.astype(bf),                             # (H, 4H)
        b0=(raw["b_ih0"] + raw["b_hh0"]).reshape(1, 4 * H),
        b1=(raw["b_ih1"] + raw["b_hh1"]).reshape(1, 4 * H),
        wh_diag=wh_diag,                                               # (1, 2H)
        wxt=jnp.concatenate([raw["attn_wx"][0].T, raw["attn_wx"][1].T],
                            axis=1).astype(bf),                        # (In, 2H)
        wht_diag=wht_diag,                                             # (1, 2H)
        v=raw["attn_v"].reshape(1, L * H),                             # (1, 2H)
    )
    xs = jax.random.normal(ks[12], (SEQ_LEN, BATCH, In), jnp.float32)
    return xs, raw, kp


if __name__ == "__main__":
    xs, raw, kp = make_params(jax.random.PRNGKey(0))

    out = lstmn_pallas(xs, kp, tape_depth=TAPE_DEPTH, hidden=HIDDEN_SIZE)
    out = jax.block_until_ready(out)

    ref = lstmn_reference(xs, raw, tape_depth=TAPE_DEPTH, hidden=HIDDEN_SIZE)
    ref = jax.block_until_ready(ref)

    assert out.shape == (SEQ_LEN, HIDDEN_SIZE)
    max_err = float(jnp.max(jnp.abs(out - ref)))
    # bf16 MXU operands + approx reciprocal vs. an f32-HIGHEST reference over a
    # 12-step recurrence: 3e-2 abs tolerance (real bugs show up as O(0.1-1)).
    assert max_err < 3e-2, f"mismatch vs reference: max_err={max_err}"
    print("KERNEL_OK")
</pallas_src>

<mosaic_0001>
module attributes {stable_mosaic.version = 11 : i64} {
  func.func @kernel(%arg0: memref<20x32xf32, #tpu.memory_space<vmem>>, %arg1: memref<32x128xbf16, #tpu.memory_space<vmem>>, %arg2: memref<32x128xbf16, #tpu.memory_space<vmem>>, %arg3: memref<1x128xf32, #tpu.memory_space<vmem>>, %arg4: memref<32x128xbf16, #tpu.memory_space<vmem>>, %arg5: memref<32x128xbf16, #tpu.memory_space<vmem>>, %arg6: memref<1x128xf32, #tpu.memory_space<vmem>>, %arg7: memref<1x64xf32, #tpu.memory_space<vmem>>, %arg8: memref<32x64xbf16, #tpu.memory_space<vmem>>, %arg9: memref<1x64xf32, #tpu.memory_space<vmem>>, %arg10: memref<1x64xf32, #tpu.memory_space<vmem>>, %arg11: memref<20x32xf32, #tpu.memory_space<vmem>>, %arg12: memref<8x64xf32, #tpu.memory_space<vmem>>, %arg13: memref<8x64xf32, #tpu.memory_space<vmem>>, %arg14: memref<8x256xf32, #tpu.memory_space<vmem>>, %arg15: memref<20x128xf32, #tpu.memory_space<vmem>>, %arg16: memref<20x64xf32, #tpu.memory_space<vmem>>) attributes {dimension_semantics = [], scalar_prefetch = 0 : i64, scratch_operands = 5 : i64, tpu.core_type = #tpu.core_type<tc>} {
    %c0 = arith.constant 0 : index
    %c0_0 = arith.constant 0 : index
    %0 = vector.load %arg0[%c0, %c0_0] : memref<20x32xf32, #tpu.memory_space<vmem>>, vector<20x32xf32>
    %1 = arith.truncf %0 : vector<20x32xf32> to vector<20x32xbf16>
    %c0_1 = arith.constant 0 : index
    %c0_2 = arith.constant 0 : index
    %2 = vector.load %arg1[%c0_1, %c0_2] : memref<32x128xbf16, #tpu.memory_space<vmem>>, vector<32x128xbf16>
    %cst = arith.constant dense<0.000000e+00> : vector<20x128xf32>
    %3 = tpu.matmul %1, %2, %cst {dimension_numbers = #tpu.dot_dimension_numbers<[1], [0], [0], [1], [0, 0, 1, 1], [], []>} : vector<20x32xbf16>, vector<32x128xbf16>, vector<20x128xf32> -> vector<20x128xf32>
    %c0_3 = arith.constant 0 : index
    %c0_4 = arith.constant 0 : index
    %4 = vector.load %arg3[%c0_3, %c0_4] : memref<1x128xf32, #tpu.memory_space<vmem>>, vector<1x128xf32>
    %5 = vector.broadcast %4 : vector<1x128xf32> to vector<20x128xf32>
    %6 = arith.addf %3, %5 : vector<20x128xf32>
    %c0_5 = arith.constant 0 : index
    %c0_6 = arith.constant 0 : index
    %7 = vector.load %arg8[%c0_5, %c0_6] : memref<32x64xbf16, #tpu.memory_space<vmem>>, vector<32x64xbf16>
    %cst_7 = arith.constant dense<0.000000e+00> : vector<20x64xf32>
    %8 = tpu.matmul %1, %7, %cst_7 {dimension_numbers = #tpu.dot_dimension_numbers<[1], [0], [0], [1], [0, 0, 1, 1], [], []>} : vector<20x32xbf16>, vector<32x64xbf16>, vector<20x64xf32> -> vector<20x64xf32>
    %c0_8 = arith.constant 0 : index
    %c0_9 = arith.constant 0 : index
    %9 = vector.load %arg15[%c0_8, %c0_9] : memref<20x128xf32, #tpu.memory_space<vmem>>, vector<20x128xf32>
    tpu.vector_store %arg15[%c0_8, %c0_9], %6 {strides = array<i32>} : memref<20x128xf32, #tpu.memory_space<vmem>>, vector<20x128xf32>,
    %c0_10 = arith.constant 0 : index
    %c0_11 = arith.constant 0 : index
    %10 = vector.load %arg16[%c0_10, %c0_11] : memref<20x64xf32, #tpu.memory_space<vmem>>, vector<20x64xf32>
    tpu.vector_store %arg16[%c0_10, %c0_11], %8 {strides = array<i32>} : memref<20x64xf32, #tpu.memory_space<vmem>>, vector<20x64xf32>,
    %11 = vector.extract_strided_slice %6 {offsets = [0, 0], sizes = [8, 128], strides = [1, 1]} : vector<20x128xf32> to vector<8x128xf32>
    %12 = arith.negf %11 : vector<8x128xf32>
    %13 = math.exp %12 : vector<8x128xf32>
    %cst_12 = arith.constant 1.000000e+00 : f32
    %14 = vector.broadcast %cst_12 : f32 to vector<8x128xf32>
    %15 = arith.addf %14, %13 : vector<8x128xf32>
    %16 = arith.divf %14, %15 : vector<8x128xf32>
    %17 = math.tanh %11 : vector<8x128xf32>
    %18 = vector.extract_strided_slice %16 {offsets = [0, 0], sizes = [8, 32], strides = [1, 1]} : vector<8x128xf32> to vector<8x32xf32>
    %19 = vector.extract_strided_slice %17 {offsets = [0, 64], sizes = [8, 32], strides = [1, 1]} : vector<8x128xf32> to vector<8x32xf32>
    %20 = vector.extract_strided_slice %16 {offsets = [0, 96], sizes = [8, 32], strides = [1, 1]} : vector<8x128xf32> to vector<8x32xf32>
    %21 = arith.mulf %18, %19 : vector<8x32xf32>
    %22 = math.tanh %21 : vector<8x32xf32>
    %23 = arith.mulf %20, %22 : vector<8x32xf32>
    %24 = arith.truncf %23 : vector<8x32xf32> to vector<8x32xbf16>
    %c0_13 = arith.constant 0 : index
    %c0_14 = arith.constant 0 : index
    %25 = vector.load %arg4[%c0_13, %c0_14] : memref<32x128xbf16, #tpu.memory_space<vmem>>, vector<32x128xbf16>
    %cst_15 = arith.constant dense<0.000000e+00> : vector<8x128xf32>
    %26 = tpu.matmul %24, %25, %cst_15 {dimension_numbers = #tpu.dot_dimension_numbers<[1], [0], [0], [1], [0, 0, 1, 1], [], []>} : vector<8x32xbf16>, vector<32x128xbf16>, vector<8x128xf32> -> vector<8x128xf32>
    %c0_16 = arith.constant 0 : index
    %c0_17 = arith.constant 0 : index
    %27 = vector.load %arg6[%c0_16, %c0_17] : memref<1x128xf32, #tpu.memory_space<vmem>>, vector<1x128xf32>
    %28 = vector.broadcast %27 : vector<1x128xf32> to vector<8x128xf32>
    %29 = arith.addf %26, %28 : vector<8x128xf32>
    %30 = arith.negf %29 : vector<8x128xf32>
    %31 = math.exp %30 : vector<8x128xf32>
    %cst_18 = arith.constant 1.000000e+00 : f32
    %32 = vector.broadcast %cst_18 : f32 to vector<8x128xf32>
    %33 = arith.addf %32, %31 : vector<8x128xf32>
    %34 = arith.divf %32, %33 : vector<8x128xf32>
    %35 = math.tanh %29 : vector<8x128xf32>
    %36 = vector.extract_strided_slice %34 {offsets = [0, 0], sizes = [8, 32], strides = [1, 1]} : vector<8x128xf32> to vector<8x32xf32>
    %37 = vector.extract_strided_slice %35 {offsets = [0, 64], sizes = [8, 32], strides = [1, 1]} : vector<8x128xf32> to vector<8x32xf32>
    %38 = vector.extract_strided_slice %34 {offsets = [0, 96], sizes = [8, 32], strides = [1, 1]} : vector<8x128xf32> to vector<8x32xf32>
    %39 = arith.mulf %36, %37 : vector<8x32xf32>
    %40 = math.tanh %39 : vector<8x32xf32>
    %41 = arith.mulf %38, %40 : vector<8x32xf32>
    %c0_19 = arith.constant 0 : index
    %c0_20 = arith.constant 0 : index
    %42 = vector.load %arg12[%c0_19, %c0_20] : memref<8x64xf32, #tpu.memory_space<vmem>>, vector<8x32xf32>
    tpu.vector_store %arg12[%c0_19, %c0_20], %23 {strides = array<i32>} : memref<8x64xf32, #tpu.memory_space<vmem>>, vector<8x32xf32>,
    %c0_21 = arith.constant 0 : index
    %c32 = arith.constant 32 : index
    %43 = vector.load %arg12[%c0_21, %c32] : memref<8x64xf32, #tpu.memory_space<vmem>>, vector<8x32xf32>
    tpu.vector_store %arg12[%c0_21, %c32], %41 {strides = array<i32>} : memref<8x64xf32, #tpu.memory_space<vmem>>, vector<8x32xf32>,
    %c0_22 = arith.constant 0 : index
    %c0_23 = arith.constant 0 : index
    %44 = vector.load %arg13[%c0_22, %c0_23] : memref<8x64xf32, #tpu.memory_space<vmem>>, vector<8x32xf32>
    tpu.vector_store %arg13[%c0_22, %c0_23], %21 {strides = array<i32>} : memref<8x64xf32, #tpu.memory_space<vmem>>, vector<8x32xf32>,
    %c0_24 = arith.constant 0 : index
    %c32_25 = arith.constant 32 : index
    %45 = vector.load %arg13[%c0_24, %c32_25] : memref<8x64xf32, #tpu.memory_space<vmem>>, vector<8x32xf32>
    tpu.vector_store %arg13[%c0_24, %c32_25], %39 {strides = array<i32>} : memref<8x64xf32, #tpu.memory_space<vmem>>, vector<8x32xf32>,
    %46 = arith.truncf %23 : vector<8x32xf32> to vector<8x32xbf16>
    %c0_26 = arith.constant 0 : index
    %c0_27 = arith.constant 0 : index
    %47 = vector.load %arg2[%c0_26, %c0_27] : memref<32x128xbf16, #tpu.memory_space<vmem>>, vector<32x128xbf16>
    %cst_28 = arith.constant dense<0.000000e+00> : vector<8x128xf32>
    %48 = tpu.matmul %46, %47, %cst_28 {dimension_numbers = #tpu.dot_dimension_numbers<[1], [0], [0], [1], [0, 0, 1, 1], [], []>} : vector<8x32xbf16>, vector<32x128xbf16>, vector<8x128xf32> -> vector<8x128xf32>
    %c0_29 = arith.constant 0 : index
    %c0_30 = arith.constant 0 : index
    %49 = vector.load %arg14[%c0_29, %c0_30] : memref<8x256xf32, #tpu.memory_space<vmem>>, vector<8x128xf32>
    tpu.vector_store %arg14[%c0_29, %c0_30], %48 {strides = array<i32>} : memref<8x256xf32, #tpu.memory_space<vmem>>, vector<8x128xf32>,
    %50 = arith.truncf %41 : vector<8x32xf32> to vector<8x32xbf16>
    %c0_31 = arith.constant 0 : index
    %c0_32 = arith.constant 0 : index
    %51 = vector.load %arg5[%c0_31, %c0_32] : memref<32x128xbf16, #tpu.memory_space<vmem>>, vector<32x128xbf16>
    %cst_33 = arith.constant dense<0.000000e+00> : vector<8x128xf32>
    %52 = tpu.matmul %50, %51, %cst_33 {dimension_numbers = #tpu.dot_dimension_numbers<[1], [0], [0], [1], [0, 0, 1, 1], [], []>} : vector<8x32xbf16>, vector<32x128xbf16>, vector<8x128xf32> -> vector<8x128xf32>
    %c0_34 = arith.constant 0 : index
    %c128 = arith.constant 128 : index
    %53 = vector.load %arg14[%c0_34, %c128] : memref<8x256xf32, #tpu.memory_space<vmem>>, vector<8x128xf32>
    tpu.vector_store %arg14[%c0_34, %c128], %52 {strides = array<i32>} : memref<8x256xf32, #tpu.memory_space<vmem>>, vector<8x128xf32>,
    %c0_35 = arith.constant 0 : index
    %c0_36 = arith.constant 0 : index
    %54 = vector.load %arg11[%c0_35, %c0_36] : memref<20x32xf32, #tpu.memory_space<vmem>>, vector<8x32xf32>
    tpu.vector_store %arg11[%c0_35, %c0_36], %41 {strides = array<i32>} : memref<20x32xf32, #tpu.memory_space<vmem>>, vector<8x32xf32>,
    %cst_37 = arith.constant 0.000000e+00 : f32
    %55 = vector.broadcast %cst_37 : f32 to vector<12x32xf32>
    %c8 = arith.constant 8 : index
    %c0_38 = arith.constant 0 : index
    %56 = vector.load %arg11[%c8, %c0_38] : memref<20x32xf32, #tpu.memory_space<vmem>>, vector<12x32xf32>
    tpu.vector_store %arg11[%c8, %c0_38], %55 {strides = array<i32>} : memref<20x32xf32, #tpu.memory_space<vmem>>, vector<12x32xf32>,
    %cst_39 = arith.constant 0.000000e+00 : f32
    %57 = vector.broadcast %cst_39 : f32 to vector<1x64xf32>
    %c0_40 = arith.constant 0 : index
    %c0_41 = arith.constant 0 : index
    %58 = vector.load %arg12[%c0_40, %c0_41] : memref<8x64xf32, #tpu.memory_space<vmem>>, vector<8x64xf32>
    %c0_42 = arith.constant 0 : index
    %c0_43 = arith.constant 0 : index
    %59 = vector.load %arg7[%c0_42, %c0_43] : memref<1x64xf32, #tpu.memory_space<vmem>>, vector<1x64xf32>
    %60 = vector.broadcast %59 : vector<1x64xf32> to vector<8x64xf32>
    %61 = arith.mulf %60, %58 : vector<8x64xf32>
    %c8_44 = arith.constant 8 : index
    %c0_45 = arith.constant 0 : index
    %62 = vector.load %arg16[%c8_44, %c0_45] : memref<20x64xf32, #tpu.memory_space<vmem>>, vector<1x64xf32>
    %63 = vector.broadcast %62 : vector<1x64xf32> to vector<8x64xf32>
    %64 = arith.addf %61, %63 : vector<8x64xf32>
    %c0_46 = arith.constant 0 : index
    %c0_47 = arith.constant 0 : index
    %65 = vector.load %arg9[%c0_46, %c0_47] : memref<1x64xf32, #tpu.memory_space<vmem>>, vector<1x64xf32>
    %66 = arith.mulf %65, %57 : vector<1x64xf32>
    %67 = vector.broadcast %66 : vector<1x64xf32> to vector<8x64xf32>
    %68 = arith.addf %64, %67 : vector<8x64xf32>
    %69 = math.tanh %68 : vector<8x64xf32>
    %c0_48 = arith.constant 0 : index
    %c0_49 = arith.constant 0 : index
    %70 = vector.load %arg10[%c0_48, %c0_49] : memref<1x64xf32, #tpu.memory_space<vmem>>, vector<1x64xf32>
    %71 = vector.broadcast %70 : vector<1x64xf32> to vector<8x64xf32>
    %72 = arith.mulf %69, %71 : vector<8x64xf32>
    %73 = vector.extract_strided_slice %72 {offsets = [0, 0], sizes = [8, 32], strides = [1, 1]} : vector<8x64xf32> to vector<8x32xf32>
    %cst_50 = arith.constant dense<0.000000e+00> : vector<8xf32>
    %74 = vector.multi_reduction <add>, %73, %cst_50 [1] : vector<8x32xf32> to vector<8xf32>
    %75 = vector.shape_cast %74 : vector<8xf32> to vector<8x1xf32>
    %76 = vector.extract_strided_slice %72 {offsets = [0, 32], sizes = [8, 32], strides = [1, 1]} : vector<8x64xf32> to vector<8x32xf32>
    %cst_51 = arith.constant dense<0.000000e+00> : vector<8xf32>
    %77 = vector.multi_reduction <add>, %76, %cst_51 [1] : vector<8x32xf32> to vector<8xf32>
    %78 = vector.shape_cast %77 : vector<8xf32> to vector<8x1xf32>
    %79 = tpu.concatenate %75, %78 in 1 : vector<8x1xf32>, vector<8x1xf32> -> vector<8x2xf32>
    %80 = math.exp %79 : vector<8x2xf32>
    %cst_52 = arith.constant dense<0.000000e+00> : vector<2xf32>
    %81 = vector.multi_reduction <add>, %80, %cst_52 [0] : vector<8x2xf32> to vector<2xf32>
    %82 = vector.shape_cast %81 : vector<2xf32> to vector<1x2xf32>
    %83 = tpu.reciprocal %82 {approx = true} : vector<1x2xf32> -> vector<1x2xf32>
    %84 = vector.broadcast %83 : vector<1x2xf32> to vector<8x2xf32>
    %85 = arith.mulf %80, %84 : vector<8x2xf32>
    %86 = vector.extract_strided_slice %85 {offsets = [0, 0], sizes = [8, 1], strides = [1, 1]} : vector<8x2xf32> to vector<8x1xf32>
    %87 = vector.shape_cast %86 : vector<8x1xf32> to vector<8x1xf32>
    %88 = vector.broadcast %87 : vector<8x1xf32> to vector<8x128xf32>
    %89 = vector.extract_strided_slice %85 {offsets = [0, 1], sizes = [8, 1], strides = [1, 1]} : vector<8x2xf32> to vector<8x1xf32>
    %90 = vector.shape_cast %89 : vector<8x1xf32> to vector<8x1xf32>
    %91 = vector.broadcast %90 : vector<8x1xf32> to vector<8x128xf32>
    %92 = tpu.concatenate %88, %91 in 1 : vector<8x128xf32>, vector<8x128xf32> -> vector<8x256xf32>
    %93 = vector.extract_strided_slice %88 {offsets = [0, 0], sizes = [8, 32], strides = [1, 1]} : vector<8x128xf32> to vector<8x32xf32>
    %94 = vector.extract_strided_slice %91 {offsets = [0, 0], sizes = [8, 32], strides = [1, 1]} : vector<8x128xf32> to vector<8x32xf32>
    %95 = tpu.concatenate %93, %94 in 1 : vector<8x32xf32>, vector<8x32xf32> -> vector<8x64xf32>
    %c0_53 = arith.constant 0 : index
    %c0_54 = arith.constant 0 : index
    %96 = vector.load %arg14[%c0_53, %c0_54] : memref<8x256xf32, #tpu.memory_space<vmem>>, vector<8x256xf32>
    %97 = arith.mulf %92, %96 : vector<8x256xf32>
    %cst_55 = arith.constant dense<0.000000e+00> : vector<256xf32>
    %98 = vector.multi_reduction <add>, %97, %cst_55 [0] : vector<8x256xf32> to vector<256xf32>
    %99 = vector.shape_cast %98 : vector<256xf32> to vector<1x256xf32>
    %c0_56 = arith.constant 0 : index
    %c0_57 = arith.constant 0 : index
    %100 = vector.load %arg13[%c0_56, %c0_57] : memref<8x64xf32, #tpu.memory_space<vmem>>, vector<8x64xf32>
    %101 = arith.mulf %95, %100 : vector<8x64xf32>
    %cst_58 = arith.constant dense<0.000000e+00> : vector<64xf32>
    %102 = vector.multi_reduction <add>, %101, %cst_58 [0] : vector<8x64xf32> to vector<64xf32>
    %103 = vector.shape_cast %102 : vector<64xf32> to vector<1x64xf32>
    %104 = arith.mulf %95, %58 : vector<8x64xf32>
    %cst_59 = arith.constant dense<0.000000e+00> : vector<64xf32>
    %105 = vector.multi_reduction <add>, %104, %cst_59 [0] : vector<8x64xf32> to vector<64xf32>
    %106 = vector.shape_cast %105 : vector<64xf32> to vector<1x64xf32>
    %c8_60 = arith.constant 8 : index
    %c0_61 = arith.constant 0 : index
    %107 = vector.load %arg15[%c8_60, %c0_61] : memref<20x128xf32, #tpu.memory_space<vmem>>, vector<1x128xf32>
    %108 = vector.extract_strided_slice %99 {offsets = [0, 0], sizes = [1, 128], strides = [1, 1]} : vector<1x256xf32> to vector<1x128xf32>
    %109 = arith.addf %107, %108 : vector<1x128xf32>
    %110 = vector.extract_strided_slice %103 {offsets = [0, 0], sizes = [1, 32], strides = [1, 1]} : vector<1x64xf32> to vector<1x32xf32>
    %111 = arith.negf %109 : vector<1x128xf32>
    %112 = math.exp %111 : vector<1x128xf32>
    %cst_62 = arith.constant 1.000000e+00 : f32
    %113 = vector.broadcast %cst_62 : f32 to vector<1x128xf32>
    %114 = arith.addf %113, %112 : vector<1x128xf32>
    %115 = arith.divf %113, %114 : vector<1x128xf32>
    %116 = math.tanh %109 : vector<1x128xf32>
    %117 = vector.extract_strided_slice %115 {offsets = [0, 0], sizes = [1, 32], strides = [1, 1]} : vector<1x128xf32> to vector<1x32xf32>
    %118 = vector.extract_strided_slice %115 {offsets = [0, 32], sizes = [1, 32], strides = [1, 1]} : vector<1x128xf32> to vector<1x32xf32>
    %119 = vector.extract_strided_slice %116 {offsets = [0, 64], sizes = [1, 32], strides = [1, 1]} : vector<1x128xf32> to vector<1x32xf32>
    %120 = vector.extract_strided_slice %115 {offsets = [0, 96], sizes = [1, 32], strides = [1, 1]} : vector<1x128xf32> to vector<1x32xf32>
    %121 = arith.mulf %118, %110 : vector<1x32xf32>
    %122 = arith.mulf %117, %119 : vector<1x32xf32>
    %123 = arith.addf %121, %122 : vector<1x32xf32>
    %124 = math.tanh %123 : vector<1x32xf32>
    %125 = arith.mulf %120, %124 : vector<1x32xf32>
    %126 = arith.truncf %125 : vector<1x32xf32> to vector<1x32xbf16>
    %c0_63 = arith.constant 0 : index
    %c0_64 = arith.constant 0 : index
    %127 = vector.load %arg4[%c0_63, %c0_64] : memref<32x128xbf16, #tpu.memory_space<vmem>>, vector<32x128xbf16>
    %cst_65 = arith.constant dense<0.000000e+00> : vector<1x128xf32>
    %128 = tpu.matmul %126, %127, %cst_65 {dimension_numbers = #tpu.dot_dimension_numbers<[1], [0], [0], [1], [0, 0, 1, 1], [], []>} : vector<1x32xbf16>, vector<32x128xbf16>, vector<1x128xf32> -> vector<1x128xf32>
    %129 = vector.extract_strided_slice %99 {offsets = [0, 128], sizes = [1, 128], strides = [1, 1]} : vector<1x256xf32> to vector<1x128xf32>
    %130 = arith.addf %128, %129 : vector<1x128xf32>
    %c0_66 = arith.constant 0 : index
    %c0_67 = arith.constant 0 : index
    %131 = vector.load %arg6[%c0_66, %c0_67] : memref<1x128xf32, #tpu.memory_space<vmem>>, vector<1x128xf32>
    %132 = arith.addf %130, %131 : vector<1x128xf32>
    %133 = vector.extract_strided_slice %103 {offsets = [0, 32], sizes = [1, 32], strides = [1, 1]} : vector<1x64xf32> to vector<1x32xf32>
    %134 = arith.negf %132 : vector<1x128xf32>
    %135 = math.exp %134 : vector<1x128xf32>
    %cst_68 = arith.constant 1.000000e+00 : f32
    %136 = vector.broadcast %cst_68 : f32 to vector<1x128xf32>
    %137 = arith.addf %136, %135 : vector<1x128xf32>
    %138 = arith.divf %136, %137 : vector<1x128xf32>
    %139 = math.tanh %132 : vector<1x128xf32>
    %140 = vector.extract_strided_slice %138 {offsets = [0, 0], sizes = [1, 32], strides = [1, 1]} : vector<1x128xf32> to vector<1x32xf32>
    %141 = vector.extract_strided_slice %138 {offsets = [0, 32], sizes = [1, 32], strides = [1, 1]} : vector<1x128xf32> to vector<1x32xf32>
    %142 = vector.extract_strided_slice %139 {offsets = [0, 64], sizes = [1, 32], strides = [1, 1]} : vector<1x128xf32> to vector<1x32xf32>
    %143 = vector.extract_strided_slice %138 {offsets = [0, 96], sizes = [1, 32], strides = [1, 1]} : vector<1x128xf32> to vector<1x32xf32>
    %144 = arith.mulf %141, %133 : vector<1x32xf32>
    %145 = arith.mulf %140, %142 : vector<1x32xf32>
    %146 = arith.addf %144, %145 : vector<1x32xf32>
    %147 = math.tanh %146 : vector<1x32xf32>
    %148 = arith.mulf %143, %147 : vector<1x32xf32>
    %c0_69 = arith.constant 0 : index
    %c0_70 = arith.constant 0 : index
    %149 = vector.load %arg12[%c0_69, %c0_70] : memref<8x64xf32, #tpu.memory_space<vmem>>, vector<1x32xf32>
    tpu.vector_store %arg12[%c0_69, %c0_70], %125 {strides = array<i32>} : memref<8x64xf32, #tpu.memory_space<vmem>>, vector<1x32xf32>,
    %c0_71 = arith.constant 0 : index
    %c32_72 = arith.constant 32 : index
    %150 = vector.load %arg12[%c0_71, %c32_72] : memref<8x64xf32, #tpu.memory_space<vmem>>, vector<1x32xf32>
    tpu.vector_store %arg12[%c0_71, %c32_72], %148 {strides = array<i32>} : memref<8x64xf32, #tpu.memory_space<vmem>>, vector<1x32xf32>,
    %c0_73 = arith.constant 0 : index
    %c0_74 = arith.constant 0 : index
    %151 = vector.load %arg13[%c0_73, %c0_74] : memref<8x64xf32, #tpu.memory_space<vmem>>, vector<1x32xf32>
    tpu.vector_store %arg13[%c0_73, %c0_74], %123 {strides = array<i32>} : memref<8x64xf32, #tpu.memory_space<vmem>>, vector<1x32xf32>,
    %c0_75 = arith.constant 0 : index
    %c32_76 = arith.constant 32 : index
    %152 = vector.load %arg13[%c0_75, %c32_76] : memref<8x64xf32, #tpu.memory_space<vmem>>, vector<1x32xf32>
    tpu.vector_store %arg13[%c0_75, %c32_76], %146 {strides = array<i32>} : memref<8x64xf32, #tpu.memory_space<vmem>>, vector<1x32xf32>,
    %153 = arith.truncf %125 : vector<1x32xf32> to vector<1x32xbf16>
    %c0_77 = arith.constant 0 : index
    %c0_78 = arith.constant 0 : index
    %154 = vector.load %arg2[%c0_77, %c0_78] : memref<32x128xbf16, #tpu.memory_space<vmem>>, vector<32x128xbf16>
    %cst_79 = arith.constant dense<0.000000e+00> : vector<1x128xf32>
    %155 = tpu.matmul %153, %154, %cst_79 {dimension_numbers = #tpu.dot_dimension_numbers<[1], [0], [0], [1], [0, 0, 1, 1], [], []>} : vector<1x32xbf16>, vector<32x128xbf16>, vector<1x128xf32> -> vector<1x128xf32>
    %c0_80 = arith.constant 0 : index
    %c0_81 = arith.constant 0 : index
    %156 = vector.load %arg14[%c0_80, %c0_81] : memref<8x256xf32, #tpu.memory_space<vmem>>, vector<1x128xf32>
    tpu.vector_store %arg14[%c0_80, %c0_81], %155 {strides = array<i32>} : memref<8x256xf32, #tpu.memory_space<vmem>>, vector<1x128xf32>,
    %157 = arith.truncf %148 : vector<1x32xf32> to vector<1x32xbf16>
    %c0_82 = arith.constant 0 : index
    %c0_83 = arith.constant 0 : index
    %158 = vector.load %arg5[%c0_82, %c0_83] : memref<32x128xbf16, #tpu.memory_space<vmem>>, vector<32x128xbf16>
    %cst_84 = arith.constant dense<0.000000e+00> : vector<1x128xf32>
    %159 = tpu.matmul %157, %158, %cst_84 {dimension_numbers = #tpu.dot_dimension_numbers<[1], [0], [0], [1], [0, 0, 1, 1], [], []>} : vector<1x32xbf16>, vector<32x128xbf16>, vector<1x128xf32> -> vector<1x128xf32>
    %c0_85 = arith.constant 0 : index
    %c128_86 = arith.constant 128 : index
    %160 = vector.load %arg14[%c0_85, %c128_86] : memref<8x256xf32, #tpu.memory_space<vmem>>, vector<1x128xf32>
    tpu.vector_store %arg14[%c0_85, %c128_86], %159 {strides = array<i32>} : memref<8x256xf32, #tpu.memory_space<vmem>>, vector<1x128xf32>,
    %c0_87 = arith.constant 0 : index
    %c0_88 = arith.constant 0 : index
    %161 = vector.load %arg11[%c0_87, %c0_88] : memref<20x32xf32, #tpu.memory_space<vmem>>, vector<1x32xf32>
    tpu.vector_store %arg11[%c0_87, %c0_88], %148 {strides = array<i32>} : memref<20x32xf32, #tpu.memory_space<vmem>>, vector<1x32xf32>,
    %c0_89 = arith.constant 0 : index
    %c0_90 = arith.constant 0 : index
    %162 = vector.load %arg12[%c0_89, %c0_90] : memref<8x64xf32, #tpu.memory_space<vmem>>, vector<8x64xf32>
    %c0_91 = arith.constant 0 : index
    %c0_92 = arith.constant 0 : index
    %163 = vector.load %arg7[%c0_91, %c0_92] : memref<1x64xf32, #tpu.memory_space<vmem>>, vector<1x64xf32>
    %164 = vector.broadcast %163 : vector<1x64xf32> to vector<8x64xf32>
    %165 = arith.mulf %164, %162 : vector<8x64xf32>
    %c9 = arith.constant 9 : index
    %c0_93 = arith.constant 0 : index
    %166 = vector.load %arg16[%c9, %c0_93] : memref<20x64xf32, #tpu.memory_space<vmem>>, vector<1x64xf32>
    %167 = vector.broadcast %166 : vector<1x64xf32> to vector<8x64xf32>
    %168 = arith.addf %165, %167 : vector<8x64xf32>
    %c0_94 = arith.constant 0 : index
    %c0_95 = arith.constant 0 : index
    %169 = vector.load %arg9[%c0_94, %c0_95] : memref<1x64xf32, #tpu.memory_space<vmem>>, vector<1x64xf32>
    %170 = arith.mulf %169, %106 : vector<1x64xf32>
    %171 = vector.broadcast %170 : vector<1x64xf32> to vector<8x64xf32>
    %172 = arith.addf %168, %171 : vector<8x64xf32>
    %173 = math.tanh %172 : vector<8x64xf32>
    %c0_96 = arith.constant 0 : index
    %c0_97 = arith.constant 0 : index
    %174 = vector.load %arg10[%c0_96, %c0_97] : memref<1x64xf32, #tpu.memory_space<vmem>>, vector<1x64xf32>
    %175 = vector.broadcast %174 : vector<1x64xf32> to vector<8x64xf32>
    %176 = arith.mulf %173, %175 : vector<8x64xf32>
    %177 = vector.extract_strided_slice %176 {offsets = [0, 0], sizes = [8, 32], strides = [1, 1]} : vector<8x64xf32> to vector<8x32xf32>
    %cst_98 = arith.constant dense<0.000000e+00> : vector<8xf32>
    %178 = vector.multi_reduction <add>, %177, %cst_98 [1] : vector<8x32xf32> to vector<8xf32>
    %179 = vector.shape_cast %178 : vector<8xf32> to vector<8x1xf32>
    %180 = vector.extract_strided_slice %176 {offsets = [0, 32], sizes = [8, 32], strides = [1, 1]} : vector<8x64xf32> to vector<8x32xf32>
    %cst_99 = arith.constant dense<0.000000e+00> : vector<8xf32>
    %181 = vector.multi_reduction <add>, %180, %cst_99 [1] : vector<8x32xf32> to vector<8xf32>
    %182 = vector.shape_cast %181 : vector<8xf32> to vector<8x1xf32>
    %183 = tpu.concatenate %179, %182 in 1 : vector<8x1xf32>, vector<8x1xf32> -> vector<8x2xf32>
    %184 = math.exp %183 : vector<8x2xf32>
    %cst_100 = arith.constant dense<0.000000e+00> : vector<2xf32>
    %185 = vector.multi_reduction <add>, %184, %cst_100 [0] : vector<8x2xf32> to vector<2xf32>
    %186 = vector.shape_cast %185 : vector<2xf32> to vector<1x2xf32>
    %187 = tpu.reciprocal %186 {approx = true} : vector<1x2xf32> -> vector<1x2xf32>
    %188 = vector.broadcast %187 : vector<1x2xf32> to vector<8x2xf32>
    %189 = arith.mulf %184, %188 : vector<8x2xf32>
    %190 = vector.extract_strided_slice %189 {offsets = [0, 0], sizes = [8, 1], strides = [1, 1]} : vector<8x2xf32> to vector<8x1xf32>
    %191 = vector.shape_cast %190 : vector<8x1xf32> to vector<8x1xf32>
    %192 = vector.broadcast %191 : vector<8x1xf32> to vector<8x128xf32>
    %193 = vector.extract_strided_slice %189 {offsets = [0, 1], sizes = [8, 1], strides = [1, 1]} : vector<8x2xf32> to vector<8x1xf32>
    %194 = vector.shape_cast %193 : vector<8x1xf32> to vector<8x1xf32>
    %195 = vector.broadcast %194 : vector<8x1xf32> to vector<8x128xf32>
    %196 = tpu.concatenate %192, %195 in 1 : vector<8x128xf32>, vector<8x128xf32> -> vector<8x256xf32>
    %197 = vector.extract_strided_slice %192 {offsets = [0, 0], sizes = [8, 32], strides = [1, 1]} : vector<8x128xf32> to vector<8x32xf32>
    %198 = vector.extract_strided_slice %195 {offsets = [0, 0], sizes = [8, 32], strides = [1, 1]} : vector<8x128xf32> to vector<8x32xf32>
    %199 = tpu.concatenate %197, %198 in 1 : vector<8x32xf32>, vector<8x32xf32> -> vector<8x64xf32>
    %c0_101 = arith.constant 0 : index
    %c0_102 = arith.constant 0 : index
    %200 = vector.load %arg14[%c0_101, %c0_102] : memref<8x256xf32, #tpu.memory_space<vmem>>, vector<8x256xf32>
    %201 = arith.mulf %196, %200 : vector<8x256xf32>
    %cst_103 = arith.constant dense<0.000000e+00> : vector<256xf32>
    %202 = vector.multi_reduction <add>, %201, %cst_103 [0] : vector<8x256xf32> to vector<256xf32>
    %203 = vector.shape_cast %202 : vector<256xf32> to vector<1x256xf32>
    %c0_104 = arith.constant 0 : index
    %c0_105 = arith.constant 0 : index
    %204 = vector.load %arg13[%c0_104, %c0_105] : memref<8x64xf32, #tpu.memory_space<vmem>>, vector<8x64xf32>
    %205 = arith.mulf %199, %204 : vector<8x64xf32>
    %cst_106 = arith.constant dense<0.000000e+00> : vector<64xf32>
    %206 = vector.multi_reduction <add>, %205, %cst_106 [0] : vector<8x64xf32> to vector<64xf32>
    %207 = vector.shape_cast %206 : vector<64xf32> to vector<1x64xf32>
    %208 = arith.mulf %199, %162 : vector<8x64xf32>
    %cst_107 = arith.constant dense<0.000000e+00> : vector<64xf32>
    %209 = vector.multi_reduction <add>, %208, %cst_107 [0] : vector<8x64xf32> to vector<64xf32>
    %210 = vector.shape_cast %209 : vector<64xf32> to vector<1x64xf32>
    %c9_108 = arith.constant 9 : index
    %c0_109 = arith.constant 0 : index
    %211 = vector.load %arg15[%c9_108, %c0_109] : memref<20x128xf32, #tpu.memory_space<vmem>>, vector<1x128xf32>
    %212 = vector.extract_strided_slice %203 {offsets = [0, 0], sizes = [1, 128], strides = [1, 1]} : vector<1x256xf32> to vector<1x128xf32>
    %213 = arith.addf %211, %212 : vector<1x128xf32>
    %214 = vector.extract_strided_slice %207 {offsets = [0, 0], sizes = [1, 32], strides = [1, 1]} : vector<1x64xf32> to vector<1x32xf32>
    %215 = arith.negf %213 : vector<1x128xf32>
    %216 = math.exp %215 : vector<1x128xf32>
    %cst_110 = arith.constant 1.000000e+00 : f32
    %217 = vector.broadcast %cst_110 : f32 to vector<1x128xf32>
    %218 = arith.addf %217, %216 : vector<1x128xf32>
    %219 = arith.divf %217, %218 : vector<1x128xf32>
    %220 = math.tanh %213 : vector<1x128xf32>
    %221 = vector.extract_strided_slice %219 {offsets = [0, 0], sizes = [1, 32], strides = [1, 1]} : vector<1x128xf32> to vector<1x32xf32>
    %222 = vector.extract_strided_slice %219 {offsets = [0, 32], sizes = [1, 32], strides = [1, 1]} : vector<1x128xf32> to vector<1x32xf32>
    %223 = vector.extract_strided_slice %220 {offsets = [0, 64], sizes = [1, 32], strides = [1, 1]} : vector<1x128xf32> to vector<1x32xf32>
    %224 = vector.extract_strided_slice %219 {offsets = [0, 96], sizes = [1, 32], strides = [1, 1]} : vector<1x128xf32> to vector<1x32xf32>
    %225 = arith.mulf %222, %214 : vector<1x32xf32>
    %226 = arith.mulf %221, %223 : vector<1x32xf32>
    %227 = arith.addf %225, %226 : vector<1x32xf32>
    %228 = math.tanh %227 : vector<1x32xf32>
    %229 = arith.mulf %224, %228 : vector<1x32xf32>
    %230 = arith.truncf %229 : vector<1x32xf32> to vector<1x32xbf16>
    %c0_111 = arith.constant 0 : index
    %c0_112 = arith.constant 0 : index
    %231 = vector.load %arg4[%c0_111, %c0_112] : memref<32x128xbf16, #tpu.memory_space<vmem>>, vector<32x128xbf16>
    %cst_113 = arith.constant dense<0.000000e+00> : vector<1x128xf32>
    %232 = tpu.matmul %230, %231, %cst_113 {dimension_numbers = #tpu.dot_dimension_numbers<[1], [0], [0], [1], [0, 0, 1, 1], [], []>} : vector<1x32xbf16>, vector<32x128xbf16>, vector<1x128xf32> -> vector<1x128xf32>
    %233 = vector.extract_strided_slice %203 {offsets = [0, 128], sizes = [1, 128], strides = [1, 1]} : vector<1x256xf32> to vector<1x128xf32>
    %234 = arith.addf %232, %233 : vector<1x128xf32>
    %c0_114 = arith.constant 0 : index
    %c0_115 = arith.constant 0 : index
    %235 = vector.load %arg6[%c0_114, %c0_115] : memref<1x128xf32, #tpu.memory_space<vmem>>, vector<1x128xf32>
    %236 = arith.addf %234, %235 : vector<1x128xf32>
    %237 = vector.extract_strided_slice %207 {offsets = [0, 32], sizes = [1, 32], strides = [1, 1]} : vector<1x64xf32> to vector<1x32xf32>
    %238 = arith.negf %236 : vector<1x128xf32>
    %239 = math.exp %238 : vector<1x128xf32>
    %cst_116 = arith.constant 1.000000e+00 : f32
    %240 = vector.broadcast %cst_116 : f32 to vector<1x128xf32>
    %241 = arith.addf %240, %239 : vector<1x128xf32>
    %242 = arith.divf %240, %241 : vector<1x128xf32>
    %243 = math.tanh %236 : vector<1x128xf32>
    %244 = vector.extract_strided_slice %242 {offsets = [0, 0], sizes = [1, 32], strides = [1, 1]} : vector<1x128xf32> to vector<1x32xf32>
    %245 = vector.extract_strided_slice %242 {offsets = [0, 32], sizes = [1, 32], strides = [1, 1]} : vector<1x128xf32> to vector<1x32xf32>
    %246 = vector.extract_strided_slice %243 {offsets = [0, 64], sizes = [1, 32], strides = [1, 1]} : vector<1x128xf32> to vector<1x32xf32>
    %247 = vector.extract_strided_slice %242 {offsets = [0, 96], sizes = [1, 32], strides = [1, 1]} : vector<1x128xf32> to vector<1x32xf32>
    %248 = arith.mulf %245, %237 : vector<1x32xf32>
    %249 = arith.mulf %244, %246 : vector<1x32xf32>
    %250 = arith.addf %248, %249 : vector<1x32xf32>
    %251 = math.tanh %250 : vector<1x32xf32>
    %252 = arith.mulf %247, %251 : vector<1x32xf32>
    %c1 = arith.constant 1 : index
    %c0_117 = arith.constant 0 : index
    %253 = vector.load %arg12[%c1, %c0_117] : memref<8x64xf32, #tpu.memory_space<vmem>>, vector<1x32xf32>
    tpu.vector_store %arg12[%c1, %c0_117], %229 {strides = array<i32>} : memref<8x64xf32, #tpu.memory_space<vmem>>, vector<1x32xf32>,
    %c1_118 = arith.constant 1 : index
    %c32_119 = arith.constant 32 : index
    %254 = vector.load %arg12[%c1_118, %c32_119] : memref<8x64xf32, #tpu.memory_space<vmem>>, vector<1x32xf32>
    tpu.vector_store %arg12[%c1_118, %c32_119], %252 {strides = array<i32>} : memref<8x64xf32, #tpu.memory_space<vmem>>, vector<1x32xf32>,
    %c1_120 = arith.constant 1 : index
    %c0_121 = arith.constant 0 : index
    %255 = vector.load %arg13[%c1_120, %c0_121] : memref<8x64xf32, #tpu.memory_space<vmem>>, vector<1x32xf32>
    tpu.vector_store %arg13[%c1_120, %c0_121], %227 {strides = array<i32>} : memref<8x64xf32, #tpu.memory_space<vmem>>, vector<1x32xf32>,
    %c1_122 = arith.constant 1 : index
    %c32_123 = arith.constant 32 : index
    %256 = vector.load %arg13[%c1_122, %c32_123] : memref<8x64xf32, #tpu.memory_space<vmem>>, vector<1x32xf32>
    tpu.vector_store %arg13[%c1_122, %c32_123], %250 {strides = array<i32>} : memref<8x64xf32, #tpu.memory_space<vmem>>, vector<1x32xf32>,
    %257 = arith.truncf %229 : vector<1x32xf32> to vector<1x32xbf16>
    %c0_124 = arith.constant 0 : index
    %c0_125 = arith.constant 0 : index
    %258 = vector.load %arg2[%c0_124, %c0_125] : memref<32x128xbf16, #tpu.memory_space<vmem>>, vector<32x128xbf16>
    %cst_126 = arith.constant dense<0.000000e+00> : vector<1x128xf32>
    %259 = tpu.matmul %257, %258, %cst_126 {dimension_numbers = #tpu.dot_dimension_numbers<[1], [0], [0], [1], [0, 0, 1, 1], [], []>} : vector<1x32xbf16>, vector<32x128xbf16>, vector<1x128xf32> -> vector<1x128xf32>
    %c1_127 = arith.constant 1 : index
    %c0_128 = arith.constant 0 : index
    %260 = vector.load %arg14[%c1_127, %c0_128] : memref<8x256xf32, #tpu.memory_space<vmem>>, vector<1x128xf32>
    tpu.vector_store %arg14[%c1_127, %c0_128], %259 {strides = array<i32>} : memref<8x256xf32, #tpu.memory_space<vmem>>, vector<1x128xf32>,
    %261 = arith.truncf %252 : vector<1x32xf32> to vector<1x32xbf16>
    %c0_129 = arith.constant 0 : index
    %c0_130 = arith.constant 0 : index
    %262 = vector.load %arg5[%c0_129, %c0_130] : memref<32x128xbf16, #tpu.memory_space<vmem>>, vector<32x128xbf16>
    %cst_131 = arith.constant dense<0.000000e+00> : vector<1x128xf32>
    %263 = tpu.matmul %261, %262, %cst_131 {dimension_numbers = #tpu.dot_dimension_numbers<[1], [0], [0], [1], [0, 0, 1, 1], [], []>} : vector<1x32xbf16>, vector<32x128xbf16>, vector<1x128xf32> -> vector<1x128xf32>
    %c1_132 = arith.constant 1 : index
    %c128_133 = arith.constant 128 : index
    %264 = vector.load %arg14[%c1_132, %c128_133] : memref<8x256xf32, #tpu.memory_space<vmem>>, vector<1x128xf32>
    tpu.vector_store %arg14[%c1_132, %c128_133], %263 {strides = array<i32>} : memref<8x256xf32, #tpu.memory_space<vmem>>, vector<1x128xf32>,
    %c1_134 = arith.constant 1 : index
    %c0_135 = arith.constant 0 : index
    %265 = vector.load %arg11[%c1_134, %c0_135] : memref<20x32xf32, #tpu.memory_space<vmem>>, vector<1x32xf32>
    tpu.vector_store %arg11[%c1_134, %c0_135], %252 {strides = array<i32>} : memref<20x32xf32, #tpu.memory_space<vmem>>, vector<1x32xf32>,
    %c0_136 = arith.constant 0 : index
    %c0_137 = arith.constant 0 : index
    %266 = vector.load %arg12[%c0_136, %c0_137] : memref<8x64xf32, #tpu.memory_space<vmem>>, vector<8x64xf32>
    %c0_138 = arith.constant 0 : index
    %c0_139 = arith.constant 0 : index
    %267 = vector.load %arg7[%c0_138, %c0_139] : memref<1x64xf32, #tpu.memory_space<vmem>>, vector<1x64xf32>
    %268 = vector.broadcast %267 : vector<1x64xf32> to vector<8x64xf32>
    %269 = arith.mulf %268, %266 : vector<8x64xf32>
    %c10 = arith.constant 10 : index
    %c0_140 = arith.constant 0 : index
    %270 = vector.load %arg16[%c10, %c0_140] : memref<20x64xf32, #tpu.memory_space<vmem>>, vector<1x64xf32>
    %271 = vector.broadcast %270 : vector<1x64xf32> to vector<8x64xf32>
    %272 = arith.addf %269, %271 : vector<8x64xf32>
    %c0_141 = arith.constant 0 : index
    %c0_142 = arith.constant 0 : index
    %273 = vector.load %arg9[%c0_141, %c0_142] : memref<1x64xf32, #tpu.memory_space<vmem>>, vector<1x64xf32>
    %274 = arith.mulf %273, %210 : vector<1x64xf32>
    %275 = vector.broadcast %274 : vector<1x64xf32> to vector<8x64xf32>
    %276 = arith.addf %272, %275 : vector<8x64xf32>
    %277 = math.tanh %276 : vector<8x64xf32>
    %c0_143 = arith.constant 0 : index
    %c0_144 = arith.constant 0 : index
    %278 = vector.load %arg10[%c0_143, %c0_144] : memref<1x64xf32, #tpu.memory_space<vmem>>, vector<1x64xf32>
    %279 = vector.broadcast %278 : vector<1x64xf32> to vector<8x64xf32>
    %280 = arith.mulf %277, %279 : vector<8x64xf32>
    %281 = vector.extract_strided_slice %280 {offsets = [0, 0], sizes = [8, 32], strides = [1, 1]} : vector<8x64xf32> to vector<8x32xf32>
    %cst_145 = arith.constant dense<0.000000e+00> : vector<8xf32>
    %282 = vector.multi_reduction <add>, %281, %cst_145 [1] : vector<8x32xf32> to vector<8xf32>
    %283 = vector.shape_cast %282 : vector<8xf32> to vector<8x1xf32>
    %284 = vector.extract_strided_slice %280 {offsets = [0, 32], sizes = [8, 32], strides = [1, 1]} : vector<8x64xf32> to vector<8x32xf32>
    %cst_146 = arith.constant dense<0.000000e+00> : vector<8xf32>
    %285 = vector.multi_reduction <add>, %284, %cst_146 [1] : vector<8x32xf32> to vector<8xf32>
    %286 = vector.shape_cast %285 : vector<8xf32> to vector<8x1xf32>
    %287 = tpu.concatenate %283, %286 in 1 : vector<8x1xf32>, vector<8x1xf32> -> vector<8x2xf32>
    %288 = math.exp %287 : vector<8x2xf32>
    %cst_147 = arith.constant dense<0.000000e+00> : vector<2xf32>
    %289 = vector.multi_reduction <add>, %288, %cst_147 [0] : vector<8x2xf32> to vector<2xf32>
    %290 = vector.shape_cast %289 : vector<2xf32> to vector<1x2xf32>
    %291 = tpu.reciprocal %290 {approx = true} : vector<1x2xf32> -> vector<1x2xf32>
    %292 = vector.broadcast %291 : vector<1x2xf32> to vector<8x2xf32>
    %293 = arith.mulf %288, %292 : vector<8x2xf32>
    %294 = vector.extract_strided_slice %293 {offsets = [0, 0], sizes = [8, 1], strides = [1, 1]} : vector<8x2xf32> to vector<8x1xf32>
    %295 = vector.shape_cast %294 : vector<8x1xf32> to vector<8x1xf32>
    %296 = vector.broadcast %295 : vector<8x1xf32> to vector<8x128xf32>
    %297 = vector.extract_strided_slice %293 {offsets = [0, 1], sizes = [8, 1], strides = [1, 1]} : vector<8x2xf32> to vector<8x1xf32>
    %298 = vector.shape_cast %297 : vector<8x1xf32> to vector<8x1xf32>
    %299 = vector.broadcast %298 : vector<8x1xf32> to vector<8x128xf32>
    %300 = tpu.concatenate %296, %299 in 1 : vector<8x128xf32>, vector<8x128xf32> -> vector<8x256xf32>
    %301 = vector.extract_strided_slice %296 {offsets = [0, 0], sizes = [8, 32], strides = [1, 1]} : vector<8x128xf32> to vector<8x32xf32>
    %302 = vector.extract_strided_slice %299 {offsets = [0, 0], sizes = [8, 32], strides = [1, 1]} : vector<8x128xf32> to vector<8x32xf32>
    %303 = tpu.concatenate %301, %302 in 1 : vector<8x32xf32>, vector<8x32xf32> -> vector<8x64xf32>
    %c0_148 = arith.constant 0 : index
    %c0_149 = arith.constant 0 : index
    %304 = vector.load %arg14[%c0_148, %c0_149] : memref<8x256xf32, #tpu.memory_space<vmem>>, vector<8x256xf32>
    %305 = arith.mulf %300, %304 : vector<8x256xf32>
    %cst_150 = arith.constant dense<0.000000e+00> : vector<256xf32>
    %306 = vector.multi_reduction <add>, %305, %cst_150 [0] : vector<8x256xf32> to vector<256xf32>
    %307 = vector.shape_cast %306 : vector<256xf32> to vector<1x256xf32>
    %c0_151 = arith.constant 0 : index
    %c0_152 = arith.constant 0 : index
    %308 = vector.load %arg13[%c0_151, %c0_152] : memref<8x64xf32, #tpu.memory_space<vmem>>, vector<8x64xf32>
    %309 = arith.mulf %303, %308 : vector<8x64xf32>
    %cst_153 = arith.constant dense<0.000000e+00> : vector<64xf32>
    %310 = vector.multi_reduction <add>, %309, %cst_153 [0] : vector<8x64xf32> to vector<64xf32>
    %311 = vector.shape_cast %310 : vector<64xf32> to vector<1x64xf32>
    %312 = arith.mulf %303, %266 : vector<8x64xf32>
    %cst_154 = arith.constant dense<0.000000e+00> : vector<64xf32>
    %313 = vector.multi_reduction <add>, %312, %cst_154 [0] : vector<8x64xf32> to vector<64xf32>
    %314 = vector.shape_cast %313 : vector<64xf32> to vector<1x64xf32>
    %c10_155 = arith.constant 10 : index
    %c0_156 = arith.constant 0 : index
    %315 = vector.load %arg15[%c10_155, %c0_156] : memref<20x128xf32, #tpu.memory_space<vmem>>, vector<1x128xf32>
    %316 = vector.extract_strided_slice %307 {offsets = [0, 0], sizes = [1, 128], strides = [1, 1]} : vector<1x256xf32> to vector<1x128xf32>
    %317 = arith.addf %315, %316 : vector<1x128xf32>
    %318 = vector.extract_strided_slice %311 {offsets = [0, 0], sizes = [1, 32], strides = [1, 1]} : vector<1x64xf32> to vector<1x32xf32>
    %319 = arith.negf %317 : vector<1x128xf32>
    %320 = math.exp %319 : vector<1x128xf32>
    %cst_157 = arith.constant 1.000000e+00 : f32
    %321 = vector.broadcast %cst_157 : f32 to vector<1x128xf32>
    %322 = arith.addf %321, %320 : vector<1x128xf32>
    %323 = arith.divf %321, %322 : vector<1x128xf32>
    %324 = math.tanh %317 : vector<1x128xf32>
    %325 = vector.extract_strided_slice %323 {offsets = [0, 0], sizes = [1, 32], strides = [1, 1]} : vector<1x128xf32> to vector<1x32xf32>
    %326 = vector.extract_strided_slice %323 {offsets = [0, 32], sizes = [1, 32], strides = [1, 1]} : vector<1x128xf32> to vector<1x32xf32>
    %327 = vector.extract_strided_slice %324 {offsets = [0, 64], sizes = [1, 32], strides = [1, 1]} : vector<1x128xf32> to vector<1x32xf32>
    %328 = vector.extract_strided_slice %323 {offsets = [0, 96], sizes = [1, 32], strides = [1, 1]} : vector<1x128xf32> to vector<1x32xf32>
    %329 = arith.mulf %326, %318 : vector<1x32xf32>
    %330 = arith.mulf %325, %327 : vector<1x32xf32>
    %331 = arith.addf %329, %330 : vector<1x32xf32>
    %332 = math.tanh %331 : vector<1x32xf32>
    %333 = arith.mulf %328, %332 : vector<1x32xf32>
    %334 = arith.truncf %333 : vector<1x32xf32> to vector<1x32xbf16>
    %c0_158 = arith.constant 0 : index
    %c0_159 = arith.constant 0 : index
    %335 = vector.load %arg4[%c0_158, %c0_159] : memref<32x128xbf16, #tpu.memory_space<vmem>>, vector<32x128xbf16>
    %cst_160 = arith.constant dense<0.000000e+00> : vector<1x128xf32>
    %336 = tpu.matmul %334, %335, %cst_160 {dimension_numbers = #tpu.dot_dimension_numbers<[1], [0], [0], [1], [0, 0, 1, 1], [], []>} : vector<1x32xbf16>, vector<32x128xbf16>, vector<1x128xf32> -> vector<1x128xf32>
    %337 = vector.extract_strided_slice %307 {offsets = [0, 128], sizes = [1, 128], strides = [1, 1]} : vector<1x256xf32> to vector<1x128xf32>
    %338 = arith.addf %336, %337 : vector<1x128xf32>
    %c0_161 = arith.constant 0 : index
    %c0_162 = arith.constant 0 : index
    %339 = vector.load %arg6[%c0_161, %c0_162] : memref<1x128xf32, #tpu.memory_space<vmem>>, vector<1x128xf32>
    %340 = arith.addf %338, %339 : vector<1x128xf32>
    %341 = vector.extract_strided_slice %311 {offsets = [0, 32], sizes = [1, 32], strides = [1, 1]} : vector<1x64xf32> to vector<1x32xf32>
    %342 = arith.negf %340 : vector<1x128xf32>
    %343 = math.exp %342 : vector<1x128xf32>
    %cst_163 = arith.constant 1.000000e+00 : f32
    %344 = vector.broadcast %cst_163 : f32 to vector<1x128xf32>
    %345 = arith.addf %344, %343 : vector<1x128xf32>
    %346 = arith.divf %344, %345 : vector<1x128xf32>
    %347 = math.tanh %340 : vector<1x128xf32>
    %348 = vector.extract_strided_slice %346 {offsets = [0, 0], sizes = [1, 32], strides = [1, 1]} : vector<1x128xf32> to vector<1x32xf32>
    %349 = vector.extract_strided_slice %346 {offsets = [0, 32], sizes = [1, 32], strides = [1, 1]} : vector<1x128xf32> to vector<1x32xf32>
    %350 = vector.extract_strided_slice %347 {offsets = [0, 64], sizes = [1, 32], strides = [1, 1]} : vector<1x128xf32> to vector<1x32xf32>
    %351 = vector.extract_strided_slice %346 {offsets = [0, 96], sizes = [1, 32], strides = [1, 1]} : vector<1x128xf32> to vector<1x32xf32>
    %352 = arith.mulf %349, %341 : vector<1x32xf32>
    %353 = arith.mulf %348, %350 : vector<1x32xf32>
    %354 = arith.addf %352, %353 : vector<1x32xf32>
    %355 = math.tanh %354 : vector<1x32xf32>
    %356 = arith.mulf %351, %355 : vector<1x32xf32>
    %c2 = arith.constant 2 : index
    %c0_164 = arith.constant 0 : index
    %357 = vector.load %arg12[%c2, %c0_164] : memref<8x64xf32, #tpu.memory_space<vmem>>, vector<1x32xf32>
    tpu.vector_store %arg12[%c2, %c0_164], %333 {strides = array<i32>} : memref<8x64xf32, #tpu.memory_space<vmem>>, vector<1x32xf32>,
    %c2_165 = arith.constant 2 : index
    %c32_166 = arith.constant 32 : index
    %358 = vector.load %arg12[%c2_165, %c32_166] : memref<8x64xf32, #tpu.memory_space<vmem>>, vector<1x32xf32>
    tpu.vector_store %arg12[%c2_165, %c32_166], %356 {strides = array<i32>} : memref<8x64xf32, #tpu.memory_space<vmem>>, vector<1x32xf32>,
    %c2_167 = arith.constant 2 : index
    %c0_168 = arith.constant 0 : index
    %359 = vector.load %arg13[%c2_167, %c0_168] : memref<8x64xf32, #tpu.memory_space<vmem>>, vector<1x32xf32>
    tpu.vector_store %arg13[%c2_167, %c0_168], %331 {strides = array<i32>} : memref<8x64xf32, #tpu.memory_space<vmem>>, vector<1x32xf32>,
    %c2_169 = arith.constant 2 : index
    %c32_170 = arith.constant 32 : index
    %360 = vector.load %arg13[%c2_169, %c32_170] : memref<8x64xf32, #tpu.memory_space<vmem>>, vector<1x32xf32>
    tpu.vector_store %arg13[%c2_169, %c32_170], %354 {strides = array<i32>} : memref<8x64xf32, #tpu.memory_space<vmem>>, vector<1x32xf32>,
    %361 = arith.truncf %333 : vector<1x32xf32> to vector<1x32xbf16>
    %c0_171 = arith.constant 0 : index
    %c0_172 = arith.constant 0 : index
    %362 = vector.load %arg2[%c0_171, %c0_172] : memref<32x128xbf16, #tpu.memory_space<vmem>>, vector<32x128xbf16>
    %cst_173 = arith.constant dense<0.000000e+00> : vector<1x128xf32>
    %363 = tpu.matmul %361, %362, %cst_173 {dimension_numbers = #tpu.dot_dimension_numbers<[1], [0], [0], [1], [0, 0, 1, 1], [], []>} : vector<1x32xbf16>, vector<32x128xbf16>, vector<1x128xf32> -> vector<1x128xf32>
    %c2_174 = arith.constant 2 : index
    %c0_175 = arith.constant 0 : index
    %364 = vector.load %arg14[%c2_174, %c0_175] : memref<8x256xf32, #tpu.memory_space<vmem>>, vector<1x128xf32>
    tpu.vector_store %arg14[%c2_174, %c0_175], %363 {strides = array<i32>} : memref<8x256xf32, #tpu.memory_space<vmem>>, vector<1x128xf32>,
    %365 = arith.truncf %356 : vector<1x32xf32> to vector<1x32xbf16>
    %c0_176 = arith.constant 0 : index
    %c0_177 = arith.constant 0 : index
    %366 = vector.load %arg5[%c0_176, %c0_177] : memref<32x128xbf16, #tpu.memory_space<vmem>>, vector<32x128xbf16>
    %cst_178 = arith.constant dense<0.000000e+00> : vector<1x128xf32>
    %367 = tpu.matmul %365, %366, %cst_178 {dimension_numbers = #tpu.dot_dimension_numbers<[1], [0], [0], [1], [0, 0, 1, 1], [], []>} : vector<1x32xbf16>, vector<32x128xbf16>, vector<1x128xf32> -> vector<1x128xf32>
    %c2_179 = arith.constant 2 : index
    %c128_180 = arith.constant 128 : index
    %368 = vector.load %arg14[%c2_179, %c128_180] : memref<8x256xf32, #tpu.memory_space<vmem>>, vector<1x128xf32>
    tpu.vector_store %arg14[%c2_179, %c128_180], %367 {strides = array<i32>} : memref<8x256xf32, #tpu.memory_space<vmem>>, vector<1x128xf32>,
    %c2_181 = arith.constant 2 : index
    %c0_182 = arith.constant 0 : index
    %369 = vector.load %arg11[%c2_181, %c0_182] : memref<20x32xf32, #tpu.memory_space<vmem>>, vector<1x32xf32>
    tpu.vector_store %arg11[%c2_181, %c0_182], %356 {strides = array<i32>} : memref<20x32xf32, #tpu.memory_space<vmem>>, vector<1x32xf32>,
    %c0_183 = arith.constant 0 : index
    %c0_184 = arith.constant 0 : index
    %370 = vector.load %arg12[%c0_183, %c0_184] : memref<8x64xf32, #tpu.memory_space<vmem>>, vector<8x64xf32>
    %c0_185 = arith.constant 0 : index
    %c0_186 = arith.constant 0 : index
    %371 = vector.load %arg7[%c0_185, %c0_186] : memref<1x64xf32, #tpu.memory_space<vmem>>, vector<1x64xf32>
    %372 = vector.broadcast %371 : vector<1x64xf32> to vector<8x64xf32>
    %373 = arith.mulf %372, %370 : vector<8x64xf32>
    %c11 = arith.constant 11 : index
    %c0_187 = arith.constant 0 : index
    %374 = vector.load %arg16[%c11, %c0_187] : memref<20x64xf32, #tpu.memory_space<vmem>>, vector<1x64xf32>
    %375 = vector.broadcast %374 : vector<1x64xf32> to vector<8x64xf32>
    %376 = arith.addf %373, %375 : vector<8x64xf32>
    %c0_188 = arith.constant 0 : index
    %c0_189 = arith.constant 0 : index
    %377 = vector.load %arg9[%c0_188, %c0_189] : memref<1x64xf32, #tpu.memory_space<vmem>>, vector<1x64xf32>
    %378 = arith.mulf %377, %314 : vector<1x64xf32>
    %379 = vector.broadcast %378 : vector<1x64xf32> to vector<8x64xf32>
    %380 = arith.addf %376, %379 : vector<8x64xf32>
    %381 = math.tanh %380 : vector<8x64xf32>
    %c0_190 = arith.constant 0 : index
    %c0_191 = arith.constant 0 : index
    %382 = vector.load %arg10[%c0_190, %c0_191] : memref<1x64xf32, #tpu.memory_space<vmem>>, vector<1x64xf32>
    %383 = vector.broadcast %382 : vector<1x64xf32> to vector<8x64xf32>
    %384 = arith.mulf %381, %383 : vector<8x64xf32>
    %385 = vector.extract_strided_slice %384 {offsets = [0, 0], sizes = [8, 32], strides = [1, 1]} : vector<8x64xf32> to vector<8x32xf32>
    %cst_192 = arith.constant dense<0.000000e+00> : vector<8xf32>
    %386 = vector.multi_reduction <add>, %385, %cst_192 [1] : vector<8x32xf32> to vector<8xf32>
    %387 = vector.shape_cast %386 : vector<8xf32> to vector<8x1xf32>
    %388 = vector.extract_strided_slice %384 {offsets = [0, 32], sizes = [8, 32], strides = [1, 1]} : vector<8x64xf32> to vector<8x32xf32>
    %cst_193 = arith.constant dense<0.000000e+00> : vector<8xf32>
    %389 = vector.multi_reduction <add>, %388, %cst_193 [1] : vector<8x32xf32> to vector<8xf32>
    %390 = vector.shape_cast %389 : vector<8xf32> to vector<8x1xf32>
    %391 = tpu.concatenate %387, %390 in 1 : vector<8x1xf32>, vector<8x1xf32> -> vector<8x2xf32>
    %392 = math.exp %391 : vector<8x2xf32>
    %cst_194 = arith.constant dense<0.000000e+00> : vector<2xf32>
    %393 = vector.multi_reduction <add>, %392, %cst_194 [0] : vector<8x2xf32> to vector<2xf32>
    %394 = vector.shape_cast %393 : vector<2xf32> to vector<1x2xf32>
    %395 = tpu.reciprocal %394 {approx = true} : vector<1x2xf32> -> vector<1x2xf32>
    %396 = vector.broadcast %395 : vector<1x2xf32> to vector<8x2xf32>
    %397 = arith.mulf %392, %396 : vector<8x2xf32>
    %398 = vector.extract_strided_slice %397 {offsets = [0, 0], sizes = [8, 1], strides = [1, 1]} : vector<8x2xf32> to vector<8x1xf32>
    %399 = vector.shape_cast %398 : vector<8x1xf32> to vector<8x1xf32>
    %400 = vector.broadcast %399 : vector<8x1xf32> to vector<8x128xf32>
    %401 = vector.extract_strided_slice %397 {offsets = [0, 1], sizes = [8, 1], strides = [1, 1]} : vector<8x2xf32> to vector<8x1xf32>
    %402 = vector.shape_cast %401 : vector<8x1xf32> to vector<8x1xf32>
    %403 = vector.broadcast %402 : vector<8x1xf32> to vector<8x128xf32>
    %404 = tpu.concatenate %400, %403 in 1 : vector<8x128xf32>, vector<8x128xf32> -> vector<8x256xf32>
    %405 = vector.extract_strided_slice %400 {offsets = [0, 0], sizes = [8, 32], strides = [1, 1]} : vector<8x128xf32> to vector<8x32xf32>
    %406 = vector.extract_strided_slice %403 {offsets = [0, 0], sizes = [8, 32], strides = [1, 1]} : vector<8x128xf32> to vector<8x32xf32>
    %407 = tpu.concatenate %405, %406 in 1 : vector<8x32xf32>, vector<8x32xf32> -> vector<8x64xf32>
    %c0_195 = arith.constant 0 : index
    %c0_196 = arith.constant 0 : index
    %408 = vector.load %arg14[%c0_195, %c0_196] : memref<8x256xf32, #tpu.memory_space<vmem>>, vector<8x256xf32>
    %409 = arith.mulf %404, %408 : vector<8x256xf32>
    %cst_197 = arith.constant dense<0.000000e+00> : vector<256xf32>
    %410 = vector.multi_reduction <add>, %409, %cst_197 [0] : vector<8x256xf32> to vector<256xf32>
    %411 = vector.shape_cast %410 : vector<256xf32> to vector<1x256xf32>
    %c0_198 = arith.constant 0 : index
    %c0_199 = arith.constant 0 : index
    %412 = vector.load %arg13[%c0_198, %c0_199] : memref<8x64xf32, #tpu.memory_space<vmem>>, vector<8x64xf32>
    %413 = arith.mulf %407, %412 : vector<8x64xf32>
    %cst_200 = arith.constant dense<0.000000e+00> : vector<64xf32>
    %414 = vector.multi_reduction <add>, %413, %cst_200 [0] : vector<8x64xf32> to vector<64xf32>
    %415 = vector.shape_cast %414 : vector<64xf32> to vector<1x64xf32>
    %416 = arith.mulf %407, %370 : vector<8x64xf32>
    %cst_201 = arith.constant dense<0.000000e+00> : vector<64xf32>
    %417 = vector.multi_reduction <add>, %416, %cst_201 [0] : vector<8x64xf32> to vector<64xf32>
    %418 = vector.shape_cast %417 : vector<64xf32> to vector<1x64xf32>
    %c11_202 = arith.constant 11 : index
    %c0_203 = arith.constant 0 : index
    %419 = vector.load %arg15[%c11_202, %c0_203] : memref<20x128xf32, #tpu.memory_space<vmem>>, vector<1x128xf32>
    %420 = vector.extract_strided_slice %411 {offsets = [0, 0], sizes = [1, 128], strides = [1, 1]} : vector<1x256xf32> to vector<1x128xf32>
    %421 = arith.addf %419, %420 : vector<1x128xf32>
    %422 = vector.extract_strided_slice %415 {offsets = [0, 0], sizes = [1, 32], strides = [1, 1]} : vector<1x64xf32> to vector<1x32xf32>
    %423 = arith.negf %421 : vector<1x128xf32>
    %424 = math.exp %423 : vector<1x128xf32>
    %cst_204 = arith.constant 1.000000e+00 : f32
    %425 = vector.broadcast %cst_204 : f32 to vector<1x128xf32>
    %426 = arith.addf %425, %424 : vector<1x128xf32>
    %427 = arith.divf %425, %426 : vector<1x128xf32>
    %428 = math.tanh %421 : vector<1x128xf32>
    %429 = vector.extract_strided_slice %427 {offsets = [0, 0], sizes = [1, 32], strides = [1, 1]} : vector<1x128xf32> to vector<1x32xf32>
    %430 = vector.extract_strided_slice %427 {offsets = [0, 32], sizes = [1, 32], strides = [1, 1]} : vector<1x128xf32> to vector<1x32xf32>
    %431 = vector.extract_strided_slice %428 {offsets = [0, 64], sizes = [1, 32], strides = [1, 1]} : vector<1x128xf32> to vector<1x32xf32>
    %432 = vector.extract_strided_slice %427 {offsets = [0, 96], sizes = [1, 32], strides = [1, 1]} : vector<1x128xf32> to vector<1x32xf32>
    %433 = arith.mulf %430, %422 : vector<1x32xf32>
    %434 = arith.mulf %429, %431 : vector<1x32xf32>
    %435 = arith.addf %433, %434 : vector<1x32xf32>
    %436 = math.tanh %435 : vector<1x32xf32>
    %437 = arith.mulf %432, %436 : vector<1x32xf32>
    %438 = arith.truncf %437 : vector<1x32xf32> to vector<1x32xbf16>
    %c0_205 = arith.constant 0 : index
    %c0_206 = arith.constant 0 : index
    %439 = vector.load %arg4[%c0_205, %c0_206] : memref<32x128xbf16, #tpu.memory_space<vmem>>, vector<32x128xbf16>
    %cst_207 = arith.constant dense<0.000000e+00> : vector<1x128xf32>
    %440 = tpu.matmul %438, %439, %cst_207 {dimension_numbers = #tpu.dot_dimension_numbers<[1], [0], [0], [1], [0, 0, 1, 1], [], []>} : vector<1x32xbf16>, vector<32x128xbf16>, vector<1x128xf32> -> vector<1x128xf32>
    %441 = vector.extract_strided_slice %411 {offsets = [0, 128], sizes = [1, 128], strides = [1, 1]} : vector<1x256xf32> to vector<1x128xf32>
    %442 = arith.addf %440, %441 : vector<1x128xf32>
    %c0_208 = arith.constant 0 : index
    %c0_209 = arith.constant 0 : index
    %443 = vector.load %arg6[%c0_208, %c0_209] : memref<1x128xf32, #tpu.memory_space<vmem>>, vector<1x128xf32>
    %444 = arith.addf %442, %443 : vector<1x128xf32>
    %445 = vector.extract_strided_slice %415 {offsets = [0, 32], sizes = [1, 32], strides = [1, 1]} : vector<1x64xf32> to vector<1x32xf32>
    %446 = arith.negf %444 : vector<1x128xf32>
    %447 = math.exp %446 : vector<1x128xf32>
    %cst_210 = arith.constant 1.000000e+00 : f32
    %448 = vector.broadcast %cst_210 : f32 to vector<1x128xf32>
    %449 = arith.addf %448, %447 : vector<1x128xf32>
    %450 = arith.divf %448, %449 : vector<1x128xf32>
    %451 = math.tanh %444 : vector<1x128xf32>
    %452 = vector.extract_strided_slice %450 {offsets = [0, 0], sizes = [1, 32], strides = [1, 1]} : vector<1x128xf32> to vector<1x32xf32>
    %453 = vector.extract_strided_slice %450 {offsets = [0, 32], sizes = [1, 32], strides = [1, 1]} : vector<1x128xf32> to vector<1x32xf32>
    %454 = vector.extract_strided_slice %451 {offsets = [0, 64], sizes = [1, 32], strides = [1, 1]} : vector<1x128xf32> to vector<1x32xf32>
    %455 = vector.extract_strided_slice %450 {offsets = [0, 96], sizes = [1, 32], strides = [1, 1]} : vector<1x128xf32> to vector<1x32xf32>
    %456 = arith.mulf %453, %445 : vector<1x32xf32>
    %457 = arith.mulf %452, %454 : vector<1x32xf32>
    %458 = arith.addf %456, %457 : vector<1x32xf32>
    %459 = math.tanh %458 : vector<1x32xf32>
    %460 = arith.mulf %455, %459 : vector<1x32xf32>
    %c3 = arith.constant 3 : index
    %c0_211 = arith.constant 0 : index
    %461 = vector.load %arg12[%c3, %c0_211] : memref<8x64xf32, #tpu.memory_space<vmem>>, vector<1x32xf32>
    tpu.vector_store %arg12[%c3, %c0_211], %437 {strides = array<i32>} : memref<8x64xf32, #tpu.memory_space<vmem>>, vector<1x32xf32>,
    %c3_212 = arith.constant 3 : index
    %c32_213 = arith.constant 32 : index
    %462 = vector.load %arg12[%c3_212, %c32_213] : memref<8x64xf32, #tpu.memory_space<vmem>>, vector<1x32xf32>
    tpu.vector_store %arg12[%c3_212, %c32_213], %460 {strides = array<i32>} : memref<8x64xf32, #tpu.memory_space<vmem>>, vector<1x32xf32>,
    %c3_214 = arith.constant 3 : index
    %c0_215 = arith.constant 0 : index
    %463 = vector.load %arg13[%c3_214, %c0_215] : memref<8x64xf32, #tpu.memory_space<vmem>>, vector<1x32xf32>
    tpu.vector_store %arg13[%c3_214, %c0_215], %435 {strides = array<i32>} : memref<8x64xf32, #tpu.memory_space<vmem>>, vector<1x32xf32>,
    %c3_216 = arith.constant 3 : index
    %c32_217 = arith.constant 32 : index
    %464 = vector.load %arg13[%c3_216, %c32_217] : memref<8x64xf32, #tpu.memory_space<vmem>>, vector<1x32xf32>
    tpu.vector_store %arg13[%c3_216, %c32_217], %458 {strides = array<i32>} : memref<8x64xf32, #tpu.memory_space<vmem>>, vector<1x32xf32>,
    %465 = arith.truncf %437 : vector<1x32xf32> to vector<1x32xbf16>
    %c0_218 = arith.constant 0 : index
    %c0_219 = arith.constant 0 : index
    %466 = vector.load %arg2[%c0_218, %c0_219] : memref<32x128xbf16, #tpu.memory_space<vmem>>, vector<32x128xbf16>
    %cst_220 = arith.constant dense<0.000000e+00> : vector<1x128xf32>
    %467 = tpu.matmul %465, %466, %cst_220 {dimension_numbers = #tpu.dot_dimension_numbers<[1], [0], [0], [1], [0, 0, 1, 1], [], []>} : vector<1x32xbf16>, vector<32x128xbf16>, vector<1x128xf32> -> vector<1x128xf32>
    %c3_221 = arith.constant 3 : index
    %c0_222 = arith.constant 0 : index
    %468 = vector.load %arg14[%c3_221, %c0_222] : memref<8x256xf32, #tpu.memory_space<vmem>>, vector<1x128xf32>
    tpu.vector_store %arg14[%c3_221, %c0_222], %467 {strides = array<i32>} : memref<8x256xf32, #tpu.memory_space<vmem>>, vector<1x128xf32>,
    %469 = arith.truncf %460 : vector<1x32xf32> to vector<1x32xbf16>
    %c0_223 = arith.constant 0 : index
    %c0_224 = arith.constant 0 : index
    %470 = vector.load %arg5[%c0_223, %c0_224] : memref<32x128xbf16, #tpu.memory_space<vmem>>, vector<32x128xbf16>
    %cst_225 = arith.constant dense<0.000000e+00> : vector<1x128xf32>
    %471 = tpu.matmul %469, %470, %cst_225 {dimension_numbers = #tpu.dot_dimension_numbers<[1], [0], [0], [1], [0, 0, 1, 1], [], []>} : vector<1x32xbf16>, vector<32x128xbf16>, vector<1x128xf32> -> vector<1x128xf32>
    %c3_226 = arith.constant 3 : index
    %c128_227 = arith.constant 128 : index
    %472 = vector.load %arg14[%c3_226, %c128_227] : memref<8x256xf32, #tpu.memory_space<vmem>>, vector<1x128xf32>
    tpu.vector_store %arg14[%c3_226, %c128_227], %471 {strides = array<i32>} : memref<8x256xf32, #tpu.memory_space<vmem>>, vector<1x128xf32>,
    %c3_228 = arith.constant 3 : index
    %c0_229 = arith.constant 0 : index
    %473 = vector.load %arg11[%c3_228, %c0_229] : memref<20x32xf32, #tpu.memory_space<vmem>>, vector<1x32xf32>
    tpu.vector_store %arg11[%c3_228, %c0_229], %460 {strides = array<i32>} : memref<20x32xf32, #tpu.memory_space<vmem>>, vector<1x32xf32>,
    %c0_230 = arith.constant 0 : index
    %c0_231 = arith.constant 0 : index
    %474 = vector.load %arg12[%c0_230, %c0_231] : memref<8x64xf32, #tpu.memory_space<vmem>>, vector<8x64xf32>
    %c0_232 = arith.constant 0 : index
    %c0_233 = arith.constant 0 : index
    %475 = vector.load %arg7[%c0_232, %c0_233] : memref<1x64xf32, #tpu.memory_space<vmem>>, vector<1x64xf32>
    %476 = vector.broadcast %475 : vector<1x64xf32> to vector<8x64xf32>
    %477 = arith.mulf %476, %474 : vector<8x64xf32>
    %c12 = arith.constant 12 : index
    %c0_234 = arith.constant 0 : index
    %478 = vector.load %arg16[%c12, %c0_234] : memref<20x64xf32, #tpu.memory_space<vmem>>, vector<1x64xf32>
    %479 = vector.broadcast %478 : vector<1x64xf32> to vector<8x64xf32>
    %480 = arith.addf %477, %479 : vector<8x64xf32>
    %c0_235 = arith.constant 0 : index
    %c0_236 = arith.constant 0 : index
    %481 = vector.load %arg9[%c0_235, %c0_236] : memref<1x64xf32, #tpu.memory_space<vmem>>, vector<1x64xf32>
    %482 = arith.mulf %481, %418 : vector<1x64xf32>
    %483 = vector.broadcast %482 : vector<1x64xf32> to vector<8x64xf32>
    %484 = arith.addf %480, %483 : vector<8x64xf32>
    %485 = math.tanh %484 : vector<8x64xf32>
    %c0_237 = arith.constant 0 : index
    %c0_238 = arith.constant 0 : index
    %486 = vector.load %arg10[%c0_237, %c0_238] : memref<1x64xf32, #tpu.memory_space<vmem>>, vector<1x64xf32>
    %487 = vector.broadcast %486 : vector<1x64xf32> to vector<8x64xf32>
    %488 = arith.mulf %485, %487 : vector<8x64xf32>
    %489 = vector.extract_strided_slice %488 {offsets = [0, 0], sizes = [8, 32], strides = [1, 1]} : vector<8x64xf32> to vector<8x32xf32>
    %cst_239 = arith.constant dense<0.000000e+00> : vector<8xf32>
    %490 = vector.multi_reduction <add>, %489, %cst_239 [1] : vector<8x32xf32> to vector<8xf32>
    %491 = vector.shape_cast %490 : vector<8xf32> to vector<8x1xf32>
    %492 = vector.extract_strided_slice %488 {offsets = [0, 32], sizes = [8, 32], strides = [1, 1]} : vector<8x64xf32> to vector<8x32xf32>
    %cst_240 = arith.constant dense<0.000000e+00> : vector<8xf32>
    %493 = vector.multi_reduction <add>, %492, %cst_240 [1] : vector<8x32xf32> to vector<8xf32>
    %494 = vector.shape_cast %493 : vector<8xf32> to vector<8x1xf32>
    %495 = tpu.concatenate %491, %494 in 1 : vector<8x1xf32>, vector<8x1xf32> -> vector<8x2xf32>
    %496 = math.exp %495 : vector<8x2xf32>
    %cst_241 = arith.constant dense<0.000000e+00> : vector<2xf32>
    %497 = vector.multi_reduction <add>, %496, %cst_241 [0] : vector<8x2xf32> to vector<2xf32>
    %498 = vector.shape_cast %497 : vector<2xf32> to vector<1x2xf32>
    %499 = tpu.reciprocal %498 {approx = true} : vector<1x2xf32> -> vector<1x2xf32>
    %500 = vector.broadcast %499 : vector<1x2xf32> to vector<8x2xf32>
    %501 = arith.mulf %496, %500 : vector<8x2xf32>
    %502 = vector.extract_strided_slice %501 {offsets = [0, 0], sizes = [8, 1], strides = [1, 1]} : vector<8x2xf32> to vector<8x1xf32>
    %503 = vector.shape_cast %502 : vector<8x1xf32> to vector<8x1xf32>
    %504 = vector.broadcast %503 : vector<8x1xf32> to vector<8x128xf32>
    %505 = vector.extract_strided_slice %501 {offsets = [0, 1], sizes = [8, 1], strides = [1, 1]} : vector<8x2xf32> to vector<8x1xf32>
    %506 = vector.shape_cast %505 : vector<8x1xf32> to vector<8x1xf32>
    %507 = vector.broadcast %506 : vector<8x1xf32> to vector<8x128xf32>
    %508 = tpu.concatenate %504, %507 in 1 : vector<8x128xf32>, vector<8x128xf32> -> vector<8x256xf32>
    %509 = vector.extract_strided_slice %504 {offsets = [0, 0], sizes = [8, 32], strides = [1, 1]} : vector<8x128xf32> to vector<8x32xf32>
    %510 = vector.extract_strided_slice %507 {offsets = [0, 0], sizes = [8, 32], strides = [1, 1]} : vector<8x128xf32> to vector<8x32xf32>
    %511 = tpu.concatenate %509, %510 in 1 : vector<8x32xf32>, vector<8x32xf32> -> vector<8x64xf32>
    %c0_242 = arith.constant 0 : index
    %c0_243 = arith.constant 0 : index
    %512 = vector.load %arg14[%c0_242, %c0_243] : memref<8x256xf32, #tpu.memory_space<vmem>>, vector<8x256xf32>
    %513 = arith.mulf %508, %512 : vector<8x256xf32>
    %cst_244 = arith.constant dense<0.000000e+00> : vector<256xf32>
    %514 = vector.multi_reduction <add>, %513, %cst_244 [0] : vector<8x256xf32> to vector<256xf32>
    %515 = vector.shape_cast %514 : vector<256xf32> to vector<1x256xf32>
    %c0_245 = arith.constant 0 : index
    %c0_246 = arith.constant 0 : index
    %516 = vector.load %arg13[%c0_245, %c0_246] : memref<8x64xf32, #tpu.memory_space<vmem>>, vector<8x64xf32>
    %517 = arith.mulf %511, %516 : vector<8x64xf32>
    %cst_247 = arith.constant dense<0.000000e+00> : vector<64xf32>
    %518 = vector.multi_reduction <add>, %517, %cst_247 [0] : vector<8x64xf32> to vector<64xf32>
    %519 = vector.shape_cast %518 : vector<64xf32> to vector<1x64xf32>
    %520 = arith.mulf %511, %474 : vector<8x64xf32>
    %cst_248 = arith.constant dense<0.000000e+00> : vector<64xf32>
    %521 = vector.multi_reduction <add>, %520, %cst_248 [0] : vector<8x64xf32> to vector<64xf32>
    %522 = vector.shape_cast %521 : vector<64xf32> to vector<1x64xf32>
    %c12_249 = arith.constant 12 : index
    %c0_250 = arith.constant 0 : index
    %523 = vector.load %arg15[%c12_249, %c0_250] : memref<20x128xf32, #tpu.memory_space<vmem>>, vector<1x128xf32>
    %524 = vector.extract_strided_slice %515 {offsets = [0, 0], sizes = [1, 128], strides = [1, 1]} : vector<1x256xf32> to vector<1x128xf32>
    %525 = arith.addf %523, %524 : vector<1x128xf32>
    %526 = vector.extract_strided_slice %519 {offsets = [0, 0], sizes = [1, 32], strides = [1, 1]} : vector<1x64xf32> to vector<1x32xf32>
    %527 = arith.negf %525 : vector<1x128xf32>
    %528 = math.exp %527 : vector<1x128xf32>
    %cst_251 = arith.constant 1.000000e+00 : f32
    %529 = vector.broadcast %cst_251 : f32 to vector<1x128xf32>
    %530 = arith.addf %529, %528 : vector<1x128xf32>
    %531 = arith.divf %529, %530 : vector<1x128xf32>
    %532 = math.tanh %525 : vector<1x128xf32>
    %533 = vector.extract_strided_slice %531 {offsets = [0, 0], sizes = [1, 32], strides = [1, 1]} : vector<1x128xf32> to vector<1x32xf32>
    %534 = vector.extract_strided_slice %531 {offsets = [0, 32], sizes = [1, 32], strides = [1, 1]} : vector<1x128xf32> to vector<1x32xf32>
    %535 = vector.extract_strided_slice %532 {offsets = [0, 64], sizes = [1, 32], strides = [1, 1]} : vector<1x128xf32> to vector<1x32xf32>
    %536 = vector.extract_strided_slice %531 {offsets = [0, 96], sizes = [1, 32], strides = [1, 1]} : vector<1x128xf32> to vector<1x32xf32>
    %537 = arith.mulf %534, %526 : vector<1x32xf32>
    %538 = arith.mulf %533, %535 : vector<1x32xf32>
    %539 = arith.addf %537, %538 : vector<1x32xf32>
    %540 = math.tanh %539 : vector<1x32xf32>
    %541 = arith.mulf %536, %540 : vector<1x32xf32>
    %542 = arith.truncf %541 : vector<1x32xf32> to vector<1x32xbf16>
    %c0_252 = arith.constant 0 : index
    %c0_253 = arith.constant 0 : index
    %543 = vector.load %arg4[%c0_252, %c0_253] : memref<32x128xbf16, #tpu.memory_space<vmem>>, vector<32x128xbf16>
    %cst_254 = arith.constant dense<0.000000e+00> : vector<1x128xf32>
    %544 = tpu.matmul %542, %543, %cst_254 {dimension_numbers = #tpu.dot_dimension_numbers<[1], [0], [0], [1], [0, 0, 1, 1], [], []>} : vector<1x32xbf16>, vector<32x128xbf16>, vector<1x128xf32> -> vector<1x128xf32>
    %545 = vector.extract_strided_slice %515 {offsets = [0, 128], sizes = [1, 128], strides = [1, 1]} : vector<1x256xf32> to vector<1x128xf32>
    %546 = arith.addf %544, %545 : vector<1x128xf32>
    %c0_255 = arith.constant 0 : index
    %c0_256 = arith.constant 0 : index
    %547 = vector.load %arg6[%c0_255, %c0_256] : memref<1x128xf32, #tpu.memory_space<vmem>>, vector<1x128xf32>
    %548 = arith.addf %546, %547 : vector<1x128xf32>
    %549 = vector.extract_strided_slice %519 {offsets = [0, 32], sizes = [1, 32], strides = [1, 1]} : vector<1x64xf32> to vector<1x32xf32>
    %550 = arith.negf %548 : vector<1x128xf32>
    %551 = math.exp %550 : vector<1x128xf32>
    %cst_257 = arith.constant 1.000000e+00 : f32
    %552 = vector.broadcast %cst_257 : f32 to vector<1x128xf32>
    %553 = arith.addf %552, %551 : vector<1x128xf32>
    %554 = arith.divf %552, %553 : vector<1x128xf32>
    %555 = math.tanh %548 : vector<1x128xf32>
    %556 = vector.extract_strided_slice %554 {offsets = [0, 0], sizes = [1, 32], strides = [1, 1]} : vector<1x128xf32> to vector<1x32xf32>
    %557 = vector.extract_strided_slice %554 {offsets = [0, 32], sizes = [1, 32], strides = [1, 1]} : vector<1x128xf32> to vector<1x32xf32>
    %558 = vector.extract_strided_slice %555 {offsets = [0, 64], sizes = [1, 32], strides = [1, 1]} : vector<1x128xf32> to vector<1x32xf32>
    %559 = vector.extract_strided_slice %554 {offsets = [0, 96], sizes = [1, 32], strides = [1, 1]} : vector<1x128xf32> to vector<1x32xf32>
    %560 = arith.mulf %557, %549 : vector<1x32xf32>
    %561 = arith.mulf %556, %558 : vector<1x32xf32>
    %562 = arith.addf %560, %561 : vector<1x32xf32>
    %563 = math.tanh %562 : vector<1x32xf32>
    %564 = arith.mulf %559, %563 : vector<1x32xf32>
    %c4 = arith.constant 4 : index
    %c0_258 = arith.constant 0 : index
    %565 = vector.load %arg12[%c4, %c0_258] : memref<8x64xf32, #tpu.memory_space<vmem>>, vector<1x32xf32>
    tpu.vector_store %arg12[%c4, %c0_258], %541 {strides = array<i32>} : memref<8x64xf32, #tpu.memory_space<vmem>>, vector<1x32xf32>,
    %c4_259 = arith.constant 4 : index
    %c32_260 = arith.constant 32 : index
    %566 = vector.load %arg12[%c4_259, %c32_260] : memref<8x64xf32, #tpu.memory_space<vmem>>, vector<1x32xf32>
    tpu.vector_store %arg12[%c4_259, %c32_260], %564 {strides = array<i32>} : memref<8x64xf32, #tpu.memory_space<vmem>>, vector<1x32xf32>,
    %c4_261 = arith.constant 4 : index
    %c0_262 = arith.constant 0 : index
    %567 = vector.load %arg13[%c4_261, %c0_262] : memref<8x64xf32, #tpu.memory_space<vmem>>, vector<1x32xf32>
    tpu.vector_store %arg13[%c4_261, %c0_262], %539 {strides = array<i32>} : memref<8x64xf32, #tpu.memory_space<vmem>>, vector<1x32xf32>,
    %c4_263 = arith.constant 4 : index
    %c32_264 = arith.constant 32 : index
    %568 = vector.load %arg13[%c4_263, %c32_264] : memref<8x64xf32, #tpu.memory_space<vmem>>, vector<1x32xf32>
    tpu.vector_store %arg13[%c4_263, %c32_264], %562 {strides = array<i32>} : memref<8x64xf32, #tpu.memory_space<vmem>>, vector<1x32xf32>,
    %569 = arith.truncf %541 : vector<1x32xf32> to vector<1x32xbf16>
    %c0_265 = arith.constant 0 : index
    %c0_266 = arith.constant 0 : index
    %570 = vector.load %arg2[%c0_265, %c0_266] : memref<32x128xbf16, #tpu.memory_space<vmem>>, vector<32x128xbf16>
    %cst_267 = arith.constant dense<0.000000e+00> : vector<1x128xf32>
    %571 = tpu.matmul %569, %570, %cst_267 {dimension_numbers = #tpu.dot_dimension_numbers<[1], [0], [0], [1], [0, 0, 1, 1], [], []>} : vector<1x32xbf16>, vector<32x128xbf16>, vector<1x128xf32> -> vector<1x128xf32>
    %c4_268 = arith.constant 4 : index
    %c0_269 = arith.constant 0 : index
    %572 = vector.load %arg14[%c4_268, %c0_269] : memref<8x256xf32, #tpu.memory_space<vmem>>, vector<1x128xf32>
    tpu.vector_store %arg14[%c4_268, %c0_269], %571 {strides = array<i32>} : memref<8x256xf32, #tpu.memory_space<vmem>>, vector<1x128xf32>,
    %573 = arith.truncf %564 : vector<1x32xf32> to vector<1x32xbf16>
    %c0_270 = arith.constant 0 : index
    %c0_271 = arith.constant 0 : index
    %574 = vector.load %arg5[%c0_270, %c0_271] : memref<32x128xbf16, #tpu.memory_space<vmem>>, vector<32x128xbf16>
    %cst_272 = arith.constant dense<0.000000e+00> : vector<1x128xf32>
    %575 = tpu.matmul %573, %574, %cst_272 {dimension_numbers = #tpu.dot_dimension_numbers<[1], [0], [0], [1], [0, 0, 1, 1], [], []>} : vector<1x32xbf16>, vector<32x128xbf16>, vector<1x128xf32> -> vector<1x128xf32>
    %c4_273 = arith.constant 4 : index
    %c128_274 = arith.constant 128 : index
    %576 = vector.load %arg14[%c4_273, %c128_274] : memref<8x256xf32, #tpu.memory_space<vmem>>, vector<1x128xf32>
    tpu.vector_store %arg14[%c4_273, %c128_274], %575 {strides = array<i32>} : memref<8x256xf32, #tpu.memory_space<vmem>>, vector<1x128xf32>,
    %c4_275 = arith.constant 4 : index
    %c0_276 = arith.constant 0 : index
    %577 = vector.load %arg11[%c4_275, %c0_276] : memref<20x32xf32, #tpu.memory_space<vmem>>, vector<1x32xf32>
    tpu.vector_store %arg11[%c4_275, %c0_276], %564 {strides = array<i32>} : memref<20x32xf32, #tpu.memory_space<vmem>>, vector<1x32xf32>,
    %c0_277 = arith.constant 0 : index
    %c0_278 = arith.constant 0 : index
    %578 = vector.load %arg12[%c0_277, %c0_278] : memref<8x64xf32, #tpu.memory_space<vmem>>, vector<8x64xf32>
    %c0_279 = arith.constant 0 : index
    %c0_280 = arith.constant 0 : index
    %579 = vector.load %arg7[%c0_279, %c0_280] : memref<1x64xf32, #tpu.memory_space<vmem>>, vector<1x64xf32>
    %580 = vector.broadcast %579 : vector<1x64xf32> to vector<8x64xf32>
    %581 = arith.mulf %580, %578 : vector<8x64xf32>
    %c13 = arith.constant 13 : index
    %c0_281 = arith.constant 0 : index
    %582 = vector.load %arg16[%c13, %c0_281] : memref<20x64xf32, #tpu.memory_space<vmem>>, vector<1x64xf32>
    %583 = vector.broadcast %582 : vector<1x64xf32> to vector<8x64xf32>
    %584 = arith.addf %581, %583 : vector<8x64xf32>
    %c0_282 = arith.constant 0 : index
    %c0_283 = arith.constant 0 : index
    %585 = vector.load %arg9[%c0_282, %c0_283] : memref<1x64xf32, #tpu.memory_space<vmem>>, vector<1x64xf32>
    %586 = arith.mulf %585, %522 : vector<1x64xf32>
    %587 = vector.broadcast %586 : vector<1x64xf32> to vector<8x64xf32>
    %588 = arith.addf %584, %587 : vector<8x64xf32>
    %589 = math.tanh %588 : vector<8x64xf32>
    %c0_284 = arith.constant 0 : index
    %c0_285 = arith.constant 0 : index
    %590 = vector.load %arg10[%c0_284, %c0_285] : memref<1x64xf32, #tpu.memory_space<vmem>>, vector<1x64xf32>
    %591 = vector.broadcast %590 : vector<1x64xf32> to vector<8x64xf32>
    %592 = arith.mulf %589, %591 : vector<8x64xf32>
    %593 = vector.extract_strided_slice %592 {offsets = [0, 0], sizes = [8, 32], strides = [1, 1]} : vector<8x64xf32> to vector<8x32xf32>
    %cst_286 = arith.constant dense<0.000000e+00> : vector<8xf32>
    %594 = vector.multi_reduction <add>, %593, %cst_286 [1] : vector<8x32xf32> to vector<8xf32>
    %595 = vector.shape_cast %594 : vector<8xf32> to vector<8x1xf32>
    %596 = vector.extract_strided_slice %592 {offsets = [0, 32], sizes = [8, 32], strides = [1, 1]} : vector<8x64xf32> to vector<8x32xf32>
    %cst_287 = arith.constant dense<0.000000e+00> : vector<8xf32>
    %597 = vector.multi_reduction <add>, %596, %cst_287 [1] : vector<8x32xf32> to vector<8xf32>
    %598 = vector.shape_cast %597 : vector<8xf32> to vector<8x1xf32>
    %599 = tpu.concatenate %595, %598 in 1 : vector<8x1xf32>, vector<8x1xf32> -> vector<8x2xf32>
    %600 = math.exp %599 : vector<8x2xf32>
    %cst_288 = arith.constant dense<0.000000e+00> : vector<2xf32>
    %601 = vector.multi_reduction <add>, %600, %cst_288 [0] : vector<8x2xf32> to vector<2xf32>
    %602 = vector.shape_cast %601 : vector<2xf32> to vector<1x2xf32>
    %603 = tpu.reciprocal %602 {approx = true} : vector<1x2xf32> -> vector<1x2xf32>
    %604 = vector.broadcast %603 : vector<1x2xf32> to vector<8x2xf32>
    %605 = arith.mulf %600, %604 : vector<8x2xf32>
    %606 = vector.extract_strided_slice %605 {offsets = [0, 0], sizes = [8, 1], strides = [1, 1]} : vector<8x2xf32> to vector<8x1xf32>
    %607 = vector.shape_cast %606 : vector<8x1xf32> to vector<8x1xf32>
    %608 = vector.broadcast %607 : vector<8x1xf32> to vector<8x128xf32>
    %609 = vector.extract_strided_slice %605 {offsets = [0, 1], sizes = [8, 1], strides = [1, 1]} : vector<8x2xf32> to vector<8x1xf32>
    %610 = vector.shape_cast %609 : vector<8x1xf32> to vector<8x1xf32>
    %611 = vector.broadcast %610 : vector<8x1xf32> to vector<8x128xf32>
    %612 = tpu.concatenate %608, %611 in 1 : vector<8x128xf32>, vector<8x128xf32> -> vector<8x256xf32>
    %613 = vector.extract_strided_slice %608 {offsets = [0, 0], sizes = [8, 32], strides = [1, 1]} : vector<8x128xf32> to vector<8x32xf32>
    %614 = vector.extract_strided_slice %611 {offsets = [0, 0], sizes = [8, 32], strides = [1, 1]} : vector<8x128xf32> to vector<8x32xf32>
    %615 = tpu.concatenate %613, %614 in 1 : vector<8x32xf32>, vector<8x32xf32> -> vector<8x64xf32>
    %c0_289 = arith.constant 0 : index
    %c0_290 = arith.constant 0 : index
    %616 = vector.load %arg14[%c0_289, %c0_290] : memref<8x256xf32, #tpu.memory_space<vmem>>, vector<8x256xf32>
    %617 = arith.mulf %612, %616 : vector<8x256xf32>
    %cst_291 = arith.constant dense<0.000000e+00> : vector<256xf32>
    %618 = vector.multi_reduction <add>, %617, %cst_291 [0] : vector<8x256xf32> to vector<256xf32>
    %619 = vector.shape_cast %618 : vector<256xf32> to vector<1x256xf32>
    %c0_292 = arith.constant 0 : index
    %c0_293 = arith.constant 0 : index
    %620 = vector.load %arg13[%c0_292, %c0_293] : memref<8x64xf32, #tpu.memory_space<vmem>>, vector<8x64xf32>
    %621 = arith.mulf %615, %620 : vector<8x64xf32>
    %cst_294 = arith.constant dense<0.000000e+00> : vector<64xf32>
    %622 = vector.multi_reduction <add>, %621, %cst_294 [0] : vector<8x64xf32> to vector<64xf32>
    %623 = vector.shape_cast %622 : vector<64xf32> to vector<1x64xf32>
    %624 = arith.mulf %615, %578 : vector<8x64xf32>
    %cst_295 = arith.constant dense<0.000000e+00> : vector<64xf32>
    %625 = vector.multi_reduction <add>, %624, %cst_295 [0] : vector<8x64xf32> to vector<64xf32>
    %626 = vector.shape_cast %625 : vector<64xf32> to vector<1x64xf32>
    %c13_296 = arith.constant 13 : index
    %c0_297 = arith.constant 0 : index
    %627 = vector.load %arg15[%c13_296, %c0_297] : memref<20x128xf32, #tpu.memory_space<vmem>>, vector<1x128xf32>
    %628 = vector.extract_strided_slice %619 {offsets = [0, 0], sizes = [1, 128], strides = [1, 1]} : vector<1x256xf32> to vector<1x128xf32>
    %629 = arith.addf %627, %628 : vector<1x128xf32>
    %630 = vector.extract_strided_slice %623 {offsets = [0, 0], sizes = [1, 32], strides = [1, 1]} : vector<1x64xf32> to vector<1x32xf32>
    %631 = arith.negf %629 : vector<1x128xf32>
    %632 = math.exp %631 : vector<1x128xf32>
    %cst_298 = arith.constant 1.000000e+00 : f32
    %633 = vector.broadcast %cst_298 : f32 to vector<1x128xf32>
    %634 = arith.addf %633, %632 : vector<1x128xf32>
    %635 = arith.divf %633, %634 : vector<1x128xf32>
    %636 = math.tanh %629 : vector<1x128xf32>
    %637 = vector.extract_strided_slice %635 {offsets = [0, 0], sizes = [1, 32], strides = [1, 1]} : vector<1x128xf32> to vector<1x32xf32>
    %638 = vector.extract_strided_slice %635 {offsets = [0, 32], sizes = [1, 32], strides = [1, 1]} : vector<1x128xf32> to vector<1x32xf32>
    %639 = vector.extract_strided_slice %636 {offsets = [0, 64], sizes = [1, 32], strides = [1, 1]} : vector<1x128xf32> to vector<1x32xf32>
    %640 = vector.extract_strided_slice %635 {offsets = [0, 96], sizes = [1, 32], strides = [1, 1]} : vector<1x128xf32> to vector<1x32xf32>
    %641 = arith.mulf %638, %630 : vector<1x32xf32>
    %642 = arith.mulf %637, %639 : vector<1x32xf32>
    %643 = arith.addf %641, %642 : vector<1x32xf32>
    %644 = math.tanh %643 : vector<1x32xf32>
    %645 = arith.mulf %640, %644 : vector<1x32xf32>
    %646 = arith.truncf %645 : vector<1x32xf32> to vector<1x32xbf16>
    %c0_299 = arith.constant 0 : index
    %c0_300 = arith.constant 0 : index
    %647 = vector.load %arg4[%c0_299, %c0_300] : memref<32x128xbf16, #tpu.memory_space<vmem>>, vector<32x128xbf16>
    %cst_301 = arith.constant dense<0.000000e+00> : vector<1x128xf32>
    %648 = tpu.matmul %646, %647, %cst_301 {dimension_numbers = #tpu.dot_dimension_numbers<[1], [0], [0], [1], [0, 0, 1, 1], [], []>} : vector<1x32xbf16>, vector<32x128xbf16>, vector<1x128xf32> -> vector<1x128xf32>
    %649 = vector.extract_strided_slice %619 {offsets = [0, 128], sizes = [1, 128], strides = [1, 1]} : vector<1x256xf32> to vector<1x128xf32>
    %650 = arith.addf %648, %649 : vector<1x128xf32>
    %c0_302 = arith.constant 0 : index
    %c0_303 = arith.constant 0 : index
    %651 = vector.load %arg6[%c0_302, %c0_303] : memref<1x128xf32, #tpu.memory_space<vmem>>, vector<1x128xf32>
    %652 = arith.addf %650, %651 : vector<1x128xf32>
    %653 = vector.extract_strided_slice %623 {offsets = [0, 32], sizes = [1, 32], strides = [1, 1]} : vector<1x64xf32> to vector<1x32xf32>
    %654 = arith.negf %652 : vector<1x128xf32>
    %655 = math.exp %654 : vector<1x128xf32>
    %cst_304 = arith.constant 1.000000e+00 : f32
    %656 = vector.broadcast %cst_304 : f32 to vector<1x128xf32>
    %657 = arith.addf %656, %655 : vector<1x128xf32>
    %658 = arith.divf %656, %657 : vector<1x128xf32>
    %659 = math.tanh %652 : vector<1x128xf32>
    %660 = vector.extract_strided_slice %658 {offsets = [0, 0], sizes = [1, 32], strides = [1, 1]} : vector<1x128xf32> to vector<1x32xf32>
    %661 = vector.extract_strided_slice %658 {offsets = [0, 32], sizes = [1, 32], strides = [1, 1]} : vector<1x128xf32> to vector<1x32xf32>
    %662 = vector.extract_strided_slice %659 {offsets = [0, 64], sizes = [1, 32], strides = [1, 1]} : vector<1x128xf32> to vector<1x32xf32>
    %663 = vector.extract_strided_slice %658 {offsets = [0, 96], sizes = [1, 32], strides = [1, 1]} : vector<1x128xf32> to vector<1x32xf32>
    %664 = arith.mulf %661, %653 : vector<1x32xf32>
    %665 = arith.mulf %660, %662 : vector<1x32xf32>
    %666 = arith.addf %664, %665 : vector<1x32xf32>
    %667 = math.tanh %666 : vector<1x32xf32>
    %668 = arith.mulf %663, %667 : vector<1x32xf32>
    %c5 = arith.constant 5 : index
    %c0_305 = arith.constant 0 : index
    %669 = vector.load %arg12[%c5, %c0_305] : memref<8x64xf32, #tpu.memory_space<vmem>>, vector<1x32xf32>
    tpu.vector_store %arg12[%c5, %c0_305], %645 {strides = array<i32>} : memref<8x64xf32, #tpu.memory_space<vmem>>, vector<1x32xf32>,
    %c5_306 = arith.constant 5 : index
    %c32_307 = arith.constant 32 : index
    %670 = vector.load %arg12[%c5_306, %c32_307] : memref<8x64xf32, #tpu.memory_space<vmem>>, vector<1x32xf32>
    tpu.vector_store %arg12[%c5_306, %c32_307], %668 {strides = array<i32>} : memref<8x64xf32, #tpu.memory_space<vmem>>, vector<1x32xf32>,
    %c5_308 = arith.constant 5 : index
    %c0_309 = arith.constant 0 : index
    %671 = vector.load %arg13[%c5_308, %c0_309] : memref<8x64xf32, #tpu.memory_space<vmem>>, vector<1x32xf32>
    tpu.vector_store %arg13[%c5_308, %c0_309], %643 {strides = array<i32>} : memref<8x64xf32, #tpu.memory_space<vmem>>, vector<1x32xf32>,
    %c5_310 = arith.constant 5 : index
    %c32_311 = arith.constant 32 : index
    %672 = vector.load %arg13[%c5_310, %c32_311] : memref<8x64xf32, #tpu.memory_space<vmem>>, vector<1x32xf32>
    tpu.vector_store %arg13[%c5_310, %c32_311], %666 {strides = array<i32>} : memref<8x64xf32, #tpu.memory_space<vmem>>, vector<1x32xf32>,
    %673 = arith.truncf %645 : vector<1x32xf32> to vector<1x32xbf16>
    %c0_312 = arith.constant 0 : index
    %c0_313 = arith.constant 0 : index
    %674 = vector.load %arg2[%c0_312, %c0_313] : memref<32x128xbf16, #tpu.memory_space<vmem>>, vector<32x128xbf16>
    %cst_314 = arith.constant dense<0.000000e+00> : vector<1x128xf32>
    %675 = tpu.matmul %673, %674, %cst_314 {dimension_numbers = #tpu.dot_dimension_numbers<[1], [0], [0], [1], [0, 0, 1, 1], [], []>} : vector<1x32xbf16>, vector<32x128xbf16>, vector<1x128xf32> -> vector<1x128xf32>
    %c5_315 = arith.constant 5 : index
    %c0_316 = arith.constant 0 : index
    %676 = vector.load %arg14[%c5_315, %c0_316] : memref<8x256xf32, #tpu.memory_space<vmem>>, vector<1x128xf32>
    tpu.vector_store %arg14[%c5_315, %c0_316], %675 {strides = array<i32>} : memref<8x256xf32, #tpu.memory_space<vmem>>, vector<1x128xf32>,
    %677 = arith.truncf %668 : vector<1x32xf32> to vector<1x32xbf16>
    %c0_317 = arith.constant 0 : index
    %c0_318 = arith.constant 0 : index
    %678 = vector.load %arg5[%c0_317, %c0_318] : memref<32x128xbf16, #tpu.memory_space<vmem>>, vector<32x128xbf16>
    %cst_319 = arith.constant dense<0.000000e+00> : vector<1x128xf32>
    %679 = tpu.matmul %677, %678, %cst_319 {dimension_numbers = #tpu.dot_dimension_numbers<[1], [0], [0], [1], [0, 0, 1, 1], [], []>} : vector<1x32xbf16>, vector<32x128xbf16>, vector<1x128xf32> -> vector<1x128xf32>
    %c5_320 = arith.constant 5 : index
    %c128_321 = arith.constant 128 : index
    %680 = vector.load %arg14[%c5_320, %c128_321] : memref<8x256xf32, #tpu.memory_space<vmem>>, vector<1x128xf32>
    tpu.vector_store %arg14[%c5_320, %c128_321], %679 {strides = array<i32>} : memref<8x256xf32, #tpu.memory_space<vmem>>, vector<1x128xf32>,
    %c5_322 = arith.constant 5 : index
    %c0_323 = arith.constant 0 : index
    %681 = vector.load %arg11[%c5_322, %c0_323] : memref<20x32xf32, #tpu.memory_space<vmem>>, vector<1x32xf32>
    tpu.vector_store %arg11[%c5_322, %c0_323], %668 {strides = array<i32>} : memref<20x32xf32, #tpu.memory_space<vmem>>, vector<1x32xf32>,
    %c0_324 = arith.constant 0 : index
    %c0_325 = arith.constant 0 : index
    %682 = vector.load %arg12[%c0_324, %c0_325] : memref<8x64xf32, #tpu.memory_space<vmem>>, vector<8x64xf32>
    %c0_326 = arith.constant 0 : index
    %c0_327 = arith.constant 0 : index
    %683 = vector.load %arg7[%c0_326, %c0_327] : memref<1x64xf32, #tpu.memory_space<vmem>>, vector<1x64xf32>
    %684 = vector.broadcast %683 : vector<1x64xf32> to vector<8x64xf32>
    %685 = arith.mulf %684, %682 : vector<8x64xf32>
    %c14 = arith.constant 14 : index
    %c0_328 = arith.constant 0 : index
    %686 = vector.load %arg16[%c14, %c0_328] : memref<20x64xf32, #tpu.memory_space<vmem>>, vector<1x64xf32>
    %687 = vector.broadcast %686 : vector<1x64xf32> to vector<8x64xf32>
    %688 = arith.addf %685, %687 : vector<8x64xf32>
    %c0_329 = arith.constant 0 : index
    %c0_330 = arith.constant 0 : index
    %689 = vector.load %arg9[%c0_329, %c0_330] : memref<1x64xf32, #tpu.memory_space<vmem>>, vector<1x64xf32>
    %690 = arith.mulf %689, %626 : vector<1x64xf32>
    %691 = vector.broadcast %690 : vector<1x64xf32> to vector<8x64xf32>
    %692 = arith.addf %688, %691 : vector<8x64xf32>
    %693 = math.tanh %692 : vector<8x64xf32>
    %c0_331 = arith.constant 0 : index
    %c0_332 = arith.constant 0 : index
    %694 = vector.load %arg10[%c0_331, %c0_332] : memref<1x64xf32, #tpu.memory_space<vmem>>, vector<1x64xf32>
    %695 = vector.broadcast %694 : vector<1x64xf32> to vector<8x64xf32>
    %696 = arith.mulf %693, %695 : vector<8x64xf32>
    %697 = vector.extract_strided_slice %696 {offsets = [0, 0], sizes = [8, 32], strides = [1, 1]} : vector<8x64xf32> to vector<8x32xf32>
    %cst_333 = arith.constant dense<0.000000e+00> : vector<8xf32>
    %698 = vector.multi_reduction <add>, %697, %cst_333 [1] : vector<8x32xf32> to vector<8xf32>
    %699 = vector.shape_cast %698 : vector<8xf32> to vector<8x1xf32>
    %700 = vector.extract_strided_slice %696 {offsets = [0, 32], sizes = [8, 32], strides = [1, 1]} : vector<8x64xf32> to vector<8x32xf32>
    %cst_334 = arith.constant dense<0.000000e+00> : vector<8xf32>
    %701 = vector.multi_reduction <add>, %700, %cst_334 [1] : vector<8x32xf32> to vector<8xf32>
    %702 = vector.shape_cast %701 : vector<8xf32> to vector<8x1xf32>
    %703 = tpu.concatenate %699, %702 in 1 : vector<8x1xf32>, vector<8x1xf32> -> vector<8x2xf32>
    %704 = math.exp %703 : vector<8x2xf32>
    %cst_335 = arith.constant dense<0.000000e+00> : vector<2xf32>
    %705 = vector.multi_reduction <add>, %704, %cst_335 [0] : vector<8x2xf32> to vector<2xf32>
    %706 = vector.shape_cast %705 : vector<2xf32> to vector<1x2xf32>
    %707 = tpu.reciprocal %706 {approx = true} : vector<1x2xf32> -> vector<1x2xf32>
    %708 = vector.broadcast %707 : vector<1x2xf32> to vector<8x2xf32>
    %709 = arith.mulf %704, %708 : vector<8x2xf32>
    %710 = vector.extract_strided_slice %709 {offsets = [0, 0], sizes = [8, 1], strides = [1, 1]} : vector<8x2xf32> to vector<8x1xf32>
    %711 = vector.shape_cast %710 : vector<8x1xf32> to vector<8x1xf32>
    %712 = vector.broadcast %711 : vector<8x1xf32> to vector<8x128xf32>
    %713 = vector.extract_strided_slice %709 {offsets = [0, 1], sizes = [8, 1], strides = [1, 1]} : vector<8x2xf32> to vector<8x1xf32>
    %714 = vector.shape_cast %713 : vector<8x1xf32> to vector<8x1xf32>
    %715 = vector.broadcast %714 : vector<8x1xf32> to vector<8x128xf32>
    %716 = tpu.concatenate %712, %715 in 1 : vector<8x128xf32>, vector<8x128xf32> -> vector<8x256xf32>
    %717 = vector.extract_strided_slice %712 {offsets = [0, 0], sizes = [8, 32], strides = [1, 1]} : vector<8x128xf32> to vector<8x32xf32>
    %718 = vector.extract_strided_slice %715 {offsets = [0, 0], sizes = [8, 32], strides = [1, 1]} : vector<8x128xf32> to vector<8x32xf32>
    %719 = tpu.concatenate %717, %718 in 1 : vector<8x32xf32>, vector<8x32xf32> -> vector<8x64xf32>
    %c0_336 = arith.constant 0 : index
    %c0_337 = arith.constant 0 : index
    %720 = vector.load %arg14[%c0_336, %c0_337] : memref<8x256xf32, #tpu.memory_space<vmem>>, vector<8x256xf32>
    %721 = arith.mulf %716, %720 : vector<8x256xf32>
    %cst_338 = arith.constant dense<0.000000e+00> : vector<256xf32>
    %722 = vector.multi_reduction <add>, %721, %cst_338 [0] : vector<8x256xf32> to vector<256xf32>
    %723 = vector.shape_cast %722 : vector<256xf32> to vector<1x256xf32>
    %c0_339 = arith.constant 0 : index
    %c0_340 = arith.constant 0 : index
    %724 = vector.load %arg13[%c0_339, %c0_340] : memref<8x64xf32, #tpu.memory_space<vmem>>, vector<8x64xf32>
    %725 = arith.mulf %719, %724 : vector<8x64xf32>
    %cst_341 = arith.constant dense<0.000000e+00> : vector<64xf32>
    %726 = vector.multi_reduction <add>, %725, %cst_341 [0] : vector<8x64xf32> to vector<64xf32>
    %727 = vector.shape_cast %726 : vector<64xf32> to vector<1x64xf32>
    %728 = arith.mulf %719, %682 : vector<8x64xf32>
    %cst_342 = arith.constant dense<0.000000e+00> : vector<64xf32>
    %729 = vector.multi_reduction <add>, %728, %cst_342 [0] : vector<8x64xf32> to vector<64xf32>
    %730 = vector.shape_cast %729 : vector<64xf32> to vector<1x64xf32>
    %c14_343 = arith.constant 14 : index
    %c0_344 = arith.constant 0 : index
    %731 = vector.load %arg15[%c14_343, %c0_344] : memref<20x128xf32, #tpu.memory_space<vmem>>, vector<1x128xf32>
    %732 = vector.extract_strided_slice %723 {offsets = [0, 0], sizes = [1, 128], strides = [1, 1]} : vector<1x256xf32> to vector<1x128xf32>
    %733 = arith.addf %731, %732 : vector<1x128xf32>
    %734 = vector.extract_strided_slice %727 {offsets = [0, 0], sizes = [1, 32], strides = [1, 1]} : vector<1x64xf32> to vector<1x32xf32>
    %735 = arith.negf %733 : vector<1x128xf32>
    %736 = math.exp %735 : vector<1x128xf32>
    %cst_345 = arith.constant 1.000000e+00 : f32
    %737 = vector.broadcast %cst_345 : f32 to vector<1x128xf32>
    %738 = arith.addf %737, %736 : vector<1x128xf32>
    %739 = arith.divf %737, %738 : vector<1x128xf32>
    %740 = math.tanh %733 : vector<1x128xf32>
    %741 = vector.extract_strided_slice %739 {offsets = [0, 0], sizes = [1, 32], strides = [1, 1]} : vector<1x128xf32> to vector<1x32xf32>
    %742 = vector.extract_strided_slice %739 {offsets = [0, 32], sizes = [1, 32], strides = [1, 1]} : vector<1x128xf32> to vector<1x32xf32>
    %743 = vector.extract_strided_slice %740 {offsets = [0, 64], sizes = [1, 32], strides = [1, 1]} : vector<1x128xf32> to vector<1x32xf32>
    %744 = vector.extract_strided_slice %739 {offsets = [0, 96], sizes = [1, 32], strides = [1, 1]} : vector<1x128xf32> to vector<1x32xf32>
    %745 = arith.mulf %742, %734 : vector<1x32xf32>
    %746 = arith.mulf %741, %743 : vector<1x32xf32>
    %747 = arith.addf %745, %746 : vector<1x32xf32>
    %748 = math.tanh %747 : vector<1x32xf32>
    %749 = arith.mulf %744, %748 : vector<1x32xf32>
    %750 = arith.truncf %749 : vector<1x32xf32> to vector<1x32xbf16>
    %c0_346 = arith.constant 0 : index
    %c0_347 = arith.constant 0 : index
    %751 = vector.load %arg4[%c0_346, %c0_347] : memref<32x128xbf16, #tpu.memory_space<vmem>>, vector<32x128xbf16>
    %cst_348 = arith.constant dense<0.000000e+00> : vector<1x128xf32>
    %752 = tpu.matmul %750, %751, %cst_348 {dimension_numbers = #tpu.dot_dimension_numbers<[1], [0], [0], [1], [0, 0, 1, 1], [], []>} : vector<1x32xbf16>, vector<32x128xbf16>, vector<1x128xf32> -> vector<1x128xf32>
    %753 = vector.extract_strided_slice %723 {offsets = [0, 128], sizes = [1, 128], strides = [1, 1]} : vector<1x256xf32> to vector<1x128xf32>
    %754 = arith.addf %752, %753 : vector<1x128xf32>
    %c0_349 = arith.constant 0 : index
    %c0_350 = arith.constant 0 : index
    %755 = vector.load %arg6[%c0_349, %c0_350] : memref<1x128xf32, #tpu.memory_space<vmem>>, vector<1x128xf32>
    %756 = arith.addf %754, %755 : vector<1x128xf32>
    %757 = vector.extract_strided_slice %727 {offsets = [0, 32], sizes = [1, 32], strides = [1, 1]} : vector<1x64xf32> to vector<1x32xf32>
    %758 = arith.negf %756 : vector<1x128xf32>
    %759 = math.exp %758 : vector<1x128xf32>
    %cst_351 = arith.constant 1.000000e+00 : f32
    %760 = vector.broadcast %cst_351 : f32 to vector<1x128xf32>
    %761 = arith.addf %760, %759 : vector<1x128xf32>
    %762 = arith.divf %760, %761 : vector<1x128xf32>
    %763 = math.tanh %756 : vector<1x128xf32>
    %764 = vector.extract_strided_slice %762 {offsets = [0, 0], sizes = [1, 32], strides = [1, 1]} : vector<1x128xf32> to vector<1x32xf32>
    %765 = vector.extract_strided_slice %762 {offsets = [0, 32], sizes = [1, 32], strides = [1, 1]} : vector<1x128xf32> to vector<1x32xf32>
    %766 = vector.extract_strided_slice %763 {offsets = [0, 64], sizes = [1, 32], strides = [1, 1]} : vector<1x128xf32> to vector<1x32xf32>
    %767 = vector.extract_strided_slice %762 {offsets = [0, 96], sizes = [1, 32], strides = [1, 1]} : vector<1x128xf32> to vector<1x32xf32>
    %768 = arith.mulf %765, %757 : vector<1x32xf32>
    %769 = arith.mulf %764, %766 : vector<1x32xf32>
    %770 = arith.addf %768, %769 : vector<1x32xf32>
    %771 = math.tanh %770 : vector<1x32xf32>
    %772 = arith.mulf %767, %771 : vector<1x32xf32>
    %c6 = arith.constant 6 : index
    %c0_352 = arith.constant 0 : index
    %773 = vector.load %arg12[%c6, %c0_352] : memref<8x64xf32, #tpu.memory_space<vmem>>, vector<1x32xf32>
    tpu.vector_store %arg12[%c6, %c0_352], %749 {strides = array<i32>} : memref<8x64xf32, #tpu.memory_space<vmem>>, vector<1x32xf32>,
    %c6_353 = arith.constant 6 : index
    %c32_354 = arith.constant 32 : index
    %774 = vector.load %arg12[%c6_353, %c32_354] : memref<8x64xf32, #tpu.memory_space<vmem>>, vector<1x32xf32>
    tpu.vector_store %arg12[%c6_353, %c32_354], %772 {strides = array<i32>} : memref<8x64xf32, #tpu.memory_space<vmem>>, vector<1x32xf32>,
    %c6_355 = arith.constant 6 : index
    %c0_356 = arith.constant 0 : index
    %775 = vector.load %arg13[%c6_355, %c0_356] : memref<8x64xf32, #tpu.memory_space<vmem>>, vector<1x32xf32>
    tpu.vector_store %arg13[%c6_355, %c0_356], %747 {strides = array<i32>} : memref<8x64xf32, #tpu.memory_space<vmem>>, vector<1x32xf32>,
    %c6_357 = arith.constant 6 : index
    %c32_358 = arith.constant 32 : index
    %776 = vector.load %arg13[%c6_357, %c32_358] : memref<8x64xf32, #tpu.memory_space<vmem>>, vector<1x32xf32>
    tpu.vector_store %arg13[%c6_357, %c32_358], %770 {strides = array<i32>} : memref<8x64xf32, #tpu.memory_space<vmem>>, vector<1x32xf32>,
    %777 = arith.truncf %749 : vector<1x32xf32> to vector<1x32xbf16>
    %c0_359 = arith.constant 0 : index
    %c0_360 = arith.constant 0 : index
    %778 = vector.load %arg2[%c0_359, %c0_360] : memref<32x128xbf16, #tpu.memory_space<vmem>>, vector<32x128xbf16>
    %cst_361 = arith.constant dense<0.000000e+00> : vector<1x128xf32>
    %779 = tpu.matmul %777, %778, %cst_361 {dimension_numbers = #tpu.dot_dimension_numbers<[1], [0], [0], [1], [0, 0, 1, 1], [], []>} : vector<1x32xbf16>, vector<32x128xbf16>, vector<1x128xf32> -> vector<1x128xf32>
    %c6_362 = arith.constant 6 : index
    %c0_363 = arith.constant 0 : index
    %780 = vector.load %arg14[%c6_362, %c0_363] : memref<8x256xf32, #tpu.memory_space<vmem>>, vector<1x128xf32>
    tpu.vector_store %arg14[%c6_362, %c0_363], %779 {strides = array<i32>} : memref<8x256xf32, #tpu.memory_space<vmem>>, vector<1x128xf32>,
    %781 = arith.truncf %772 : vector<1x32xf32> to vector<1x32xbf16>
    %c0_364 = arith.constant 0 : index
    %c0_365 = arith.constant 0 : index
    %782 = vector.load %arg5[%c0_364, %c0_365] : memref<32x128xbf16, #tpu.memory_space<vmem>>, vector<32x128xbf16>
    %cst_366 = arith.constant dense<0.000000e+00> : vector<1x128xf32>
    %783 = tpu.matmul %781, %782, %cst_366 {dimension_numbers = #tpu.dot_dimension_numbers<[1], [0], [0], [1], [0, 0, 1, 1], [], []>} : vector<1x32xbf16>, vector<32x128xbf16>, vector<1x128xf32> -> vector<1x128xf32>
    %c6_367 = arith.constant 6 : index
    %c128_368 = arith.constant 128 : index
    %784 = vector.load %arg14[%c6_367, %c128_368] : memref<8x256xf32, #tpu.memory_space<vmem>>, vector<1x128xf32>
    tpu.vector_store %arg14[%c6_367, %c128_368], %783 {strides = array<i32>} : memref<8x256xf32, #tpu.memory_space<vmem>>, vector<1x128xf32>,
    %c6_369 = arith.constant 6 : index
    %c0_370 = arith.constant 0 : index
    %785 = vector.load %arg11[%c6_369, %c0_370] : memref<20x32xf32, #tpu.memory_space<vmem>>, vector<1x32xf32>
    tpu.vector_store %arg11[%c6_369, %c0_370], %772 {strides = array<i32>} : memref<20x32xf32, #tpu.memory_space<vmem>>, vector<1x32xf32>,
    %c0_371 = arith.constant 0 : index
    %c0_372 = arith.constant 0 : index
    %786 = vector.load %arg12[%c0_371, %c0_372] : memref<8x64xf32, #tpu.memory_space<vmem>>, vector<8x64xf32>
    %c0_373 = arith.constant 0 : index
    %c0_374 = arith.constant 0 : index
    %787 = vector.load %arg7[%c0_373, %c0_374] : memref<1x64xf32, #tpu.memory_space<vmem>>, vector<1x64xf32>
    %788 = vector.broadcast %787 : vector<1x64xf32> to vector<8x64xf32>
    %789 = arith.mulf %788, %786 : vector<8x64xf32>
    %c15 = arith.constant 15 : index
    %c0_375 = arith.constant 0 : index
    %790 = vector.load %arg16[%c15, %c0_375] : memref<20x64xf32, #tpu.memory_space<vmem>>, vector<1x64xf32>
    %791 = vector.broadcast %790 : vector<1x64xf32> to vector<8x64xf32>
    %792 = arith.addf %789, %791 : vector<8x64xf32>
    %c0_376 = arith.constant 0 : index
    %c0_377 = arith.constant 0 : index
    %793 = vector.load %arg9[%c0_376, %c0_377] : memref<1x64xf32, #tpu.memory_space<vmem>>, vector<1x64xf32>
    %794 = arith.mulf %793, %730 : vector<1x64xf32>
    %795 = vector.broadcast %794 : vector<1x64xf32> to vector<8x64xf32>
    %796 = arith.addf %792, %795 : vector<8x64xf32>
    %797 = math.tanh %796 : vector<8x64xf32>
    %c0_378 = arith.constant 0 : index
    %c0_379 = arith.constant 0 : index
    %798 = vector.load %arg10[%c0_378, %c0_379] : memref<1x64xf32, #tpu.memory_space<vmem>>, vector<1x64xf32>
    %799 = vector.broadcast %798 : vector<1x64xf32> to vector<8x64xf32>
    %800 = arith.mulf %797, %799 : vector<8x64xf32>
    %801 = vector.extract_strided_slice %800 {offsets = [0, 0], sizes = [8, 32], strides = [1, 1]} : vector<8x64xf32> to vector<8x32xf32>
    %cst_380 = arith.constant dense<0.000000e+00> : vector<8xf32>
    %802 = vector.multi_reduction <add>, %801, %cst_380 [1] : vector<8x32xf32> to vector<8xf32>
    %803 = vector.shape_cast %802 : vector<8xf32> to vector<8x1xf32>
    %804 = vector.extract_strided_slice %800 {offsets = [0, 32], sizes = [8, 32], strides = [1, 1]} : vector<8x64xf32> to vector<8x32xf32>
    %cst_381 = arith.constant dense<0.000000e+00> : vector<8xf32>
    %805 = vector.multi_reduction <add>, %804, %cst_381 [1] : vector<8x32xf32> to vector<8xf32>
    %806 = vector.shape_cast %805 : vector<8xf32> to vector<8x1xf32>
    %807 = tpu.concatenate %803, %806 in 1 : vector<8x1xf32>, vector<8x1xf32> -> vector<8x2xf32>
    %808 = math.exp %807 : vector<8x2xf32>
    %cst_382 = arith.constant dense<0.000000e+00> : vector<2xf32>
    %809 = vector.multi_reduction <add>, %808, %cst_382 [0] : vector<8x2xf32> to vector<2xf32>
    %810 = vector.shape_cast %809 : vector<2xf32> to vector<1x2xf32>
    %811 = tpu.reciprocal %810 {approx = true} : vector<1x2xf32> -> vector<1x2xf32>
    %812 = vector.broadcast %811 : vector<1x2xf32> to vector<8x2xf32>
    %813 = arith.mulf %808, %812 : vector<8x2xf32>
    %814 = vector.extract_strided_slice %813 {offsets = [0, 0], sizes = [8, 1], strides = [1, 1]} : vector<8x2xf32> to vector<8x1xf32>
    %815 = vector.shape_cast %814 : vector<8x1xf32> to vector<8x1xf32>
    %816 = vector.broadcast %815 : vector<8x1xf32> to vector<8x128xf32>
    %817 = vector.extract_strided_slice %813 {offsets = [0, 1], sizes = [8, 1], strides = [1, 1]} : vector<8x2xf32> to vector<8x1xf32>
    %818 = vector.shape_cast %817 : vector<8x1xf32> to vector<8x1xf32>
    %819 = vector.broadcast %818 : vector<8x1xf32> to vector<8x128xf32>
    %820 = tpu.concatenate %816, %819 in 1 : vector<8x128xf32>, vector<8x128xf32> -> vector<8x256xf32>
    %821 = vector.extract_strided_slice %816 {offsets = [0, 0], sizes = [8, 32], strides = [1, 1]} : vector<8x128xf32> to vector<8x32xf32>
    %822 = vector.extract_strided_slice %819 {offsets = [0, 0], sizes = [8, 32], strides = [1, 1]} : vector<8x128xf32> to vector<8x32xf32>
    %823 = tpu.concatenate %821, %822 in 1 : vector<8x32xf32>, vector<8x32xf32> -> vector<8x64xf32>
    %c0_383 = arith.constant 0 : index
    %c0_384 = arith.constant 0 : index
    %824 = vector.load %arg14[%c0_383, %c0_384] : memref<8x256xf32, #tpu.memory_space<vmem>>, vector<8x256xf32>
    %825 = arith.mulf %820, %824 : vector<8x256xf32>
    %cst_385 = arith.constant dense<0.000000e+00> : vector<256xf32>
    %826 = vector.multi_reduction <add>, %825, %cst_385 [0] : vector<8x256xf32> to vector<256xf32>
    %827 = vector.shape_cast %826 : vector<256xf32> to vector<1x256xf32>
    %c0_386 = arith.constant 0 : index
    %c0_387 = arith.constant 0 : index
    %828 = vector.load %arg13[%c0_386, %c0_387] : memref<8x64xf32, #tpu.memory_space<vmem>>, vector<8x64xf32>
    %829 = arith.mulf %823, %828 : vector<8x64xf32>
    %cst_388 = arith.constant dense<0.000000e+00> : vector<64xf32>
    %830 = vector.multi_reduction <add>, %829, %cst_388 [0] : vector<8x64xf32> to vector<64xf32>
    %831 = vector.shape_cast %830 : vector<64xf32> to vector<1x64xf32>
    %832 = arith.mulf %823, %786 : vector<8x64xf32>
    %cst_389 = arith.constant dense<0.000000e+00> : vector<64xf32>
    %833 = vector.multi_reduction <add>, %832, %cst_389 [0] : vector<8x64xf32> to vector<64xf32>
    %834 = vector.shape_cast %833 : vector<64xf32> to vector<1x64xf32>
    %c15_390 = arith.constant 15 : index
    %c0_391 = arith.constant 0 : index
    %835 = vector.load %arg15[%c15_390, %c0_391] : memref<20x128xf32, #tpu.memory_space<vmem>>, vector<1x128xf32>
    %836 = vector.extract_strided_slice %827 {offsets = [0, 0], sizes = [1, 128], strides = [1, 1]} : vector<1x256xf32> to vector<1x128xf32>
    %837 = arith.addf %835, %836 : vector<1x128xf32>
    %838 = vector.extract_strided_slice %831 {offsets = [0, 0], sizes = [1, 32], strides = [1, 1]} : vector<1x64xf32> to vector<1x32xf32>
    %839 = arith.negf %837 : vector<1x128xf32>
    %840 = math.exp %839 : vector<1x128xf32>
    %cst_392 = arith.constant 1.000000e+00 : f32
    %841 = vector.broadcast %cst_392 : f32 to vector<1x128xf32>
    %842 = arith.addf %841, %840 : vector<1x128xf32>
    %843 = arith.divf %841, %842 : vector<1x128xf32>
    %844 = math.tanh %837 : vector<1x128xf32>
    %845 = vector.extract_strided_slice %843 {offsets = [0, 0], sizes = [1, 32], strides = [1, 1]} : vector<1x128xf32> to vector<1x32xf32>
    %846 = vector.extract_strided_slice %843 {offsets = [0, 32], sizes = [1, 32], strides = [1, 1]} : vector<1x128xf32> to vector<1x32xf32>
    %847 = vector.extract_strided_slice %844 {offsets = [0, 64], sizes = [1, 32], strides = [1, 1]} : vector<1x128xf32> to vector<1x32xf32>
    %848 = vector.extract_strided_slice %843 {offsets = [0, 96], sizes = [1, 32], strides = [1, 1]} : vector<1x128xf32> to vector<1x32xf32>
    %849 = arith.mulf %846, %838 : vector<1x32xf32>
    %850 = arith.mulf %845, %847 : vector<1x32xf32>
    %851 = arith.addf %849, %850 : vector<1x32xf32>
    %852 = math.tanh %851 : vector<1x32xf32>
    %853 = arith.mulf %848, %852 : vector<1x32xf32>
    %854 = arith.truncf %853 : vector<1x32xf32> to vector<1x32xbf16>
    %c0_393 = arith.constant 0 : index
    %c0_394 = arith.constant 0 : index
    %855 = vector.load %arg4[%c0_393, %c0_394] : memref<32x128xbf16, #tpu.memory_space<vmem>>, vector<32x128xbf16>
    %cst_395 = arith.constant dense<0.000000e+00> : vector<1x128xf32>
    %856 = tpu.matmul %854, %855, %cst_395 {dimension_numbers = #tpu.dot_dimension_numbers<[1], [0], [0], [1], [0, 0, 1, 1], [], []>} : vector<1x32xbf16>, vector<32x128xbf16>, vector<1x128xf32> -> vector<1x128xf32>
    %857 = vector.extract_strided_slice %827 {offsets = [0, 128], sizes = [1, 128], strides = [1, 1]} : vector<1x256xf32> to vector<1x128xf32>
    %858 = arith.addf %856, %857 : vector<1x128xf32>
    %c0_396 = arith.constant 0 : index
    %c0_397 = arith.constant 0 : index
    %859 = vector.load %arg6[%c0_396, %c0_397] : memref<1x128xf32, #tpu.memory_space<vmem>>, vector<1x128xf32>
    %860 = arith.addf %858, %859 : vector<1x128xf32>
    %861 = vector.extract_strided_slice %831 {offsets = [0, 32], sizes = [1, 32], strides = [1, 1]} : vector<1x64xf32> to vector<1x32xf32>
    %862 = arith.negf %860 : vector<1x128xf32>
    %863 = math.exp %862 : vector<1x128xf32>
    %cst_398 = arith.constant 1.000000e+00 : f32
    %864 = vector.broadcast %cst_398 : f32 to vector<1x128xf32>
    %865 = arith.addf %864, %863 : vector<1x128xf32>
    %866 = arith.divf %864, %865 : vector<1x128xf32>
    %867 = math.tanh %860 : vector<1x128xf32>
    %868 = vector.extract_strided_slice %866 {offsets = [0, 0], sizes = [1, 32], strides = [1, 1]} : vector<1x128xf32> to vector<1x32xf32>
    %869 = vector.extract_strided_slice %866 {offsets = [0, 32], sizes = [1, 32], strides = [1, 1]} : vector<1x128xf32> to vector<1x32xf32>
    %870 = vector.extract_strided_slice %867 {offsets = [0, 64], sizes = [1, 32], strides = [1, 1]} : vector<1x128xf32> to vector<1x32xf32>
    %871 = vector.extract_strided_slice %866 {offsets = [0, 96], sizes = [1, 32], strides = [1, 1]} : vector<1x128xf32> to vector<1x32xf32>
    %872 = arith.mulf %869, %861 : vector<1x32xf32>
    %873 = arith.mulf %868, %870 : vector<1x32xf32>
    %874 = arith.addf %872, %873 : vector<1x32xf32>
    %875 = math.tanh %874 : vector<1x32xf32>
    %876 = arith.mulf %871, %875 : vector<1x32xf32>
    %c7 = arith.constant 7 : index
    %c0_399 = arith.constant 0 : index
    %877 = vector.load %arg12[%c7, %c0_399] : memref<8x64xf32, #tpu.memory_space<vmem>>, vector<1x32xf32>
    tpu.vector_store %arg12[%c7, %c0_399], %853 {strides = array<i32>} : memref<8x64xf32, #tpu.memory_space<vmem>>, vector<1x32xf32>,
    %c7_400 = arith.constant 7 : index
    %c32_401 = arith.constant 32 : index
    %878 = vector.load %arg12[%c7_400, %c32_401] : memref<8x64xf32, #tpu.memory_space<vmem>>, vector<1x32xf32>
    tpu.vector_store %arg12[%c7_400, %c32_401], %876 {strides = array<i32>} : memref<8x64xf32, #tpu.memory_space<vmem>>, vector<1x32xf32>,
    %c7_402 = arith.constant 7 : index
    %c0_403 = arith.constant 0 : index
    %879 = vector.load %arg13[%c7_402, %c0_403] : memref<8x64xf32, #tpu.memory_space<vmem>>, vector<1x32xf32>
    tpu.vector_store %arg13[%c7_402, %c0_403], %851 {strides = array<i32>} : memref<8x64xf32, #tpu.memory_space<vmem>>, vector<1x32xf32>,
    %c7_404 = arith.constant 7 : index
    %c32_405 = arith.constant 32 : index
    %880 = vector.load %arg13[%c7_404, %c32_405] : memref<8x64xf32, #tpu.memory_space<vmem>>, vector<1x32xf32>
    tpu.vector_store %arg13[%c7_404, %c32_405], %874 {strides = array<i32>} : memref<8x64xf32, #tpu.memory_space<vmem>>, vector<1x32xf32>,
    %881 = arith.truncf %853 : vector<1x32xf32> to vector<1x32xbf16>
    %c0_406 = arith.constant 0 : index
    %c0_407 = arith.constant 0 : index
    %882 = vector.load %arg2[%c0_406, %c0_407] : memref<32x128xbf16, #tpu.memory_space<vmem>>, vector<32x128xbf16>
    %cst_408 = arith.constant dense<0.000000e+00> : vector<1x128xf32>
    %883 = tpu.matmul %881, %882, %cst_408 {dimension_numbers = #tpu.dot_dimension_numbers<[1], [0], [0], [1], [0, 0, 1, 1], [], []>} : vector<1x32xbf16>, vector<32x128xbf16>, vector<1x128xf32> -> vector<1x128xf32>
    %c7_409 = arith.constant 7 : index
    %c0_410 = arith.constant 0 : index
    %884 = vector.load %arg14[%c7_409, %c0_410] : memref<8x256xf32, #tpu.memory_space<vmem>>, vector<1x128xf32>
    tpu.vector_store %arg14[%c7_409, %c0_410], %883 {strides = array<i32>} : memref<8x256xf32, #tpu.memory_space<vmem>>, vector<1x128xf32>,
    %885 = arith.truncf %876 : vector<1x32xf32> to vector<1x32xbf16>
    %c0_411 = arith.constant 0 : index
    %c0_412 = arith.constant 0 : index
    %886 = vector.load %arg5[%c0_411, %c0_412] : memref<32x128xbf16, #tpu.memory_space<vmem>>, vector<32x128xbf16>
    %cst_413 = arith.constant dense<0.000000e+00> : vector<1x128xf32>
    %887 = tpu.matmul %885, %886, %cst_413 {dimension_numbers = #tpu.dot_dimension_numbers<[1], [0], [0], [1], [0, 0, 1, 1], [], []>} : vector<1x32xbf16>, vector<32x128xbf16>, vector<1x128xf32> -> vector<1x128xf32>
    %c7_414 = arith.constant 7 : index
    %c128_415 = arith.constant 128 : index
    %888 = vector.load %arg14[%c7_414, %c128_415] : memref<8x256xf32, #tpu.memory_space<vmem>>, vector<1x128xf32>
    tpu.vector_store %arg14[%c7_414, %c128_415], %887 {strides = array<i32>} : memref<8x256xf32, #tpu.memory_space<vmem>>, vector<1x128xf32>,
    %c7_416 = arith.constant 7 : index
    %c0_417 = arith.constant 0 : index
    %889 = vector.load %arg11[%c7_416, %c0_417] : memref<20x32xf32, #tpu.memory_space<vmem>>, vector<1x32xf32>
    tpu.vector_store %arg11[%c7_416, %c0_417], %876 {strides = array<i32>} : memref<20x32xf32, #tpu.memory_space<vmem>>, vector<1x32xf32>,
    %c0_418 = arith.constant 0 : index
    %c0_419 = arith.constant 0 : index
    %890 = vector.load %arg12[%c0_418, %c0_419] : memref<8x64xf32, #tpu.memory_space<vmem>>, vector<8x64xf32>
    %c0_420 = arith.constant 0 : index
    %c0_421 = arith.constant 0 : index
    %891 = vector.load %arg7[%c0_420, %c0_421] : memref<1x64xf32, #tpu.memory_space<vmem>>, vector<1x64xf32>
    %892 = vector.broadcast %891 : vector<1x64xf32> to vector<8x64xf32>
    %893 = arith.mulf %892, %890 : vector<8x64xf32>
    %c16 = arith.constant 16 : index
    %c0_422 = arith.constant 0 : index
    %894 = vector.load %arg16[%c16, %c0_422] : memref<20x64xf32, #tpu.memory_space<vmem>>, vector<1x64xf32>
    %895 = vector.broadcast %894 : vector<1x64xf32> to vector<8x64xf32>
    %896 = arith.addf %893, %895 : vector<8x64xf32>
    %c0_423 = arith.constant 0 : index
    %c0_424 = arith.constant 0 : index
    %897 = vector.load %arg9[%c0_423, %c0_424] : memref<1x64xf32, #tpu.memory_space<vmem>>, vector<1x64xf32>
    %898 = arith.mulf %897, %834 : vector<1x64xf32>
    %899 = vector.broadcast %898 : vector<1x64xf32> to vector<8x64xf32>
    %900 = arith.addf %896, %899 : vector<8x64xf32>
    %901 = math.tanh %900 : vector<8x64xf32>
    %c0_425 = arith.constant 0 : index
    %c0_426 = arith.constant 0 : index
    %902 = vector.load %arg10[%c0_425, %c0_426] : memref<1x64xf32, #tpu.memory_space<vmem>>, vector<1x64xf32>
    %903 = vector.broadcast %902 : vector<1x64xf32> to vector<8x64xf32>
    %904 = arith.mulf %901, %903 : vector<8x64xf32>
    %905 = vector.extract_strided_slice %904 {offsets = [0, 0], sizes = [8, 32], strides = [1, 1]} : vector<8x64xf32> to vector<8x32xf32>
    %cst_427 = arith.constant dense<0.000000e+00> : vector<8xf32>
    %906 = vector.multi_reduction <add>, %905, %cst_427 [1] : vector<8x32xf32> to vector<8xf32>
    %907 = vector.shape_cast %906 : vector<8xf32> to vector<8x1xf32>
    %908 = vector.extract_strided_slice %904 {offsets = [0, 32], sizes = [8, 32], strides = [1, 1]} : vector<8x64xf32> to vector<8x32xf32>
    %cst_428 = arith.constant dense<0.000000e+00> : vector<8xf32>
    %909 = vector.multi_reduction <add>, %908, %cst_428 [1] : vector<8x32xf32> to vector<8xf32>
    %910 = vector.shape_cast %909 : vector<8xf32> to vector<8x1xf32>
    %911 = tpu.concatenate %907, %910 in 1 : vector<8x1xf32>, vector<8x1xf32> -> vector<8x2xf32>
    %912 = math.exp %911 : vector<8x2xf32>
    %cst_429 = arith.constant dense<0.000000e+00> : vector<2xf32>
    %913 = vector.multi_reduction <add>, %912, %cst_429 [0] : vector<8x2xf32> to vector<2xf32>
    %914 = vector.shape_cast %913 : vector<2xf32> to vector<1x2xf32>
    %915 = tpu.reciprocal %914 {approx = true} : vector<1x2xf32> -> vector<1x2xf32>
    %916 = vector.broadcast %915 : vector<1x2xf32> to vector<8x2xf32>
    %917 = arith.mulf %912, %916 : vector<8x2xf32>
    %918 = vector.extract_strided_slice %917 {offsets = [0, 0], sizes = [8, 1], strides = [1, 1]} : vector<8x2xf32> to vector<8x1xf32>
    %919 = vector.shape_cast %918 : vector<8x1xf32> to vector<8x1xf32>
    %920 = vector.broadcast %919 : vector<8x1xf32> to vector<8x128xf32>
    %921 = vector.extract_strided_slice %917 {offsets = [0, 1], sizes = [8, 1], strides = [1, 1]} : vector<8x2xf32> to vector<8x1xf32>
    %922 = vector.shape_cast %921 : vector<8x1xf32> to vector<8x1xf32>
    %923 = vector.broadcast %922 : vector<8x1xf32> to vector<8x128xf32>
    %924 = tpu.concatenate %920, %923 in 1 : vector<8x128xf32>, vector<8x128xf32> -> vector<8x256xf32>
    %925 = vector.extract_strided_slice %920 {offsets = [0, 0], sizes = [8, 32], strides = [1, 1]} : vector<8x128xf32> to vector<8x32xf32>
    %926 = vector.extract_strided_slice %923 {offsets = [0, 0], sizes = [8, 32], strides = [1, 1]} : vector<8x128xf32> to vector<8x32xf32>
    %927 = tpu.concatenate %925, %926 in 1 : vector<8x32xf32>, vector<8x32xf32> -> vector<8x64xf32>
    %c0_430 = arith.constant 0 : index
    %c0_431 = arith.constant 0 : index
    %928 = vector.load %arg14[%c0_430, %c0_431] : memref<8x256xf32, #tpu.memory_space<vmem>>, vector<8x256xf32>
    %929 = arith.mulf %924, %928 : vector<8x256xf32>
    %cst_432 = arith.constant dense<0.000000e+00> : vector<256xf32>
    %930 = vector.multi_reduction <add>, %929, %cst_432 [0] : vector<8x256xf32> to vector<256xf32>
    %931 = vector.shape_cast %930 : vector<256xf32> to vector<1x256xf32>
    %c0_433 = arith.constant 0 : index
    %c0_434 = arith.constant 0 : index
    %932 = vector.load %arg13[%c0_433, %c0_434] : memref<8x64xf32, #tpu.memory_space<vmem>>, vector<8x64xf32>
    %933 = arith.mulf %927, %932 : vector<8x64xf32>
    %cst_435 = arith.constant dense<0.000000e+00> : vector<64xf32>
    %934 = vector.multi_reduction <add>, %933, %cst_435 [0] : vector<8x64xf32> to vector<64xf32>
    %935 = vector.shape_cast %934 : vector<64xf32> to vector<1x64xf32>
    %936 = arith.mulf %927, %890 : vector<8x64xf32>
    %cst_436 = arith.constant dense<0.000000e+00> : vector<64xf32>
    %937 = vector.multi_reduction <add>, %936, %cst_436 [0] : vector<8x64xf32> to vector<64xf32>
    %938 = vector.shape_cast %937 : vector<64xf32> to vector<1x64xf32>
    %c16_437 = arith.constant 16 : index
    %c0_438 = arith.constant 0 : index
    %939 = vector.load %arg15[%c16_437, %c0_438] : memref<20x128xf32, #tpu.memory_space<vmem>>, vector<1x128xf32>
    %940 = vector.extract_strided_slice %931 {offsets = [0, 0], sizes = [1, 128], strides = [1, 1]} : vector<1x256xf32> to vector<1x128xf32>
    %941 = arith.addf %939, %940 : vector<1x128xf32>
    %942 = vector.extract_strided_slice %935 {offsets = [0, 0], sizes = [1, 32], strides = [1, 1]} : vector<1x64xf32> to vector<1x32xf32>
    %943 = arith.negf %941 : vector<1x128xf32>
    %944 = math.exp %943 : vector<1x128xf32>
    %cst_439 = arith.constant 1.000000e+00 : f32
    %945 = vector.broadcast %cst_439 : f32 to vector<1x128xf32>
    %946 = arith.addf %945, %944 : vector<1x128xf32>
    %947 = arith.divf %945, %946 : vector<1x128xf32>
    %948 = math.tanh %941 : vector<1x128xf32>
    %949 = vector.extract_strided_slice %947 {offsets = [0, 0], sizes = [1, 32], strides = [1, 1]} : vector<1x128xf32> to vector<1x32xf32>
    %950 = vector.extract_strided_slice %947 {offsets = [0, 32], sizes = [1, 32], strides = [1, 1]} : vector<1x128xf32> to vector<1x32xf32>
    %951 = vector.extract_strided_slice %948 {offsets = [0, 64], sizes = [1, 32], strides = [1, 1]} : vector<1x128xf32> to vector<1x32xf32>
    %952 = vector.extract_strided_slice %947 {offsets = [0, 96], sizes = [1, 32], strides = [1, 1]} : vector<1x128xf32> to vector<1x32xf32>
    %953 = arith.mulf %950, %942 : vector<1x32xf32>
    %954 = arith.mulf %949, %951 : vector<1x32xf32>
    %955 = arith.addf %953, %954 : vector<1x32xf32>
    %956 = math.tanh %955 : vector<1x32xf32>
    %957 = arith.mulf %952, %956 : vector<1x32xf32>
    %958 = arith.truncf %957 : vector<1x32xf32> to vector<1x32xbf16>
    %c0_440 = arith.constant 0 : index
    %c0_441 = arith.constant 0 : index
    %959 = vector.load %arg4[%c0_440, %c0_441] : memref<32x128xbf16, #tpu.memory_space<vmem>>, vector<32x128xbf16>
    %cst_442 = arith.constant dense<0.000000e+00> : vector<1x128xf32>
    %960 = tpu.matmul %958, %959, %cst_442 {dimension_numbers = #tpu.dot_dimension_numbers<[1], [0], [0], [1], [0, 0, 1, 1], [], []>} : vector<1x32xbf16>, vector<32x128xbf16>, vector<1x128xf32> -> vector<1x128xf32>
    %961 = vector.extract_strided_slice %931 {offsets = [0, 128], sizes = [1, 128], strides = [1, 1]} : vector<1x256xf32> to vector<1x128xf32>
    %962 = arith.addf %960, %961 : vector<1x128xf32>
    %c0_443 = arith.constant 0 : index
    %c0_444 = arith.constant 0 : index
    %963 = vector.load %arg6[%c0_443, %c0_444] : memref<1x128xf32, #tpu.memory_space<vmem>>, vector<1x128xf32>
    %964 = arith.addf %962, %963 : vector<1x128xf32>
    %965 = vector.extract_strided_slice %935 {offsets = [0, 32], sizes = [1, 32], strides = [1, 1]} : vector<1x64xf32> to vector<1x32xf32>
    %966 = arith.negf %964 : vector<1x128xf32>
    %967 = math.exp %966 : vector<1x128xf32>
    %cst_445 = arith.constant 1.000000e+00 : f32
    %968 = vector.broadcast %cst_445 : f32 to vector<1x128xf32>
    %969 = arith.addf %968, %967 : vector<1x128xf32>
    %970 = arith.divf %968, %969 : vector<1x128xf32>
    %971 = math.tanh %964 : vector<1x128xf32>
    %972 = vector.extract_strided_slice %970 {offsets = [0, 0], sizes = [1, 32], strides = [1, 1]} : vector<1x128xf32> to vector<1x32xf32>
    %973 = vector.extract_strided_slice %970 {offsets = [0, 32], sizes = [1, 32], strides = [1, 1]} : vector<1x128xf32> to vector<1x32xf32>
    %974 = vector.extract_strided_slice %971 {offsets = [0, 64], sizes = [1, 32], strides = [1, 1]} : vector<1x128xf32> to vector<1x32xf32>
    %975 = vector.extract_strided_slice %970 {offsets = [0, 96], sizes = [1, 32], strides = [1, 1]} : vector<1x128xf32> to vector<1x32xf32>
    %976 = arith.mulf %973, %965 : vector<1x32xf32>
    %977 = arith.mulf %972, %974 : vector<1x32xf32>
    %978 = arith.addf %976, %977 : vector<1x32xf32>
    %979 = math.tanh %978 : vector<1x32xf32>
    %980 = arith.mulf %975, %979 : vector<1x32xf32>
    %c0_446 = arith.constant 0 : index
    %c0_447 = arith.constant 0 : index
    %981 = vector.load %arg12[%c0_446, %c0_447] : memref<8x64xf32, #tpu.memory_space<vmem>>, vector<1x32xf32>
    tpu.vector_store %arg12[%c0_446, %c0_447], %957 {strides = array<i32>} : memref<8x64xf32, #tpu.memory_space<vmem>>, vector<1x32xf32>,
    %c0_448 = arith.constant 0 : index
    %c32_449 = arith.constant 32 : index
    %982 = vector.load %arg12[%c0_448, %c32_449] : memref<8x64xf32, #tpu.memory_space<vmem>>, vector<1x32xf32>
    tpu.vector_store %arg12[%c0_448, %c32_449], %980 {strides = array<i32>} : memref<8x64xf32, #tpu.memory_space<vmem>>, vector<1x32xf32>,
    %c0_450 = arith.constant 0 : index
    %c0_451 = arith.constant 0 : index
    %983 = vector.load %arg13[%c0_450, %c0_451] : memref<8x64xf32, #tpu.memory_space<vmem>>, vector<1x32xf32>
    tpu.vector_store %arg13[%c0_450, %c0_451], %955 {strides = array<i32>} : memref<8x64xf32, #tpu.memory_space<vmem>>, vector<1x32xf32>,
    %c0_452 = arith.constant 0 : index
    %c32_453 = arith.constant 32 : index
    %984 = vector.load %arg13[%c0_452, %c32_453] : memref<8x64xf32, #tpu.memory_space<vmem>>, vector<1x32xf32>
    tpu.vector_store %arg13[%c0_452, %c32_453], %978 {strides = array<i32>} : memref<8x64xf32, #tpu.memory_space<vmem>>, vector<1x32xf32>,
    %985 = arith.truncf %957 : vector<1x32xf32> to vector<1x32xbf16>
    %c0_454 = arith.constant 0 : index
    %c0_455 = arith.constant 0 : index
    %986 = vector.load %arg2[%c0_454, %c0_455] : memref<32x128xbf16, #tpu.memory_space<vmem>>, vector<32x128xbf16>
    %cst_456 = arith.constant dense<0.000000e+00> : vector<1x128xf32>
    %987 = tpu.matmul %985, %986, %cst_456 {dimension_numbers = #tpu.dot_dimension_numbers<[1], [0], [0], [1], [0, 0, 1, 1], [], []>} : vector<1x32xbf16>, vector<32x128xbf16>, vector<1x128xf32> -> vector<1x128xf32>
    %c0_457 = arith.constant 0 : index
    %c0_458 = arith.constant 0 : index
    %988 = vector.load %arg14[%c0_457, %c0_458] : memref<8x256xf32, #tpu.memory_space<vmem>>, vector<1x128xf32>
    tpu.vector_store %arg14[%c0_457, %c0_458], %987 {strides = array<i32>} : memref<8x256xf32, #tpu.memory_space<vmem>>, vector<1x128xf32>,
    %989 = arith.truncf %980 : vector<1x32xf32> to vector<1x32xbf16>
    %c0_459 = arith.constant 0 : index
    %c0_460 = arith.constant 0 : index
    %990 = vector.load %arg5[%c0_459, %c0_460] : memref<32x128xbf16, #tpu.memory_space<vmem>>, vector<32x128xbf16>
    %cst_461 = arith.constant dense<0.000000e+00> : vector<1x128xf32>
    %991 = tpu.matmul %989, %990, %cst_461 {dimension_numbers = #tpu.dot_dimension_numbers<[1], [0], [0], [1], [0, 0, 1, 1], [], []>} : vector<1x32xbf16>, vector<32x128xbf16>, vector<1x128xf32> -> vector<1x128xf32>
    %c0_462 = arith.constant 0 : index
    %c128_463 = arith.constant 128 : index
    %992 = vector.load %arg14[%c0_462, %c128_463] : memref<8x256xf32, #tpu.memory_space<vmem>>, vector<1x128xf32>
    tpu.vector_store %arg14[%c0_462, %c128_463], %991 {strides = array<i32>} : memref<8x256xf32, #tpu.memory_space<vmem>>, vector<1x128xf32>,
    %c8_464 = arith.constant 8 : index
    %c0_465 = arith.constant 0 : index
    %993 = vector.load %arg11[%c8_464, %c0_465] : memref<20x32xf32, #tpu.memory_space<vmem>>, vector<1x32xf32>
    tpu.vector_store %arg11[%c8_464, %c0_465], %980 {strides = array<i32>} : memref<20x32xf32, #tpu.memory_space<vmem>>, vector<1x32xf32>,
    %c0_466 = arith.constant 0 : index
    %c0_467 = arith.constant 0 : index
    %994 = vector.load %arg12[%c0_466, %c0_467] : memref<8x64xf32, #tpu.memory_space<vmem>>, vector<8x64xf32>
    %c0_468 = arith.constant 0 : index
    %c0_469 = arith.constant 0 : index
    %995 = vector.load %arg7[%c0_468, %c0_469] : memref<1x64xf32, #tpu.memory_space<vmem>>, vector<1x64xf32>
    %996 = vector.broadcast %995 : vector<1x64xf32> to vector<8x64xf32>
    %997 = arith.mulf %996, %994 : vector<8x64xf32>
    %c17 = arith.constant 17 : index
    %c0_470 = arith.constant 0 : index
    %998 = vector.load %arg16[%c17, %c0_470] : memref<20x64xf32, #tpu.memory_space<vmem>>, vector<1x64xf32>
    %999 = vector.broadcast %998 : vector<1x64xf32> to vector<8x64xf32>
    %1000 = arith.addf %997, %999 : vector<8x64xf32>
    %c0_471 = arith.constant 0 : index
    %c0_472 = arith.constant 0 : index
    %1001 = vector.load %arg9[%c0_471, %c0_472] : memref<1x64xf32, #tpu.memory_space<vmem>>, vector<1x64xf32>
    %1002 = arith.mulf %1001, %938 : vector<1x64xf32>
    %1003 = vector.broadcast %1002 : vector<1x64xf32> to vector<8x64xf32>
    %1004 = arith.addf %1000, %1003 : vector<8x64xf32>
    %1005 = math.tanh %1004 : vector<8x64xf32>
    %c0_473 = arith.constant 0 : index
    %c0_474 = arith.constant 0 : index
    %1006 = vector.load %arg10[%c0_473, %c0_474] : memref<1x64xf32, #tpu.memory_space<vmem>>, vector<1x64xf32>
    %1007 = vector.broadcast %1006 : vector<1x64xf32> to vector<8x64xf32>
    %1008 = arith.mulf %1005, %1007 : vector<8x64xf32>
    %1009 = vector.extract_strided_slice %1008 {offsets = [0, 0], sizes = [8, 32], strides = [1, 1]} : vector<8x64xf32> to vector<8x32xf32>
    %cst_475 = arith.constant dense<0.000000e+00> : vector<8xf32>
    %1010 = vector.multi_reduction <add>, %1009, %cst_475 [1] : vector<8x32xf32> to vector<8xf32>
    %1011 = vector.shape_cast %1010 : vector<8xf32> to vector<8x1xf32>
    %1012 = vector.extract_strided_slice %1008 {offsets = [0, 32], sizes = [8, 32], strides = [1, 1]} : vector<8x64xf32> to vector<8x32xf32>
    %cst_476 = arith.constant dense<0.000000e+00> : vector<8xf32>
    %1013 = vector.multi_reduction <add>, %1012, %cst_476 [1] : vector<8x32xf32> to vector<8xf32>
    %1014 = vector.shape_cast %1013 : vector<8xf32> to vector<8x1xf32>
    %1015 = tpu.concatenate %1011, %1014 in 1 : vector<8x1xf32>, vector<8x1xf32> -> vector<8x2xf32>
    %1016 = math.exp %1015 : vector<8x2xf32>
    %cst_477 = arith.constant dense<0.000000e+00> : vector<2xf32>
    %1017 = vector.multi_reduction <add>, %1016, %cst_477 [0] : vector<8x2xf32> to vector<2xf32>
    %1018 = vector.shape_cast %1017 : vector<2xf32> to vector<1x2xf32>
    %1019 = tpu.reciprocal %1018 {approx = true} : vector<1x2xf32> -> vector<1x2xf32>
    %1020 = vector.broadcast %1019 : vector<1x2xf32> to vector<8x2xf32>
    %1021 = arith.mulf %1016, %1020 : vector<8x2xf32>
    %1022 = vector.extract_strided_slice %1021 {offsets = [0, 0], sizes = [8, 1], strides = [1, 1]} : vector<8x2xf32> to vector<8x1xf32>
    %1023 = vector.shape_cast %1022 : vector<8x1xf32> to vector<8x1xf32>
    %1024 = vector.broadcast %1023 : vector<8x1xf32> to vector<8x128xf32>
    %1025 = vector.extract_strided_slice %1021 {offsets = [0, 1], sizes = [8, 1], strides = [1, 1]} : vector<8x2xf32> to vector<8x1xf32>
    %1026 = vector.shape_cast %1025 : vector<8x1xf32> to vector<8x1xf32>
    %1027 = vector.broadcast %1026 : vector<8x1xf32> to vector<8x128xf32>
    %1028 = tpu.concatenate %1024, %1027 in 1 : vector<8x128xf32>, vector<8x128xf32> -> vector<8x256xf32>
    %1029 = vector.extract_strided_slice %1024 {offsets = [0, 0], sizes = [8, 32], strides = [1, 1]} : vector<8x128xf32> to vector<8x32xf32>
    %1030 = vector.extract_strided_slice %1027 {offsets = [0, 0], sizes = [8, 32], strides = [1, 1]} : vector<8x128xf32> to vector<8x32xf32>
    %1031 = tpu.concatenate %1029, %1030 in 1 : vector<8x32xf32>, vector<8x32xf32> -> vector<8x64xf32>
    %c0_478 = arith.constant 0 : index
    %c0_479 = arith.constant 0 : index
    %1032 = vector.load %arg14[%c0_478, %c0_479] : memref<8x256xf32, #tpu.memory_space<vmem>>, vector<8x256xf32>
    %1033 = arith.mulf %1028, %1032 : vector<8x256xf32>
    %cst_480 = arith.constant dense<0.000000e+00> : vector<256xf32>
    %1034 = vector.multi_reduction <add>, %1033, %cst_480 [0] : vector<8x256xf32> to vector<256xf32>
    %1035 = vector.shape_cast %1034 : vector<256xf32> to vector<1x256xf32>
    %c0_481 = arith.constant 0 : index
    %c0_482 = arith.constant 0 : index
    %1036 = vector.load %arg13[%c0_481, %c0_482] : memref<8x64xf32, #tpu.memory_space<vmem>>, vector<8x64xf32>
    %1037 = arith.mulf %1031, %1036 : vector<8x64xf32>
    %cst_483 = arith.constant dense<0.000000e+00> : vector<64xf32>
    %1038 = vector.multi_reduction <add>, %1037, %cst_483 [0] : vector<8x64xf32> to vector<64xf32>
    %1039 = vector.shape_cast %1038 : vector<64xf32> to vector<1x64xf32>
    %1040 = arith.mulf %1031, %994 : vector<8x64xf32>
    %cst_484 = arith.constant dense<0.000000e+00> : vector<64xf32>
    %1041 = vector.multi_reduction <add>, %1040, %cst_484 [0] : vector<8x64xf32> to vector<64xf32>
    %1042 = vector.shape_cast %1041 : vector<64xf32> to vector<1x64xf32>
    %c17_485 = arith.constant 17 : index
    %c0_486 = arith.constant 0 : index
    %1043 = vector.load %arg15[%c17_485, %c0_486] : memref<20x128xf32, #tpu.memory_space<vmem>>, vector<1x128xf32>
    %1044 = vector.extract_strided_slice %1035 {offsets = [0, 0], sizes = [1, 128], strides = [1, 1]} : vector<1x256xf32> to vector<1x128xf32>
    %1045 = arith.addf %1043, %1044 : vector<1x128xf32>
    %1046 = vector.extract_strided_slice %1039 {offsets = [0, 0], sizes = [1, 32], strides = [1, 1]} : vector<1x64xf32> to vector<1x32xf32>
    %1047 = arith.negf %1045 : vector<1x128xf32>
    %1048 = math.exp %1047 : vector<1x128xf32>
    %cst_487 = arith.constant 1.000000e+00 : f32
    %1049 = vector.broadcast %cst_487 : f32 to vector<1x128xf32>
    %1050 = arith.addf %1049, %1048 : vector<1x128xf32>
    %1051 = arith.divf %1049, %1050 : vector<1x128xf32>
    %1052 = math.tanh %1045 : vector<1x128xf32>
    %1053 = vector.extract_strided_slice %1051 {offsets = [0, 0], sizes = [1, 32], strides = [1, 1]} : vector<1x128xf32> to vector<1x32xf32>
    %1054 = vector.extract_strided_slice %1051 {offsets = [0, 32], sizes = [1, 32], strides = [1, 1]} : vector<1x128xf32> to vector<1x32xf32>
    %1055 = vector.extract_strided_slice %1052 {offsets = [0, 64], sizes = [1, 32], strides = [1, 1]} : vector<1x128xf32> to vector<1x32xf32>
    %1056 = vector.extract_strided_slice %1051 {offsets = [0, 96], sizes = [1, 32], strides = [1, 1]} : vector<1x128xf32> to vector<1x32xf32>
    %1057 = arith.mulf %1054, %1046 : vector<1x32xf32>
    %1058 = arith.mulf %1053, %1055 : vector<1x32xf32>
    %1059 = arith.addf %1057, %1058 : vector<1x32xf32>
    %1060 = math.tanh %1059 : vector<1x32xf32>
    %1061 = arith.mulf %1056, %1060 : vector<1x32xf32>
    %1062 = arith.truncf %1061 : vector<1x32xf32> to vector<1x32xbf16>
    %c0_488 = arith.constant 0 : index
    %c0_489 = arith.constant 0 : index
    %1063 = vector.load %arg4[%c0_488, %c0_489] : memref<32x128xbf16, #tpu.memory_space<vmem>>, vector<32x128xbf16>
    %cst_490 = arith.constant dense<0.000000e+00> : vector<1x128xf32>
    %1064 = tpu.matmul %1062, %1063, %cst_490 {dimension_numbers = #tpu.dot_dimension_numbers<[1], [0], [0], [1], [0, 0, 1, 1], [], []>} : vector<1x32xbf16>, vector<32x128xbf16>, vector<1x128xf32> -> vector<1x128xf32>
    %1065 = vector.extract_strided_slice %1035 {offsets = [0, 128], sizes = [1, 128], strides = [1, 1]} : vector<1x256xf32> to vector<1x128xf32>
    %1066 = arith.addf %1064, %1065 : vector<1x128xf32>
    %c0_491 = arith.constant 0 : index
    %c0_492 = arith.constant 0 : index
    %1067 = vector.load %arg6[%c0_491, %c0_492] : memref<1x128xf32, #tpu.memory_space<vmem>>, vector<1x128xf32>
    %1068 = arith.addf %1066, %1067 : vector<1x128xf32>
    %1069 = vector.extract_strided_slice %1039 {offsets = [0, 32], sizes = [1, 32], strides = [1, 1]} : vector<1x64xf32> to vector<1x32xf32>
    %1070 = arith.negf %1068 : vector<1x128xf32>
    %1071 = math.exp %1070 : vector<1x128xf32>
    %cst_493 = arith.constant 1.000000e+00 : f32
    %1072 = vector.broadcast %cst_493 : f32 to vector<1x128xf32>
    %1073 = arith.addf %1072, %1071 : vector<1x128xf32>
    %1074 = arith.divf %1072, %1073 : vector<1x128xf32>
    %1075 = math.tanh %1068 : vector<1x128xf32>
    %1076 = vector.extract_strided_slice %1074 {offsets = [0, 0], sizes = [1, 32], strides = [1, 1]} : vector<1x128xf32> to vector<1x32xf32>
    %1077 = vector.extract_strided_slice %1074 {offsets = [0, 32], sizes = [1, 32], strides = [1, 1]} : vector<1x128xf32> to vector<1x32xf32>
    %1078 = vector.extract_strided_slice %1075 {offsets = [0, 64], sizes = [1, 32], strides = [1, 1]} : vector<1x128xf32> to vector<1x32xf32>
    %1079 = vector.extract_strided_slice %1074 {offsets = [0, 96], sizes = [1, 32], strides = [1, 1]} : vector<1x128xf32> to vector<1x32xf32>
    %1080 = arith.mulf %1077, %1069 : vector<1x32xf32>
    %1081 = arith.mulf %1076, %1078 : vector<1x32xf32>
    %1082 = arith.addf %1080, %1081 : vector<1x32xf32>
    %1083 = math.tanh %1082 : vector<1x32xf32>
    %1084 = arith.mulf %1079, %1083 : vector<1x32xf32>
    %c1_494 = arith.constant 1 : index
    %c0_495 = arith.constant 0 : index
    %1085 = vector.load %arg12[%c1_494, %c0_495] : memref<8x64xf32, #tpu.memory_space<vmem>>, vector<1x32xf32>
    tpu.vector_store %arg12[%c1_494, %c0_495], %1061 {strides = array<i32>} : memref<8x64xf32, #tpu.memory_space<vmem>>, vector<1x32xf32>,
    %c1_496 = arith.constant 1 : index
    %c32_497 = arith.constant 32 : index
    %1086 = vector.load %arg12[%c1_496, %c32_497] : memref<8x64xf32, #tpu.memory_space<vmem>>, vector<1x32xf32>
    tpu.vector_store %arg12[%c1_496, %c32_497], %1084 {strides = array<i32>} : memref<8x64xf32, #tpu.memory_space<vmem>>, vector<1x32xf32>,
    %c1_498 = arith.constant 1 : index
    %c0_499 = arith.constant 0 : index
    %1087 = vector.load %arg13[%c1_498, %c0_499] : memref<8x64xf32, #tpu.memory_space<vmem>>, vector<1x32xf32>
    tpu.vector_store %arg13[%c1_498, %c0_499], %1059 {strides = array<i32>} : memref<8x64xf32, #tpu.memory_space<vmem>>, vector<1x32xf32>,
    %c1_500 = arith.constant 1 : index
    %c32_501 = arith.constant 32 : index
    %1088 = vector.load %arg13[%c1_500, %c32_501] : memref<8x64xf32, #tpu.memory_space<vmem>>, vector<1x32xf32>
    tpu.vector_store %arg13[%c1_500, %c32_501], %1082 {strides = array<i32>} : memref<8x64xf32, #tpu.memory_space<vmem>>, vector<1x32xf32>,
    %1089 = arith.truncf %1061 : vector<1x32xf32> to vector<1x32xbf16>
    %c0_502 = arith.constant 0 : index
    %c0_503 = arith.constant 0 : index
    %1090 = vector.load %arg2[%c0_502, %c0_503] : memref<32x128xbf16, #tpu.memory_space<vmem>>, vector<32x128xbf16>
    %cst_504 = arith.constant dense<0.000000e+00> : vector<1x128xf32>
    %1091 = tpu.matmul %1089, %1090, %cst_504 {dimension_numbers = #tpu.dot_dimension_numbers<[1], [0], [0], [1], [0, 0, 1, 1], [], []>} : vector<1x32xbf16>, vector<32x128xbf16>, vector<1x128xf32> -> vector<1x128xf32>
    %c1_505 = arith.constant 1 : index
    %c0_506 = arith.constant 0 : index
    %1092 = vector.load %arg14[%c1_505, %c0_506] : memref<8x256xf32, #tpu.memory_space<vmem>>, vector<1x128xf32>
    tpu.vector_store %arg14[%c1_505, %c0_506], %1091 {strides = array<i32>} : memref<8x256xf32, #tpu.memory_space<vmem>>, vector<1x128xf32>,
    %1093 = arith.truncf %1084 : vector<1x32xf32> to vector<1x32xbf16>
    %c0_507 = arith.constant 0 : index
    %c0_508 = arith.constant 0 : index
    %1094 = vector.load %arg5[%c0_507, %c0_508] : memref<32x128xbf16, #tpu.memory_space<vmem>>, vector<32x128xbf16>
    %cst_509 = arith.constant dense<0.000000e+00> : vector<1x128xf32>
    %1095 = tpu.matmul %1093, %1094, %cst_509 {dimension_numbers = #tpu.dot_dimension_numbers<[1], [0], [0], [1], [0, 0, 1, 1], [], []>} : vector<1x32xbf16>, vector<32x128xbf16>, vector<1x128xf32> -> vector<1x128xf32>
    %c1_510 = arith.constant 1 : index
    %c128_511 = arith.constant 128 : index
    %1096 = vector.load %arg14[%c1_510, %c128_511] : memref<8x256xf32, #tpu.memory_space<vmem>>, vector<1x128xf32>
    tpu.vector_store %arg14[%c1_510, %c128_511], %1095 {strides = array<i32>} : memref<8x256xf32, #tpu.memory_space<vmem>>, vector<1x128xf32>,
    %c9_512 = arith.constant 9 : index
    %c0_513 = arith.constant 0 : index
    %1097 = vector.load %arg11[%c9_512, %c0_513] : memref<20x32xf32, #tpu.memory_space<vmem>>, vector<1x32xf32>
    tpu.vector_store %arg11[%c9_512, %c0_513], %1084 {strides = array<i32>} : memref<20x32xf32, #tpu.memory_space<vmem>>, vector<1x32xf32>,
    %c0_514 = arith.constant 0 : index
    %c0_515 = arith.constant 0 : index
    %1098 = vector.load %arg12[%c0_514, %c0_515] : memref<8x64xf32, #tpu.memory_space<vmem>>, vector<8x64xf32>
    %c0_516 = arith.constant 0 : index
    %c0_517 = arith.constant 0 : index
    %1099 = vector.load %arg7[%c0_516, %c0_517] : memref<1x64xf32, #tpu.memory_space<vmem>>, vector<1x64xf32>
    %1100 = vector.broadcast %1099 : vector<1x64xf32> to vector<8x64xf32>
    %1101 = arith.mulf %1100, %1098 : vector<8x64xf32>
    %c18 = arith.constant 18 : index
    %c0_518 = arith.constant 0 : index
    %1102 = vector.load %arg16[%c18, %c0_518] : memref<20x64xf32, #tpu.memory_space<vmem>>, vector<1x64xf32>
    %1103 = vector.broadcast %1102 : vector<1x64xf32> to vector<8x64xf32>
    %1104 = arith.addf %1101, %1103 : vector<8x64xf32>
    %c0_519 = arith.constant 0 : index
    %c0_520 = arith.constant 0 : index
    %1105 = vector.load %arg9[%c0_519, %c0_520] : memref<1x64xf32, #tpu.memory_space<vmem>>, vector<1x64xf32>
    %1106 = arith.mulf %1105, %1042 : vector<1x64xf32>
    %1107 = vector.broadcast %1106 : vector<1x64xf32> to vector<8x64xf32>
    %1108 = arith.addf %1104, %1107 : vector<8x64xf32>
    %1109 = math.tanh %1108 : vector<8x64xf32>
    %c0_521 = arith.constant 0 : index
    %c0_522 = arith.constant 0 : index
    %1110 = vector.load %arg10[%c0_521, %c0_522] : memref<1x64xf32, #tpu.memory_space<vmem>>, vector<1x64xf32>
    %1111 = vector.broadcast %1110 : vector<1x64xf32> to vector<8x64xf32>
    %1112 = arith.mulf %1109, %1111 : vector<8x64xf32>
    %1113 = vector.extract_strided_slice %1112 {offsets = [0, 0], sizes = [8, 32], strides = [1, 1]} : vector<8x64xf32> to vector<8x32xf32>
    %cst_523 = arith.constant dense<0.000000e+00> : vector<8xf32>
    %1114 = vector.multi_reduction <add>, %1113, %cst_523 [1] : vector<8x32xf32> to vector<8xf32>
    %1115 = vector.shape_cast %1114 : vector<8xf32> to vector<8x1xf32>
    %1116 = vector.extract_strided_slice %1112 {offsets = [0, 32], sizes = [8, 32], strides = [1, 1]} : vector<8x64xf32> to vector<8x32xf32>
    %cst_524 = arith.constant dense<0.000000e+00> : vector<8xf32>
    %1117 = vector.multi_reduction <add>, %1116, %cst_524 [1] : vector<8x32xf32> to vector<8xf32>
    %1118 = vector.shape_cast %1117 : vector<8xf32> to vector<8x1xf32>
    %1119 = tpu.concatenate %1115, %1118 in 1 : vector<8x1xf32>, vector<8x1xf32> -> vector<8x2xf32>
    %1120 = math.exp %1119 : vector<8x2xf32>
    %cst_525 = arith.constant dense<0.000000e+00> : vector<2xf32>
    %1121 = vector.multi_reduction <add>, %1120, %cst_525 [0] : vector<8x2xf32> to vector<2xf32>
    %1122 = vector.shape_cast %1121 : vector<2xf32> to vector<1x2xf32>
    %1123 = tpu.reciprocal %1122 {approx = true} : vector<1x2xf32> -> vector<1x2xf32>
    %1124 = vector.broadcast %1123 : vector<1x2xf32> to vector<8x2xf32>
    %1125 = arith.mulf %1120, %1124 : vector<8x2xf32>
    %1126 = vector.extract_strided_slice %1125 {offsets = [0, 0], sizes = [8, 1], strides = [1, 1]} : vector<8x2xf32> to vector<8x1xf32>
    %1127 = vector.shape_cast %1126 : vector<8x1xf32> to vector<8x1xf32>
    %1128 = vector.broadcast %1127 : vector<8x1xf32> to vector<8x128xf32>
    %1129 = vector.extract_strided_slice %1125 {offsets = [0, 1], sizes = [8, 1], strides = [1, 1]} : vector<8x2xf32> to vector<8x1xf32>
    %1130 = vector.shape_cast %1129 : vector<8x1xf32> to vector<8x1xf32>
    %1131 = vector.broadcast %1130 : vector<8x1xf32> to vector<8x128xf32>
    %1132 = tpu.concatenate %1128, %1131 in 1 : vector<8x128xf32>, vector<8x128xf32> -> vector<8x256xf32>
    %1133 = vector.extract_strided_slice %1128 {offsets = [0, 0], sizes = [8, 32], strides = [1, 1]} : vector<8x128xf32> to vector<8x32xf32>
    %1134 = vector.extract_strided_slice %1131 {offsets = [0, 0], sizes = [8, 32], strides = [1, 1]} : vector<8x128xf32> to vector<8x32xf32>
    %1135 = tpu.concatenate %1133, %1134 in 1 : vector<8x32xf32>, vector<8x32xf32> -> vector<8x64xf32>
    %c0_526 = arith.constant 0 : index
    %c0_527 = arith.constant 0 : index
    %1136 = vector.load %arg14[%c0_526, %c0_527] : memref<8x256xf32, #tpu.memory_space<vmem>>, vector<8x256xf32>
    %1137 = arith.mulf %1132, %1136 : vector<8x256xf32>
    %cst_528 = arith.constant dense<0.000000e+00> : vector<256xf32>
    %1138 = vector.multi_reduction <add>, %1137, %cst_528 [0] : vector<8x256xf32> to vector<256xf32>
    %1139 = vector.shape_cast %1138 : vector<256xf32> to vector<1x256xf32>
    %c0_529 = arith.constant 0 : index
    %c0_530 = arith.constant 0 : index
    %1140 = vector.load %arg13[%c0_529, %c0_530] : memref<8x64xf32, #tpu.memory_space<vmem>>, vector<8x64xf32>
    %1141 = arith.mulf %1135, %1140 : vector<8x64xf32>
    %cst_531 = arith.constant dense<0.000000e+00> : vector<64xf32>
    %1142 = vector.multi_reduction <add>, %1141, %cst_531 [0] : vector<8x64xf32> to vector<64xf32>
    %1143 = vector.shape_cast %1142 : vector<64xf32> to vector<1x64xf32>
    %1144 = arith.mulf %1135, %1098 : vector<8x64xf32>
    %cst_532 = arith.constant dense<0.000000e+00> : vector<64xf32>
    %1145 = vector.multi_reduction <add>, %1144, %cst_532 [0] : vector<8x64xf32> to vector<64xf32>
    %1146 = vector.shape_cast %1145 : vector<64xf32> to vector<1x64xf32>
    %c18_533 = arith.constant 18 : index
    %c0_534 = arith.constant 0 : index
    %1147 = vector.load %arg15[%c18_533, %c0_534] : memref<20x128xf32, #tpu.memory_space<vmem>>, vector<1x128xf32>
    %1148 = vector.extract_strided_slice %1139 {offsets = [0, 0], sizes = [1, 128], strides = [1, 1]} : vector<1x256xf32> to vector<1x128xf32>
    %1149 = arith.addf %1147, %1148 : vector<1x128xf32>
    %1150 = vector.extract_strided_slice %1143 {offsets = [0, 0], sizes = [1, 32], strides = [1, 1]} : vector<1x64xf32> to vector<1x32xf32>
    %1151 = arith.negf %1149 : vector<1x128xf32>
    %1152 = math.exp %1151 : vector<1x128xf32>
    %cst_535 = arith.constant 1.000000e+00 : f32
    %1153 = vector.broadcast %cst_535 : f32 to vector<1x128xf32>
    %1154 = arith.addf %1153, %1152 : vector<1x128xf32>
    %1155 = arith.divf %1153, %1154 : vector<1x128xf32>
    %1156 = math.tanh %1149 : vector<1x128xf32>
    %1157 = vector.extract_strided_slice %1155 {offsets = [0, 0], sizes = [1, 32], strides = [1, 1]} : vector<1x128xf32> to vector<1x32xf32>
    %1158 = vector.extract_strided_slice %1155 {offsets = [0, 32], sizes = [1, 32], strides = [1, 1]} : vector<1x128xf32> to vector<1x32xf32>
    %1159 = vector.extract_strided_slice %1156 {offsets = [0, 64], sizes = [1, 32], strides = [1, 1]} : vector<1x128xf32> to vector<1x32xf32>
    %1160 = vector.extract_strided_slice %1155 {offsets = [0, 96], sizes = [1, 32], strides = [1, 1]} : vector<1x128xf32> to vector<1x32xf32>
    %1161 = arith.mulf %1158, %1150 : vector<1x32xf32>
    %1162 = arith.mulf %1157, %1159 : vector<1x32xf32>
    %1163 = arith.addf %1161, %1162 : vector<1x32xf32>
    %1164 = math.tanh %1163 : vector<1x32xf32>
    %1165 = arith.mulf %1160, %1164 : vector<1x32xf32>
    %1166 = arith.truncf %1165 : vector<1x32xf32> to vector<1x32xbf16>
    %c0_536 = arith.constant 0 : index
    %c0_537 = arith.constant 0 : index
    %1167 = vector.load %arg4[%c0_536, %c0_537] : memref<32x128xbf16, #tpu.memory_space<vmem>>, vector<32x128xbf16>
    %cst_538 = arith.constant dense<0.000000e+00> : vector<1x128xf32>
    %1168 = tpu.matmul %1166, %1167, %cst_538 {dimension_numbers = #tpu.dot_dimension_numbers<[1], [0], [0], [1], [0, 0, 1, 1], [], []>} : vector<1x32xbf16>, vector<32x128xbf16>, vector<1x128xf32> -> vector<1x128xf32>
    %1169 = vector.extract_strided_slice %1139 {offsets = [0, 128], sizes = [1, 128], strides = [1, 1]} : vector<1x256xf32> to vector<1x128xf32>
    %1170 = arith.addf %1168, %1169 : vector<1x128xf32>
    %c0_539 = arith.constant 0 : index
    %c0_540 = arith.constant 0 : index
    %1171 = vector.load %arg6[%c0_539, %c0_540] : memref<1x128xf32, #tpu.memory_space<vmem>>, vector<1x128xf32>
    %1172 = arith.addf %1170, %1171 : vector<1x128xf32>
    %1173 = vector.extract_strided_slice %1143 {offsets = [0, 32], sizes = [1, 32], strides = [1, 1]} : vector<1x64xf32> to vector<1x32xf32>
    %1174 = arith.negf %1172 : vector<1x128xf32>
    %1175 = math.exp %1174 : vector<1x128xf32>
    %cst_541 = arith.constant 1.000000e+00 : f32
    %1176 = vector.broadcast %cst_541 : f32 to vector<1x128xf32>
    %1177 = arith.addf %1176, %1175 : vector<1x128xf32>
    %1178 = arith.divf %1176, %1177 : vector<1x128xf32>
    %1179 = math.tanh %1172 : vector<1x128xf32>
    %1180 = vector.extract_strided_slice %1178 {offsets = [0, 0], sizes = [1, 32], strides = [1, 1]} : vector<1x128xf32> to vector<1x32xf32>
    %1181 = vector.extract_strided_slice %1178 {offsets = [0, 32], sizes = [1, 32], strides = [1, 1]} : vector<1x128xf32> to vector<1x32xf32>
    %1182 = vector.extract_strided_slice %1179 {offsets = [0, 64], sizes = [1, 32], strides = [1, 1]} : vector<1x128xf32> to vector<1x32xf32>
    %1183 = vector.extract_strided_slice %1178 {offsets = [0, 96], sizes = [1, 32], strides = [1, 1]} : vector<1x128xf32> to vector<1x32xf32>
    %1184 = arith.mulf %1181, %1173 : vector<1x32xf32>
    %1185 = arith.mulf %1180, %1182 : vector<1x32xf32>
    %1186 = arith.addf %1184, %1185 : vector<1x32xf32>
    %1187 = math.tanh %1186 : vector<1x32xf32>
    %1188 = arith.mulf %1183, %1187 : vector<1x32xf32>
    %c2_542 = arith.constant 2 : index
    %c0_543 = arith.constant 0 : index
    %1189 = vector.load %arg12[%c2_542, %c0_543] : memref<8x64xf32, #tpu.memory_space<vmem>>, vector<1x32xf32>
    tpu.vector_store %arg12[%c2_542, %c0_543], %1165 {strides = array<i32>} : memref<8x64xf32, #tpu.memory_space<vmem>>, vector<1x32xf32>,
    %c2_544 = arith.constant 2 : index
    %c32_545 = arith.constant 32 : index
    %1190 = vector.load %arg12[%c2_544, %c32_545] : memref<8x64xf32, #tpu.memory_space<vmem>>, vector<1x32xf32>
    tpu.vector_store %arg12[%c2_544, %c32_545], %1188 {strides = array<i32>} : memref<8x64xf32, #tpu.memory_space<vmem>>, vector<1x32xf32>,
    %c2_546 = arith.constant 2 : index
    %c0_547 = arith.constant 0 : index
    %1191 = vector.load %arg13[%c2_546, %c0_547] : memref<8x64xf32, #tpu.memory_space<vmem>>, vector<1x32xf32>
    tpu.vector_store %arg13[%c2_546, %c0_547], %1163 {strides = array<i32>} : memref<8x64xf32, #tpu.memory_space<vmem>>, vector<1x32xf32>,
    %c2_548 = arith.constant 2 : index
    %c32_549 = arith.constant 32 : index
    %1192 = vector.load %arg13[%c2_548, %c32_549] : memref<8x64xf32, #tpu.memory_space<vmem>>, vector<1x32xf32>
    tpu.vector_store %arg13[%c2_548, %c32_549], %1186 {strides = array<i32>} : memref<8x64xf32, #tpu.memory_space<vmem>>, vector<1x32xf32>,
    %1193 = arith.truncf %1165 : vector<1x32xf32> to vector<1x32xbf16>
    %c0_550 = arith.constant 0 : index
    %c0_551 = arith.constant 0 : index
    %1194 = vector.load %arg2[%c0_550, %c0_551] : memref<32x128xbf16, #tpu.memory_space<vmem>>, vector<32x128xbf16>
    %cst_552 = arith.constant dense<0.000000e+00> : vector<1x128xf32>
    %1195 = tpu.matmul %1193, %1194, %cst_552 {dimension_numbers = #tpu.dot_dimension_numbers<[1], [0], [0], [1], [0, 0, 1, 1], [], []>} : vector<1x32xbf16>, vector<32x128xbf16>, vector<1x128xf32> -> vector<1x128xf32>
    %c2_553 = arith.constant 2 : index
    %c0_554 = arith.constant 0 : index
    %1196 = vector.load %arg14[%c2_553, %c0_554] : memref<8x256xf32, #tpu.memory_space<vmem>>, vector<1x128xf32>
    tpu.vector_store %arg14[%c2_553, %c0_554], %1195 {strides = array<i32>} : memref<8x256xf32, #tpu.memory_space<vmem>>, vector<1x128xf32>,
    %1197 = arith.truncf %1188 : vector<1x32xf32> to vector<1x32xbf16>
    %c0_555 = arith.constant 0 : index
    %c0_556 = arith.constant 0 : index
    %1198 = vector.load %arg5[%c0_555, %c0_556] : memref<32x128xbf16, #tpu.memory_space<vmem>>, vector<32x128xbf16>
    %cst_557 = arith.constant dense<0.000000e+00> : vector<1x128xf32>
    %1199 = tpu.matmul %1197, %1198, %cst_557 {dimension_numbers = #tpu.dot_dimension_numbers<[1], [0], [0], [1], [0, 0, 1, 1], [], []>} : vector<1x32xbf16>, vector<32x128xbf16>, vector<1x128xf32> -> vector<1x128xf32>
    %c2_558 = arith.constant 2 : index
    %c128_559 = arith.constant 128 : index
    %1200 = vector.load %arg14[%c2_558, %c128_559] : memref<8x256xf32, #tpu.memory_space<vmem>>, vector<1x128xf32>
    tpu.vector_store %arg14[%c2_558, %c128_559], %1199 {strides = array<i32>} : memref<8x256xf32, #tpu.memory_space<vmem>>, vector<1x128xf32>,
    %c10_560 = arith.constant 10 : index
    %c0_561 = arith.constant 0 : index
    %1201 = vector.load %arg11[%c10_560, %c0_561] : memref<20x32xf32, #tpu.memory_space<vmem>>, vector<1x32xf32>
    tpu.vector_store %arg11[%c10_560, %c0_561], %1188 {strides = array<i32>} : memref<20x32xf32, #tpu.memory_space<vmem>>, vector<1x32xf32>,
    %c0_562 = arith.constant 0 : index
    %c0_563 = arith.constant 0 : index
    %1202 = vector.load %arg12[%c0_562, %c0_563] : memref<8x64xf32, #tpu.memory_space<vmem>>, vector<8x64xf32>
    %c0_564 = arith.constant 0 : index
    %c0_565 = arith.constant 0 : index
    %1203 = vector.load %arg7[%c0_564, %c0_565] : memref<1x64xf32, #tpu.memory_space<vmem>>, vector<1x64xf32>
    %1204 = vector.broadcast %1203 : vector<1x64xf32> to vector<8x64xf32>
    %1205 = arith.mulf %1204, %1202 : vector<8x64xf32>
    %c19 = arith.constant 19 : index
    %c0_566 = arith.constant 0 : index
    %1206 = vector.load %arg16[%c19, %c0_566] : memref<20x64xf32, #tpu.memory_space<vmem>>, vector<1x64xf32>
    %1207 = vector.broadcast %1206 : vector<1x64xf32> to vector<8x64xf32>
    %1208 = arith.addf %1205, %1207 : vector<8x64xf32>
    %c0_567 = arith.constant 0 : index
    %c0_568 = arith.constant 0 : index
    %1209 = vector.load %arg9[%c0_567, %c0_568] : memref<1x64xf32, #tpu.memory_space<vmem>>, vector<1x64xf32>
    %1210 = arith.mulf %1209, %1146 : vector<1x64xf32>
    %1211 = vector.broadcast %1210 : vector<1x64xf32> to vector<8x64xf32>
    %1212 = arith.addf %1208, %1211 : vector<8x64xf32>
    %1213 = math.tanh %1212 : vector<8x64xf32>
    %c0_569 = arith.constant 0 : index
    %c0_570 = arith.constant 0 : index
    %1214 = vector.load %arg10[%c0_569, %c0_570] : memref<1x64xf32, #tpu.memory_space<vmem>>, vector<1x64xf32>
    %1215 = vector.broadcast %1214 : vector<1x64xf32> to vector<8x64xf32>
    %1216 = arith.mulf %1213, %1215 : vector<8x64xf32>
    %1217 = vector.extract_strided_slice %1216 {offsets = [0, 0], sizes = [8, 32], strides = [1, 1]} : vector<8x64xf32> to vector<8x32xf32>
    %cst_571 = arith.constant dense<0.000000e+00> : vector<8xf32>
    %1218 = vector.multi_reduction <add>, %1217, %cst_571 [1] : vector<8x32xf32> to vector<8xf32>
    %1219 = vector.shape_cast %1218 : vector<8xf32> to vector<8x1xf32>
    %1220 = vector.extract_strided_slice %1216 {offsets = [0, 32], sizes = [8, 32], strides = [1, 1]} : vector<8x64xf32> to vector<8x32xf32>
    %cst_572 = arith.constant dense<0.000000e+00> : vector<8xf32>
    %1221 = vector.multi_reduction <add>, %1220, %cst_572 [1] : vector<8x32xf32> to vector<8xf32>
    %1222 = vector.shape_cast %1221 : vector<8xf32> to vector<8x1xf32>
    %1223 = tpu.concatenate %1219, %1222 in 1 : vector<8x1xf32>, vector<8x1xf32> -> vector<8x2xf32>
    %1224 = math.exp %1223 : vector<8x2xf32>
    %cst_573 = arith.constant dense<0.000000e+00> : vector<2xf32>
    %1225 = vector.multi_reduction <add>, %1224, %cst_573 [0] : vector<8x2xf32> to vector<2xf32>
    %1226 = vector.shape_cast %1225 : vector<2xf32> to vector<1x2xf32>
    %1227 = tpu.reciprocal %1226 {approx = true} : vector<1x2xf32> -> vector<1x2xf32>
    %1228 = vector.broadcast %1227 : vector<1x2xf32> to vector<8x2xf32>
    %1229 = arith.mulf %1224, %1228 : vector<8x2xf32>
    %1230 = vector.extract_strided_slice %1229 {offsets = [0, 0], sizes = [8, 1], strides = [1, 1]} : vector<8x2xf32> to vector<8x1xf32>
    %1231 = vector.shape_cast %1230 : vector<8x1xf32> to vector<8x1xf32>
    %1232 = vector.broadcast %1231 : vector<8x1xf32> to vector<8x128xf32>
    %1233 = vector.extract_strided_slice %1229 {offsets = [0, 1], sizes = [8, 1], strides = [1, 1]} : vector<8x2xf32> to vector<8x1xf32>
    %1234 = vector.shape_cast %1233 : vector<8x1xf32> to vector<8x1xf32>
    %1235 = vector.broadcast %1234 : vector<8x1xf32> to vector<8x128xf32>
    %1236 = tpu.concatenate %1232, %1235 in 1 : vector<8x128xf32>, vector<8x128xf32> -> vector<8x256xf32>
    %1237 = vector.extract_strided_slice %1232 {offsets = [0, 0], sizes = [8, 32], strides = [1, 1]} : vector<8x128xf32> to vector<8x32xf32>
    %1238 = vector.extract_strided_slice %1235 {offsets = [0, 0], sizes = [8, 32], strides = [1, 1]} : vector<8x128xf32> to vector<8x32xf32>
    %1239 = tpu.concatenate %1237, %1238 in 1 : vector<8x32xf32>, vector<8x32xf32> -> vector<8x64xf32>
    %c0_574 = arith.constant 0 : index
    %c0_575 = arith.constant 0 : index
    %1240 = vector.load %arg14[%c0_574, %c0_575] : memref<8x256xf32, #tpu.memory_space<vmem>>, vector<8x256xf32>
    %1241 = arith.mulf %1236, %1240 : vector<8x256xf32>
    %cst_576 = arith.constant dense<0.000000e+00> : vector<256xf32>
    %1242 = vector.multi_reduction <add>, %1241, %cst_576 [0] : vector<8x256xf32> to vector<256xf32>
    %1243 = vector.shape_cast %1242 : vector<256xf32> to vector<1x256xf32>
    %c0_577 = arith.constant 0 : index
    %c0_578 = arith.constant 0 : index
    %1244 = vector.load %arg13[%c0_577, %c0_578] : memref<8x64xf32, #tpu.memory_space<vmem>>, vector<8x64xf32>
    %1245 = arith.mulf %1239, %1244 : vector<8x64xf32>
    %cst_579 = arith.constant dense<0.000000e+00> : vector<64xf32>
    %1246 = vector.multi_reduction <add>, %1245, %cst_579 [0] : vector<8x64xf32> to vector<64xf32>
    %1247 = vector.shape_cast %1246 : vector<64xf32> to vector<1x64xf32>
    %c19_580 = arith.constant 19 : index
    %c0_581 = arith.constant 0 : index
    %1248 = vector.load %arg15[%c19_580, %c0_581] : memref<20x128xf32, #tpu.memory_space<vmem>>, vector<1x128xf32>
    %1249 = vector.extract_strided_slice %1243 {offsets = [0, 0], sizes = [1, 128], strides = [1, 1]} : vector<1x256xf32> to vector<1x128xf32>
    %1250 = arith.addf %1248, %1249 : vector<1x128xf32>
    %1251 = vector.extract_strided_slice %1247 {offsets = [0, 0], sizes = [1, 32], strides = [1, 1]} : vector<1x64xf32> to vector<1x32xf32>
    %1252 = arith.negf %1250 : vector<1x128xf32>
    %1253 = math.exp %1252 : vector<1x128xf32>
    %cst_582 = arith.constant 1.000000e+00 : f32
    %1254 = vector.broadcast %cst_582 : f32 to vector<1x128xf32>
    %1255 = arith.addf %1254, %1253 : vector<1x128xf32>
    %1256 = arith.divf %1254, %1255 : vector<1x128xf32>
    %1257 = math.tanh %1250 : vector<1x128xf32>
    %1258 = vector.extract_strided_slice %1256 {offsets = [0, 0], sizes = [1, 32], strides = [1, 1]} : vector<1x128xf32> to vector<1x32xf32>
    %1259 = vector.extract_strided_slice %1256 {offsets = [0, 32], sizes = [1, 32], strides = [1, 1]} : vector<1x128xf32> to vector<1x32xf32>
    %1260 = vector.extract_strided_slice %1257 {offsets = [0, 64], sizes = [1, 32], strides = [1, 1]} : vector<1x128xf32> to vector<1x32xf32>
    %1261 = vector.extract_strided_slice %1256 {offsets = [0, 96], sizes = [1, 32], strides = [1, 1]} : vector<1x128xf32> to vector<1x32xf32>
    %1262 = arith.mulf %1259, %1251 : vector<1x32xf32>
    %1263 = arith.mulf %1258, %1260 : vector<1x32xf32>
    %1264 = arith.addf %1262, %1263 : vector<1x32xf32>
    %1265 = math.tanh %1264 : vector<1x32xf32>
    %1266 = arith.mulf %1261, %1265 : vector<1x32xf32>
    %1267 = arith.truncf %1266 : vector<1x32xf32> to vector<1x32xbf16>
    %c0_583 = arith.constant 0 : index
    %c0_584 = arith.constant 0 : index
    %1268 = vector.load %arg4[%c0_583, %c0_584] : memref<32x128xbf16, #tpu.memory_space<vmem>>, vector<32x128xbf16>
    %cst_585 = arith.constant dense<0.000000e+00> : vector<1x128xf32>
    %1269 = tpu.matmul %1267, %1268, %cst_585 {dimension_numbers = #tpu.dot_dimension_numbers<[1], [0], [0], [1], [0, 0, 1, 1], [], []>} : vector<1x32xbf16>, vector<32x128xbf16>, vector<1x128xf32> -> vector<1x128xf32>
    %1270 = vector.extract_strided_slice %1243 {offsets = [0, 128], sizes = [1, 128], strides = [1, 1]} : vector<1x256xf32> to vector<1x128xf32>
    %1271 = arith.addf %1269, %1270 : vector<1x128xf32>
    %c0_586 = arith.constant 0 : index
    %c0_587 = arith.constant 0 : index
    %1272 = vector.load %arg6[%c0_586, %c0_587] : memref<1x128xf32, #tpu.memory_space<vmem>>, vector<1x128xf32>
    %1273 = arith.addf %1271, %1272 : vector<1x128xf32>
    %1274 = vector.extract_strided_slice %1247 {offsets = [0, 32], sizes = [1, 32], strides = [1, 1]} : vector<1x64xf32> to vector<1x32xf32>
    %1275 = arith.negf %1273 : vector<1x128xf32>
    %1276 = math.exp %1275 : vector<1x128xf32>
    %cst_588 = arith.constant 1.000000e+00 : f32
    %1277 = vector.broadcast %cst_588 : f32 to vector<1x128xf32>
    %1278 = arith.addf %1277, %1276 : vector<1x128xf32>
    %1279 = arith.divf %1277, %1278 : vector<1x128xf32>
    %1280 = math.tanh %1273 : vector<1x128xf32>
    %1281 = vector.extract_strided_slice %1279 {offsets = [0, 0], sizes = [1, 32], strides = [1, 1]} : vector<1x128xf32> to vector<1x32xf32>
    %1282 = vector.extract_strided_slice %1279 {offsets = [0, 32], sizes = [1, 32], strides = [1, 1]} : vector<1x128xf32> to vector<1x32xf32>
    %1283 = vector.extract_strided_slice %1280 {offsets = [0, 64], sizes = [1, 32], strides = [1, 1]} : vector<1x128xf32> to vector<1x32xf32>
    %1284 = vector.extract_strided_slice %1279 {offsets = [0, 96], sizes = [1, 32], strides = [1, 1]} : vector<1x128xf32> to vector<1x32xf32>
    %1285 = arith.mulf %1282, %1274 : vector<1x32xf32>
    %1286 = arith.mulf %1281, %1283 : vector<1x32xf32>
    %1287 = arith.addf %1285, %1286 : vector<1x32xf32>
    %1288 = math.tanh %1287 : vector<1x32xf32>
    %1289 = arith.mulf %1284, %1288 : vector<1x32xf32>
    %c3_589 = arith.constant 3 : index
    %c0_590 = arith.constant 0 : index
    %1290 = vector.load %arg12[%c3_589, %c0_590] : memref<8x64xf32, #tpu.memory_space<vmem>>, vector<1x32xf32>
    tpu.vector_store %arg12[%c3_589, %c0_590], %1266 {strides = array<i32>} : memref<8x64xf32, #tpu.memory_space<vmem>>, vector<1x32xf32>,
    %c3_591 = arith.constant 3 : index
    %c32_592 = arith.constant 32 : index
    %1291 = vector.load %arg12[%c3_591, %c32_592] : memref<8x64xf32, #tpu.memory_space<vmem>>, vector<1x32xf32>
    tpu.vector_store %arg12[%c3_591, %c32_592], %1289 {strides = array<i32>} : memref<8x64xf32, #tpu.memory_space<vmem>>, vector<1x32xf32>,
    %c3_593 = arith.constant 3 : index
    %c0_594 = arith.constant 0 : index
    %1292 = vector.load %arg13[%c3_593, %c0_594] : memref<8x64xf32, #tpu.memory_space<vmem>>, vector<1x32xf32>
    tpu.vector_store %arg13[%c3_593, %c0_594], %1264 {strides = array<i32>} : memref<8x64xf32, #tpu.memory_space<vmem>>, vector<1x32xf32>,
    %c3_595 = arith.constant 3 : index
    %c32_596 = arith.constant 32 : index
    %1293 = vector.load %arg13[%c3_595, %c32_596] : memref<8x64xf32, #tpu.memory_space<vmem>>, vector<1x32xf32>
    tpu.vector_store %arg13[%c3_595, %c32_596], %1287 {strides = array<i32>} : memref<8x64xf32, #tpu.memory_space<vmem>>, vector<1x32xf32>,
    %1294 = arith.truncf %1266 : vector<1x32xf32> to vector<1x32xbf16>
    %c0_597 = arith.constant 0 : index
    %c0_598 = arith.constant 0 : index
    %1295 = vector.load %arg2[%c0_597, %c0_598] : memref<32x128xbf16, #tpu.memory_space<vmem>>, vector<32x128xbf16>
    %cst_599 = arith.constant dense<0.000000e+00> : vector<1x128xf32>
    %1296 = tpu.matmul %1294, %1295, %cst_599 {dimension_numbers = #tpu.dot_dimension_numbers<[1], [0], [0], [1], [0, 0, 1, 1], [], []>} : vector<1x32xbf16>, vector<32x128xbf16>, vector<1x128xf32> -> vector<1x128xf32>
    %c3_600 = arith.constant 3 : index
    %c0_601 = arith.constant 0 : index
    %1297 = vector.load %arg14[%c3_600, %c0_601] : memref<8x256xf32, #tpu.memory_space<vmem>>, vector<1x128xf32>
    tpu.vector_store %arg14[%c3_600, %c0_601], %1296 {strides = array<i32>} : memref<8x256xf32, #tpu.memory_space<vmem>>, vector<1x128xf32>,
    %1298 = arith.truncf %1289 : vector<1x32xf32> to vector<1x32xbf16>
    %c0_602 = arith.constant 0 : index
    %c0_603 = arith.constant 0 : index
    %1299 = vector.load %arg5[%c0_602, %c0_603] : memref<32x128xbf16, #tpu.memory_space<vmem>>, vector<32x128xbf16>
    %cst_604 = arith.constant dense<0.000000e+00> : vector<1x128xf32>
    %1300 = tpu.matmul %1298, %1299, %cst_604 {dimension_numbers = #tpu.dot_dimension_numbers<[1], [0], [0], [1], [0, 0, 1, 1], [], []>} : vector<1x32xbf16>, vector<32x128xbf16>, vector<1x128xf32> -> vector<1x128xf32>
    %c3_605 = arith.constant 3 : index
    %c128_606 = arith.constant 128 : index
    %1301 = vector.load %arg14[%c3_605, %c128_606] : memref<8x256xf32, #tpu.memory_space<vmem>>, vector<1x128xf32>
    tpu.vector_store %arg14[%c3_605, %c128_606], %1300 {strides = array<i32>} : memref<8x256xf32, #tpu.memory_space<vmem>>, vector<1x128xf32>,
    %c11_607 = arith.constant 11 : index
    %c0_608 = arith.constant 0 : index
    %1302 = vector.load %arg11[%c11_607, %c0_608] : memref<20x32xf32, #tpu.memory_space<vmem>>, vector<1x32xf32>
    tpu.vector_store %arg11[%c11_607, %c0_608], %1289 {strides = array<i32>} : memref<20x32xf32, #tpu.memory_space<vmem>>, vector<1x32xf32>,
    return
  }
}

</mosaic_0001>

<llo_original>
// kernel: tpu_custom_call.1
$region0: #{tpu_custom_call.1}
  #allocation0 [shape = 'u32[]', space=smem, size = 0x4, offset = 0x4, fixed_abs, tag = 'smem constant byte address 0x4 - core index']
  #allocation1 [shape = 'u32[72,128]{1,0:T(1,128)}', space=vmem, size = 0x9000, scoped, tag = 'internal scratch']
  #allocation2 [shape = 'f32[8,64]{1,0:T(8,128)}', space=vmem, size = 0x1000, scoped, tag = 'scratch operand']
  #allocation3 [shape = 'f32[8,64]{1,0:T(8,128)}', space=vmem, size = 0x1000, scoped, tag = 'scratch operand']
  #allocation4 [shape = 'f32[8,256]{1,0:T(8,128)}', space=vmem, size = 0x2000, scoped, tag = 'scratch operand']
  #allocation5 [shape = 'f32[20,128]{1,0:T(8,128)}', space=vmem, size = 0x3000, scoped, tag = 'scratch operand']
  #allocation6 [shape = 'f32[20,64]{1,0:T(8,128)}', space=vmem, size = 0x3000, scoped, tag = 'scratch operand']
  %s0 = inlined_call_operand.hbm [shape: f32[20,32], index: 0, kind: input, shape index: {}]
  %s1 = inlined_call_operand.hbm [shape: bf16[32,128], index: 1, kind: input, shape index: {}]
  %s2 = inlined_call_operand.hbm [shape: bf16[32,128], index: 2, kind: input, shape index: {}]
  %s3 = inlined_call_operand.vmem [shape: f32[1,128], index: 3, kind: input, shape index: {}]
  %s4 = inlined_call_operand.hbm [shape: bf16[32,128], index: 4, kind: input, shape index: {}]
  %s5 = inlined_call_operand.hbm [shape: bf16[32,128], index: 5, kind: input, shape index: {}]
  %s6 = inlined_call_operand.vmem [shape: f32[1,128], index: 6, kind: input, shape index: {}]
  %s7 = inlined_call_operand.vmem [shape: f32[1,64], index: 7, kind: input, shape index: {}]
  %s8 = inlined_call_operand.hbm [shape: bf16[32,64], index: 8, kind: input, shape index: {}]
  %s9 = inlined_call_operand.vmem [shape: f32[1,64], index: 9, kind: input, shape index: {}]
  %s10 = inlined_call_operand.vmem [shape: f32[1,64], index: 10, kind: input, shape index: {}]
  %s11 = inlined_call_operand.hbm [shape: f32[20,32], index: 11, kind: output, shape index: {}]
  %s12 = sld [smem:[#allocation0]]
  $region78: #{tpu_custom_call.1} parent=0
    _
  %s14 = ssub.s32 1, %s12
  %s15 = scalar_select 0, %s14, %s12
  $region1: #{tpu_custom_call.1} parent=0
    #allocation7 [shape = 'u8[12288]{0}', space=vmem, size = 0x3000, scoped, tag = 'input window, operand 0, single buffered']
    #allocation8 [shape = 's32[1]{0}', space=sflag, size = 0x4, scoped, tag = 'scoped memory for tpu_custom_call.1']
    #allocation9 [shape = 's32[1]{0}', space=sflag, size = 0x4, scoped, tag = 'scoped memory for tpu_custom_call.1']
    #allocation10 [shape = 'u8[8192]{0}', space=vmem, size = 0x2000, scoped, tag = 'input window, operand 1, single buffered']
    #allocation11 [shape = 's32[1]{0}', space=sflag, size = 0x4, scoped, tag = 'scoped memory for tpu_custom_call.1']
    #allocation12 [shape = 'u8[8192]{0}', space=vmem, size = 0x2000, scoped, tag = 'input window, operand 2, single buffered']
    #allocation13 [shape = 'u8[8192]{0}', space=vmem, size = 0x2000, scoped, tag = 'input window, operand 4, single buffered']
    #allocation14 [shape = 's32[1]{0}', space=sflag, size = 0x4, scoped, tag = 'scoped memory for tpu_custom_call.1']
    #allocation15 [shape = 'u8[8192]{0}', space=vmem, size = 0x2000, scoped, tag = 'input window, operand 5, single buffered']
    #allocation16 [shape = 'u8[8192]{0}', space=vmem, size = 0x2000, scoped, tag = 'input window, operand 8, single buffered']
    #allocation17 [shape = 's32[1]{0}', space=sflag, size = 0x4, scoped, tag = 'scoped memory for tpu_custom_call.1']
    #allocation18 [shape = 'u8[12288]{0}', space=vmem, size = 0x3000, scoped, tag = 'output window, operand 0, single buffered']
    %16 = vsyncpa [#allocation8], 0
    %17 = vsyncpa [#allocation11], 0
    %18 = vsyncpa [#allocation14], 0
    %19 = vsyncpa [#allocation17], 0
    %20 = vsyncpa [#allocation9], 0
    // Predicated region
    $region2: #{tpu_custom_call.1} parent=1 // pred_check
      _
    $region3: #{tpu_custom_call.1} parent=1 // pred_check_branch
      %22 = sbr.rel (0) target = $region5
    $region4: #{tpu_custom_call.1} parent=1 // pred_region
      %24 = vsyncadd [#allocation8], 0
      %s25 = sshll.u32 %s0, 4
      %s26 = int_to_ptr.hbm [resolvable:$true] %s25
      %s27 = sshll.u32 [#allocation7], 4
      %s28 = int_to_ptr.vmem [resolvable:$true] %s27
      %33 = dma.hbm_to_vmem [thread:$0]  %s26, 384, %s28, [#allocation8], 128, 128, 8
    $region5: #{tpu_custom_call.1} parent=1 // pred_fallthru
      _
    // Predicated region
    $region6: #{tpu_custom_call.1} parent=1 // pred_check
      _
    $region7: #{tpu_custom_call.1} parent=1 // pred_check_branch
      %35 = sbr.rel (0) target = $region9
    $region8: #{tpu_custom_call.1} parent=1 // pred_region
      %37 = vsyncadd [#allocation11], 0
      %s38 = sshll.u32 %s1, 4
      %s39 = int_to_ptr.hbm [resolvable:$true] %s38
      %s40 = sshll.u32 [#allocation10], 4
      %s41 = int_to_ptr.vmem [resolvable:$true] %s40
      %46 = dma.hbm_to_vmem [thread:$0]  %s39, 256, %s41, [#allocation11], 64, 64, 4
    $region9: #{tpu_custom_call.1} parent=1 // pred_fallthru
      _
    // Predicated region
    $region10: #{tpu_custom_call.1} parent=1 // pred_check
      _
    $region11: #{tpu_custom_call.1} parent=1 // pred_check_branch
      %48 = sbr.rel (0) target = $region13
    $region12: #{tpu_custom_call.1} parent=1 // pred_region
      %50 = vsyncadd [#allocation11], 0
      %s51 = sshll.u32 %s2, 4
      %s52 = int_to_ptr.hbm [resolvable:$true] %s51
      %s53 = sshll.u32 [#allocation12], 4
      %s54 = int_to_ptr.vmem [resolvable:$true] %s53
      %59 = dma.hbm_to_vmem [thread:$0]  %s52, 256, %s54, [#allocation11], 64, 64, 4
    $region13: #{tpu_custom_call.1} parent=1 // pred_fallthru
      _
    // Predicated region
    $region14: #{tpu_custom_call.1} parent=1 // pred_check
      _
    $region15: #{tpu_custom_call.1} parent=1 // pred_check_branch
      %61 = sbr.rel (0) target = $region17
    $region16: #{tpu_custom_call.1} parent=1 // pred_region
      _
    $region17: #{tpu_custom_call.1} parent=1 // pred_fallthru
      _
    // Predicated region
    $region18: #{tpu_custom_call.1} parent=1 // pred_check
      _
    $region19: #{tpu_custom_call.1} parent=1 // pred_check_branch
      %63 = sbr.rel (0) target = $region21
    $region20: #{tpu_custom_call.1} parent=1 // pred_region
      %65 = vsyncadd [#allocation14], 0
      %s66 = sshll.u32 %s4, 4
      %s67 = int_to_ptr.hbm [resolvable:$true] %s66
      %s68 = sshll.u32 [#allocation13], 4
      %s69 = int_to_ptr.vmem [resolvable:$true] %s68
      %74 = dma.hbm_to_vmem [thread:$0]  %s67, 256, %s69, [#allocation14], 64, 64, 4
    $region21: #{tpu_custom_call.1} parent=1 // pred_fallthru
      _
    // Predicated region
    $region22: #{tpu_custom_call.1} parent=1 // pred_check
      _
    $region23: #{tpu_custom_call.1} parent=1 // pred_check_branch
      %76 = sbr.rel (0) target = $region25
    $region24: #{tpu_custom_call.1} parent=1 // pred_region
      %78 = vsyncadd [#allocation14], 0
      %s79 = sshll.u32 %s5, 4
      %s80 = int_to_ptr.hbm [resolvable:$true] %s79
      %s81 = sshll.u32 [#allocation15], 4
      %s82 = int_to_ptr.vmem [resolvable:$true] %s81
      %87 = dma.hbm_to_vmem [thread:$0]  %s80, 256, %s82, [#allocation14], 64, 64, 4
    $region25: #{tpu_custom_call.1} parent=1 // pred_fallthru
      _
    // Predicated region
    $region26: #{tpu_custom_call.1} parent=1 // pred_check
      _
    $region27: #{tpu_custom_call.1} parent=1 // pred_check_branch
      %89 = sbr.rel (0) target = $region29
    $region28: #{tpu_custom_call.1} parent=1 // pred_region
      _
    $region29: #{tpu_custom_call.1} parent=1 // pred_fallthru
      _
    // Predicated region
    $region30: #{tpu_custom_call.1} parent=1 // pred_check
      _
    $region31: #{tpu_custom_call.1} parent=1 // pred_check_branch
      %91 = sbr.rel (0) target = $region33
    $region32: #{tpu_custom_call.1} parent=1 // pred_region
      _
    $region33: #{tpu_custom_call.1} parent=1 // pred_fallthru
      _
    // Predicated region
    $region34: #{tpu_custom_call.1} parent=1 // pred_check
      _
    $region35: #{tpu_custom_call.1} parent=1 // pred_check_branch
      %93 = sbr.rel (0) target = $region37
    $region36: #{tpu_custom_call.1} parent=1 // pred_region
      %95 = vsyncadd [#allocation17], 0
      %s96 = sshll.u32 %s8, 4
      %s97 = int_to_ptr.hbm [resolvable:$true] %s96
      %s98 = sshll.u32 [#allocation16], 4
      %s99 = int_to_ptr.vmem [resolvable:$true] %s98
      %104 = dma.hbm_to_vmem [thread:$0]  %s97, 256, %s99, [#allocation17], 64, 64, 4
    $region37: #{tpu_custom_call.1} parent=1 // pred_fallthru
      _
    // Predicated region
    $region38: #{tpu_custom_call.1} parent=1 // pred_check
      _
    $region39: #{tpu_custom_call.1} parent=1 // pred_check_branch
      %106 = sbr.rel (0) target = $region41
    $region40: #{tpu_custom_call.1} parent=1 // pred_region
      _
    $region41: #{tpu_custom_call.1} parent=1 // pred_fallthru
      _
    // Predicated region
    $region42: #{tpu_custom_call.1} parent=1 // pred_check
      _
    $region43: #{tpu_custom_call.1} parent=1 // pred_check_branch
      %108 = sbr.rel (0) target = $region45
    $region44: #{tpu_custom_call.1} parent=1 // pred_region
      _
    $region45: #{tpu_custom_call.1} parent=1 // pred_fallthru
      _
    // Predicated region
    $region46: #{tpu_custom_call.1} parent=1 // pred_check
      _
    $region47: #{tpu_custom_call.1} parent=1 // pred_check_branch
      %110 = sbr.rel (0) target = $region49
    $region48: #{tpu_custom_call.1} parent=1 // pred_region
      %112 = dma.done [#allocation8], 384
    $region49: #{tpu_custom_call.1} parent=1 // pred_fallthru
      _
    // Predicated region
    $region50: #{tpu_custom_call.1} parent=1 // pred_check
      _
    $region51: #{tpu_custom_call.1} parent=1 // pred_check_branch
      %114 = sbr.rel (0) target = $region53
    $region52: #{tpu_custom_call.1} parent=1 // pred_region
      %116 = dma.done [#allocation11], 256
    $region53: #{tpu_custom_call.1} parent=1 // pred_fallthru
      _
    // Predicated region
    $region54: #{tpu_custom_call.1} parent=1 // pred_check
      _
    $region55: #{tpu_custom_call.1} parent=1 // pred_check_branch
      %118 = sbr.rel (0) target = $region57
    $region56: #{tpu_custom_call.1} parent=1 // pred_region
      %120 = dma.done [#allocation11], 256
    $region57: #{tpu_custom_call.1} parent=1 // pred_fallthru
      _
    // Predicated region
    $region58: #{tpu_custom_call.1} parent=1 // pred_check
      _
    $region59: #{tpu_custom_call.1} parent=1 // pred_check_branch
      %122 = sbr.rel (0) target = $region61
    $region60: #{tpu_custom_call.1} parent=1 // pred_region
      %124 = dma.done [#allocation14], 256
    $region61: #{tpu_custom_call.1} parent=1 // pred_fallthru
      _
    // Predicated region
    $region62: #{tpu_custom_call.1} parent=1 // pred_check
      _
    $region63: #{tpu_custom_call.1} parent=1 // pred_check_branch
      %126 = sbr.rel (0) target = $region65
    $region64: #{tpu_custom_call.1} parent=1 // pred_region
      %128 = dma.done [#allocation14], 256
    $region65: #{tpu_custom_call.1} parent=1 // pred_fallthru
      _
    // Predicated region
    $region66: #{tpu_custom_call.1} parent=1 // pred_check
      _
    $region67: #{tpu_custom_call.1} parent=1 // pred_check_branch
      %130 = sbr.rel (0) target = $region69
    $region68: #{tpu_custom_call.1} parent=1 // pred_region
      %132 = dma.done [#allocation17], 256
    $region69: #{tpu_custom_call.1} parent=1 // pred_fallthru
      _
    %v134 = vld [vmem:[#allocation7] sm:$0xff]
    %v135 = vld [vmem:[#allocation7 + $0x8] sm:$0xff]
    %v136 = vld [vmem:[#allocation7 + $0x10] sm:$0xf]
    %v137 = vpack.c.bf16 %v135, %v134
    %v138 = vpack.c.bf16 %v136, %v136
    %v139 = vld [vmem:[#allocation10] sm:$0xf]
    %v140 = vld [vmem:[#allocation10 + $0x4] sm:$0xf]
    %v141 = vld [vmem:[#allocation10 + $0x8] sm:$0xf]
    %v142 = vld [vmem:[#allocation10 + $0xc] sm:$0xf]
    %v143 = vld [vmem:[%s3] sm:$0x1]
    %v145 = vperm.slane %v143, 0
    %v151 = vunpack.c.l.b16 %v139
    %v152 = vunpack.c.l.b16 %v140
    %v153 = vunpack.c.l.b16 %v141
    %v154 = vunpack.c.l.b16 %v142
    %v155 = vpack.c.b16 %v152, %v151
    %v156 = vpack.c.b16 %v154, %v153
    %vm159 = vcmask 261120
    %v161 = vsel %vm159, %v137, 0
    %v164 = vsel %vm159, %v138, 0
    %166 = vmatpush.bf16.msra.mxu0 0
    %167 = vmatpush.bf16.msra.mxu0 0
    %168 = vmatpush.bf16.msra.mxu0 0
    %169 = vmatpush.bf16.msra.mxu0 0
    %170 = vmatpush.bf16.msra.mxu0 0
    %171 = vmatpush.bf16.msra.mxu0 0
    %172 = vmatpush.bf16.msra.mxu0 %v156
    %173 = vmatpush.bf16.msra.mxu0 %v155
    %174 = vmatmul.bf16.gmra.mxu0 %v161
    %v175 = vpop.f32.mrf.mxu0
    %v176 = vadd.f32 %v145, %v175
    %v177 = vpop.f32.mrf.mxu0
    %v178 = vadd.f32 %v145, %v177
    %179 = vmatmul.bf16.gmra.mxu0 %v164
    %v180 = vpop.f32.mrf.mxu0
    %v181 = vadd.f32 %v145, %v180
    %v182 = vpop.f32.mrf.mxu0
    %183 = vdwg.mxu0
    %v184 = vld [vmem:[#allocation16] sm:$0xf]
    %v185 = vld [vmem:[#allocation16 + $0x4] sm:$0xf]
    %v186 = vld [vmem:[#allocation16 + $0x8] sm:$0xf]
    %v187 = vld [vmem:[#allocation16 + $0xc] sm:$0xf]
    %v192 = vunpack.c.l.b16 %v184
    %v193 = vunpack.c.l.b16 %v185
    %v194 = vunpack.c.l.b16 %v186
    %v195 = vunpack.c.l.b16 %v187
    %v196 = vpack.c.b16 %v193, %v192
    %v197 = vpack.c.b16 %v195, %v194
    %200 = vmatpush.bf16.msra.mxu0 0
    %201 = vmatpush.bf16.msra.mxu0 0
    %202 = vmatpush.bf16.msra.mxu0 0
    %203 = vmatpush.bf16.msra.mxu0 0
    %204 = vmatpush.bf16.msra.mxu0 0
    %205 = vmatpush.bf16.msra.mxu0 0
    %206 = vmatpush.bf16.msra.mxu0 %v197
    %207 = vmatpush.bf16.msra.mxu0 %v196
    %208 = vmatmul.bf16.gmra.mxu0 %v161
    %v209 = vpop.f32.mrf.mxu0
    %v210 = vadd.f32 0.0, %v209
    %v211 = vpop.f32.mrf.mxu0
    %v212 = vadd.f32 0.0, %v211
    %213 = vmatmul.bf16.gmra.mxu0 %v164
    %v214 = vpop.f32.mrf.mxu0
    %v215 = vadd.f32 0.0, %v214
    %v216 = vpop.f32.mrf.mxu0
    %217 = vdwg.mxu0
    %218 = vst [vmem:[#allocation5] sm:$0xff] %v176
    %219 = vst [vmem:[#allocation5 + $0x8] sm:$0xff] %v178
    %220 = vst [vmem:[#allocation5 + $0x10] sm:$0xf] %v181
    %vm221 = vcmask 523264
    %222 = vst.msk [vmem:[#allocation6] sm:$0xff] %vm221, %v210
    %223 = vst.msk [vmem:[#allocation6 + $0x8] sm:$0xff] %vm221, %v212
    %vm224 = vcmask 519168
    %225 = vst.msk [vmem:[#allocation6 + $0x10] sm:$0xf] %vm224, %v215
    %v226 = vxor.u32 %v176, 2147483648
    %v227 = vmul.f32 %v226, 1.442695
    %v228 = vpow.pop %v227
    %v229 = vadd.f32 %v228, 1.0
    %v230 = vrcp.pop %v229
    %v231 = vmul.f32 %v229, %v230
    %v232 = vsub.f32 1.0, %v231
    %v233 = vmul.f32 %v230, %v232
    %v234 = vadd.f32 %v230, %v233
    %vm235 = vweird.f32 %v229
    %vm236 = vweird.f32 %v230
    %vm237 = vmor %vm235, %vm236
    %v238 = vsel %vm237, %v230, %v234
    %v239 = vand.u32 2147483647, %v229
    %vm240 = vcmp.eq.f32.partialorder %v239, 8.507059e+37
    %v241 = vand.u32 %v229, 2147483648
    %v242 = vor.u32 1.1754944e-38, %v241
    %v243 = vsel %vm240, %v242, %v238
    %v244 = vmul.f32 1.0, %v243
    %v245 = vtanh.pop %v176
    %247 = vrot.lane.b32.xlu0 %v245, 64
    %v248 = vpop.permute.xlu0 %247
    %v250 = vmul.f32 %v244, %v248
    %v251 = vtanh.pop %v250
    %253 = vrot.lane.b32.xlu0 %v251, 96
    %v254 = vpop.permute.xlu0 %253
    %v256 = vmul.f32 %v244, %v254
    %v257 = vpack.c.bf16 %v256, %v256
    %v258 = vld [vmem:[#allocation13] sm:$0xf]
    %v259 = vld [vmem:[#allocation13 + $0x4] sm:$0xf]
    %v260 = vld [vmem:[#allocation13 + $0x8] sm:$0xf]
    %v261 = vld [vmem:[#allocation13 + $0xc] sm:$0xf]
    %v262 = vld [vmem:[%s6] sm:$0x1]
    %v264 = vperm.slane %v262, 0
    %267 = vrot.lane.b32.xlu0 %v257, 32
    %v268 = vpop.permute.xlu0 %267
    %v273 = vunpack.c.l.b16 %v258
    %v274 = vunpack.c.l.b16 %v259
    %v275 = vunpack.c.l.b16 %v260
    %v276 = vunpack.c.l.b16 %v261
    %v277 = vpack.c.b16 %v274, %v273
    %v278 = vpack.c.b16 %v276, %v275
    %v282 = vsel %vm159, %v268, 0
    %284 = vmatpush.bf16.msra.mxu0 0
    %285 = vmatpush.bf16.msra.mxu0 0
    %286 = vmatpush.bf16.msra.mxu0 0
    %287 = vmatpush.bf16.msra.mxu0 0
    %288 = vmatpush.bf16.msra.mxu0 0
    %289 = vmatpush.bf16.msra.mxu0 0
    %290 = vmatpush.bf16.msra.mxu0 %v278
    %291 = vmatpush.bf16.msra.mxu0 %v277
    %292 = vmatmul.bf16.gmra.mxu0 %v282
    %v293 = vpop.f32.mrf.mxu0
    %v294 = vadd.f32 %v264, %v293
    %v295 = vpop.f32.mrf.mxu0
    %296 = vdwg.mxu0
    %v297 = vxor.u32 %v294, 2147483648
    %v298 = vmul.f32 %v297, 1.442695
    %v299 = vpow.pop %v298
    %v300 = vadd.f32 %v299, 1.0
    %v301 = vrcp.pop %v300
    %v302 = vmul.f32 %v300, %v301
    %v303 = vsub.f32 1.0, %v302
    %v304 = vmul.f32 %v301, %v303
    %v305 = vadd.f32 %v301, %v304
    %vm306 = vweird.f32 %v300
    %vm307 = vweird.f32 %v301
    %vm308 = vmor %vm306, %vm307
    %v309 = vsel %vm308, %v301, %v305
    %v310 = vand.u32 2147483647, %v300
    %vm311 = vcmp.eq.f32.partialorder %v310, 8.507059e+37
    %v312 = vand.u32 %v300, 2147483648
    %v313 = vor.u32 1.1754944e-38, %v312
    %v314 = vsel %vm311, %v313, %v309
    %v315 = vmul.f32 1.0, %v314
    %v316 = vtanh.pop %v294
    %318 = vrot.lane.b32.xlu0 %v316, 64
    %v319 = vpop.permute.xlu0 %318
    %v321 = vmul.f32 %v315, %v319
    %v322 = vtanh.pop %v321
    %324 = vrot.lane.b32.xlu0 %v322, 96
    %v325 = vpop.permute.xlu0 %324
    %v327 = vmul.f32 %v315, %v325
    %329 = vrot.lane.b32.xlu0 %v256, 32
    %v330 = vpop.permute.xlu0 %329
    %332 = vst.msk [vmem:[#allocation2] sm:$0xff] %vm159, %v330
    %334 = vrot.lane.b32.xlu0 %v327, 64
    %v335 = vpop.permute.xlu0 %334
    %vm337 = vcmask 523520
    %338 = vst.msk [vmem:[#allocation2] sm:$0xff] %vm337, %v335
    %339 = vst.msk [vmem:[#allocation3] sm:$0xff] %vm159, %v250
    %341 = vrot.lane.b32.xlu0 %v321, 32
    %v342 = vpop.permute.xlu0 %341
    %344 = vst.msk [vmem:[#allocation3] sm:$0xff] %vm337, %v342
    %v345 = vld [vmem:[#allocation12] sm:$0xf]
    %v346 = vld [vmem:[#allocation12 + $0x4] sm:$0xf]
    %v347 = vld [vmem:[#allocation12 + $0x8] sm:$0xf]
    %v348 = vld [vmem:[#allocation12 + $0xc] sm:$0xf]
    %v353 = vunpack.c.l.b16 %v345
    %v354 = vunpack.c.l.b16 %v346
    %v355 = vunpack.c.l.b16 %v347
    %v356 = vunpack.c.l.b16 %v348
    %v357 = vpack.c.b16 %v354, %v353
    %v358 = vpack.c.b16 %v356, %v355
    %361 = vmatpush.bf16.msra.mxu0 0
    %362 = vmatpush.bf16.msra.mxu0 0
    %363 = vmatpush.bf16.msra.mxu0 0
    %364 = vmatpush.bf16.msra.mxu0 0
    %365 = vmatpush.bf16.msra.mxu0 0
    %366 = vmatpush.bf16.msra.mxu0 0
    %367 = vmatpush.bf16.msra.mxu0 %v358
    %368 = vmatpush.bf16.msra.mxu0 %v357
    %369 = vmatmul.bf16.gmra.mxu0 %v282
    %v370 = vpop.f32.mrf.mxu0
    %v371 = vadd.f32 0.0, %v370
    %v372 = vpop.f32.mrf.mxu0
    %373 = vdwg.mxu0
    %374 = vst [vmem:[#allocation4] sm:$0xff] %v371
    %v375 = vpack.c.bf16 %v327, %v327
    %v376 = vld [vmem:[#allocation15] sm:$0xf]
    %v377 = vld [vmem:[#allocation15 + $0x4] sm:$0xf]
    %v378 = vld [vmem:[#allocation15 + $0x8] sm:$0xf]
    %v379 = vld [vmem:[#allocation15 + $0xc] sm:$0xf]
    %381 = vrot.lane.b32.xlu0 %v375, 32
    %v382 = vpop.permute.xlu0 %381
    %v387 = vunpack.c.l.b16 %v376
    %v388 = vunpack.c.l.b16 %v377
    %v389 = vunpack.c.l.b16 %v378
    %v390 = vunpack.c.l.b16 %v379
    %v391 = vpack.c.b16 %v388, %v387
    %v392 = vpack.c.b16 %v390, %v389
    %v396 = vsel %vm159, %v382, 0
    %398 = vmatpush.bf16.msra.mxu0 0
    %399 = vmatpush.bf16.msra.mxu0 0
    %400 = vmatpush.bf16.msra.mxu0 0
    %401 = vmatpush.bf16.msra.mxu0 0
    %402 = vmatpush.bf16.msra.mxu0 0
    %403 = vmatpush.bf16.msra.mxu0 0
    %404 = vmatpush.bf16.msra.mxu0 %v392
    %405 = vmatpush.bf16.msra.mxu0 %v391
    %406 = vmatmul.bf16.gmra.mxu0 %v396
    %v407 = vpop.f32.mrf.mxu0
    %v408 = vadd.f32 0.0, %v407
    %v409 = vpop.f32.mrf.mxu0
    %410 = vdwg.mxu0
    %411 = vst [vmem:[#allocation4 + $0x8] sm:$0xff] %v408
    %412 = vrot.lane.b32.xlu0 %v327, 32
    %v413 = vpop.permute.xlu0 %412
    %415 = vst.msk [vmem:[#allocation18] sm:$0xff] %vm159, %v413
    %416 = vst.msk [vmem:[#allocation18 + $0x8] sm:$0xff] %vm159, 0.0
    %vm417 = vcmask 257024
    %418 = vst.msk [vmem:[#allocation18 + $0x10] sm:$0xf] %vm417, 0.0
    %v419 = vld [vmem:[#allocation2] sm:$0xff]
    %v420 = vld [vmem:[%s7] sm:$0x1]
    %v422 = vperm.slane %v420, 0
    %v424 = vmul.f32 %v422, %v419
    %v425 = vld [vmem:[#allocation6 + $0x8] sm:$0x1]
    %v426 = vperm.slane %v425, 0
    %v427 = vadd.f32 %v424, %v426
    %v428 = vld [vmem:[%s9] sm:$0x1]
    %v429 = vmul.f32 %v428, 0.0
    %v431 = vperm.slane %v429, 0
    %v433 = vadd.f32 %v427, %v431
    %v434 = vtanh.pop %v433
    %v435 = vld [vmem:[%s10] sm:$0x1]
    %v437 = vperm.slane %v435, 0
    %v439 = vmul.f32 %v434, %v437
    %v440 = vsel %vm159, %v439, 0.0
    %441 = vadd.xlane.f32.xlu0 %v440
    %v442 = vpop.xlane.xlu0 %441
    %444 = vrot.lane.b32.xlu0 %v439, 96
    %v445 = vpop.permute.xlu0 %444
    %v447 = vsel %vm159, %v445, 0.0
    %448 = vadd.xlane.f32.xlu0 %v447
    %v449 = vpop.xlane.xlu0 %448
    %vm450 = vcmask 7168
    %v451 = vsel %vm450, %v442, %v449
    %v452 = vmul.f32 %v451, 1.442695
    %v453 = vpow.pop %v452
    %vm454 = vcmask 15360
    %v455 = vsel %vm454, %v453, 0.0
    %v456 = vrot.slane %v455, 4
    %v457 = vadd.f32 %v455, %v456
    %v458 = vrot.slane %v457, 2
    %v459 = vadd.f32 %v457, %v458
    %v460 = vrot.slane %v459, 1
    %v461 = vadd.f32 %v459, %v460
    %v462 = vrcp.pop %v461
    %v463 = vmul.f32 %v453, %v462
    %465 = vset.pattern.permute.xlu0 0
    %466 = vperm.xlu0 %465, %v463
    %v467 = vpop.permute.xlu0 %466
    %469 = vset.pattern.permute.xlu0 1
    %470 = vperm.xlu0 %469, %v463
    %v471 = vpop.permute.xlu0 %470
    %v473 = vsel %vm159, %v467, %v471
    %v474 = vld [vmem:[#allocation4] sm:$0xff]
    %v475 = vld [vmem:[#allocation4 + $0x8] sm:$0xff]
    %v476 = vmul.f32 %v467, %v474
    %v477 = vmul.f32 %v471, %v475
    %v478 = vrot.slane %v476, 4
    %v479 = vadd.f32 %v476, %v478
    %v480 = vrot.slane %v479, 2
    %v481 = vadd.f32 %v479, %v480
    %v482 = vrot.slane %v481, 1
    %v483 = vadd.f32 %v481, %v482
    %v484 = vrot.slane %v477, 4
    %v485 = vadd.f32 %v477, %v484
    %v486 = vrot.slane %v485, 2
    %v487 = vadd.f32 %v485, %v486
    %v488 = vrot.slane %v487, 1
    %v489 = vadd.f32 %v487, %v488
    %v490 = vld [vmem:[#allocation3] sm:$0xff]
    %v491 = vmul.f32 %v473, %v490
    %v492 = vsel %vm221, %v491, 0.0
    %v493 = vrot.slane %v492, 4
    %v494 = vadd.f32 %v492, %v493
    %v495 = vrot.slane %v494, 2
    %v496 = vadd.f32 %v494, %v495
    %v497 = vrot.slane %v496, 1
    %v498 = vadd.f32 %v496, %v497
    %v499 = vmul.f32 %v473, %v419
    %v500 = vsel %vm221, %v499, 0.0
    %v501 = vrot.slane %v500, 4
    %v502 = vadd.f32 %v500, %v501
    %v503 = vrot.slane %v502, 2
    %v504 = vadd.f32 %v502, %v503
    %v505 = vrot.slane %v504, 1
    %v506 = vadd.f32 %v504, %v505
    %v507 = vld [vmem:[#allocation5 + $0x8] sm:$0x1]
    %v508 = vadd.f32 %v507, %v483
    %v509 = vxor.u32 %v508, 2147483648
    %v510 = vmul.f32 %v509, 1.442695
    %v511 = vpow.pop %v510
    %v512 = vadd.f32 %v511, 1.0
    %v513 = vrcp.pop %v512
    %v514 = vmul.f32 %v512, %v513
    %v515 = vsub.f32 1.0, %v514
    %v516 = vmul.f32 %v513, %v515
    %v517 = vadd.f32 %v513, %v516
    %vm518 = vweird.f32 %v512
    %vm519 = vweird.f32 %v513
    %vm520 = vmor %vm518, %vm519
    %v521 = vsel %vm520, %v513, %v517
    %v522 = vand.u32 2147483647, %v512
    %vm523 = vcmp.eq.f32.partialorder %v522, 8.507059e+37
    %v524 = vand.u32 %v512, 2147483648
    %v525 = vor.u32 1.1754944e-38, %v524
    %v526 = vsel %vm523, %v525, %v521
    %v527 = vmul.f32 1.0, %v526
    %v528 = vtanh.pop %v508
    %530 = vrot.lane.b32.xlu0 %v498, 32
    %v531 = vpop.permute.xlu0 %530
    %v533 = vmul.f32 %v527, %v531
    %535 = vrot.lane.b32.xlu0 %v528, 64
    %v536 = vpop.permute.xlu0 %535
    %v538 = vmul.f32 %v527, %v536
    %540 = vrot.lane.b32.xlu0 %v538, 32
    %v541 = vpop.permute.xlu0 %540
    %v543 = vadd.f32 %v533, %v541
    %v544 = vtanh.pop %v543
    %546 = vrot.lane.b32.xlu0 %v544, 64
    %v547 = vpop.permute.xlu0 %546
    %v549 = vmul.f32 %v527, %v547
    %v550 = vpack.c.bf16 %v549, %v549
    %v551 = vld [vmem:[#allocation13] sm:$0xf]
    %v552 = vld [vmem:[#allocation13 + $0x4] sm:$0xf]
    %v553 = vld [vmem:[#allocation13 + $0x8] sm:$0xf]
    %v554 = vld [vmem:[#allocation13 + $0xc] sm:$0xf]
    %556 = vrot.lane.b32.xlu0 %v550, 32
    %v557 = vpop.permute.xlu0 %556
    %v562 = vunpack.c.l.b16 %v551
    %v563 = vunpack.c.l.b16 %v552
    %v564 = vunpack.c.l.b16 %v553
    %v565 = vunpack.c.l.b16 %v554
    %v566 = vpack.c.b16 %v563, %v562
    %v567 = vpack.c.b16 %v565, %v564
    %v571 = vsel %vm159, %v557, 0
    %573 = vmatpush.bf16.msra.mxu0 0
    %574 = vmatpush.bf16.msra.mxu0 0
    %575 = vmatpush.bf16.msra.mxu0 0
    %576 = vmatpush.bf16.msra.mxu0 0
    %577 = vmatpush.bf16.msra.mxu0 0
    %578 = vmatpush.bf16.msra.mxu0 0
    %579 = vmatpush.bf16.msra.mxu0 %v567
    %580 = vmatpush.bf16.msra.mxu0 %v566
    %581 = vmatmul.bf16.gmra.mxu0 %v571
    %v582 = vpop.f32.mrf.mxu0
    %v583 = vadd.f32 %v489, %v582
    %v584 = vpop.f32.mrf.mxu0
    %585 = vdwg.mxu0
    %v586 = vld [vmem:[%s6] sm:$0x1]
    %v587 = vadd.f32 %v583, %v586
    %v588 = vxor.u32 %v587, 2147483648
    %v589 = vmul.f32 %v588, 1.442695
    %v590 = vpow.pop %v589
    %v591 = vadd.f32 %v590, 1.0
    %v592 = vrcp.pop %v591
    %v593 = vmul.f32 %v591, %v592
    %v594 = vsub.f32 1.0, %v593
    %v595 = vmul.f32 %v592, %v594
    %v596 = vadd.f32 %v592, %v595
    %vm597 = vweird.f32 %v591
    %vm598 = vweird.f32 %v592
    %vm599 = vmor %vm597, %vm598
    %v600 = vsel %vm599, %v592, %v596
    %v601 = vand.u32 2147483647, %v591
    %vm602 = vcmp.eq.f32.partialorder %v601, 8.507059e+37
    %v603 = vand.u32 %v591, 2147483648
    %v604 = vor.u32 1.1754944e-38, %v603
    %v605 = vsel %vm602, %v604, %v600
    %v606 = vmul.f32 1.0, %v605
    %v607 = vtanh.pop %v587
    %v608 = vmul.f32 %v606, %v498
    %610 = vrot.lane.b32.xlu0 %v607, 64
    %v611 = vpop.permute.xlu0 %610
    %v613 = vmul.f32 %v606, %v611
    %615 = vrot.lane.b32.xlu0 %v613, 32
    %v616 = vpop.permute.xlu0 %615
    %v618 = vadd.f32 %v608, %v616
    %v619 = vtanh.pop %v618
    %621 = vrot.lane.b32.xlu0 %v619, 64
    %v622 = vpop.permute.xlu0 %621
    %v624 = vmul.f32 %v606, %v622
    %626 = vrot.lane.b32.xlu0 %v549, 32
    %v627 = vpop.permute.xlu0 %626
    %vm629 = vcmask 253952
    %630 = vst.msk [vmem:[#allocation2] sm:$0x1] %vm629, %v627
    %632 = vrot.lane.b32.xlu0 %v624, 64
    %v633 = vpop.permute.xlu0 %632
    %vm635 = vcmask 516352
    %636 = vst.msk [vmem:[#allocation2] sm:$0x1] %vm635, %v633
    %638 = vrot.lane.b32.xlu0 %v543, 96
    %v639 = vpop.permute.xlu0 %638
    %641 = vst.msk [vmem:[#allocation3] sm:$0x1] %vm629, %v639
    %642 = vst.msk [vmem:[#allocation3] sm:$0x1] %vm635, %v618
    %v643 = vld [vmem:[#allocation12] sm:$0xf]
    %v644 = vld [vmem:[#allocation12 + $0x4] sm:$0xf]
    %v645 = vld [vmem:[#allocation12 + $0x8] sm:$0xf]
    %v646 = vld [vmem:[#allocation12 + $0xc] sm:$0xf]
    %v651 = vunpack.c.l.b16 %v643
    %v652 = vunpack.c.l.b16 %v644
    %v653 = vunpack.c.l.b16 %v645
    %v654 = vunpack.c.l.b16 %v646
    %v655 = vpack.c.b16 %v652, %v651
    %v656 = vpack.c.b16 %v654, %v653
    %659 = vmatpush.bf16.msra.mxu0 0
    %660 = vmatpush.bf16.msra.mxu0 0
    %661 = vmatpush.bf16.msra.mxu0 0
    %662 = vmatpush.bf16.msra.mxu0 0
    %663 = vmatpush.bf16.msra.mxu0 0
    %664 = vmatpush.bf16.msra.mxu0 0
    %665 = vmatpush.bf16.msra.mxu0 %v656
    %666 = vmatpush.bf16.msra.mxu0 %v655
    %667 = vmatmul.bf16.gmra.mxu0 %v571
    %v668 = vpop.f32.mrf.mxu0
    %v669 = vadd.f32 0.0, %v668
    %v670 = vpop.f32.mrf.mxu0
    %671 = vdwg.mxu0
    %672 = vst [vmem:[#allocation4] sm:$0x1] %v669
    %v673 = vpack.c.bf16 %v624, %v624
    %v674 = vld [vmem:[#allocation15] sm:$0xf]
    %v675 = vld [vmem:[#allocation15 + $0x4] sm:$0xf]
    %v676 = vld [vmem:[#allocation15 + $0x8] sm:$0xf]
    %v677 = vld [vmem:[#allocation15 + $0xc] sm:$0xf]
    %679 = vrot.lane.b32.xlu0 %v673, 32
    %v680 = vpop.permute.xlu0 %679
    %v685 = vunpack.c.l.b16 %v674
    %v686 = vunpack.c.l.b16 %v675
    %v687 = vunpack.c.l.b16 %v676
    %v688 = vunpack.c.l.b16 %v677
    %v689 = vpack.c.b16 %v686, %v685
    %v690 = vpack.c.b16 %v688, %v687
    %v694 = vsel %vm159, %v680, 0
    %696 = vmatpush.bf16.msra.mxu0 0
    %697 = vmatpush.bf16.msra.mxu0 0
    %698 = vmatpush.bf16.msra.mxu0 0
    %699 = vmatpush.bf16.msra.mxu0 0
    %700 = vmatpush.bf16.msra.mxu0 0
    %701 = vmatpush.bf16.msra.mxu0 0
    %702 = vmatpush.bf16.msra.mxu0 %v690
    %703 = vmatpush.bf16.msra.mxu0 %v689
    %704 = vmatmul.bf16.gmra.mxu0 %v694
    %v705 = vpop.f32.mrf.mxu0
    %v706 = vadd.f32 0.0, %v705
    %v707 = vpop.f32.mrf.mxu0
    %708 = vdwg.mxu0
    %709 = vst [vmem:[#allocation4 + $0x8] sm:$0x1] %v706
    %710 = vrot.lane.b32.xlu0 %v624, 32
    %v711 = vpop.permute.xlu0 %710
    %713 = vst.msk [vmem:[#allocation18] sm:$0x1] %vm629, %v711
    %v714 = vld [vmem:[#allocation2] sm:$0xff]
    %v715 = vld [vmem:[%s7] sm:$0x1]
    %v717 = vperm.slane %v715, 0
    %v719 = vmul.f32 %v717, %v714
    %v720 = vld [vmem:[#allocation6 + $0x9] sm:$0x1]
    %v721 = vperm.slane %v720, 0
    %v722 = vadd.f32 %v719, %v721
    %v723 = vld [vmem:[%s9] sm:$0x1]
    %v724 = vmul.f32 %v723, %v506
    %v726 = vperm.slane %v724, 0
    %v728 = vadd.f32 %v722, %v726
    %v729 = vtanh.pop %v728
    %v730 = vld [vmem:[%s10] sm:$0x1]
    %v732 = vperm.slane %v730, 0
    %v734 = vmul.f32 %v729, %v732
    %v735 = vsel %vm159, %v734, 0.0
    %736 = vadd.xlane.f32.xlu0 %v735
    %v737 = vpop.xlane.xlu0 %736
    %739 = vrot.lane.b32.xlu0 %v734, 96
    %v740 = vpop.permute.xlu0 %739
    %v742 = vsel %vm159, %v740, 0.0
    %743 = vadd.xlane.f32.xlu0 %v742
    %v744 = vpop.xlane.xlu0 %743
    %v745 = vsel %vm450, %v737, %v744
    %v746 = vmul.f32 %v745, 1.442695
    %v747 = vpow.pop %v746
    %v748 = vsel %vm454, %v747, 0.0
    %v749 = vrot.slane %v748, 4
    %v750 = vadd.f32 %v748, %v749
    %v751 = vrot.slane %v750, 2
    %v752 = vadd.f32 %v750, %v751
    %v753 = vrot.slane %v752, 1
    %v754 = vadd.f32 %v752, %v753
    %v755 = vrcp.pop %v754
    %v756 = vmul.f32 %v747, %v755
    %758 = vset.pattern.permute.xlu0 0
    %759 = vperm.xlu0 %758, %v756
    %v760 = vpop.permute.xlu0 %759
    %762 = vset.pattern.permute.xlu0 1
    %763 = vperm.xlu0 %762, %v756
    %v764 = vpop.permute.xlu0 %763
    %v766 = vsel %vm159, %v760, %v764
    %v767 = vld [vmem:[#allocation4] sm:$0xff]
    %v768 = vld [vmem:[#allocation4 + $0x8] sm:$0xff]
    %v769 = vmul.f32 %v760, %v767
    %v770 = vmul.f32 %v764, %v768
    %v771 = vrot.slane %v769, 4
    %v772 = vadd.f32 %v769, %v771
    %v773 = vrot.slane %v772, 2
    %v774 = vadd.f32 %v772, %v773
    %v775 = vrot.slane %v774, 1
    %v776 = vadd.f32 %v774, %v775
    %v777 = vrot.slane %v770, 4
    %v778 = vadd.f32 %v770, %v777
    %v779 = vrot.slane %v778, 2
    %v780 = vadd.f32 %v778, %v779
    %v781 = vrot.slane %v780, 1
    %v782 = vadd.f32 %v780, %v781
    %v783 = vld [vmem:[#allocation3] sm:$0xff]
    %v784 = vmul.f32 %v766, %v783
    %v785 = vsel %vm221, %v784, 0.0
    %v786 = vrot.slane %v785, 4
    %v787 = vadd.f32 %v785, %v786
    %v788 = vrot.slane %v787, 2
    %v789 = vadd.f32 %v787, %v788
    %v790 = vrot.slane %v789, 1
    %v791 = vadd.f32 %v789, %v790
    %v792 = vmul.f32 %v766, %v714
    %v793 = vsel %vm221, %v792, 0.0
    %v794 = vrot.slane %v793, 4
    %v795 = vadd.f32 %v793, %v794
    %v796 = vrot.slane %v795, 2
    %v797 = vadd.f32 %v795, %v796
    %v798 = vrot.slane %v797, 1
    %v799 = vadd.f32 %v797, %v798
    %v800 = vld [vmem:[#allocation5 + $0x9] sm:$0x1]
    %v801 = vadd.f32 %v800, %v776
    %v802 = vxor.u32 %v801, 2147483648
    %v803 = vmul.f32 %v802, 1.442695
    %v804 = vpow.pop %v803
    %v805 = vadd.f32 %v804, 1.0
    %v806 = vrcp.pop %v805
    %v807 = vmul.f32 %v805, %v806
    %v808 = vsub.f32 1.0, %v807
    %v809 = vmul.f32 %v806, %v808
    %v810 = vadd.f32 %v806, %v809
    %vm811 = vweird.f32 %v805
    %vm812 = vweird.f32 %v806
    %vm813 = vmor %vm811, %vm812
    %v814 = vsel %vm813, %v806, %v810
    %v815 = vand.u32 2147483647, %v805
    %vm816 = vcmp.eq.f32.partialorder %v815, 8.507059e+37
    %v817 = vand.u32 %v805, 2147483648
    %v818 = vor.u32 1.1754944e-38, %v817
    %v819 = vsel %vm816, %v818, %v814
    %v820 = vmul.f32 1.0, %v819
    %v821 = vtanh.pop %v801
    %823 = vrot.lane.b32.xlu0 %v791, 32
    %v824 = vpop.permute.xlu0 %823
    %v826 = vmul.f32 %v820, %v824
    %828 = vrot.lane.b32.xlu0 %v821, 64
    %v829 = vpop.permute.xlu0 %828
    %v831 = vmul.f32 %v820, %v829
    %833 = vrot.lane.b32.xlu0 %v831, 32
    %v834 = vpop.permute.xlu0 %833
    %v836 = vadd.f32 %v826, %v834
    %v837 = vtanh.pop %v836
    %839 = vrot.lane.b32.xlu0 %v837, 64
    %v840 = vpop.permute.xlu0 %839
    %v842 = vmul.f32 %v820, %v840
    %v843 = vpack.c.bf16 %v842, %v842
    %v844 = vld [vmem:[#allocation13] sm:$0xf]
    %v845 = vld [vmem:[#allocation13 + $0x4] sm:$0xf]
    %v846 = vld [vmem:[#allocation13 + $0x8] sm:$0xf]
    %v847 = vld [vmem:[#allocation13 + $0xc] sm:$0xf]
    %849 = vrot.lane.b32.xlu0 %v843, 32
    %v850 = vpop.permute.xlu0 %849
    %v855 = vunpack.c.l.b16 %v844
    %v856 = vunpack.c.l.b16 %v845
    %v857 = vunpack.c.l.b16 %v846
    %v858 = vunpack.c.l.b16 %v847
    %v859 = vpack.c.b16 %v856, %v855
    %v860 = vpack.c.b16 %v858, %v857
    %v864 = vsel %vm159, %v850, 0
    %866 = vmatpush.bf16.msra.mxu0 0
    %867 = vmatpush.bf16.msra.mxu0 0
    %868 = vmatpush.bf16.msra.mxu0 0
    %869 = vmatpush.bf16.msra.mxu0 0
    %870 = vmatpush.bf16.msra.mxu0 0
    %871 = vmatpush.bf16.msra.mxu0 0
    %872 = vmatpush.bf16.msra.mxu0 %v860
    %873 = vmatpush.bf16.msra.mxu0 %v859
    %874 = vmatmul.bf16.gmra.mxu0 %v864
    %v875 = vpop.f32.mrf.mxu0
    %v876 = vadd.f32 %v782, %v875
    %v877 = vpop.f32.mrf.mxu0
    %878 = vdwg.mxu0
    %v879 = vld [vmem:[%s6] sm:$0x1]
    %v880 = vadd.f32 %v876, %v879
    %v881 = vxor.u32 %v880, 2147483648
    %v882 = vmul.f32 %v881, 1.442695
    %v883 = vpow.pop %v882
    %v884 = vadd.f32 %v883, 1.0
    %v885 = vrcp.pop %v884
    %v886 = vmul.f32 %v884, %v885
    %v887 = vsub.f32 1.0, %v886
    %v888 = vmul.f32 %v885, %v887
    %v889 = vadd.f32 %v885, %v888
    %vm890 = vweird.f32 %v884
    %vm891 = vweird.f32 %v885
    %vm892 = vmor %vm890, %vm891
    %v893 = vsel %vm892, %v885, %v889
    %v894 = vand.u32 2147483647, %v884
    %vm895 = vcmp.eq.f32.partialorder %v894, 8.507059e+37
    %v896 = vand.u32 %v884, 2147483648
    %v897 = vor.u32 1.1754944e-38, %v896
    %v898 = vsel %vm895, %v897, %v893
    %v899 = vmul.f32 1.0, %v898
    %v900 = vtanh.pop %v880
    %v901 = vmul.f32 %v899, %v791
    %903 = vrot.lane.b32.xlu0 %v900, 64
    %v904 = vpop.permute.xlu0 %903
    %v906 = vmul.f32 %v899, %v904
    %908 = vrot.lane.b32.xlu0 %v906, 32
    %v909 = vpop.permute.xlu0 %908
    %v911 = vadd.f32 %v901, %v909
    %v912 = vtanh.pop %v911
    %914 = vrot.lane.b32.xlu0 %v912, 64
    %v915 = vpop.permute.xlu0 %914
    %v917 = vmul.f32 %v899, %v915
    %919 = vrot.lane.b32.xlu0 %v842, 32
    %v920 = vpop.permute.xlu0 %919
    %922 = vst.msk [vmem:[#allocation2 + $0x1] sm:$0x1] %vm629, %v920
    %924 = vrot.lane.b32.xlu0 %v917, 64
    %v925 = vpop.permute.xlu0 %924
    %927 = vst.msk [vmem:[#allocation2 + $0x1] sm:$0x1] %vm635, %v925
    %929 = vrot.lane.b32.xlu0 %v836, 96
    %v930 = vpop.permute.xlu0 %929
    %932 = vst.msk [vmem:[#allocation3 + $0x1] sm:$0x1] %vm629, %v930
    %933 = vst.msk [vmem:[#allocation3 + $0x1] sm:$0x1] %vm635, %v911
    %v934 = vld [vmem:[#allocation12] sm:$0xf]
    %v935 = vld [vmem:[#allocation12 + $0x4] sm:$0xf]
    %v936 = vld [vmem:[#allocation12 + $0x8] sm:$0xf]
    %v937 = vld [vmem:[#allocation12 + $0xc] sm:$0xf]
    %v942 = vunpack.c.l.b16 %v934
    %v943 = vunpack.c.l.b16 %v935
    %v944 = vunpack.c.l.b16 %v936
    %v945 = vunpack.c.l.b16 %v937
    %v946 = vpack.c.b16 %v943, %v942
    %v947 = vpack.c.b16 %v945, %v944
    %950 = vmatpush.bf16.msra.mxu0 0
    %951 = vmatpush.bf16.msra.mxu0 0
    %952 = vmatpush.bf16.msra.mxu0 0
    %953 = vmatpush.bf16.msra.mxu0 0
    %954 = vmatpush.bf16.msra.mxu0 0
    %955 = vmatpush.bf16.msra.mxu0 0
    %956 = vmatpush.bf16.msra.mxu0 %v947
    %957 = vmatpush.bf16.msra.mxu0 %v946
    %958 = vmatmul.bf16.gmra.mxu0 %v864
    %v959 = vpop.f32.mrf.mxu0
    %v960 = vadd.f32 0.0, %v959
    %v961 = vpop.f32.mrf.mxu0
    %962 = vdwg.mxu0
    %963 = vst [vmem:[#allocation4 + $0x1] sm:$0x1] %v960
    %v964 = vpack.c.bf16 %v917, %v917
    %v965 = vld [vmem:[#allocation15] sm:$0xf]
    %v966 = vld [vmem:[#allocation15 + $0x4] sm:$0xf]
    %v967 = vld [vmem:[#allocation15 + $0x8] sm:$0xf]
    %v968 = vld [vmem:[#allocation15 + $0xc] sm:$0xf]
    %970 = vrot.lane.b32.xlu0 %v964, 32
    %v971 = vpop.permute.xlu0 %970
    %v976 = vunpack.c.l.b16 %v965
    %v977 = vunpack.c.l.b16 %v966
    %v978 = vunpack.c.l.b16 %v967
    %v979 = vunpack.c.l.b16 %v968
    %v980 = vpack.c.b16 %v977, %v976
    %v981 = vpack.c.b16 %v979, %v978
    %v985 = vsel %vm159, %v971, 0
    %987 = vmatpush.bf16.msra.mxu0 0
    %988 = vmatpush.bf16.msra.mxu0 0
    %989 = vmatpush.bf16.msra.mxu0 0
    %990 = vmatpush.bf16.msra.mxu0 0
    %991 = vmatpush.bf16.msra.mxu0 0
    %992 = vmatpush.bf16.msra.mxu0 0
    %993 = vmatpush.bf16.msra.mxu0 %v981
    %994 = vmatpush.bf16.msra.mxu0 %v980
    %995 = vmatmul.bf16.gmra.mxu0 %v985
    %v996 = vpop.f32.mrf.mxu0
    %v997 = vadd.f32 0.0, %v996
    %v998 = vpop.f32.mrf.mxu0
    %999 = vdwg.mxu0
    %1000 = vst [vmem:[#allocation4 + $0x9] sm:$0x1] %v997
    %1001 = vrot.lane.b32.xlu0 %v917, 32
    %v1002 = vpop.permute.xlu0 %1001
    %1004 = vst.msk [vmem:[#allocation18 + $0x1] sm:$0x1] %vm629, %v1002
    %v1005 = vld [vmem:[#allocation2] sm:$0xff]
    %v1006 = vld [vmem:[%s7] sm:$0x1]
    %v1008 = vperm.slane %v1006, 0
    %v1010 = vmul.f32 %v1008, %v1005
    %v1011 = vld [vmem:[#allocation6 + $0xa] sm:$0x1]
    %v1012 = vperm.slane %v1011, 0
    %v1013 = vadd.f32 %v1010, %v1012
    %v1014 = vld [vmem:[%s9] sm:$0x1]
    %v1015 = vmul.f32 %v1014, %v799
    %v1017 = vperm.slane %v1015, 0
    %v1019 = vadd.f32 %v1013, %v1017
    %v1020 = vtanh.pop %v1019
    %v1021 = vld [vmem:[%s10] sm:$0x1]
    %v1023 = vperm.slane %v1021, 0
    %v1025 = vmul.f32 %v1020, %v1023
    %v1026 = vsel %vm159, %v1025, 0.0
    %1027 = vadd.xlane.f32.xlu0 %v1026
    %v1028 = vpop.xlane.xlu0 %1027
    %1030 = vrot.lane.b32.xlu0 %v1025, 96
    %v1031 = vpop.permute.xlu0 %1030
    %v1033 = vsel %vm159, %v1031, 0.0
    %1034 = vadd.xlane.f32.xlu0 %v1033
    %v1035 = vpop.xlane.xlu0 %1034
    %v1036 = vsel %vm450, %v1028, %v1035
    %v1037 = vmul.f32 %v1036, 1.442695
    %v1038 = vpow.pop %v1037
    %v1039 = vsel %vm454, %v1038, 0.0
    %v1040 = vrot.slane %v1039, 4
    %v1041 = vadd.f32 %v1039, %v1040
    %v1042 = vrot.slane %v1041, 2
    %v1043 = vadd.f32 %v1041, %v1042
    %v1044 = vrot.slane %v1043, 1
    %v1045 = vadd.f32 %v1043, %v1044
    %v1046 = vrcp.pop %v1045
    %v1047 = vmul.f32 %v1038, %v1046
    %1049 = vset.pattern.permute.xlu0 0
    %1050 = vperm.xlu0 %1049, %v1047
    %v1051 = vpop.permute.xlu0 %1050
    %1053 = vset.pattern.permute.xlu0 1
    %1054 = vperm.xlu0 %1053, %v1047
    %v1055 = vpop.permute.xlu0 %1054
    %v1057 = vsel %vm159, %v1051, %v1055
    %v1058 = vld [vmem:[#allocation4] sm:$0xff]
    %v1059 = vld [vmem:[#allocation4 + $0x8] sm:$0xff]
    %v1060 = vmul.f32 %v1051, %v1058
    %v1061 = vmul.f32 %v1055, %v1059
    %v1062 = vrot.slane %v1060, 4
    %v1063 = vadd.f32 %v1060, %v1062
    %v1064 = vrot.slane %v1063, 2
    %v1065 = vadd.f32 %v1063, %v1064
    %v1066 = vrot.slane %v1065, 1
    %v1067 = vadd.f32 %v1065, %v1066
    %v1068 = vrot.slane %v1061, 4
    %v1069 = vadd.f32 %v1061, %v1068
    %v1070 = vrot.slane %v1069, 2
    %v1071 = vadd.f32 %v1069, %v1070
    %v1072 = vrot.slane %v1071, 1
    %v1073 = vadd.f32 %v1071, %v1072
    %v1074 = vld [vmem:[#allocation3] sm:$0xff]
    %v1075 = vmul.f32 %v1057, %v1074
    %v1076 = vsel %vm221, %v1075, 0.0
    %v1077 = vrot.slane %v1076, 4
    %v1078 = vadd.f32 %v1076, %v1077
    %v1079 = vrot.slane %v1078, 2
    %v1080 = vadd.f32 %v1078, %v1079
    %v1081 = vrot.slane %v1080, 1
    %v1082 = vadd.f32 %v1080, %v1081
    %v1083 = vmul.f32 %v1057, %v1005
    %v1084 = vsel %vm221, %v1083, 0.0
    %v1085 = vrot.slane %v1084, 4
    %v1086 = vadd.f32 %v1084, %v1085
    %v1087 = vrot.slane %v1086, 2
    %v1088 = vadd.f32 %v1086, %v1087
    %v1089 = vrot.slane %v1088, 1
    %v1090 = vadd.f32 %v1088, %v1089
    %v1091 = vld [vmem:[#allocation5 + $0xa] sm:$0x1]
    %v1092 = vadd.f32 %v1091, %v1067
    %v1093 = vxor.u32 %v1092, 2147483648
    %v1094 = vmul.f32 %v1093, 1.442695
    %v1095 = vpow.pop %v1094
    %v1096 = vadd.f32 %v1095, 1.0
    %v1097 = vrcp.pop %v1096
    %v1098 = vmul.f32 %v1096, %v1097
    %v1099 = vsub.f32 1.0, %v1098
    %v1100 = vmul.f32 %v1097, %v1099
    %v1101 = vadd.f32 %v1097, %v1100
    %vm1102 = vweird.f32 %v1096
    %vm1103 = vweird.f32 %v1097
    %vm1104 = vmor %vm1102, %vm1103
    %v1105 = vsel %vm1104, %v1097, %v1101
    %v1106 = vand.u32 2147483647, %v1096
    %vm1107 = vcmp.eq.f32.partialorder %v1106, 8.507059e+37
    %v1108 = vand.u32 %v1096, 2147483648
    %v1109 = vor.u32 1.1754944e-38, %v1108
    %v1110 = vsel %vm1107, %v1109, %v1105
    %v1111 = vmul.f32 1.0, %v1110
    %v1112 = vtanh.pop %v1092
    %1114 = vrot.lane.b32.xlu0 %v1082, 32
    %v1115 = vpop.permute.xlu0 %1114
    %v1117 = vmul.f32 %v1111, %v1115
    %1119 = vrot.lane.b32.xlu0 %v1112, 64
    %v1120 = vpop.permute.xlu0 %1119
    %v1122 = vmul.f32 %v1111, %v1120
    %1124 = vrot.lane.b32.xlu0 %v1122, 32
    %v1125 = vpop.permute.xlu0 %1124
    %v1127 = vadd.f32 %v1117, %v1125
    %v1128 = vtanh.pop %v1127
    %1130 = vrot.lane.b32.xlu0 %v1128, 64
    %v1131 = vpop.permute.xlu0 %1130
    %v1133 = vmul.f32 %v1111, %v1131
    %v1134 = vpack.c.bf16 %v1133, %v1133
    %v1135 = vld [vmem:[#allocation13] sm:$0xf]
    %v1136 = vld [vmem:[#allocation13 + $0x4] sm:$0xf]
    %v1137 = vld [vmem:[#allocation13 + $0x8] sm:$0xf]
    %v1138 = vld [vmem:[#allocation13 + $0xc] sm:$0xf]
    %1140 = vrot.lane.b32.xlu0 %v1134, 32
    %v1141 = vpop.permute.xlu0 %1140
    %v1146 = vunpack.c.l.b16 %v1135
    %v1147 = vunpack.c.l.b16 %v1136
    %v1148 = vunpack.c.l.b16 %v1137
    %v1149 = vunpack.c.l.b16 %v1138
    %v1150 = vpack.c.b16 %v1147, %v1146
    %v1151 = vpack.c.b16 %v1149, %v1148
    %v1155 = vsel %vm159, %v1141, 0
    %1157 = vmatpush.bf16.msra.mxu0 0
    %1158 = vmatpush.bf16.msra.mxu0 0
    %1159 = vmatpush.bf16.msra.mxu0 0
    %1160 = vmatpush.bf16.msra.mxu0 0
    %1161 = vmatpush.bf16.msra.mxu0 0
    %1162 = vmatpush.bf16.msra.mxu0 0
    %1163 = vmatpush.bf16.msra.mxu0 %v1151
    %1164 = vmatpush.bf16.msra.mxu0 %v1150
    %1165 = vmatmul.bf16.gmra.mxu0 %v1155
    %v1166 = vpop.f32.mrf.mxu0
    %v1167 = vadd.f32 %v1073, %v1166
    %v1168 = vpop.f32.mrf.mxu0
    %1169 = vdwg.mxu0
    %v1170 = vld [vmem:[%s6] sm:$0x1]
    %v1171 = vadd.f32 %v1167, %v1170
    %v1172 = vxor.u32 %v1171, 2147483648
    %v1173 = vmul.f32 %v1172, 1.442695
    %v1174 = vpow.pop %v1173
    %v1175 = vadd.f32 %v1174, 1.0
    %v1176 = vrcp.pop %v1175
    %v1177 = vmul.f32 %v1175, %v1176
    %v1178 = vsub.f32 1.0, %v1177
    %v1179 = vmul.f32 %v1176, %v1178
    %v1180 = vadd.f32 %v1176, %v1179
    %vm1181 = vweird.f32 %v1175
    %vm1182 = vweird.f32 %v1176
    %vm1183 = vmor %vm1181, %vm1182
    %v1184 = vsel %vm1183, %v1176, %v1180
    %v1185 = vand.u32 2147483647, %v1175
    %vm1186 = vcmp.eq.f32.partialorder %v1185, 8.507059e+37
    %v1187 = vand.u32 %v1175, 2147483648
    %v1188 = vor.u32 1.1754944e-38, %v1187
    %v1189 = vsel %vm1186, %v1188, %v1184
    %v1190 = vmul.f32 1.0, %v1189
    %v1191 = vtanh.pop %v1171
    %v1192 = vmul.f32 %v1190, %v1082
    %1194 = vrot.lane.b32.xlu0 %v1191, 64
    %v1195 = vpop.permute.xlu0 %1194
    %v1197 = vmul.f32 %v1190, %v1195
    %1199 = vrot.lane.b32.xlu0 %v1197, 32
    %v1200 = vpop.permute.xlu0 %1199
    %v1202 = vadd.f32 %v1192, %v1200
    %v1203 = vtanh.pop %v1202
    %1205 = vrot.lane.b32.xlu0 %v1203, 64
    %v1206 = vpop.permute.xlu0 %1205
    %v1208 = vmul.f32 %v1190, %v1206
    %1210 = vrot.lane.b32.xlu0 %v1133, 32
    %v1211 = vpop.permute.xlu0 %1210
    %1213 = vst.msk [vmem:[#allocation2 + $0x2] sm:$0x1] %vm629, %v1211
    %1215 = vrot.lane.b32.xlu0 %v1208, 64
    %v1216 = vpop.permute.xlu0 %1215
    %1218 = vst.msk [vmem:[#allocation2 + $0x2] sm:$0x1] %vm635, %v1216
    %1220 = vrot.lane.b32.xlu0 %v1127, 96
    %v1221 = vpop.permute.xlu0 %1220
    %1223 = vst.msk [vmem:[#allocation3 + $0x2] sm:$0x1] %vm629, %v1221
    %1224 = vst.msk [vmem:[#allocation3 + $0x2] sm:$0x1] %vm635, %v1202
    %v1225 = vld [vmem:[#allocation12] sm:$0xf]
    %v1226 = vld [vmem:[#allocation12 + $0x4] sm:$0xf]
    %v1227 = vld [vmem:[#allocation12 + $0x8] sm:$0xf]
    %v1228 = vld [vmem:[#allocation12 + $0xc] sm:$0xf]
    %v1233 = vunpack.c.l.b16 %v1225
    %v1234 = vunpack.c.l.b16 %v1226
    %v1235 = vunpack.c.l.b16 %v1227
    %v1236 = vunpack.c.l.b16 %v1228
    %v1237 = vpack.c.b16 %v1234, %v1233
    %v1238 = vpack.c.b16 %v1236, %v1235
    %1241 = vmatpush.bf16.msra.mxu0 0
    %1242 = vmatpush.bf16.msra.mxu0 0
    %1243 = vmatpush.bf16.msra.mxu0 0
    %1244 = vmatpush.bf16.msra.mxu0 0
    %1245 = vmatpush.bf16.msra.mxu0 0
    %1246 = vmatpush.bf16.msra.mxu0 0
    %1247 = vmatpush.bf16.msra.mxu0 %v1238
    %1248 = vmatpush.bf16.msra.mxu0 %v1237
    %1249 = vmatmul.bf16.gmra.mxu0 %v1155
    %v1250 = vpop.f32.mrf.mxu0
    %v1251 = vadd.f32 0.0, %v1250
    %v1252 = vpop.f32.mrf.mxu0
    %1253 = vdwg.mxu0
    %1254 = vst [vmem:[#allocation4 + $0x2] sm:$0x1] %v1251
    %v1255 = vpack.c.bf16 %v1208, %v1208
    %v1256 = vld [vmem:[#allocation15] sm:$0xf]
    %v1257 = vld [vmem:[#allocation15 + $0x4] sm:$0xf]
    %v1258 = vld [vmem:[#allocation15 + $0x8] sm:$0xf]
    %v1259 = vld [vmem:[#allocation15 + $0xc] sm:$0xf]
    %1261 = vrot.lane.b32.xlu0 %v1255, 32
    %v1262 = vpop.permute.xlu0 %1261
    %v1267 = vunpack.c.l.b16 %v1256
    %v1268 = vunpack.c.l.b16 %v1257
    %v1269 = vunpack.c.l.b16 %v1258
    %v1270 = vunpack.c.l.b16 %v1259
    %v1271 = vpack.c.b16 %v1268, %v1267
    %v1272 = vpack.c.b16 %v1270, %v1269
    %v1276 = vsel %vm159, %v1262, 0
    %1278 = vmatpush.bf16.msra.mxu0 0
    %1279 = vmatpush.bf16.msra.mxu0 0
    %1280 = vmatpush.bf16.msra.mxu0 0
    %1281 = vmatpush.bf16.msra.mxu0 0
    %1282 = vmatpush.bf16.msra.mxu0 0
    %1283 = vmatpush.bf16.msra.mxu0 0
    %1284 = vmatpush.bf16.msra.mxu0 %v1272
    %1285 = vmatpush.bf16.msra.mxu0 %v1271
    %1286 = vmatmul.bf16.gmra.mxu0 %v1276
    %v1287 = vpop.f32.mrf.mxu0
    %v1288 = vadd.f32 0.0, %v1287
    %v1289 = vpop.f32.mrf.mxu0
    %1290 = vdwg.mxu0
    %1291 = vst [vmem:[#allocation4 + $0xa] sm:$0x1] %v1288
    %1292 = vrot.lane.b32.xlu0 %v1208, 32
    %v1293 = vpop.permute.xlu0 %1292
    %1295 = vst.msk [vmem:[#allocation18 + $0x2] sm:$0x1] %vm629, %v1293
    %v1296 = vld [vmem:[#allocation2] sm:$0xff]
    %v1297 = vld [vmem:[%s7] sm:$0x1]
    %v1299 = vperm.slane %v1297, 0
    %v1301 = vmul.f32 %v1299, %v1296
    %v1302 = vld [vmem:[#allocation6 + $0xb] sm:$0x1]
    %v1303 = vperm.slane %v1302, 0
    %v1304 = vadd.f32 %v1301, %v1303
    %v1305 = vld [vmem:[%s9] sm:$0x1]
    %v1306 = vmul.f32 %v1305, %v1090
    %v1308 = vperm.slane %v1306, 0
    %v1310 = vadd.f32 %v1304, %v1308
    %v1311 = vtanh.pop %v1310
    %v1312 = vld [vmem:[%s10] sm:$0x1]
    %v1314 = vperm.slane %v1312, 0
    %v1316 = vmul.f32 %v1311, %v1314
    %v1317 = vsel %vm159, %v1316, 0.0
    %1318 = vadd.xlane.f32.xlu0 %v1317
    %v1319 = vpop.xlane.xlu0 %1318
    %1321 = vrot.lane.b32.xlu0 %v1316, 96
    %v1322 = vpop.permute.xlu0 %1321
    %v1324 = vsel %vm159, %v1322, 0.0
    %1325 = vadd.xlane.f32.xlu0 %v1324
    %v1326 = vpop.xlane.xlu0 %1325
    %v1327 = vsel %vm450, %v1319, %v1326
    %v1328 = vmul.f32 %v1327, 1.442695
    %v1329 = vpow.pop %v1328
    %v1330 = vsel %vm454, %v1329, 0.0
    %v1331 = vrot.slane %v1330, 4
    %v1332 = vadd.f32 %v1330, %v1331
    %v1333 = vrot.slane %v1332, 2
    %v1334 = vadd.f32 %v1332, %v1333
    %v1335 = vrot.slane %v1334, 1
    %v1336 = vadd.f32 %v1334, %v1335
    %v1337 = vrcp.pop %v1336
    %v1338 = vmul.f32 %v1329, %v1337
    %1340 = vset.pattern.permute.xlu0 0
    %1341 = vperm.xlu0 %1340, %v1338
    %v1342 = vpop.permute.xlu0 %1341
    %1344 = vset.pattern.permute.xlu0 1
    %1345 = vperm.xlu0 %1344, %v1338
    %v1346 = vpop.permute.xlu0 %1345
    %v1348 = vsel %vm159, %v1342, %v1346
    %v1349 = vld [vmem:[#allocation4] sm:$0xff]
    %v1350 = vld [vmem:[#allocation4 + $0x8] sm:$0xff]
    %v1351 = vmul.f32 %v1342, %v1349
    %v1352 = vmul.f32 %v1346, %v1350
    %v1353 = vrot.slane %v1351, 4
    %v1354 = vadd.f32 %v1351, %v1353
    %v1355 = vrot.slane %v1354, 2
    %v1356 = vadd.f32 %v1354, %v1355
    %v1357 = vrot.slane %v1356, 1
    %v1358 = vadd.f32 %v1356, %v1357
    %v1359 = vrot.slane %v1352, 4
    %v1360 = vadd.f32 %v1352, %v1359
    %v1361 = vrot.slane %v1360, 2
    %v1362 = vadd.f32 %v1360, %v1361
    %v1363 = vrot.slane %v1362, 1
    %v1364 = vadd.f32 %v1362, %v1363
    %v1365 = vld [vmem:[#allocation3] sm:$0xff]
    %v1366 = vmul.f32 %v1348, %v1365
    %v1367 = vsel %vm221, %v1366, 0.0
    %v1368 = vrot.slane %v1367, 4
    %v1369 = vadd.f32 %v1367, %v1368
    %v1370 = vrot.slane %v1369, 2
    %v1371 = vadd.f32 %v1369, %v1370
    %v1372 = vrot.slane %v1371, 1
    %v1373 = vadd.f32 %v1371, %v1372
    %v1374 = vmul.f32 %v1348, %v1296
    %v1375 = vsel %vm221, %v1374, 0.0
    %v1376 = vrot.slane %v1375, 4
    %v1377 = vadd.f32 %v1375, %v1376
    %v1378 = vrot.slane %v1377, 2
    %v1379 = vadd.f32 %v1377, %v1378
    %v1380 = vrot.slane %v1379, 1
    %v1381 = vadd.f32 %v1379, %v1380
    %v1382 = vld [vmem:[#allocation5 + $0xb] sm:$0x1]
    %v1383 = vadd.f32 %v1382, %v1358
    %v1384 = vxor.u32 %v1383, 2147483648
    %v1385 = vmul.f32 %v1384, 1.442695
    %v1386 = vpow.pop %v1385
    %v1387 = vadd.f32 %v1386, 1.0
    %v1388 = vrcp.pop %v1387
    %v1389 = vmul.f32 %v1387, %v1388
    %v1390 = vsub.f32 1.0, %v1389
    %v1391 = vmul.f32 %v1388, %v1390
    %v1392 = vadd.f32 %v1388, %v1391
    %vm1393 = vweird.f32 %v1387
    %vm1394 = vweird.f32 %v1388
    %vm1395 = vmor %vm1393, %vm1394
    %v1396 = vsel %vm1395, %v1388, %v1392
    %v1397 = vand.u32 2147483647, %v1387
    %vm1398 = vcmp.eq.f32.partialorder %v1397, 8.507059e+37
    %v1399 = vand.u32 %v1387, 2147483648
    %v1400 = vor.u32 1.1754944e-38, %v1399
    %v1401 = vsel %vm1398, %v1400, %v1396
    %v1402 = vmul.f32 1.0, %v1401
    %v1403 = vtanh.pop %v1383
    %1405 = vrot.lane.b32.xlu0 %v1373, 32
    %v1406 = vpop.permute.xlu0 %1405
    %v1408 = vmul.f32 %v1402, %v1406
    %1410 = vrot.lane.b32.xlu0 %v1403, 64
    %v1411 = vpop.permute.xlu0 %1410
    %v1413 = vmul.f32 %v1402, %v1411
    %1415 = vrot.lane.b32.xlu0 %v1413, 32
    %v1416 = vpop.permute.xlu0 %1415
    %v1418 = vadd.f32 %v1408, %v1416
    %v1419 = vtanh.pop %v1418
    %1421 = vrot.lane.b32.xlu0 %v1419, 64
    %v1422 = vpop.permute.xlu0 %1421
    %v1424 = vmul.f32 %v1402, %v1422
    %v1425 = vpack.c.bf16 %v1424, %v1424
    %v1426 = vld [vmem:[#allocation13] sm:$0xf]
    %v1427 = vld [vmem:[#allocation13 + $0x4] sm:$0xf]
    %v1428 = vld [vmem:[#allocation13 + $0x8] sm:$0xf]
    %v1429 = vld [vmem:[#allocation13 + $0xc] sm:$0xf]
    %1431 = vrot.lane.b32.xlu0 %v1425, 32
    %v1432 = vpop.permute.xlu0 %1431
    %v1437 = vunpack.c.l.b16 %v1426
    %v1438 = vunpack.c.l.b16 %v1427
    %v1439 = vunpack.c.l.b16 %v1428
    %v1440 = vunpack.c.l.b16 %v1429
    %v1441 = vpack.c.b16 %v1438, %v1437
    %v1442 = vpack.c.b16 %v1440, %v1439
    %v1446 = vsel %vm159, %v1432, 0
    %1448 = vmatpush.bf16.msra.mxu0 0
    %1449 = vmatpush.bf16.msra.mxu0 0
    %1450 = vmatpush.bf16.msra.mxu0 0
    %1451 = vmatpush.bf16.msra.mxu0 0
    %1452 = vmatpush.bf16.msra.mxu0 0
    %1453 = vmatpush.bf16.msra.mxu0 0
    %1454 = vmatpush.bf16.msra.mxu0 %v1442
    %1455 = vmatpush.bf16.msra.mxu0 %v1441
    %1456 = vmatmul.bf16.gmra.mxu0 %v1446
    %v1457 = vpop.f32.mrf.mxu0
    %v1458 = vadd.f32 %v1364, %v1457
    %v1459 = vpop.f32.mrf.mxu0
    %1460 = vdwg.mxu0
    %v1461 = vld [vmem:[%s6] sm:$0x1]
    %v1462 = vadd.f32 %v1458, %v1461
    %v1463 = vxor.u32 %v1462, 2147483648
    %v1464 = vmul.f32 %v1463, 1.442695
    %v1465 = vpow.pop %v1464
    %v1466 = vadd.f32 %v1465, 1.0
    %v1467 = vrcp.pop %v1466
    %v1468 = vmul.f32 %v1466, %v1467
    %v1469 = vsub.f32 1.0, %v1468
    %v1470 = vmul.f32 %v1467, %v1469
    %v1471 = vadd.f32 %v1467, %v1470
    %vm1472 = vweird.f32 %v1466
    %vm1473 = vweird.f32 %v1467
    %vm1474 = vmor %vm1472, %vm1473
    %v1475 = vsel %vm1474, %v1467, %v1471
    %v1476 = vand.u32 2147483647, %v1466
    %vm1477 = vcmp.eq.f32.partialorder %v1476, 8.507059e+37
    %v1478 = vand.u32 %v1466, 2147483648
    %v1479 = vor.u32 1.1754944e-38, %v1478
    %v1480 = vsel %vm1477, %v1479, %v1475
    %v1481 = vmul.f32 1.0, %v1480
    %v1482 = vtanh.pop %v1462
    %v1483 = vmul.f32 %v1481, %v1373
    %1485 = vrot.lane.b32.xlu0 %v1482, 64
    %v1486 = vpop.permute.xlu0 %1485
    %v1488 = vmul.f32 %v1481, %v1486
    %1490 = vrot.lane.b32.xlu0 %v1488, 32
    %v1491 = vpop.permute.xlu0 %1490
    %v1493 = vadd.f32 %v1483, %v1491
    %v1494 = vtanh.pop %v1493
    %1496 = vrot.lane.b32.xlu0 %v1494, 64
    %v1497 = vpop.permute.xlu0 %1496
    %v1499 = vmul.f32 %v1481, %v1497
    %1501 = vrot.lane.b32.xlu0 %v1424, 32
    %v1502 = vpop.permute.xlu0 %1501
    %1504 = vst.msk [vmem:[#allocation2 + $0x3] sm:$0x1] %vm629, %v1502
    %1506 = vrot.lane.b32.xlu0 %v1499, 64
    %v1507 = vpop.permute.xlu0 %1506
    %1509 = vst.msk [vmem:[#allocation2 + $0x3] sm:$0x1] %vm635, %v1507
    %1511 = vrot.lane.b32.xlu0 %v1418, 96
    %v1512 = vpop.permute.xlu0 %1511
    %1514 = vst.msk [vmem:[#allocation3 + $0x3] sm:$0x1] %vm629, %v1512
    %1515 = vst.msk [vmem:[#allocation3 + $0x3] sm:$0x1] %vm635, %v1493
    %v1516 = vld [vmem:[#allocation12] sm:$0xf]
    %v1517 = vld [vmem:[#allocation12 + $0x4] sm:$0xf]
    %v1518 = vld [vmem:[#allocation12 + $0x8] sm:$0xf]
    %v1519 = vld [vmem:[#allocation12 + $0xc] sm:$0xf]
    %v1524 = vunpack.c.l.b16 %v1516
    %v1525 = vunpack.c.l.b16 %v1517
    %v1526 = vunpack.c.l.b16 %v1518
    %v1527 = vunpack.c.l.b16 %v1519
    %v1528 = vpack.c.b16 %v1525, %v1524
    %v1529 = vpack.c.b16 %v1527, %v1526
    %1532 = vmatpush.bf16.msra.mxu0 0
    %1533 = vmatpush.bf16.msra.mxu0 0
    %1534 = vmatpush.bf16.msra.mxu0 0
    %1535 = vmatpush.bf16.msra.mxu0 0
    %1536 = vmatpush.bf16.msra.mxu0 0
    %1537 = vmatpush.bf16.msra.mxu0 0
    %1538 = vmatpush.bf16.msra.mxu0 %v1529
    %1539 = vmatpush.bf16.msra.mxu0 %v1528
    %1540 = vmatmul.bf16.gmra.mxu0 %v1446
    %v1541 = vpop.f32.mrf.mxu0
    %v1542 = vadd.f32 0.0, %v1541
    %v1543 = vpop.f32.mrf.mxu0
    %1544 = vdwg.mxu0
    %1545 = vst [vmem:[#allocation4 + $0x3] sm:$0x1] %v1542
    %v1546 = vpack.c.bf16 %v1499, %v1499
    %v1547 = vld [vmem:[#allocation15] sm:$0xf]
    %v1548 = vld [vmem:[#allocation15 + $0x4] sm:$0xf]
    %v1549 = vld [vmem:[#allocation15 + $0x8] sm:$0xf]
    %v1550 = vld [vmem:[#allocation15 + $0xc] sm:$0xf]
    %1552 = vrot.lane.b32.xlu0 %v1546, 32
    %v1553 = vpop.permute.xlu0 %1552
    %v1558 = vunpack.c.l.b16 %v1547
    %v1559 = vunpack.c.l.b16 %v1548
    %v1560 = vunpack.c.l.b16 %v1549
    %v1561 = vunpack.c.l.b16 %v1550
    %v1562 = vpack.c.b16 %v1559, %v1558
    %v1563 = vpack.c.b16 %v1561, %v1560
    %v1567 = vsel %vm159, %v1553, 0
    %1569 = vmatpush.bf16.msra.mxu0 0
    %1570 = vmatpush.bf16.msra.mxu0 0
    %1571 = vmatpush.bf16.msra.mxu0 0
    %1572 = vmatpush.bf16.msra.mxu0 0
    %1573 = vmatpush.bf16.msra.mxu0 0
    %1574 = vmatpush.bf16.msra.mxu0 0
    %1575 = vmatpush.bf16.msra.mxu0 %v1563
    %1576 = vmatpush.bf16.msra.mxu0 %v1562
    %1577 = vmatmul.bf16.gmra.mxu0 %v1567
    %v1578 = vpop.f32.mrf.mxu0
    %v1579 = vadd.f32 0.0, %v1578
    %v1580 = vpop.f32.mrf.mxu0
    %1581 = vdwg.mxu0
    %1582 = vst [vmem:[#allocation4 + $0xb] sm:$0x1] %v1579
    %1583 = vrot.lane.b32.xlu0 %v1499, 32
    %v1584 = vpop.permute.xlu0 %1583
    %1586 = vst.msk [vmem:[#allocation18 + $0x3] sm:$0x1] %vm629, %v1584
    %v1587 = vld [vmem:[#allocation2] sm:$0xff]
    %v1588 = vld [vmem:[%s7] sm:$0x1]
    %v1590 = vperm.slane %v1588, 0
    %v1592 = vmul.f32 %v1590, %v1587
    %v1593 = vld [vmem:[#allocation6 + $0xc] sm:$0x1]
    %v1594 = vperm.slane %v1593, 0
    %v1595 = vadd.f32 %v1592, %v1594
    %v1596 = vld [vmem:[%s9] sm:$0x1]
    %v1597 = vmul.f32 %v1596, %v1381
    %v1599 = vperm.slane %v1597, 0
    %v1601 = vadd.f32 %v1595, %v1599
    %v1602 = vtanh.pop %v1601
    %v1603 = vld [vmem:[%s10] sm:$0x1]
    %v1605 = vperm.slane %v1603, 0
    %v1607 = vmul.f32 %v1602, %v1605
    %v1608 = vsel %vm159, %v1607, 0.0
    %1609 = vadd.xlane.f32.xlu0 %v1608
    %v1610 = vpop.xlane.xlu0 %1609
    %1612 = vrot.lane.b32.xlu0 %v1607, 96
    %v1613 = vpop.permute.xlu0 %1612
    %v1615 = vsel %vm159, %v1613, 0.0
    %1616 = vadd.xlane.f32.xlu0 %v1615
    %v1617 = vpop.xlane.xlu0 %1616
    %v1618 = vsel %vm450, %v1610, %v1617
    %v1619 = vmul.f32 %v1618, 1.442695
    %v1620 = vpow.pop %v1619
    %v1621 = vsel %vm454, %v1620, 0.0
    %v1622 = vrot.slane %v1621, 4
    %v1623 = vadd.f32 %v1621, %v1622
    %v1624 = vrot.slane %v1623, 2
    %v1625 = vadd.f32 %v1623, %v1624
    %v1626 = vrot.slane %v1625, 1
    %v1627 = vadd.f32 %v1625, %v1626
    %v1628 = vrcp.pop %v1627
    %v1629 = vmul.f32 %v1620, %v1628
    %1631 = vset.pattern.permute.xlu0 0
    %1632 = vperm.xlu0 %1631, %v1629
    %v1633 = vpop.permute.xlu0 %1632
    %1635 = vset.pattern.permute.xlu0 1
    %1636 = vperm.xlu0 %1635, %v1629
    %v1637 = vpop.permute.xlu0 %1636
    %v1639 = vsel %vm159, %v1633, %v1637
    %v1640 = vld [vmem:[#allocation4] sm:$0xff]
    %v1641 = vld [vmem:[#allocation4 + $0x8] sm:$0xff]
    %v1642 = vmul.f32 %v1633, %v1640
    %v1643 = vmul.f32 %v1637, %v1641
    %v1644 = vrot.slane %v1642, 4
    %v1645 = vadd.f32 %v1642, %v1644
    %v1646 = vrot.slane %v1645, 2
    %v1647 = vadd.f32 %v1645, %v1646
    %v1648 = vrot.slane %v1647, 1
    %v1649 = vadd.f32 %v1647, %v1648
    %v1650 = vrot.slane %v1643, 4
    %v1651 = vadd.f32 %v1643, %v1650
    %v1652 = vrot.slane %v1651, 2
    %v1653 = vadd.f32 %v1651, %v1652
    %v1654 = vrot.slane %v1653, 1
    %v1655 = vadd.f32 %v1653, %v1654
    %v1656 = vld [vmem:[#allocation3] sm:$0xff]
    %v1657 = vmul.f32 %v1639, %v1656
    %v1658 = vsel %vm221, %v1657, 0.0
    %v1659 = vrot.slane %v1658, 4
    %v1660 = vadd.f32 %v1658, %v1659
    %v1661 = vrot.slane %v1660, 2
    %v1662 = vadd.f32 %v1660, %v1661
    %v1663 = vrot.slane %v1662, 1
    %v1664 = vadd.f32 %v1662, %v1663
    %v1665 = vmul.f32 %v1639, %v1587
    %v1666 = vsel %vm221, %v1665, 0.0
    %v1667 = vrot.slane %v1666, 4
    %v1668 = vadd.f32 %v1666, %v1667
    %v1669 = vrot.slane %v1668, 2
    %v1670 = vadd.f32 %v1668, %v1669
    %v1671 = vrot.slane %v1670, 1
    %v1672 = vadd.f32 %v1670, %v1671
    %v1673 = vld [vmem:[#allocation5 + $0xc] sm:$0x1]
    %v1674 = vadd.f32 %v1673, %v1649
    %v1675 = vxor.u32 %v1674, 2147483648
    %v1676 = vmul.f32 %v1675, 1.442695
    %v1677 = vpow.pop %v1676
    %v1678 = vadd.f32 %v1677, 1.0
    %v1679 = vrcp.pop %v1678
    %v1680 = vmul.f32 %v1678, %v1679
    %v1681 = vsub.f32 1.0, %v1680
    %v1682 = vmul.f32 %v1679, %v1681
    %v1683 = vadd.f32 %v1679, %v1682
    %vm1684 = vweird.f32 %v1678
    %vm1685 = vweird.f32 %v1679
    %vm1686 = vmor %vm1684, %vm1685
    %v1687 = vsel %vm1686, %v1679, %v1683
    %v1688 = vand.u32 2147483647, %v1678
    %vm1689 = vcmp.eq.f32.partialorder %v1688, 8.507059e+37
    %v1690 = vand.u32 %v1678, 2147483648
    %v1691 = vor.u32 1.1754944e-38, %v1690
    %v1692 = vsel %vm1689, %v1691, %v1687
    %v1693 = vmul.f32 1.0, %v1692
    %v1694 = vtanh.pop %v1674
    %1696 = vrot.lane.b32.xlu0 %v1664, 32
    %v1697 = vpop.permute.xlu0 %1696
    %v1699 = vmul.f32 %v1693, %v1697
    %1701 = vrot.lane.b32.xlu0 %v1694, 64
    %v1702 = vpop.permute.xlu0 %1701
    %v1704 = vmul.f32 %v1693, %v1702
    %1706 = vrot.lane.b32.xlu0 %v1704, 32
    %v1707 = vpop.permute.xlu0 %1706
    %v1709 = vadd.f32 %v1699, %v1707
    %v1710 = vtanh.pop %v1709
    %1712 = vrot.lane.b32.xlu0 %v1710, 64
    %v1713 = vpop.permute.xlu0 %1712
    %v1715 = vmul.f32 %v1693, %v1713
    %v1716 = vpack.c.bf16 %v1715, %v1715
    %v1717 = vld [vmem:[#allocation13] sm:$0xf]
    %v1718 = vld [vmem:[#allocation13 + $0x4] sm:$0xf]
    %v1719 = vld [vmem:[#allocation13 + $0x8] sm:$0xf]
    %v1720 = vld [vmem:[#allocation13 + $0xc] sm:$0xf]
    %1722 = vrot.lane.b32.xlu0 %v1716, 32
    %v1723 = vpop.permute.xlu0 %1722
    %v1728 = vunpack.c.l.b16 %v1717
    %v1729 = vunpack.c.l.b16 %v1718
    %v1730 = vunpack.c.l.b16 %v1719
    %v1731 = vunpack.c.l.b16 %v1720
    %v1732 = vpack.c.b16 %v1729, %v1728
    %v1733 = vpack.c.b16 %v1731, %v1730
    %v1737 = vsel %vm159, %v1723, 0
    %1739 = vmatpush.bf16.msra.mxu0 0
    %1740 = vmatpush.bf16.msra.mxu0 0
    %1741 = vmatpush.bf16.msra.mxu0 0
    %1742 = vmatpush.bf16.msra.mxu0 0
    %1743 = vmatpush.bf16.msra.mxu0 0
    %1744 = vmatpush.bf16.msra.mxu0 0
    %1745 = vmatpush.bf16.msra.mxu0 %v1733
    %1746 = vmatpush.bf16.msra.mxu0 %v1732
    %1747 = vmatmul.bf16.gmra.mxu0 %v1737
    %v1748 = vpop.f32.mrf.mxu0
    %v1749 = vadd.f32 %v1655, %v1748
    %v1750 = vpop.f32.mrf.mxu0
    %1751 = vdwg.mxu0
    %v1752 = vld [vmem:[%s6] sm:$0x1]
    %v1753 = vadd.f32 %v1749, %v1752
    %v1754 = vxor.u32 %v1753, 2147483648
    %v1755 = vmul.f32 %v1754, 1.442695
    %v1756 = vpow.pop %v1755
    %v1757 = vadd.f32 %v1756, 1.0
    %v1758 = vrcp.pop %v1757
    %v1759 = vmul.f32 %v1757, %v1758
    %v1760 = vsub.f32 1.0, %v1759
    %v1761 = vmul.f32 %v1758, %v1760
    %v1762 = vadd.f32 %v1758, %v1761
    %vm1763 = vweird.f32 %v1757
    %vm1764 = vweird.f32 %v1758
    %vm1765 = vmor %vm1763, %vm1764
    %v1766 = vsel %vm1765, %v1758, %v1762
    %v1767 = vand.u32 2147483647, %v1757
    %vm1768 = vcmp.eq.f32.partialorder %v1767, 8.507059e+37
    %v1769 = vand.u32 %v1757, 2147483648
    %v1770 = vor.u32 1.1754944e-38, %v1769
    %v1771 = vsel %vm1768, %v1770, %v1766
    %v1772 = vmul.f32 1.0, %v1771
    %v1773 = vtanh.pop %v1753
    %v1774 = vmul.f32 %v1772, %v1664
    %1776 = vrot.lane.b32.xlu0 %v1773, 64
    %v1777 = vpop.permute.xlu0 %1776
    %v1779 = vmul.f32 %v1772, %v1777
    %1781 = vrot.lane.b32.xlu0 %v1779, 32
    %v1782 = vpop.permute.xlu0 %1781
    %v1784 = vadd.f32 %v1774, %v1782
    %v1785 = vtanh.pop %v1784
    %1787 = vrot.lane.b32.xlu0 %v1785, 64
    %v1788 = vpop.permute.xlu0 %1787
    %v1790 = vmul.f32 %v1772, %v1788
    %1792 = vrot.lane.b32.xlu0 %v1715, 32
    %v1793 = vpop.permute.xlu0 %1792
    %1795 = vst.msk [vmem:[#allocation2 + $0x4] sm:$0x1] %vm629, %v1793
    %1797 = vrot.lane.b32.xlu0 %v1790, 64
    %v1798 = vpop.permute.xlu0 %1797
    %1800 = vst.msk [vmem:[#allocation2 + $0x4] sm:$0x1] %vm635, %v1798
    %1802 = vrot.lane.b32.xlu0 %v1709, 96
    %v1803 = vpop.permute.xlu0 %1802
    %1805 = vst.msk [vmem:[#allocation3 + $0x4] sm:$0x1] %vm629, %v1803
    %1806 = vst.msk [vmem:[#allocation3 + $0x4] sm:$0x1] %vm635, %v1784
    %v1807 = vld [vmem:[#allocation12] sm:$0xf]
    %v1808 = vld [vmem:[#allocation12 + $0x4] sm:$0xf]
    %v1809 = vld [vmem:[#allocation12 + $0x8] sm:$0xf]
    %v1810 = vld [vmem:[#allocation12 + $0xc] sm:$0xf]
    %v1815 = vunpack.c.l.b16 %v1807
    %v1816 = vunpack.c.l.b16 %v1808
    %v1817 = vunpack.c.l.b16 %v1809
    %v1818 = vunpack.c.l.b16 %v1810
    %v1819 = vpack.c.b16 %v1816, %v1815
    %v1820 = vpack.c.b16 %v1818, %v1817
    %1823 = vmatpush.bf16.msra.mxu0 0
    %1824 = vmatpush.bf16.msra.mxu0 0
    %1825 = vmatpush.bf16.msra.mxu0 0
    %1826 = vmatpush.bf16.msra.mxu0 0
    %1827 = vmatpush.bf16.msra.mxu0 0
    %1828 = vmatpush.bf16.msra.mxu0 0
    %1829 = vmatpush.bf16.msra.mxu0 %v1820
    %1830 = vmatpush.bf16.msra.mxu0 %v1819
    %1831 = vmatmul.bf16.gmra.mxu0 %v1737
    %v1832 = vpop.f32.mrf.mxu0
    %v1833 = vadd.f32 0.0, %v1832
    %v1834 = vpop.f32.mrf.mxu0
    %1835 = vdwg.mxu0
    %1836 = vst [vmem:[#allocation4 + $0x4] sm:$0x1] %v1833
    %v1837 = vpack.c.bf16 %v1790, %v1790
    %v1838 = vld [vmem:[#allocation15] sm:$0xf]
    %v1839 = vld [vmem:[#allocation15 + $0x4] sm:$0xf]
    %v1840 = vld [vmem:[#allocation15 + $0x8] sm:$0xf]
    %v1841 = vld [vmem:[#allocation15 + $0xc] sm:$0xf]
    %1843 = vrot.lane.b32.xlu0 %v1837, 32
    %v1844 = vpop.permute.xlu0 %1843
    %v1849 = vunpack.c.l.b16 %v1838
    %v1850 = vunpack.c.l.b16 %v1839
    %v1851 = vunpack.c.l.b16 %v1840
    %v1852 = vunpack.c.l.b16 %v1841
    %v1853 = vpack.c.b16 %v1850, %v1849
    %v1854 = vpack.c.b16 %v1852, %v1851
    %v1858 = vsel %vm159, %v1844, 0
    %1860 = vmatpush.bf16.msra.mxu0 0
    %1861 = vmatpush.bf16.msra.mxu0 0
    %1862 = vmatpush.bf16.msra.mxu0 0
    %1863 = vmatpush.bf16.msra.mxu0 0
    %1864 = vmatpush.bf16.msra.mxu0 0
    %1865 = vmatpush.bf16.msra.mxu0 0
    %1866 = vmatpush.bf16.msra.mxu0 %v1854
    %1867 = vmatpush.bf16.msra.mxu0 %v1853
    %1868 = vmatmul.bf16.gmra.mxu0 %v1858
    %v1869 = vpop.f32.mrf.mxu0
    %v1870 = vadd.f32 0.0, %v1869
    %v1871 = vpop.f32.mrf.mxu0
    %1872 = vdwg.mxu0
    %1873 = vst [vmem:[#allocation4 + $0xc] sm:$0x1] %v1870
    %1874 = vrot.lane.b32.xlu0 %v1790, 32
    %v1875 = vpop.permute.xlu0 %1874
    %1877 = vst.msk [vmem:[#allocation18 + $0x4] sm:$0x1] %vm629, %v1875
    %v1878 = vld [vmem:[#allocation2] sm:$0xff]
    %v1879 = vld [vmem:[%s7] sm:$0x1]
    %v1881 = vperm.slane %v1879, 0
    %v1883 = vmul.f32 %v1881, %v1878
    %v1884 = vld [vmem:[#allocation6 + $0xd] sm:$0x1]
    %v1885 = vperm.slane %v1884, 0
    %v1886 = vadd.f32 %v1883, %v1885
    %v1887 = vld [vmem:[%s9] sm:$0x1]
    %v1888 = vmul.f32 %v1887, %v1672
    %v1890 = vperm.slane %v1888, 0
    %v1892 = vadd.f32 %v1886, %v1890
    %v1893 = vtanh.pop %v1892
    %v1894 = vld [vmem:[%s10] sm:$0x1]
    %v1896 = vperm.slane %v1894, 0
    %v1898 = vmul.f32 %v1893, %v1896
    %v1899 = vsel %vm159, %v1898, 0.0
    %1900 = vadd.xlane.f32.xlu0 %v1899
    %v1901 = vpop.xlane.xlu0 %1900
    %1903 = vrot.lane.b32.xlu0 %v1898, 96
    %v1904 = vpop.permute.xlu0 %1903
    %v1906 = vsel %vm159, %v1904, 0.0
    %1907 = vadd.xlane.f32.xlu0 %v1906
    %v1908 = vpop.xlane.xlu0 %1907
    %v1909 = vsel %vm450, %v1901, %v1908
    %v1910 = vmul.f32 %v1909, 1.442695
    %v1911 = vpow.pop %v1910
    %v1912 = vsel %vm454, %v1911, 0.0
    %v1913 = vrot.slane %v1912, 4
    %v1914 = vadd.f32 %v1912, %v1913
    %v1915 = vrot.slane %v1914, 2
    %v1916 = vadd.f32 %v1914, %v1915
    %v1917 = vrot.slane %v1916, 1
    %v1918 = vadd.f32 %v1916, %v1917
    %v1919 = vrcp.pop %v1918
    %v1920 = vmul.f32 %v1911, %v1919
    %1922 = vset.pattern.permute.xlu0 0
    %1923 = vperm.xlu0 %1922, %v1920
    %v1924 = vpop.permute.xlu0 %1923
    %1926 = vset.pattern.permute.xlu0 1
    %1927 = vperm.xlu0 %1926, %v1920
    %v1928 = vpop.permute.xlu0 %1927
    %v1930 = vsel %vm159, %v1924, %v1928
    %v1931 = vld [vmem:[#allocation4] sm:$0xff]
    %v1932 = vld [vmem:[#allocation4 + $0x8] sm:$0xff]
    %v1933 = vmul.f32 %v1924, %v1931
    %v1934 = vmul.f32 %v1928, %v1932
    %v1935 = vrot.slane %v1933, 4
    %v1936 = vadd.f32 %v1933, %v1935
    %v1937 = vrot.slane %v1936, 2
    %v1938 = vadd.f32 %v1936, %v1937
    %v1939 = vrot.slane %v1938, 1
    %v1940 = vadd.f32 %v1938, %v1939
    %v1941 = vrot.slane %v1934, 4
    %v1942 = vadd.f32 %v1934, %v1941
    %v1943 = vrot.slane %v1942, 2
    %v1944 = vadd.f32 %v1942, %v1943
    %v1945 = vrot.slane %v1944, 1
    %v1946 = vadd.f32 %v1944, %v1945
    %v1947 = vld [vmem:[#allocation3] sm:$0xff]
    %v1948 = vmul.f32 %v1930, %v1947
    %v1949 = vsel %vm221, %v1948, 0.0
    %v1950 = vrot.slane %v1949, 4
    %v1951 = vadd.f32 %v1949, %v1950
    %v1952 = vrot.slane %v1951, 2
    %v1953 = vadd.f32 %v1951, %v1952
    %v1954 = vrot.slane %v1953, 1
    %v1955 = vadd.f32 %v1953, %v1954
    %v1956 = vmul.f32 %v1930, %v1878
    %v1957 = vsel %vm221, %v1956, 0.0
    %v1958 = vrot.slane %v1957, 4
    %v1959 = vadd.f32 %v1957, %v1958
    %v1960 = vrot.slane %v1959, 2
    %v1961 = vadd.f32 %v1959, %v1960
    %v1962 = vrot.slane %v1961, 1
    %v1963 = vadd.f32 %v1961, %v1962
    %v1964 = vld [vmem:[#allocation5 + $0xd] sm:$0x1]
    %v1965 = vadd.f32 %v1964, %v1940
    %v1966 = vxor.u32 %v1965, 2147483648
    %v1967 = vmul.f32 %v1966, 1.442695
    %v1968 = vpow.pop %v1967
    %v1969 = vadd.f32 %v1968, 1.0
    %v1970 = vrcp.pop %v1969
    %v1971 = vmul.f32 %v1969, %v1970
    %v1972 = vsub.f32 1.0, %v1971
    %v1973 = vmul.f32 %v1970, %v1972
    %v1974 = vadd.f32 %v1970, %v1973
    %vm1975 = vweird.f32 %v1969
    %vm1976 = vweird.f32 %v1970
    %vm1977 = vmor %vm1975, %vm1976
    %v1978 = vsel %vm1977, %v1970, %v1974
    %v1979 = vand.u32 2147483647, %v1969
    %vm1980 = vcmp.eq.f32.partialorder %v1979, 8.507059e+37
    %v1981 = vand.u32 %v1969, 2147483648
    %v1982 = vor.u32 1.1754944e-38, %v1981
    %v1983 = vsel %vm1980, %v1982, %v1978
    %v1984 = vmul.f32 1.0, %v1983
    %v1985 = vtanh.pop %v1965
    %1987 = vrot.lane.b32.xlu0 %v1955, 32
    %v1988 = vpop.permute.xlu0 %1987
    %v1990 = vmul.f32 %v1984, %v1988
    %1992 = vrot.lane.b32.xlu0 %v1985, 64
    %v1993 = vpop.permute.xlu0 %1992
    %v1995 = vmul.f32 %v1984, %v1993
    %1997 = vrot.lane.b32.xlu0 %v1995, 32
    %v1998 = vpop.permute.xlu0 %1997
    %v2000 = vadd.f32 %v1990, %v1998
    %v2001 = vtanh.pop %v2000
    %2003 = vrot.lane.b32.xlu0 %v2001, 64
    %v2004 = vpop.permute.xlu0 %2003
    %v2006 = vmul.f32 %v1984, %v2004
    %v2007 = vpack.c.bf16 %v2006, %v2006
    %v2008 = vld [vmem:[#allocation13] sm:$0xf]
    %v2009 = vld [vmem:[#allocation13 + $0x4] sm:$0xf]
    %v2010 = vld [vmem:[#allocation13 + $0x8] sm:$0xf]
    %v2011 = vld [vmem:[#allocation13 + $0xc] sm:$0xf]
    %2013 = vrot.lane.b32.xlu0 %v2007, 32
    %v2014 = vpop.permute.xlu0 %2013
    %v2019 = vunpack.c.l.b16 %v2008
    %v2020 = vunpack.c.l.b16 %v2009
    %v2021 = vunpack.c.l.b16 %v2010
    %v2022 = vunpack.c.l.b16 %v2011
    %v2023 = vpack.c.b16 %v2020, %v2019
    %v2024 = vpack.c.b16 %v2022, %v2021
    %v2028 = vsel %vm159, %v2014, 0
    %2030 = vmatpush.bf16.msra.mxu0 0
    %2031 = vmatpush.bf16.msra.mxu0 0
    %2032 = vmatpush.bf16.msra.mxu0 0
    %2033 = vmatpush.bf16.msra.mxu0 0
    %2034 = vmatpush.bf16.msra.mxu0 0
    %2035 = vmatpush.bf16.msra.mxu0 0
    %2036 = vmatpush.bf16.msra.mxu0 %v2024
    %2037 = vmatpush.bf16.msra.mxu0 %v2023
    %2038 = vmatmul.bf16.gmra.mxu0 %v2028
    %v2039 = vpop.f32.mrf.mxu0
    %v2040 = vadd.f32 %v1946, %v2039
    %v2041 = vpop.f32.mrf.mxu0
    %2042 = vdwg.mxu0
    %v2043 = vld [vmem:[%s6] sm:$0x1]
    %v2044 = vadd.f32 %v2040, %v2043
    %v2045 = vxor.u32 %v2044, 2147483648
    %v2046 = vmul.f32 %v2045, 1.442695
    %v2047 = vpow.pop %v2046
    %v2048 = vadd.f32 %v2047, 1.0
    %v2049 = vrcp.pop %v2048
    %v2050 = vmul.f32 %v2048, %v2049
    %v2051 = vsub.f32 1.0, %v2050
    %v2052 = vmul.f32 %v2049, %v2051
    %v2053 = vadd.f32 %v2049, %v2052
    %vm2054 = vweird.f32 %v2048
    %vm2055 = vweird.f32 %v2049
    %vm2056 = vmor %vm2054, %vm2055
    %v2057 = vsel %vm2056, %v2049, %v2053
    %v2058 = vand.u32 2147483647, %v2048
    %vm2059 = vcmp.eq.f32.partialorder %v2058, 8.507059e+37
    %v2060 = vand.u32 %v2048, 2147483648
    %v2061 = vor.u32 1.1754944e-38, %v2060
    %v2062 = vsel %vm2059, %v2061, %v2057
    %v2063 = vmul.f32 1.0, %v2062
    %v2064 = vtanh.pop %v2044
    %v2065 = vmul.f32 %v2063, %v1955
    %2067 = vrot.lane.b32.xlu0 %v2064, 64
    %v2068 = vpop.permute.xlu0 %2067
    %v2070 = vmul.f32 %v2063, %v2068
    %2072 = vrot.lane.b32.xlu0 %v2070, 32
    %v2073 = vpop.permute.xlu0 %2072
    %v2075 = vadd.f32 %v2065, %v2073
    %v2076 = vtanh.pop %v2075
    %2078 = vrot.lane.b32.xlu0 %v2076, 64
    %v2079 = vpop.permute.xlu0 %2078
    %v2081 = vmul.f32 %v2063, %v2079
    %2083 = vrot.lane.b32.xlu0 %v2006, 32
    %v2084 = vpop.permute.xlu0 %2083
    %2086 = vst.msk [vmem:[#allocation2 + $0x5] sm:$0x1] %vm629, %v2084
    %2088 = vrot.lane.b32.xlu0 %v2081, 64
    %v2089 = vpop.permute.xlu0 %2088
    %2091 = vst.msk [vmem:[#allocation2 + $0x5] sm:$0x1] %vm635, %v2089
    %2093 = vrot.lane.b32.xlu0 %v2000, 96
    %v2094 = vpop.permute.xlu0 %2093
    %2096 = vst.msk [vmem:[#allocation3 + $0x5] sm:$0x1] %vm629, %v2094
    %2097 = vst.msk [vmem:[#allocation3 + $0x5] sm:$0x1] %vm635, %v2075
    %v2098 = vld [vmem:[#allocation12] sm:$0xf]
    %v2099 = vld [vmem:[#allocation12 + $0x4] sm:$0xf]
    %v2100 = vld [vmem:[#allocation12 + $0x8] sm:$0xf]
    %v2101 = vld [vmem:[#allocation12 + $0xc] sm:$0xf]
    %v2106 = vunpack.c.l.b16 %v2098
    %v2107 = vunpack.c.l.b16 %v2099
    %v2108 = vunpack.c.l.b16 %v2100
    %v2109 = vunpack.c.l.b16 %v2101
    %v2110 = vpack.c.b16 %v2107, %v2106
    %v2111 = vpack.c.b16 %v2109, %v2108
    %2114 = vmatpush.bf16.msra.mxu0 0
    %2115 = vmatpush.bf16.msra.mxu0 0
    %2116 = vmatpush.bf16.msra.mxu0 0
    %2117 = vmatpush.bf16.msra.mxu0 0
    %2118 = vmatpush.bf16.msra.mxu0 0
    %2119 = vmatpush.bf16.msra.mxu0 0
    %2120 = vmatpush.bf16.msra.mxu0 %v2111
    %2121 = vmatpush.bf16.msra.mxu0 %v2110
    %2122 = vmatmul.bf16.gmra.mxu0 %v2028
    %v2123 = vpop.f32.mrf.mxu0
    %v2124 = vadd.f32 0.0, %v2123
    %v2125 = vpop.f32.mrf.mxu0
    %2126 = vdwg.mxu0
    %2127 = vst [vmem:[#allocation4 + $0x5] sm:$0x1] %v2124
    %v2128 = vpack.c.bf16 %v2081, %v2081
    %v2129 = vld [vmem:[#allocation15] sm:$0xf]
    %v2130 = vld [vmem:[#allocation15 + $0x4] sm:$0xf]
    %v2131 = vld [vmem:[#allocation15 + $0x8] sm:$0xf]
    %v2132 = vld [vmem:[#allocation15 + $0xc] sm:$0xf]
    %2134 = vrot.lane.b32.xlu0 %v2128, 32
    %v2135 = vpop.permute.xlu0 %2134
    %v2140 = vunpack.c.l.b16 %v2129
    %v2141 = vunpack.c.l.b16 %v2130
    %v2142 = vunpack.c.l.b16 %v2131
    %v2143 = vunpack.c.l.b16 %v2132
    %v2144 = vpack.c.b16 %v2141, %v2140
    %v2145 = vpack.c.b16 %v2143, %v2142
    %v2149 = vsel %vm159, %v2135, 0
    %2151 = vmatpush.bf16.msra.mxu0 0
    %2152 = vmatpush.bf16.msra.mxu0 0
    %2153 = vmatpush.bf16.msra.mxu0 0
    %2154 = vmatpush.bf16.msra.mxu0 0
    %2155 = vmatpush.bf16.msra.mxu0 0
    %2156 = vmatpush.bf16.msra.mxu0 0
    %2157 = vmatpush.bf16.msra.mxu0 %v2145
    %2158 = vmatpush.bf16.msra.mxu0 %v2144
    %2159 = vmatmul.bf16.gmra.mxu0 %v2149
    %v2160 = vpop.f32.mrf.mxu0
    %v2161 = vadd.f32 0.0, %v2160
    %v2162 = vpop.f32.mrf.mxu0
    %2163 = vdwg.mxu0
    %2164 = vst [vmem:[#allocation4 + $0xd] sm:$0x1] %v2161
    %2165 = vrot.lane.b32.xlu0 %v2081, 32
    %v2166 = vpop.permute.xlu0 %2165
    %2168 = vst.msk [vmem:[#allocation18 + $0x5] sm:$0x1] %vm629, %v2166
    %v2169 = vld [vmem:[#allocation2] sm:$0xff]
    %v2170 = vld [vmem:[%s7] sm:$0x1]
    %v2172 = vperm.slane %v2170, 0
    %v2174 = vmul.f32 %v2172, %v2169
    %v2175 = vld [vmem:[#allocation6 + $0xe] sm:$0x1]
    %v2176 = vperm.slane %v2175, 0
    %v2177 = vadd.f32 %v2174, %v2176
    %v2178 = vld [vmem:[%s9] sm:$0x1]
    %v2179 = vmul.f32 %v2178, %v1963
    %v2181 = vperm.slane %v2179, 0
    %v2183 = vadd.f32 %v2177, %v2181
    %v2184 = vtanh.pop %v2183
    %v2185 = vld [vmem:[%s10] sm:$0x1]
    %v2187 = vperm.slane %v2185, 0
    %v2189 = vmul.f32 %v2184, %v2187
    %v2190 = vsel %vm159, %v2189, 0.0
    %2191 = vadd.xlane.f32.xlu0 %v2190
    %v2192 = vpop.xlane.xlu0 %2191
    %2194 = vrot.lane.b32.xlu0 %v2189, 96
    %v2195 = vpop.permute.xlu0 %2194
    %v2197 = vsel %vm159, %v2195, 0.0
    %2198 = vadd.xlane.f32.xlu0 %v2197
    %v2199 = vpop.xlane.xlu0 %2198
    %v2200 = vsel %vm450, %v2192, %v2199
    %v2201 = vmul.f32 %v2200, 1.442695
    %v2202 = vpow.pop %v2201
    %v2203 = vsel %vm454, %v2202, 0.0
    %v2204 = vrot.slane %v2203, 4
    %v2205 = vadd.f32 %v2203, %v2204
    %v2206 = vrot.slane %v2205, 2
    %v2207 = vadd.f32 %v2205, %v2206
    %v2208 = vrot.slane %v2207, 1
    %v2209 = vadd.f32 %v2207, %v2208
    %v2210 = vrcp.pop %v2209
    %v2211 = vmul.f32 %v2202, %v2210
    %2213 = vset.pattern.permute.xlu0 0
    %2214 = vperm.xlu0 %2213, %v2211
    %v2215 = vpop.permute.xlu0 %2214
    %2217 = vset.pattern.permute.xlu0 1
    %2218 = vperm.xlu0 %2217, %v2211
    %v2219 = vpop.permute.xlu0 %2218
    %v2221 = vsel %vm159, %v2215, %v2219
    %v2222 = vld [vmem:[#allocation4] sm:$0xff]
    %v2223 = vld [vmem:[#allocation4 + $0x8] sm:$0xff]
    %v2224 = vmul.f32 %v2215, %v2222
    %v2225 = vmul.f32 %v2219, %v2223
    %v2226 = vrot.slane %v2224, 4
    %v2227 = vadd.f32 %v2224, %v2226
    %v2228 = vrot.slane %v2227, 2
    %v2229 = vadd.f32 %v2227, %v2228
    %v2230 = vrot.slane %v2229, 1
    %v2231 = vadd.f32 %v2229, %v2230
    %v2232 = vrot.slane %v2225, 4
    %v2233 = vadd.f32 %v2225, %v2232
    %v2234 = vrot.slane %v2233, 2
    %v2235 = vadd.f32 %v2233, %v2234
    %v2236 = vrot.slane %v2235, 1
    %v2237 = vadd.f32 %v2235, %v2236
    %v2238 = vld [vmem:[#allocation3] sm:$0xff]
    %v2239 = vmul.f32 %v2221, %v2238
    %v2240 = vsel %vm221, %v2239, 0.0
    %v2241 = vrot.slane %v2240, 4
    %v2242 = vadd.f32 %v2240, %v2241
    %v2243 = vrot.slane %v2242, 2
    %v2244 = vadd.f32 %v2242, %v2243
    %v2245 = vrot.slane %v2244, 1
    %v2246 = vadd.f32 %v2244, %v2245
    %v2247 = vmul.f32 %v2221, %v2169
    %v2248 = vsel %vm221, %v2247, 0.0
    %v2249 = vrot.slane %v2248, 4
    %v2250 = vadd.f32 %v2248, %v2249
    %v2251 = vrot.slane %v2250, 2
    %v2252 = vadd.f32 %v2250, %v2251
    %v2253 = vrot.slane %v2252, 1
    %v2254 = vadd.f32 %v2252, %v2253
    %v2255 = vld [vmem:[#allocation5 + $0xe] sm:$0x1]
    %v2256 = vadd.f32 %v2255, %v2231
    %v2257 = vxor.u32 %v2256, 2147483648
    %v2258 = vmul.f32 %v2257, 1.442695
    %v2259 = vpow.pop %v2258
    %v2260 = vadd.f32 %v2259, 1.0
    %v2261 = vrcp.pop %v2260
    %v2262 = vmul.f32 %v2260, %v2261
    %v2263 = vsub.f32 1.0, %v2262
    %v2264 = vmul.f32 %v2261, %v2263
    %v2265 = vadd.f32 %v2261, %v2264
    %vm2266 = vweird.f32 %v2260
    %vm2267 = vweird.f32 %v2261
    %vm2268 = vmor %vm2266, %vm2267
    %v2269 = vsel %vm2268, %v2261, %v2265
    %v2270 = vand.u32 2147483647, %v2260
    %vm2271 = vcmp.eq.f32.partialorder %v2270, 8.507059e+37
    %v2272 = vand.u32 %v2260, 2147483648
    %v2273 = vor.u32 1.1754944e-38, %v2272
    %v2274 = vsel %vm2271, %v2273, %v2269
    %v2275 = vmul.f32 1.0, %v2274
    %v2276 = vtanh.pop %v2256
    %2278 = vrot.lane.b32.xlu0 %v2246, 32
    %v2279 = vpop.permute.xlu0 %2278
    %v2281 = vmul.f32 %v2275, %v2279
    %2283 = vrot.lane.b32.xlu0 %v2276, 64
    %v2284 = vpop.permute.xlu0 %2283
    %v2286 = vmul.f32 %v2275, %v2284
    %2288 = vrot.lane.b32.xlu0 %v2286, 32
    %v2289 = vpop.permute.xlu0 %2288
    %v2291 = vadd.f32 %v2281, %v2289
    %v2292 = vtanh.pop %v2291
    %2294 = vrot.lane.b32.xlu0 %v2292, 64
    %v2295 = vpop.permute.xlu0 %2294
    %v2297 = vmul.f32 %v2275, %v2295
    %v2298 = vpack.c.bf16 %v2297, %v2297
    %v2299 = vld [vmem:[#allocation13] sm:$0xf]
    %v2300 = vld [vmem:[#allocation13 + $0x4] sm:$0xf]
    %v2301 = vld [vmem:[#allocation13 + $0x8] sm:$0xf]
    %v2302 = vld [vmem:[#allocation13 + $0xc] sm:$0xf]
    %2304 = vrot.lane.b32.xlu0 %v2298, 32
    %v2305 = vpop.permute.xlu0 %2304
    %v2310 = vunpack.c.l.b16 %v2299
    %v2311 = vunpack.c.l.b16 %v2300
    %v2312 = vunpack.c.l.b16 %v2301
    %v2313 = vunpack.c.l.b16 %v2302
    %v2314 = vpack.c.b16 %v2311, %v2310
    %v2315 = vpack.c.b16 %v2313, %v2312
    %v2319 = vsel %vm159, %v2305, 0
    %2321 = vmatpush.bf16.msra.mxu0 0
    %2322 = vmatpush.bf16.msra.mxu0 0
    %2323 = vmatpush.bf16.msra.mxu0 0
    %2324 = vmatpush.bf16.msra.mxu0 0
    %2325 = vmatpush.bf16.msra.mxu0 0
    %2326 = vmatpush.bf16.msra.mxu0 0
    %2327 = vmatpush.bf16.msra.mxu0 %v2315
    %2328 = vmatpush.bf16.msra.mxu0 %v2314
    %2329 = vmatmul.bf16.gmra.mxu0 %v2319
    %v2330 = vpop.f32.mrf.mxu0
    %v2331 = vadd.f32 %v2237, %v2330
    %v2332 = vpop.f32.mrf.mxu0
    %2333 = vdwg.mxu0
    %v2334 = vld [vmem:[%s6] sm:$0x1]
    %v2335 = vadd.f32 %v2331, %v2334
    %v2336 = vxor.u32 %v2335, 2147483648
    %v2337 = vmul.f32 %v2336, 1.442695
    %v2338 = vpow.pop %v2337
    %v2339 = vadd.f32 %v2338, 1.0
    %v2340 = vrcp.pop %v2339
    %v2341 = vmul.f32 %v2339, %v2340
    %v2342 = vsub.f32 1.0, %v2341
    %v2343 = vmul.f32 %v2340, %v2342
    %v2344 = vadd.f32 %v2340, %v2343
    %vm2345 = vweird.f32 %v2339
    %vm2346 = vweird.f32 %v2340
    %vm2347 = vmor %vm2345, %vm2346
    %v2348 = vsel %vm2347, %v2340, %v2344
    %v2349 = vand.u32 2147483647, %v2339
    %vm2350 = vcmp.eq.f32.partialorder %v2349, 8.507059e+37
    %v2351 = vand.u32 %v2339, 2147483648
    %v2352 = vor.u32 1.1754944e-38, %v2351
    %v2353 = vsel %vm2350, %v2352, %v2348
    %v2354 = vmul.f32 1.0, %v2353
    %v2355 = vtanh.pop %v2335
    %v2356 = vmul.f32 %v2354, %v2246
    %2358 = vrot.lane.b32.xlu0 %v2355, 64
    %v2359 = vpop.permute.xlu0 %2358
    %v2361 = vmul.f32 %v2354, %v2359
    %2363 = vrot.lane.b32.xlu0 %v2361, 32
    %v2364 = vpop.permute.xlu0 %2363
    %v2366 = vadd.f32 %v2356, %v2364
    %v2367 = vtanh.pop %v2366
    %2369 = vrot.lane.b32.xlu0 %v2367, 64
    %v2370 = vpop.permute.xlu0 %2369
    %v2372 = vmul.f32 %v2354, %v2370
    %2374 = vrot.lane.b32.xlu0 %v2297, 32
    %v2375 = vpop.permute.xlu0 %2374
    %2377 = vst.msk [vmem:[#allocation2 + $0x6] sm:$0x1] %vm629, %v2375
    %2379 = vrot.lane.b32.xlu0 %v2372, 64
    %v2380 = vpop.permute.xlu0 %2379
    %2382 = vst.msk [vmem:[#allocation2 + $0x6] sm:$0x1] %vm635, %v2380
    %2384 = vrot.lane.b32.xlu0 %v2291, 96
    %v2385 = vpop.permute.xlu0 %2384
    %2387 = vst.msk [vmem:[#allocation3 + $0x6] sm:$0x1] %vm629, %v2385
    %2388 = vst.msk [vmem:[#allocation3 + $0x6] sm:$0x1] %vm635, %v2366
    %v2389 = vld [vmem:[#allocation12] sm:$0xf]
    %v2390 = vld [vmem:[#allocation12 + $0x4] sm:$0xf]
    %v2391 = vld [vmem:[#allocation12 + $0x8] sm:$0xf]
    %v2392 = vld [vmem:[#allocation12 + $0xc] sm:$0xf]
    %v2397 = vunpack.c.l.b16 %v2389
    %v2398 = vunpack.c.l.b16 %v2390
    %v2399 = vunpack.c.l.b16 %v2391
    %v2400 = vunpack.c.l.b16 %v2392
    %v2401 = vpack.c.b16 %v2398, %v2397
    %v2402 = vpack.c.b16 %v2400, %v2399
    %2405 = vmatpush.bf16.msra.mxu0 0
    %2406 = vmatpush.bf16.msra.mxu0 0
    %2407 = vmatpush.bf16.msra.mxu0 0
    %2408 = vmatpush.bf16.msra.mxu0 0
    %2409 = vmatpush.bf16.msra.mxu0 0
    %2410 = vmatpush.bf16.msra.mxu0 0
    %2411 = vmatpush.bf16.msra.mxu0 %v2402
    %2412 = vmatpush.bf16.msra.mxu0 %v2401
    %2413 = vmatmul.bf16.gmra.mxu0 %v2319
    %v2414 = vpop.f32.mrf.mxu0
    %v2415 = vadd.f32 0.0, %v2414
    %v2416 = vpop.f32.mrf.mxu0
    %2417 = vdwg.mxu0
    %2418 = vst [vmem:[#allocation4 + $0x6] sm:$0x1] %v2415
    %v2419 = vpack.c.bf16 %v2372, %v2372
    %v2420 = vld [vmem:[#allocation15] sm:$0xf]
    %v2421 = vld [vmem:[#allocation15 + $0x4] sm:$0xf]
    %v2422 = vld [vmem:[#allocation15 + $0x8] sm:$0xf]
    %v2423 = vld [vmem:[#allocation15 + $0xc] sm:$0xf]
    %2425 = vrot.lane.b32.xlu0 %v2419, 32
    %v2426 = vpop.permute.xlu0 %2425
    %v2431 = vunpack.c.l.b16 %v2420
    %v2432 = vunpack.c.l.b16 %v2421
    %v2433 = vunpack.c.l.b16 %v2422
    %v2434 = vunpack.c.l.b16 %v2423
    %v2435 = vpack.c.b16 %v2432, %v2431
    %v2436 = vpack.c.b16 %v2434, %v2433
    %v2440 = vsel %vm159, %v2426, 0
    %2442 = vmatpush.bf16.msra.mxu0 0
    %2443 = vmatpush.bf16.msra.mxu0 0
    %2444 = vmatpush.bf16.msra.mxu0 0
    %2445 = vmatpush.bf16.msra.mxu0 0
    %2446 = vmatpush.bf16.msra.mxu0 0
    %2447 = vmatpush.bf16.msra.mxu0 0
    %2448 = vmatpush.bf16.msra.mxu0 %v2436
    %2449 = vmatpush.bf16.msra.mxu0 %v2435
    %2450 = vmatmul.bf16.gmra.mxu0 %v2440
    %v2451 = vpop.f32.mrf.mxu0
    %v2452 = vadd.f32 0.0, %v2451
    %v2453 = vpop.f32.mrf.mxu0
    %2454 = vdwg.mxu0
    %2455 = vst [vmem:[#allocation4 + $0xe] sm:$0x1] %v2452
    %2456 = vrot.lane.b32.xlu0 %v2372, 32
    %v2457 = vpop.permute.xlu0 %2456
    %2459 = vst.msk [vmem:[#allocation18 + $0x6] sm:$0x1] %vm629, %v2457
    %v2460 = vld [vmem:[#allocation2] sm:$0xff]
    %v2461 = vld [vmem:[%s7] sm:$0x1]
    %v2463 = vperm.slane %v2461, 0
    %v2465 = vmul.f32 %v2463, %v2460
    %v2466 = vld [vmem:[#allocation6 + $0xf] sm:$0x1]
    %v2467 = vperm.slane %v2466, 0
    %v2468 = vadd.f32 %v2465, %v2467
    %v2469 = vld [vmem:[%s9] sm:$0x1]
    %v2470 = vmul.f32 %v2469, %v2254
    %v2472 = vperm.slane %v2470, 0
    %v2474 = vadd.f32 %v2468, %v2472
    %v2475 = vtanh.pop %v2474
    %v2476 = vld [vmem:[%s10] sm:$0x1]
    %v2478 = vperm.slane %v2476, 0
    %v2480 = vmul.f32 %v2475, %v2478
    %v2481 = vsel %vm159, %v2480, 0.0
    %2482 = vadd.xlane.f32.xlu0 %v2481
    %v2483 = vpop.xlane.xlu0 %2482
    %2485 = vrot.lane.b32.xlu0 %v2480, 96
    %v2486 = vpop.permute.xlu0 %2485
    %v2488 = vsel %vm159, %v2486, 0.0
    %2489 = vadd.xlane.f32.xlu0 %v2488
    %v2490 = vpop.xlane.xlu0 %2489
    %v2491 = vsel %vm450, %v2483, %v2490
    %v2492 = vmul.f32 %v2491, 1.442695
    %v2493 = vpow.pop %v2492
    %v2494 = vsel %vm454, %v2493, 0.0
    %v2495 = vrot.slane %v2494, 4
    %v2496 = vadd.f32 %v2494, %v2495
    %v2497 = vrot.slane %v2496, 2
    %v2498 = vadd.f32 %v2496, %v2497
    %v2499 = vrot.slane %v2498, 1
    %v2500 = vadd.f32 %v2498, %v2499
    %v2501 = vrcp.pop %v2500
    %v2502 = vmul.f32 %v2493, %v2501
    %2504 = vset.pattern.permute.xlu0 0
    %2505 = vperm.xlu0 %2504, %v2502
    %v2506 = vpop.permute.xlu0 %2505
    %2508 = vset.pattern.permute.xlu0 1
    %2509 = vperm.xlu0 %2508, %v2502
    %v2510 = vpop.permute.xlu0 %2509
    %v2512 = vsel %vm159, %v2506, %v2510
    %v2513 = vld [vmem:[#allocation4] sm:$0xff]
    %v2514 = vld [vmem:[#allocation4 + $0x8] sm:$0xff]
    %v2515 = vmul.f32 %v2506, %v2513
    %v2516 = vmul.f32 %v2510, %v2514
    %v2517 = vrot.slane %v2515, 4
    %v2518 = vadd.f32 %v2515, %v2517
    %v2519 = vrot.slane %v2518, 2
    %v2520 = vadd.f32 %v2518, %v2519
    %v2521 = vrot.slane %v2520, 1
    %v2522 = vadd.f32 %v2520, %v2521
    %v2523 = vrot.slane %v2516, 4
    %v2524 = vadd.f32 %v2516, %v2523
    %v2525 = vrot.slane %v2524, 2
    %v2526 = vadd.f32 %v2524, %v2525
    %v2527 = vrot.slane %v2526, 1
    %v2528 = vadd.f32 %v2526, %v2527
    %v2529 = vld [vmem:[#allocation3] sm:$0xff]
    %v2530 = vmul.f32 %v2512, %v2529
    %v2531 = vsel %vm221, %v2530, 0.0
    %v2532 = vrot.slane %v2531, 4
    %v2533 = vadd.f32 %v2531, %v2532
    %v2534 = vrot.slane %v2533, 2
    %v2535 = vadd.f32 %v2533, %v2534
    %v2536 = vrot.slane %v2535, 1
    %v2537 = vadd.f32 %v2535, %v2536
    %v2538 = vmul.f32 %v2512, %v2460
    %v2539 = vsel %vm221, %v2538, 0.0
    %v2540 = vrot.slane %v2539, 4
    %v2541 = vadd.f32 %v2539, %v2540
    %v2542 = vrot.slane %v2541, 2
    %v2543 = vadd.f32 %v2541, %v2542
    %v2544 = vrot.slane %v2543, 1
    %v2545 = vadd.f32 %v2543, %v2544
    %v2546 = vld [vmem:[#allocation5 + $0xf] sm:$0x1]
    %v2547 = vadd.f32 %v2546, %v2522
    %v2548 = vxor.u32 %v2547, 2147483648
    %v2549 = vmul.f32 %v2548, 1.442695
    %v2550 = vpow.pop %v2549
    %v2551 = vadd.f32 %v2550, 1.0
    %v2552 = vrcp.pop %v2551
    %v2553 = vmul.f32 %v2551, %v2552
    %v2554 = vsub.f32 1.0, %v2553
    %v2555 = vmul.f32 %v2552, %v2554
    %v2556 = vadd.f32 %v2552, %v2555
    %vm2557 = vweird.f32 %v2551
    %vm2558 = vweird.f32 %v2552
    %vm2559 = vmor %vm2557, %vm2558
    %v2560 = vsel %vm2559, %v2552, %v2556
    %v2561 = vand.u32 2147483647, %v2551
    %vm2562 = vcmp.eq.f32.partialorder %v2561, 8.507059e+37
    %v2563 = vand.u32 %v2551, 2147483648
    %v2564 = vor.u32 1.1754944e-38, %v2563
    %v2565 = vsel %vm2562, %v2564, %v2560
    %v2566 = vmul.f32 1.0, %v2565
    %v2567 = vtanh.pop %v2547
    %2569 = vrot.lane.b32.xlu0 %v2537, 32
    %v2570 = vpop.permute.xlu0 %2569
    %v2572 = vmul.f32 %v2566, %v2570
    %2574 = vrot.lane.b32.xlu0 %v2567, 64
    %v2575 = vpop.permute.xlu0 %2574
    %v2577 = vmul.f32 %v2566, %v2575
    %2579 = vrot.lane.b32.xlu0 %v2577, 32
    %v2580 = vpop.permute.xlu0 %2579
    %v2582 = vadd.f32 %v2572, %v2580
    %v2583 = vtanh.pop %v2582
    %2585 = vrot.lane.b32.xlu0 %v2583, 64
    %v2586 = vpop.permute.xlu0 %2585
    %v2588 = vmul.f32 %v2566, %v2586
    %v2589 = vpack.c.bf16 %v2588, %v2588
    %v2590 = vld [vmem:[#allocation13] sm:$0xf]
    %v2591 = vld [vmem:[#allocation13 + $0x4] sm:$0xf]
    %v2592 = vld [vmem:[#allocation13 + $0x8] sm:$0xf]
    %v2593 = vld [vmem:[#allocation13 + $0xc] sm:$0xf]
    %2595 = vrot.lane.b32.xlu0 %v2589, 32
    %v2596 = vpop.permute.xlu0 %2595
    %v2601 = vunpack.c.l.b16 %v2590
    %v2602 = vunpack.c.l.b16 %v2591
    %v2603 = vunpack.c.l.b16 %v2592
    %v2604 = vunpack.c.l.b16 %v2593
    %v2605 = vpack.c.b16 %v2602, %v2601
    %v2606 = vpack.c.b16 %v2604, %v2603
    %v2610 = vsel %vm159, %v2596, 0
    %2612 = vmatpush.bf16.msra.mxu0 0
    %2613 = vmatpush.bf16.msra.mxu0 0
    %2614 = vmatpush.bf16.msra.mxu0 0
    %2615 = vmatpush.bf16.msra.mxu0 0
    %2616 = vmatpush.bf16.msra.mxu0 0
    %2617 = vmatpush.bf16.msra.mxu0 0
    %2618 = vmatpush.bf16.msra.mxu0 %v2606
    %2619 = vmatpush.bf16.msra.mxu0 %v2605
    %2620 = vmatmul.bf16.gmra.mxu0 %v2610
    %v2621 = vpop.f32.mrf.mxu0
    %v2622 = vadd.f32 %v2528, %v2621
    %v2623 = vpop.f32.mrf.mxu0
    %2624 = vdwg.mxu0
    %v2625 = vld [vmem:[%s6] sm:$0x1]
    %v2626 = vadd.f32 %v2622, %v2625
    %v2627 = vxor.u32 %v2626, 2147483648
    %v2628 = vmul.f32 %v2627, 1.442695
    %v2629 = vpow.pop %v2628
    %v2630 = vadd.f32 %v2629, 1.0
    %v2631 = vrcp.pop %v2630
    %v2632 = vmul.f32 %v2630, %v2631
    %v2633 = vsub.f32 1.0, %v2632
    %v2634 = vmul.f32 %v2631, %v2633
    %v2635 = vadd.f32 %v2631, %v2634
    %vm2636 = vweird.f32 %v2630
    %vm2637 = vweird.f32 %v2631
    %vm2638 = vmor %vm2636, %vm2637
    %v2639 = vsel %vm2638, %v2631, %v2635
    %v2640 = vand.u32 2147483647, %v2630
    %vm2641 = vcmp.eq.f32.partialorder %v2640, 8.507059e+37
    %v2642 = vand.u32 %v2630, 2147483648
    %v2643 = vor.u32 1.1754944e-38, %v2642
    %v2644 = vsel %vm2641, %v2643, %v2639
    %v2645 = vmul.f32 1.0, %v2644
    %v2646 = vtanh.pop %v2626
    %v2647 = vmul.f32 %v2645, %v2537
    %2649 = vrot.lane.b32.xlu0 %v2646, 64
    %v2650 = vpop.permute.xlu0 %2649
    %v2652 = vmul.f32 %v2645, %v2650
    %2654 = vrot.lane.b32.xlu0 %v2652, 32
    %v2655 = vpop.permute.xlu0 %2654
    %v2657 = vadd.f32 %v2647, %v2655
    %v2658 = vtanh.pop %v2657
    %2660 = vrot.lane.b32.xlu0 %v2658, 64
    %v2661 = vpop.permute.xlu0 %2660
    %v2663 = vmul.f32 %v2645, %v2661
    %2665 = vrot.lane.b32.xlu0 %v2588, 32
    %v2666 = vpop.permute.xlu0 %2665
    %2668 = vst.msk [vmem:[#allocation2 + $0x7] sm:$0x1] %vm629, %v2666
    %2670 = vrot.lane.b32.xlu0 %v2663, 64
    %v2671 = vpop.permute.xlu0 %2670
    %2673 = vst.msk [vmem:[#allocation2 + $0x7] sm:$0x1] %vm635, %v2671
    %2675 = vrot.lane.b32.xlu0 %v2582, 96
    %v2676 = vpop.permute.xlu0 %2675
    %2678 = vst.msk [vmem:[#allocation3 + $0x7] sm:$0x1] %vm629, %v2676
    %2679 = vst.msk [vmem:[#allocation3 + $0x7] sm:$0x1] %vm635, %v2657
    %v2680 = vld [vmem:[#allocation12] sm:$0xf]
    %v2681 = vld [vmem:[#allocation12 + $0x4] sm:$0xf]
    %v2682 = vld [vmem:[#allocation12 + $0x8] sm:$0xf]
    %v2683 = vld [vmem:[#allocation12 + $0xc] sm:$0xf]
    %v2688 = vunpack.c.l.b16 %v2680
    %v2689 = vunpack.c.l.b16 %v2681
    %v2690 = vunpack.c.l.b16 %v2682
    %v2691 = vunpack.c.l.b16 %v2683
    %v2692 = vpack.c.b16 %v2689, %v2688
    %v2693 = vpack.c.b16 %v2691, %v2690
    %2696 = vmatpush.bf16.msra.mxu0 0
    %2697 = vmatpush.bf16.msra.mxu0 0
    %2698 = vmatpush.bf16.msra.mxu0 0
    %2699 = vmatpush.bf16.msra.mxu0 0
    %2700 = vmatpush.bf16.msra.mxu0 0
    %2701 = vmatpush.bf16.msra.mxu0 0
    %2702 = vmatpush.bf16.msra.mxu0 %v2693
    %2703 = vmatpush.bf16.msra.mxu0 %v2692
    %2704 = vmatmul.bf16.gmra.mxu0 %v2610
    %v2705 = vpop.f32.mrf.mxu0
    %v2706 = vadd.f32 0.0, %v2705
    %v2707 = vpop.f32.mrf.mxu0
    %2708 = vdwg.mxu0
    %2709 = vst [vmem:[#allocation4 + $0x7] sm:$0x1] %v2706
    %v2710 = vpack.c.bf16 %v2663, %v2663
    %v2711 = vld [vmem:[#allocation15] sm:$0xf]
    %v2712 = vld [vmem:[#allocation15 + $0x4] sm:$0xf]
    %v2713 = vld [vmem:[#allocation15 + $0x8] sm:$0xf]
    %v2714 = vld [vmem:[#allocation15 + $0xc] sm:$0xf]
    %2716 = vrot.lane.b32.xlu0 %v2710, 32
    %v2717 = vpop.permute.xlu0 %2716
    %v2722 = vunpack.c.l.b16 %v2711
    %v2723 = vunpack.c.l.b16 %v2712
    %v2724 = vunpack.c.l.b16 %v2713
    %v2725 = vunpack.c.l.b16 %v2714
    %v2726 = vpack.c.b16 %v2723, %v2722
    %v2727 = vpack.c.b16 %v2725, %v2724
    %v2731 = vsel %vm159, %v2717, 0
    %2733 = vmatpush.bf16.msra.mxu0 0
    %2734 = vmatpush.bf16.msra.mxu0 0
    %2735 = vmatpush.bf16.msra.mxu0 0
    %2736 = vmatpush.bf16.msra.mxu0 0
    %2737 = vmatpush.bf16.msra.mxu0 0
    %2738 = vmatpush.bf16.msra.mxu0 0
    %2739 = vmatpush.bf16.msra.mxu0 %v2727
    %2740 = vmatpush.bf16.msra.mxu0 %v2726
    %2741 = vmatmul.bf16.gmra.mxu0 %v2731
    %v2742 = vpop.f32.mrf.mxu0
    %v2743 = vadd.f32 0.0, %v2742
    %v2744 = vpop.f32.mrf.mxu0
    %2745 = vdwg.mxu0
    %2746 = vst [vmem:[#allocation4 + $0xf] sm:$0x1] %v2743
    %2747 = vrot.lane.b32.xlu0 %v2663, 32
    %v2748 = vpop.permute.xlu0 %2747
    %2750 = vst.msk [vmem:[#allocation18 + $0x7] sm:$0x1] %vm629, %v2748
    %v2751 = vld [vmem:[#allocation2] sm:$0xff]
    %v2752 = vld [vmem:[%s7] sm:$0x1]
    %v2754 = vperm.slane %v2752, 0
    %v2756 = vmul.f32 %v2754, %v2751
    %v2757 = vld [vmem:[#allocation6 + $0x10] sm:$0x1]
    %v2758 = vperm.slane %v2757, 0
    %v2759 = vadd.f32 %v2756, %v2758
    %v2760 = vld [vmem:[%s9] sm:$0x1]
    %v2761 = vmul.f32 %v2760, %v2545
    %v2763 = vperm.slane %v2761, 0
    %v2765 = vadd.f32 %v2759, %v2763
    %v2766 = vtanh.pop %v2765
    %v2767 = vld [vmem:[%s10] sm:$0x1]
    %v2769 = vperm.slane %v2767, 0
    %v2771 = vmul.f32 %v2766, %v2769
    %v2772 = vsel %vm159, %v2771, 0.0
    %2773 = vadd.xlane.f32.xlu0 %v2772
    %v2774 = vpop.xlane.xlu0 %2773
    %2776 = vrot.lane.b32.xlu0 %v2771, 96
    %v2777 = vpop.permute.xlu0 %2776
    %v2779 = vsel %vm159, %v2777, 0.0
    %2780 = vadd.xlane.f32.xlu0 %v2779
    %v2781 = vpop.xlane.xlu0 %2780
    %v2782 = vsel %vm450, %v2774, %v2781
    %v2783 = vmul.f32 %v2782, 1.442695
    %v2784 = vpow.pop %v2783
    %v2785 = vsel %vm454, %v2784, 0.0
    %v2786 = vrot.slane %v2785, 4
    %v2787 = vadd.f32 %v2785, %v2786
    %v2788 = vrot.slane %v2787, 2
    %v2789 = vadd.f32 %v2787, %v2788
    %v2790 = vrot.slane %v2789, 1
    %v2791 = vadd.f32 %v2789, %v2790
    %v2792 = vrcp.pop %v2791
    %v2793 = vmul.f32 %v2784, %v2792
    %2795 = vset.pattern.permute.xlu0 0
    %2796 = vperm.xlu0 %2795, %v2793
    %v2797 = vpop.permute.xlu0 %2796
    %2799 = vset.pattern.permute.xlu0 1
    %2800 = vperm.xlu0 %2799, %v2793
    %v2801 = vpop.permute.xlu0 %2800
    %v2803 = vsel %vm159, %v2797, %v2801
    %v2804 = vld [vmem:[#allocation4] sm:$0xff]
    %v2805 = vld [vmem:[#allocation4 + $0x8] sm:$0xff]
    %v2806 = vmul.f32 %v2797, %v2804
    %v2807 = vmul.f32 %v2801, %v2805
    %v2808 = vrot.slane %v2806, 4
    %v2809 = vadd.f32 %v2806, %v2808
    %v2810 = vrot.slane %v2809, 2
    %v2811 = vadd.f32 %v2809, %v2810
    %v2812 = vrot.slane %v2811, 1
    %v2813 = vadd.f32 %v2811, %v2812
    %v2814 = vrot.slane %v2807, 4
    %v2815 = vadd.f32 %v2807, %v2814
    %v2816 = vrot.slane %v2815, 2
    %v2817 = vadd.f32 %v2815, %v2816
    %v2818 = vrot.slane %v2817, 1
    %v2819 = vadd.f32 %v2817, %v2818
    %v2820 = vld [vmem:[#allocation3] sm:$0xff]
    %v2821 = vmul.f32 %v2803, %v2820
    %v2822 = vsel %vm221, %v2821, 0.0
    %v2823 = vrot.slane %v2822, 4
    %v2824 = vadd.f32 %v2822, %v2823
    %v2825 = vrot.slane %v2824, 2
    %v2826 = vadd.f32 %v2824, %v2825
    %v2827 = vrot.slane %v2826, 1
    %v2828 = vadd.f32 %v2826, %v2827
    %v2829 = vmul.f32 %v2803, %v2751
    %v2830 = vsel %vm221, %v2829, 0.0
    %v2831 = vrot.slane %v2830, 4
    %v2832 = vadd.f32 %v2830, %v2831
    %v2833 = vrot.slane %v2832, 2
    %v2834 = vadd.f32 %v2832, %v2833
    %v2835 = vrot.slane %v2834, 1
    %v2836 = vadd.f32 %v2834, %v2835
    %v2837 = vld [vmem:[#allocation5 + $0x10] sm:$0x1]
    %v2838 = vadd.f32 %v2837, %v2813
    %v2839 = vxor.u32 %v2838, 2147483648
    %v2840 = vmul.f32 %v2839, 1.442695
    %v2841 = vpow.pop %v2840
    %v2842 = vadd.f32 %v2841, 1.0
    %v2843 = vrcp.pop %v2842
    %v2844 = vmul.f32 %v2842, %v2843
    %v2845 = vsub.f32 1.0, %v2844
    %v2846 = vmul.f32 %v2843, %v2845
    %v2847 = vadd.f32 %v2843, %v2846
    %vm2848 = vweird.f32 %v2842
    %vm2849 = vweird.f32 %v2843
    %vm2850 = vmor %vm2848, %vm2849
    %v2851 = vsel %vm2850, %v2843, %v2847
    %v2852 = vand.u32 2147483647, %v2842
    %vm2853 = vcmp.eq.f32.partialorder %v2852, 8.507059e+37
    %v2854 = vand.u32 %v2842, 2147483648
    %v2855 = vor.u32 1.1754944e-38, %v2854
    %v2856 = vsel %vm2853, %v2855, %v2851
    %v2857 = vmul.f32 1.0, %v2856
    %v2858 = vtanh.pop %v2838
    %2860 = vrot.lane.b32.xlu0 %v2828, 32
    %v2861 = vpop.permute.xlu0 %2860
    %v2863 = vmul.f32 %v2857, %v2861
    %2865 = vrot.lane.b32.xlu0 %v2858, 64
    %v2866 = vpop.permute.xlu0 %2865
    %v2868 = vmul.f32 %v2857, %v2866
    %2870 = vrot.lane.b32.xlu0 %v2868, 32
    %v2871 = vpop.permute.xlu0 %2870
    %v2873 = vadd.f32 %v2863, %v2871
    %v2874 = vtanh.pop %v2873
    %2876 = vrot.lane.b32.xlu0 %v2874, 64
    %v2877 = vpop.permute.xlu0 %2876
    %v2879 = vmul.f32 %v2857, %v2877
    %v2880 = vpack.c.bf16 %v2879, %v2879
    %v2881 = vld [vmem:[#allocation13] sm:$0xf]
    %v2882 = vld [vmem:[#allocation13 + $0x4] sm:$0xf]
    %v2883 = vld [vmem:[#allocation13 + $0x8] sm:$0xf]
    %v2884 = vld [vmem:[#allocation13 + $0xc] sm:$0xf]
    %2886 = vrot.lane.b32.xlu0 %v2880, 32
    %v2887 = vpop.permute.xlu0 %2886
    %v2892 = vunpack.c.l.b16 %v2881
    %v2893 = vunpack.c.l.b16 %v2882
    %v2894 = vunpack.c.l.b16 %v2883
    %v2895 = vunpack.c.l.b16 %v2884
    %v2896 = vpack.c.b16 %v2893, %v2892
    %v2897 = vpack.c.b16 %v2895, %v2894
    %v2901 = vsel %vm159, %v2887, 0
    %2903 = vmatpush.bf16.msra.mxu0 0
    %2904 = vmatpush.bf16.msra.mxu0 0
    %2905 = vmatpush.bf16.msra.mxu0 0
    %2906 = vmatpush.bf16.msra.mxu0 0
    %2907 = vmatpush.bf16.msra.mxu0 0
    %2908 = vmatpush.bf16.msra.mxu0 0
    %2909 = vmatpush.bf16.msra.mxu0 %v2897
    %2910 = vmatpush.bf16.msra.mxu0 %v2896
    %2911 = vmatmul.bf16.gmra.mxu0 %v2901
    %v2912 = vpop.f32.mrf.mxu0
    %v2913 = vadd.f32 %v2819, %v2912
    %v2914 = vpop.f32.mrf.mxu0
    %2915 = vdwg.mxu0
    %v2916 = vld [vmem:[%s6] sm:$0x1]
    %v2917 = vadd.f32 %v2913, %v2916
    %v2918 = vxor.u32 %v2917, 2147483648
    %v2919 = vmul.f32 %v2918, 1.442695
    %v2920 = vpow.pop %v2919
    %v2921 = vadd.f32 %v2920, 1.0
    %v2922 = vrcp.pop %v2921
    %v2923 = vmul.f32 %v2921, %v2922
    %v2924 = vsub.f32 1.0, %v2923
    %v2925 = vmul.f32 %v2922, %v2924
    %v2926 = vadd.f32 %v2922, %v2925
    %vm2927 = vweird.f32 %v2921
    %vm2928 = vweird.f32 %v2922
    %vm2929 = vmor %vm2927, %vm2928
    %v2930 = vsel %vm2929, %v2922, %v2926
    %v2931 = vand.u32 2147483647, %v2921
    %vm2932 = vcmp.eq.f32.partialorder %v2931, 8.507059e+37
    %v2933 = vand.u32 %v2921, 2147483648
    %v2934 = vor.u32 1.1754944e-38, %v2933
    %v2935 = vsel %vm2932, %v2934, %v2930
    %v2936 = vmul.f32 1.0, %v2935
    %v2937 = vtanh.pop %v2917
    %v2938 = vmul.f32 %v2936, %v2828
    %2940 = vrot.lane.b32.xlu0 %v2937, 64
    %v2941 = vpop.permute.xlu0 %2940
    %v2943 = vmul.f32 %v2936, %v2941
    %2945 = vrot.lane.b32.xlu0 %v2943, 32
    %v2946 = vpop.permute.xlu0 %2945
    %v2948 = vadd.f32 %v2938, %v2946
    %v2949 = vtanh.pop %v2948
    %2951 = vrot.lane.b32.xlu0 %v2949, 64
    %v2952 = vpop.permute.xlu0 %2951
    %v2954 = vmul.f32 %v2936, %v2952
    %2956 = vrot.lane.b32.xlu0 %v2879, 32
    %v2957 = vpop.permute.xlu0 %2956
    %2959 = vst.msk [vmem:[#allocation2] sm:$0x1] %vm629, %v2957
    %2961 = vrot.lane.b32.xlu0 %v2954, 64
    %v2962 = vpop.permute.xlu0 %2961
    %2964 = vst.msk [vmem:[#allocation2] sm:$0x1] %vm635, %v2962
    %2966 = vrot.lane.b32.xlu0 %v2873, 96
    %v2967 = vpop.permute.xlu0 %2966
    %2969 = vst.msk [vmem:[#allocation3] sm:$0x1] %vm629, %v2967
    %2970 = vst.msk [vmem:[#allocation3] sm:$0x1] %vm635, %v2948
    %v2971 = vld [vmem:[#allocation12] sm:$0xf]
    %v2972 = vld [vmem:[#allocation12 + $0x4] sm:$0xf]
    %v2973 = vld [vmem:[#allocation12 + $0x8] sm:$0xf]
    %v2974 = vld [vmem:[#allocation12 + $0xc] sm:$0xf]
    %v2979 = vunpack.c.l.b16 %v2971
    %v2980 = vunpack.c.l.b16 %v2972
    %v2981 = vunpack.c.l.b16 %v2973
    %v2982 = vunpack.c.l.b16 %v2974
    %v2983 = vpack.c.b16 %v2980, %v2979
    %v2984 = vpack.c.b16 %v2982, %v2981
    %2987 = vmatpush.bf16.msra.mxu0 0
    %2988 = vmatpush.bf16.msra.mxu0 0
    %2989 = vmatpush.bf16.msra.mxu0 0
    %2990 = vmatpush.bf16.msra.mxu0 0
    %2991 = vmatpush.bf16.msra.mxu0 0
    %2992 = vmatpush.bf16.msra.mxu0 0
    %2993 = vmatpush.bf16.msra.mxu0 %v2984
    %2994 = vmatpush.bf16.msra.mxu0 %v2983
    %2995 = vmatmul.bf16.gmra.mxu0 %v2901
    %v2996 = vpop.f32.mrf.mxu0
    %v2997 = vadd.f32 0.0, %v2996
    %v2998 = vpop.f32.mrf.mxu0
    %2999 = vdwg.mxu0
    %3000 = vst [vmem:[#allocation4] sm:$0x1] %v2997
    %v3001 = vpack.c.bf16 %v2954, %v2954
    %v3002 = vld [vmem:[#allocation15] sm:$0xf]
    %v3003 = vld [vmem:[#allocation15 + $0x4] sm:$0xf]
    %v3004 = vld [vmem:[#allocation15 + $0x8] sm:$0xf]
    %v3005 = vld [vmem:[#allocation15 + $0xc] sm:$0xf]
    %3007 = vrot.lane.b32.xlu0 %v3001, 32
    %v3008 = vpop.permute.xlu0 %3007
    %v3013 = vunpack.c.l.b16 %v3002
    %v3014 = vunpack.c.l.b16 %v3003
    %v3015 = vunpack.c.l.b16 %v3004
    %v3016 = vunpack.c.l.b16 %v3005
    %v3017 = vpack.c.b16 %v3014, %v3013
    %v3018 = vpack.c.b16 %v3016, %v3015
    %v3022 = vsel %vm159, %v3008, 0
    %3024 = vmatpush.bf16.msra.mxu0 0
    %3025 = vmatpush.bf16.msra.mxu0 0
    %3026 = vmatpush.bf16.msra.mxu0 0
    %3027 = vmatpush.bf16.msra.mxu0 0
    %3028 = vmatpush.bf16.msra.mxu0 0
    %3029 = vmatpush.bf16.msra.mxu0 0
    %3030 = vmatpush.bf16.msra.mxu0 %v3018
    %3031 = vmatpush.bf16.msra.mxu0 %v3017
    %3032 = vmatmul.bf16.gmra.mxu0 %v3022
    %v3033 = vpop.f32.mrf.mxu0
    %v3034 = vadd.f32 0.0, %v3033
    %v3035 = vpop.f32.mrf.mxu0
    %3036 = vdwg.mxu0
    %3037 = vst [vmem:[#allocation4 + $0x8] sm:$0x1] %v3034
    %3038 = vrot.lane.b32.xlu0 %v2954, 32
    %v3039 = vpop.permute.xlu0 %3038
    %3041 = vst.msk [vmem:[#allocation18 + $0x8] sm:$0x1] %vm629, %v3039
    %v3042 = vld [vmem:[#allocation2] sm:$0xff]
    %v3043 = vld [vmem:[%s7] sm:$0x1]
    %v3045 = vperm.slane %v3043, 0
    %v3047 = vmul.f32 %v3045, %v3042
    %v3048 = vld [vmem:[#allocation6 + $0x11] sm:$0x1]
    %v3049 = vperm.slane %v3048, 0
    %v3050 = vadd.f32 %v3047, %v3049
    %v3051 = vld [vmem:[%s9] sm:$0x1]
    %v3052 = vmul.f32 %v3051, %v2836
    %v3054 = vperm.slane %v3052, 0
    %v3056 = vadd.f32 %v3050, %v3054
    %v3057 = vtanh.pop %v3056
    %v3058 = vld [vmem:[%s10] sm:$0x1]
    %v3060 = vperm.slane %v3058, 0
    %v3062 = vmul.f32 %v3057, %v3060
    %v3063 = vsel %vm159, %v3062, 0.0
    %3064 = vadd.xlane.f32.xlu0 %v3063
    %v3065 = vpop.xlane.xlu0 %3064
    %3067 = vrot.lane.b32.xlu0 %v3062, 96
    %v3068 = vpop.permute.xlu0 %3067
    %v3070 = vsel %vm159, %v3068, 0.0
    %3071 = vadd.xlane.f32.xlu0 %v3070
    %v3072 = vpop.xlane.xlu0 %3071
    %v3073 = vsel %vm450, %v3065, %v3072
    %v3074 = vmul.f32 %v3073, 1.442695
    %v3075 = vpow.pop %v3074
    %v3076 = vsel %vm454, %v3075, 0.0
    %v3077 = vrot.slane %v3076, 4
    %v3078 = vadd.f32 %v3076, %v3077
    %v3079 = vrot.slane %v3078, 2
    %v3080 = vadd.f32 %v3078, %v3079
    %v3081 = vrot.slane %v3080, 1
    %v3082 = vadd.f32 %v3080, %v3081
    %v3083 = vrcp.pop %v3082
    %v3084 = vmul.f32 %v3075, %v3083
    %3086 = vset.pattern.permute.xlu0 0
    %3087 = vperm.xlu0 %3086, %v3084
    %v3088 = vpop.permute.xlu0 %3087
    %3090 = vset.pattern.permute.xlu0 1
    %3091 = vperm.xlu0 %3090, %v3084
    %v3092 = vpop.permute.xlu0 %3091
    %v3094 = vsel %vm159, %v3088, %v3092
    %v3095 = vld [vmem:[#allocation4] sm:$0xff]
    %v3096 = vld [vmem:[#allocation4 + $0x8] sm:$0xff]
    %v3097 = vmul.f32 %v3088, %v3095
    %v3098 = vmul.f32 %v3092, %v3096
    %v3099 = vrot.slane %v3097, 4
    %v3100 = vadd.f32 %v3097, %v3099
    %v3101 = vrot.slane %v3100, 2
    %v3102 = vadd.f32 %v3100, %v3101
    %v3103 = vrot.slane %v3102, 1
    %v3104 = vadd.f32 %v3102, %v3103
    %v3105 = vrot.slane %v3098, 4
    %v3106 = vadd.f32 %v3098, %v3105
    %v3107 = vrot.slane %v3106, 2
    %v3108 = vadd.f32 %v3106, %v3107
    %v3109 = vrot.slane %v3108, 1
    %v3110 = vadd.f32 %v3108, %v3109
    %v3111 = vld [vmem:[#allocation3] sm:$0xff]
    %v3112 = vmul.f32 %v3094, %v3111
    %v3113 = vsel %vm221, %v3112, 0.0
    %v3114 = vrot.slane %v3113, 4
    %v3115 = vadd.f32 %v3113, %v3114
    %v3116 = vrot.slane %v3115, 2
    %v3117 = vadd.f32 %v3115, %v3116
    %v3118 = vrot.slane %v3117, 1
    %v3119 = vadd.f32 %v3117, %v3118
    %v3120 = vmul.f32 %v3094, %v3042
    %v3121 = vsel %vm221, %v3120, 0.0
    %v3122 = vrot.slane %v3121, 4
    %v3123 = vadd.f32 %v3121, %v3122
    %v3124 = vrot.slane %v3123, 2
    %v3125 = vadd.f32 %v3123, %v3124
    %v3126 = vrot.slane %v3125, 1
    %v3127 = vadd.f32 %v3125, %v3126
    %v3128 = vld [vmem:[#allocation5 + $0x11] sm:$0x1]
    %v3129 = vadd.f32 %v3128, %v3104
    %v3130 = vxor.u32 %v3129, 2147483648
    %v3131 = vmul.f32 %v3130, 1.442695
    %v3132 = vpow.pop %v3131
    %v3133 = vadd.f32 %v3132, 1.0
    %v3134 = vrcp.pop %v3133
    %v3135 = vmul.f32 %v3133, %v3134
    %v3136 = vsub.f32 1.0, %v3135
    %v3137 = vmul.f32 %v3134, %v3136
    %v3138 = vadd.f32 %v3134, %v3137
    %vm3139 = vweird.f32 %v3133
    %vm3140 = vweird.f32 %v3134
    %vm3141 = vmor %vm3139, %vm3140
    %v3142 = vsel %vm3141, %v3134, %v3138
    %v3143 = vand.u32 2147483647, %v3133
    %vm3144 = vcmp.eq.f32.partialorder %v3143, 8.507059e+37
    %v3145 = vand.u32 %v3133, 2147483648
    %v3146 = vor.u32 1.1754944e-38, %v3145
    %v3147 = vsel %vm3144, %v3146, %v3142
    %v3148 = vmul.f32 1.0, %v3147
    %v3149 = vtanh.pop %v3129
    %3151 = vrot.lane.b32.xlu0 %v3119, 32
    %v3152 = vpop.permute.xlu0 %3151
    %v3154 = vmul.f32 %v3148, %v3152
    %3156 = vrot.lane.b32.xlu0 %v3149, 64
    %v3157 = vpop.permute.xlu0 %3156
    %v3159 = vmul.f32 %v3148, %v3157
    %3161 = vrot.lane.b32.xlu0 %v3159, 32
    %v3162 = vpop.permute.xlu0 %3161
    %v3164 = vadd.f32 %v3154, %v3162
    %v3165 = vtanh.pop %v3164
    %3167 = vrot.lane.b32.xlu0 %v3165, 64
    %v3168 = vpop.permute.xlu0 %3167
    %v3170 = vmul.f32 %v3148, %v3168
    %v3171 = vpack.c.bf16 %v3170, %v3170
    %v3172 = vld [vmem:[#allocation13] sm:$0xf]
    %v3173 = vld [vmem:[#allocation13 + $0x4] sm:$0xf]
    %v3174 = vld [vmem:[#allocation13 + $0x8] sm:$0xf]
    %v3175 = vld [vmem:[#allocation13 + $0xc] sm:$0xf]
    %3177 = vrot.lane.b32.xlu0 %v3171, 32
    %v3178 = vpop.permute.xlu0 %3177
    %v3183 = vunpack.c.l.b16 %v3172
    %v3184 = vunpack.c.l.b16 %v3173
    %v3185 = vunpack.c.l.b16 %v3174
    %v3186 = vunpack.c.l.b16 %v3175
    %v3187 = vpack.c.b16 %v3184, %v3183
    %v3188 = vpack.c.b16 %v3186, %v3185
    %v3192 = vsel %vm159, %v3178, 0
    %3194 = vmatpush.bf16.msra.mxu0 0
    %3195 = vmatpush.bf16.msra.mxu0 0
    %3196 = vmatpush.bf16.msra.mxu0 0
    %3197 = vmatpush.bf16.msra.mxu0 0
    %3198 = vmatpush.bf16.msra.mxu0 0
    %3199 = vmatpush.bf16.msra.mxu0 0
    %3200 = vmatpush.bf16.msra.mxu0 %v3188
    %3201 = vmatpush.bf16.msra.mxu0 %v3187
    %3202 = vmatmul.bf16.gmra.mxu0 %v3192
    %v3203 = vpop.f32.mrf.mxu0
    %v3204 = vadd.f32 %v3110, %v3203
    %v3205 = vpop.f32.mrf.mxu0
    %3206 = vdwg.mxu0
    %v3207 = vld [vmem:[%s6] sm:$0x1]
    %v3208 = vadd.f32 %v3204, %v3207
    %v3209 = vxor.u32 %v3208, 2147483648
    %v3210 = vmul.f32 %v3209, 1.442695
    %v3211 = vpow.pop %v3210
    %v3212 = vadd.f32 %v3211, 1.0
    %v3213 = vrcp.pop %v3212
    %v3214 = vmul.f32 %v3212, %v3213
    %v3215 = vsub.f32 1.0, %v3214
    %v3216 = vmul.f32 %v3213, %v3215
    %v3217 = vadd.f32 %v3213, %v3216
    %vm3218 = vweird.f32 %v3212
    %vm3219 = vweird.f32 %v3213
    %vm3220 = vmor %vm3218, %vm3219
    %v3221 = vsel %vm3220, %v3213, %v3217
    %v3222 = vand.u32 2147483647, %v3212
    %vm3223 = vcmp.eq.f32.partialorder %v3222, 8.507059e+37
    %v3224 = vand.u32 %v3212, 2147483648
    %v3225 = vor.u32 1.1754944e-38, %v3224
    %v3226 = vsel %vm3223, %v3225, %v3221
    %v3227 = vmul.f32 1.0, %v3226
    %v3228 = vtanh.pop %v3208
    %v3229 = vmul.f32 %v3227, %v3119
    %3231 = vrot.lane.b32.xlu0 %v3228, 64
    %v3232 = vpop.permute.xlu0 %3231
    %v3234 = vmul.f32 %v3227, %v3232
    %3236 = vrot.lane.b32.xlu0 %v3234, 32
    %v3237 = vpop.permute.xlu0 %3236
    %v3239 = vadd.f32 %v3229, %v3237
    %v3240 = vtanh.pop %v3239
    %3242 = vrot.lane.b32.xlu0 %v3240, 64
    %v3243 = vpop.permute.xlu0 %3242
    %v3245 = vmul.f32 %v3227, %v3243
    %3247 = vrot.lane.b32.xlu0 %v3170, 32
    %v3248 = vpop.permute.xlu0 %3247
    %3250 = vst.msk [vmem:[#allocation2 + $0x1] sm:$0x1] %vm629, %v3248
    %3252 = vrot.lane.b32.xlu0 %v3245, 64
    %v3253 = vpop.permute.xlu0 %3252
    %3255 = vst.msk [vmem:[#allocation2 + $0x1] sm:$0x1] %vm635, %v3253
    %3257 = vrot.lane.b32.xlu0 %v3164, 96
    %v3258 = vpop.permute.xlu0 %3257
    %3260 = vst.msk [vmem:[#allocation3 + $0x1] sm:$0x1] %vm629, %v3258
    %3261 = vst.msk [vmem:[#allocation3 + $0x1] sm:$0x1] %vm635, %v3239
    %v3262 = vld [vmem:[#allocation12] sm:$0xf]
    %v3263 = vld [vmem:[#allocation12 + $0x4] sm:$0xf]
    %v3264 = vld [vmem:[#allocation12 + $0x8] sm:$0xf]
    %v3265 = vld [vmem:[#allocation12 + $0xc] sm:$0xf]
    %v3270 = vunpack.c.l.b16 %v3262
    %v3271 = vunpack.c.l.b16 %v3263
    %v3272 = vunpack.c.l.b16 %v3264
    %v3273 = vunpack.c.l.b16 %v3265
    %v3274 = vpack.c.b16 %v3271, %v3270
    %v3275 = vpack.c.b16 %v3273, %v3272
    %3278 = vmatpush.bf16.msra.mxu0 0
    %3279 = vmatpush.bf16.msra.mxu0 0
    %3280 = vmatpush.bf16.msra.mxu0 0
    %3281 = vmatpush.bf16.msra.mxu0 0
    %3282 = vmatpush.bf16.msra.mxu0 0
    %3283 = vmatpush.bf16.msra.mxu0 0
    %3284 = vmatpush.bf16.msra.mxu0 %v3275
    %3285 = vmatpush.bf16.msra.mxu0 %v3274
    %3286 = vmatmul.bf16.gmra.mxu0 %v3192
    %v3287 = vpop.f32.mrf.mxu0
    %v3288 = vadd.f32 0.0, %v3287
    %v3289 = vpop.f32.mrf.mxu0
    %3290 = vdwg.mxu0
    %3291 = vst [vmem:[#allocation4 + $0x1] sm:$0x1] %v3288
    %v3292 = vpack.c.bf16 %v3245, %v3245
    %v3293 = vld [vmem:[#allocation15] sm:$0xf]
    %v3294 = vld [vmem:[#allocation15 + $0x4] sm:$0xf]
    %v3295 = vld [vmem:[#allocation15 + $0x8] sm:$0xf]
    %v3296 = vld [vmem:[#allocation15 + $0xc] sm:$0xf]
    %3298 = vrot.lane.b32.xlu0 %v3292, 32
    %v3299 = vpop.permute.xlu0 %3298
    %v3304 = vunpack.c.l.b16 %v3293
    %v3305 = vunpack.c.l.b16 %v3294
    %v3306 = vunpack.c.l.b16 %v3295
    %v3307 = vunpack.c.l.b16 %v3296
    %v3308 = vpack.c.b16 %v3305, %v3304
    %v3309 = vpack.c.b16 %v3307, %v3306
    %v3313 = vsel %vm159, %v3299, 0
    %3315 = vmatpush.bf16.msra.mxu0 0
    %3316 = vmatpush.bf16.msra.mxu0 0
    %3317 = vmatpush.bf16.msra.mxu0 0
    %3318 = vmatpush.bf16.msra.mxu0 0
    %3319 = vmatpush.bf16.msra.mxu0 0
    %3320 = vmatpush.bf16.msra.mxu0 0
    %3321 = vmatpush.bf16.msra.mxu0 %v3309
    %3322 = vmatpush.bf16.msra.mxu0 %v3308
    %3323 = vmatmul.bf16.gmra.mxu0 %v3313
    %v3324 = vpop.f32.mrf.mxu0
    %v3325 = vadd.f32 0.0, %v3324
    %v3326 = vpop.f32.mrf.mxu0
    %3327 = vdwg.mxu0
    %3328 = vst [vmem:[#allocation4 + $0x9] sm:$0x1] %v3325
    %3329 = vrot.lane.b32.xlu0 %v3245, 32
    %v3330 = vpop.permute.xlu0 %3329
    %3332 = vst.msk [vmem:[#allocation18 + $0x9] sm:$0x1] %vm629, %v3330
    %v3333 = vld [vmem:[#allocation2] sm:$0xff]
    %v3334 = vld [vmem:[%s7] sm:$0x1]
    %v3336 = vperm.slane %v3334, 0
    %v3338 = vmul.f32 %v3336, %v3333
    %v3339 = vld [vmem:[#allocation6 + $0x12] sm:$0x1]
    %v3340 = vperm.slane %v3339, 0
    %v3341 = vadd.f32 %v3338, %v3340
    %v3342 = vld [vmem:[%s9] sm:$0x1]
    %v3343 = vmul.f32 %v3342, %v3127
    %v3345 = vperm.slane %v3343, 0
    %v3347 = vadd.f32 %v3341, %v3345
    %v3348 = vtanh.pop %v3347
    %v3349 = vld [vmem:[%s10] sm:$0x1]
    %v3351 = vperm.slane %v3349, 0
    %v3353 = vmul.f32 %v3348, %v3351
    %v3354 = vsel %vm159, %v3353, 0.0
    %3355 = vadd.xlane.f32.xlu0 %v3354
    %v3356 = vpop.xlane.xlu0 %3355
    %3358 = vrot.lane.b32.xlu0 %v3353, 96
    %v3359 = vpop.permute.xlu0 %3358
    %v3361 = vsel %vm159, %v3359, 0.0
    %3362 = vadd.xlane.f32.xlu0 %v3361
    %v3363 = vpop.xlane.xlu0 %3362
    %v3364 = vsel %vm450, %v3356, %v3363
    %v3365 = vmul.f32 %v3364, 1.442695
    %v3366 = vpow.pop %v3365
    %v3367 = vsel %vm454, %v3366, 0.0
    %v3368 = vrot.slane %v3367, 4
    %v3369 = vadd.f32 %v3367, %v3368
    %v3370 = vrot.slane %v3369, 2
    %v3371 = vadd.f32 %v3369, %v3370
    %v3372 = vrot.slane %v3371, 1
    %v3373 = vadd.f32 %v3371, %v3372
    %v3374 = vrcp.pop %v3373
    %v3375 = vmul.f32 %v3366, %v3374
    %3377 = vset.pattern.permute.xlu0 0
    %3378 = vperm.xlu0 %3377, %v3375
    %v3379 = vpop.permute.xlu0 %3378
    %3381 = vset.pattern.permute.xlu0 1
    %3382 = vperm.xlu0 %3381, %v3375
    %v3383 = vpop.permute.xlu0 %3382
    %v3385 = vsel %vm159, %v3379, %v3383
    %v3386 = vld [vmem:[#allocation4] sm:$0xff]
    %v3387 = vld [vmem:[#allocation4 + $0x8] sm:$0xff]
    %v3388 = vmul.f32 %v3379, %v3386
    %v3389 = vmul.f32 %v3383, %v3387
    %v3390 = vrot.slane %v3388, 4
    %v3391 = vadd.f32 %v3388, %v3390
    %v3392 = vrot.slane %v3391, 2
    %v3393 = vadd.f32 %v3391, %v3392
    %v3394 = vrot.slane %v3393, 1
    %v3395 = vadd.f32 %v3393, %v3394
    %v3396 = vrot.slane %v3389, 4
    %v3397 = vadd.f32 %v3389, %v3396
    %v3398 = vrot.slane %v3397, 2
    %v3399 = vadd.f32 %v3397, %v3398
    %v3400 = vrot.slane %v3399, 1
    %v3401 = vadd.f32 %v3399, %v3400
    %v3402 = vld [vmem:[#allocation3] sm:$0xff]
    %v3403 = vmul.f32 %v3385, %v3402
    %v3404 = vsel %vm221, %v3403, 0.0
    %v3405 = vrot.slane %v3404, 4
    %v3406 = vadd.f32 %v3404, %v3405
    %v3407 = vrot.slane %v3406, 2
    %v3408 = vadd.f32 %v3406, %v3407
    %v3409 = vrot.slane %v3408, 1
    %v3410 = vadd.f32 %v3408, %v3409
    %v3411 = vmul.f32 %v3385, %v3333
    %v3412 = vsel %vm221, %v3411, 0.0
    %v3413 = vrot.slane %v3412, 4
    %v3414 = vadd.f32 %v3412, %v3413
    %v3415 = vrot.slane %v3414, 2
    %v3416 = vadd.f32 %v3414, %v3415
    %v3417 = vrot.slane %v3416, 1
    %v3418 = vadd.f32 %v3416, %v3417
    %v3419 = vld [vmem:[#allocation5 + $0x12] sm:$0x1]
    %v3420 = vadd.f32 %v3419, %v3395
    %v3421 = vxor.u32 %v3420, 2147483648
    %v3422 = vmul.f32 %v3421, 1.442695
    %v3423 = vpow.pop %v3422
    %v3424 = vadd.f32 %v3423, 1.0
    %v3425 = vrcp.pop %v3424
    %v3426 = vmul.f32 %v3424, %v3425
    %v3427 = vsub.f32 1.0, %v3426
    %v3428 = vmul.f32 %v3425, %v3427
    %v3429 = vadd.f32 %v3425, %v3428
    %vm3430 = vweird.f32 %v3424
    %vm3431 = vweird.f32 %v3425
    %vm3432 = vmor %vm3430, %vm3431
    %v3433 = vsel %vm3432, %v3425, %v3429
    %v3434 = vand.u32 2147483647, %v3424
    %vm3435 = vcmp.eq.f32.partialorder %v3434, 8.507059e+37
    %v3436 = vand.u32 %v3424, 2147483648
    %v3437 = vor.u32 1.1754944e-38, %v3436
    %v3438 = vsel %vm3435, %v3437, %v3433
    %v3439 = vmul.f32 1.0, %v3438
    %v3440 = vtanh.pop %v3420
    %3442 = vrot.lane.b32.xlu0 %v3410, 32
    %v3443 = vpop.permute.xlu0 %3442
    %v3445 = vmul.f32 %v3439, %v3443
    %3447 = vrot.lane.b32.xlu0 %v3440, 64
    %v3448 = vpop.permute.xlu0 %3447
    %v3450 = vmul.f32 %v3439, %v3448
    %3452 = vrot.lane.b32.xlu0 %v3450, 32
    %v3453 = vpop.permute.xlu0 %3452
    %v3455 = vadd.f32 %v3445, %v3453
    %v3456 = vtanh.pop %v3455
    %3458 = vrot.lane.b32.xlu0 %v3456, 64
    %v3459 = vpop.permute.xlu0 %3458
    %v3461 = vmul.f32 %v3439, %v3459
    %v3462 = vpack.c.bf16 %v3461, %v3461
    %v3463 = vld [vmem:[#allocation13] sm:$0xf]
    %v3464 = vld [vmem:[#allocation13 + $0x4] sm:$0xf]
    %v3465 = vld [vmem:[#allocation13 + $0x8] sm:$0xf]
    %v3466 = vld [vmem:[#allocation13 + $0xc] sm:$0xf]
    %3468 = vrot.lane.b32.xlu0 %v3462, 32
    %v3469 = vpop.permute.xlu0 %3468
    %v3474 = vunpack.c.l.b16 %v3463
    %v3475 = vunpack.c.l.b16 %v3464
    %v3476 = vunpack.c.l.b16 %v3465
    %v3477 = vunpack.c.l.b16 %v3466
    %v3478 = vpack.c.b16 %v3475, %v3474
    %v3479 = vpack.c.b16 %v3477, %v3476
    %v3483 = vsel %vm159, %v3469, 0
    %3485 = vmatpush.bf16.msra.mxu0 0
    %3486 = vmatpush.bf16.msra.mxu0 0
    %3487 = vmatpush.bf16.msra.mxu0 0
    %3488 = vmatpush.bf16.msra.mxu0 0
    %3489 = vmatpush.bf16.msra.mxu0 0
    %3490 = vmatpush.bf16.msra.mxu0 0
    %3491 = vmatpush.bf16.msra.mxu0 %v3479
    %3492 = vmatpush.bf16.msra.mxu0 %v3478
    %3493 = vmatmul.bf16.gmra.mxu0 %v3483
    %v3494 = vpop.f32.mrf.mxu0
    %v3495 = vadd.f32 %v3401, %v3494
    %v3496 = vpop.f32.mrf.mxu0
    %3497 = vdwg.mxu0
    %v3498 = vld [vmem:[%s6] sm:$0x1]
    %v3499 = vadd.f32 %v3495, %v3498
    %v3500 = vxor.u32 %v3499, 2147483648
    %v3501 = vmul.f32 %v3500, 1.442695
    %v3502 = vpow.pop %v3501
    %v3503 = vadd.f32 %v3502, 1.0
    %v3504 = vrcp.pop %v3503
    %v3505 = vmul.f32 %v3503, %v3504
    %v3506 = vsub.f32 1.0, %v3505
    %v3507 = vmul.f32 %v3504, %v3506
    %v3508 = vadd.f32 %v3504, %v3507
    %vm3509 = vweird.f32 %v3503
    %vm3510 = vweird.f32 %v3504
    %vm3511 = vmor %vm3509, %vm3510
    %v3512 = vsel %vm3511, %v3504, %v3508
    %v3513 = vand.u32 2147483647, %v3503
    %vm3514 = vcmp.eq.f32.partialorder %v3513, 8.507059e+37
    %v3515 = vand.u32 %v3503, 2147483648
    %v3516 = vor.u32 1.1754944e-38, %v3515
    %v3517 = vsel %vm3514, %v3516, %v3512
    %v3518 = vmul.f32 1.0, %v3517
    %v3519 = vtanh.pop %v3499
    %v3520 = vmul.f32 %v3518, %v3410
    %3522 = vrot.lane.b32.xlu0 %v3519, 64
    %v3523 = vpop.permute.xlu0 %3522
    %v3525 = vmul.f32 %v3518, %v3523
    %3527 = vrot.lane.b32.xlu0 %v3525, 32
    %v3528 = vpop.permute.xlu0 %3527
    %v3530 = vadd.f32 %v3520, %v3528
    %v3531 = vtanh.pop %v3530
    %3533 = vrot.lane.b32.xlu0 %v3531, 64
    %v3534 = vpop.permute.xlu0 %3533
    %v3536 = vmul.f32 %v3518, %v3534
    %3538 = vrot.lane.b32.xlu0 %v3461, 32
    %v3539 = vpop.permute.xlu0 %3538
    %3541 = vst.msk [vmem:[#allocation2 + $0x2] sm:$0x1] %vm629, %v3539
    %3543 = vrot.lane.b32.xlu0 %v3536, 64
    %v3544 = vpop.permute.xlu0 %3543
    %3546 = vst.msk [vmem:[#allocation2 + $0x2] sm:$0x1] %vm635, %v3544
    %3548 = vrot.lane.b32.xlu0 %v3455, 96
    %v3549 = vpop.permute.xlu0 %3548
    %3551 = vst.msk [vmem:[#allocation3 + $0x2] sm:$0x1] %vm629, %v3549
    %3552 = vst.msk [vmem:[#allocation3 + $0x2] sm:$0x1] %vm635, %v3530
    %v3553 = vld [vmem:[#allocation12] sm:$0xf]
    %v3554 = vld [vmem:[#allocation12 + $0x4] sm:$0xf]
    %v3555 = vld [vmem:[#allocation12 + $0x8] sm:$0xf]
    %v3556 = vld [vmem:[#allocation12 + $0xc] sm:$0xf]
    %v3561 = vunpack.c.l.b16 %v3553
    %v3562 = vunpack.c.l.b16 %v3554
    %v3563 = vunpack.c.l.b16 %v3555
    %v3564 = vunpack.c.l.b16 %v3556
    %v3565 = vpack.c.b16 %v3562, %v3561
    %v3566 = vpack.c.b16 %v3564, %v3563
    %3569 = vmatpush.bf16.msra.mxu0 0
    %3570 = vmatpush.bf16.msra.mxu0 0
    %3571 = vmatpush.bf16.msra.mxu0 0
    %3572 = vmatpush.bf16.msra.mxu0 0
    %3573 = vmatpush.bf16.msra.mxu0 0
    %3574 = vmatpush.bf16.msra.mxu0 0
    %3575 = vmatpush.bf16.msra.mxu0 %v3566
    %3576 = vmatpush.bf16.msra.mxu0 %v3565
    %3577 = vmatmul.bf16.gmra.mxu0 %v3483
    %v3578 = vpop.f32.mrf.mxu0
    %v3579 = vadd.f32 0.0, %v3578
    %v3580 = vpop.f32.mrf.mxu0
    %3581 = vdwg.mxu0
    %3582 = vst [vmem:[#allocation4 + $0x2] sm:$0x1] %v3579
    %v3583 = vpack.c.bf16 %v3536, %v3536
    %v3584 = vld [vmem:[#allocation15] sm:$0xf]
    %v3585 = vld [vmem:[#allocation15 + $0x4] sm:$0xf]
    %v3586 = vld [vmem:[#allocation15 + $0x8] sm:$0xf]
    %v3587 = vld [vmem:[#allocation15 + $0xc] sm:$0xf]
    %3589 = vrot.lane.b32.xlu0 %v3583, 32
    %v3590 = vpop.permute.xlu0 %3589
    %v3595 = vunpack.c.l.b16 %v3584
    %v3596 = vunpack.c.l.b16 %v3585
    %v3597 = vunpack.c.l.b16 %v3586
    %v3598 = vunpack.c.l.b16 %v3587
    %v3599 = vpack.c.b16 %v3596, %v3595
    %v3600 = vpack.c.b16 %v3598, %v3597
    %v3604 = vsel %vm159, %v3590, 0
    %3606 = vmatpush.bf16.msra.mxu0 0
    %3607 = vmatpush.bf16.msra.mxu0 0
    %3608 = vmatpush.bf16.msra.mxu0 0
    %3609 = vmatpush.bf16.msra.mxu0 0
    %3610 = vmatpush.bf16.msra.mxu0 0
    %3611 = vmatpush.bf16.msra.mxu0 0
    %3612 = vmatpush.bf16.msra.mxu0 %v3600
    %3613 = vmatpush.bf16.msra.mxu0 %v3599
    %3614 = vmatmul.bf16.gmra.mxu0 %v3604
    %v3615 = vpop.f32.mrf.mxu0
    %v3616 = vadd.f32 0.0, %v3615
    %v3617 = vpop.f32.mrf.mxu0
    %3618 = vdwg.mxu0
    %3619 = vst [vmem:[#allocation4 + $0xa] sm:$0x1] %v3616
    %3620 = vrot.lane.b32.xlu0 %v3536, 32
    %v3621 = vpop.permute.xlu0 %3620
    %3623 = vst.msk [vmem:[#allocation18 + $0xa] sm:$0x1] %vm629, %v3621
    %v3624 = vld [vmem:[#allocation2] sm:$0xff]
    %v3625 = vld [vmem:[%s7] sm:$0x1]
    %v3627 = vperm.slane %v3625, 0
    %v3629 = vmul.f32 %v3627, %v3624
    %v3630 = vld [vmem:[#allocation6 + $0x13] sm:$0x1]
    %v3631 = vperm.slane %v3630, 0
    %v3632 = vadd.f32 %v3629, %v3631
    %v3633 = vld [vmem:[%s9] sm:$0x1]
    %v3634 = vmul.f32 %v3633, %v3418
    %v3636 = vperm.slane %v3634, 0
    %v3638 = vadd.f32 %v3632, %v3636
    %v3639 = vtanh.pop %v3638
    %v3640 = vld [vmem:[%s10] sm:$0x1]
    %v3642 = vperm.slane %v3640, 0
    %v3644 = vmul.f32 %v3639, %v3642
    %v3645 = vsel %vm159, %v3644, 0.0
    %3646 = vadd.xlane.f32.xlu0 %v3645
    %v3647 = vpop.xlane.xlu0 %3646
    %3649 = vrot.lane.b32.xlu0 %v3644, 96
    %v3650 = vpop.permute.xlu0 %3649
    %v3652 = vsel %vm159, %v3650, 0.0
    %3653 = vadd.xlane.f32.xlu0 %v3652
    %v3654 = vpop.xlane.xlu0 %3653
    %v3655 = vsel %vm450, %v3647, %v3654
    %v3656 = vmul.f32 %v3655, 1.442695
    %v3657 = vpow.pop %v3656
    %v3658 = vsel %vm454, %v3657, 0.0
    %v3659 = vrot.slane %v3658, 4
    %v3660 = vadd.f32 %v3658, %v3659
    %v3661 = vrot.slane %v3660, 2
    %v3662 = vadd.f32 %v3660, %v3661
    %v3663 = vrot.slane %v3662, 1
    %v3664 = vadd.f32 %v3662, %v3663
    %v3665 = vrcp.pop %v3664
    %v3666 = vmul.f32 %v3657, %v3665
    %3668 = vset.pattern.permute.xlu0 0
    %3669 = vperm.xlu0 %3668, %v3666
    %v3670 = vpop.permute.xlu0 %3669
    %3672 = vset.pattern.permute.xlu0 1
    %3673 = vperm.xlu0 %3672, %v3666
    %v3674 = vpop.permute.xlu0 %3673
    %v3676 = vsel %vm159, %v3670, %v3674
    %v3677 = vld [vmem:[#allocation4] sm:$0xff]
    %v3678 = vld [vmem:[#allocation4 + $0x8] sm:$0xff]
    %v3679 = vmul.f32 %v3670, %v3677
    %v3680 = vmul.f32 %v3674, %v3678
    %v3681 = vrot.slane %v3679, 4
    %v3682 = vadd.f32 %v3679, %v3681
    %v3683 = vrot.slane %v3682, 2
    %v3684 = vadd.f32 %v3682, %v3683
    %v3685 = vrot.slane %v3684, 1
    %v3686 = vadd.f32 %v3684, %v3685
    %v3687 = vrot.slane %v3680, 4
    %v3688 = vadd.f32 %v3680, %v3687
    %v3689 = vrot.slane %v3688, 2
    %v3690 = vadd.f32 %v3688, %v3689
    %v3691 = vrot.slane %v3690, 1
    %v3692 = vadd.f32 %v3690, %v3691
    %v3693 = vld [vmem:[#allocation3] sm:$0xff]
    %v3694 = vmul.f32 %v3676, %v3693
    %v3695 = vsel %vm221, %v3694, 0.0
    %v3696 = vrot.slane %v3695, 4
    %v3697 = vadd.f32 %v3695, %v3696
    %v3698 = vrot.slane %v3697, 2
    %v3699 = vadd.f32 %v3697, %v3698
    %v3700 = vrot.slane %v3699, 1
    %v3701 = vadd.f32 %v3699, %v3700
    %v3702 = vld [vmem:[#allocation5 + $0x13] sm:$0x1]
    %v3703 = vadd.f32 %v3702, %v3686
    %v3704 = vxor.u32 %v3703, 2147483648
    %v3705 = vmul.f32 %v3704, 1.442695
    %v3706 = vpow.pop %v3705
    %v3707 = vadd.f32 %v3706, 1.0
    %v3708 = vrcp.pop %v3707
    %v3709 = vmul.f32 %v3707, %v3708
    %v3710 = vsub.f32 1.0, %v3709
    %v3711 = vmul.f32 %v3708, %v3710
    %v3712 = vadd.f32 %v3708, %v3711
    %vm3713 = vweird.f32 %v3707
    %vm3714 = vweird.f32 %v3708
    %vm3715 = vmor %vm3713, %vm3714
    %v3716 = vsel %vm3715, %v3708, %v3712
    %v3717 = vand.u32 2147483647, %v3707
    %vm3718 = vcmp.eq.f32.partialorder %v3717, 8.507059e+37
    %v3719 = vand.u32 %v3707, 2147483648
    %v3720 = vor.u32 1.1754944e-38, %v3719
    %v3721 = vsel %vm3718, %v3720, %v3716
    %v3722 = vmul.f32 1.0, %v3721
    %v3723 = vtanh.pop %v3703
    %3725 = vrot.lane.b32.xlu0 %v3701, 32
    %v3726 = vpop.permute.xlu0 %3725
    %v3728 = vmul.f32 %v3722, %v3726
    %3730 = vrot.lane.b32.xlu0 %v3723, 64
    %v3731 = vpop.permute.xlu0 %3730
    %v3733 = vmul.f32 %v3722, %v3731
    %3735 = vrot.lane.b32.xlu0 %v3733, 32
    %v3736 = vpop.permute.xlu0 %3735
    %v3738 = vadd.f32 %v3728, %v3736
    %v3739 = vtanh.pop %v3738
    %3741 = vrot.lane.b32.xlu0 %v3739, 64
    %v3742 = vpop.permute.xlu0 %3741
    %v3744 = vmul.f32 %v3722, %v3742
    %v3745 = vpack.c.bf16 %v3744, %v3744
    %v3746 = vld [vmem:[#allocation13] sm:$0xf]
    %v3747 = vld [vmem:[#allocation13 + $0x4] sm:$0xf]
    %v3748 = vld [vmem:[#allocation13 + $0x8] sm:$0xf]
    %v3749 = vld [vmem:[#allocation13 + $0xc] sm:$0xf]
    %3751 = vrot.lane.b32.xlu0 %v3745, 32
    %v3752 = vpop.permute.xlu0 %3751
    %v3757 = vunpack.c.l.b16 %v3746
    %v3758 = vunpack.c.l.b16 %v3747
    %v3759 = vunpack.c.l.b16 %v3748
    %v3760 = vunpack.c.l.b16 %v3749
    %v3761 = vpack.c.b16 %v3758, %v3757
    %v3762 = vpack.c.b16 %v3760, %v3759
    %v3766 = vsel %vm159, %v3752, 0
    %3768 = vmatpush.bf16.msra.mxu0 0
    %3769 = vmatpush.bf16.msra.mxu0 0
    %3770 = vmatpush.bf16.msra.mxu0 0
    %3771 = vmatpush.bf16.msra.mxu0 0
    %3772 = vmatpush.bf16.msra.mxu0 0
    %3773 = vmatpush.bf16.msra.mxu0 0
    %3774 = vmatpush.bf16.msra.mxu0 %v3762
    %3775 = vmatpush.bf16.msra.mxu0 %v3761
    %3776 = vmatmul.bf16.gmra.mxu0 %v3766
    %v3777 = vpop.f32.mrf.mxu0
    %v3778 = vadd.f32 %v3692, %v3777
    %v3779 = vpop.f32.mrf.mxu0
    %3780 = vdwg.mxu0
    %v3781 = vld [vmem:[%s6] sm:$0x1]
    %v3782 = vadd.f32 %v3778, %v3781
    %v3783 = vxor.u32 %v3782, 2147483648
    %v3784 = vmul.f32 %v3783, 1.442695
    %v3785 = vpow.pop %v3784
    %v3786 = vadd.f32 %v3785, 1.0
    %v3787 = vrcp.pop %v3786
    %v3788 = vmul.f32 %v3786, %v3787
    %v3789 = vsub.f32 1.0, %v3788
    %v3790 = vmul.f32 %v3787, %v3789
    %v3791 = vadd.f32 %v3787, %v3790
    %vm3792 = vweird.f32 %v3786
    %vm3793 = vweird.f32 %v3787
    %vm3794 = vmor %vm3792, %vm3793
    %v3795 = vsel %vm3794, %v3787, %v3791
    %v3796 = vand.u32 2147483647, %v3786
    %vm3797 = vcmp.eq.f32.partialorder %v3796, 8.507059e+37
    %v3798 = vand.u32 %v3786, 2147483648
    %v3799 = vor.u32 1.1754944e-38, %v3798
    %v3800 = vsel %vm3797, %v3799, %v3795
    %v3801 = vmul.f32 1.0, %v3800
    %v3802 = vtanh.pop %v3782
    %v3803 = vmul.f32 %v3801, %v3701
    %3805 = vrot.lane.b32.xlu0 %v3802, 64
    %v3806 = vpop.permute.xlu0 %3805
    %v3808 = vmul.f32 %v3801, %v3806
    %3810 = vrot.lane.b32.xlu0 %v3808, 32
    %v3811 = vpop.permute.xlu0 %3810
    %v3813 = vadd.f32 %v3803, %v3811
    %v3814 = vtanh.pop %v3813
    %3816 = vrot.lane.b32.xlu0 %v3814, 64
    %v3817 = vpop.permute.xlu0 %3816
    %v3819 = vmul.f32 %v3801, %v3817
    %3821 = vrot.lane.b32.xlu0 %v3744, 32
    %v3822 = vpop.permute.xlu0 %3821
    %3824 = vst.msk [vmem:[#allocation2 + $0x3] sm:$0x1] %vm629, %v3822
    %3826 = vrot.lane.b32.xlu0 %v3819, 64
    %v3827 = vpop.permute.xlu0 %3826
    %3829 = vst.msk [vmem:[#allocation2 + $0x3] sm:$0x1] %vm635, %v3827
    %3831 = vrot.lane.b32.xlu0 %v3738, 96
    %v3832 = vpop.permute.xlu0 %3831
    %3834 = vst.msk [vmem:[#allocation3 + $0x3] sm:$0x1] %vm629, %v3832
    %3835 = vst.msk [vmem:[#allocation3 + $0x3] sm:$0x1] %vm635, %v3813
    %v3836 = vld [vmem:[#allocation12] sm:$0xf]
    %v3837 = vld [vmem:[#allocation12 + $0x4] sm:$0xf]
    %v3838 = vld [vmem:[#allocation12 + $0x8] sm:$0xf]
    %v3839 = vld [vmem:[#allocation12 + $0xc] sm:$0xf]
    %v3844 = vunpack.c.l.b16 %v3836
    %v3845 = vunpack.c.l.b16 %v3837
    %v3846 = vunpack.c.l.b16 %v3838
    %v3847 = vunpack.c.l.b16 %v3839
    %v3848 = vpack.c.b16 %v3845, %v3844
    %v3849 = vpack.c.b16 %v3847, %v3846
    %3852 = vmatpush.bf16.msra.mxu0 0
    %3853 = vmatpush.bf16.msra.mxu0 0
    %3854 = vmatpush.bf16.msra.mxu0 0
    %3855 = vmatpush.bf16.msra.mxu0 0
    %3856 = vmatpush.bf16.msra.mxu0 0
    %3857 = vmatpush.bf16.msra.mxu0 0
    %3858 = vmatpush.bf16.msra.mxu0 %v3849
    %3859 = vmatpush.bf16.msra.mxu0 %v3848
    %3860 = vmatmul.bf16.gmra.mxu0 %v3766
    %v3861 = vpop.f32.mrf.mxu0
    %v3862 = vadd.f32 0.0, %v3861
    %v3863 = vpop.f32.mrf.mxu0
    %3864 = vdwg.mxu0
    %3865 = vst [vmem:[#allocation4 + $0x3] sm:$0x1] %v3862
    %v3866 = vpack.c.bf16 %v3819, %v3819
    %v3867 = vld [vmem:[#allocation15] sm:$0xf]
    %v3868 = vld [vmem:[#allocation15 + $0x4] sm:$0xf]
    %v3869 = vld [vmem:[#allocation15 + $0x8] sm:$0xf]
    %v3870 = vld [vmem:[#allocation15 + $0xc] sm:$0xf]
    %3872 = vrot.lane.b32.xlu0 %v3866, 32
    %v3873 = vpop.permute.xlu0 %3872
    %v3878 = vunpack.c.l.b16 %v3867
    %v3879 = vunpack.c.l.b16 %v3868
    %v3880 = vunpack.c.l.b16 %v3869
    %v3881 = vunpack.c.l.b16 %v3870
    %v3882 = vpack.c.b16 %v3879, %v3878
    %v3883 = vpack.c.b16 %v3881, %v3880
    %v3887 = vsel %vm159, %v3873, 0
    %3889 = vmatpush.bf16.msra.mxu0 0
    %3890 = vmatpush.bf16.msra.mxu0 0
    %3891 = vmatpush.bf16.msra.mxu0 0
    %3892 = vmatpush.bf16.msra.mxu0 0
    %3893 = vmatpush.bf16.msra.mxu0 0
    %3894 = vmatpush.bf16.msra.mxu0 0
    %3895 = vmatpush.bf16.msra.mxu0 %v3883
    %3896 = vmatpush.bf16.msra.mxu0 %v3882
    %3897 = vmatmul.bf16.gmra.mxu0 %v3887
    %v3898 = vpop.f32.mrf.mxu0
    %v3899 = vadd.f32 0.0, %v3898
    %v3900 = vpop.f32.mrf.mxu0
    %3901 = vdwg.mxu0
    %3902 = vst [vmem:[#allocation4 + $0xb] sm:$0x1] %v3899
    %3903 = vrot.lane.b32.xlu0 %v3819, 32
    %v3904 = vpop.permute.xlu0 %3903
    %3906 = vst.msk [vmem:[#allocation18 + $0xb] sm:$0x1] %vm629, %v3904
    // Predicated region
    $region70: #{tpu_custom_call.1} parent=1 // pred_check
      _
    $region71: #{tpu_custom_call.1} parent=1 // pred_check_branch
      %3908 = sbr.rel (0) target = $region73
    $region72: #{tpu_custom_call.1} parent=1 // pred_region
      %3910 = vsyncadd [#allocation9], 0
      %s3911 = sshll.u32 [#allocation18], 4
      %s3912 = int_to_ptr.vmem [resolvable:$true] %s3911
      %s3913 = sshll.u32 %s11, 4
      %s3914 = int_to_ptr.hbm [resolvable:$true] %s3913
      %3919 = dma.vmem_to_hbm [thread:$0]  %s3912, 384, %s3914, [#allocation9], 128, 128, 8
    $region73: #{tpu_custom_call.1} parent=1 // pred_fallthru
      _
    // Predicated region
    $region74: #{tpu_custom_call.1} parent=1 // pred_check
      _
    $region75: #{tpu_custom_call.1} parent=1 // pred_check_branch
      %3921 = sbr.rel (0) target = $region77
    $region76: #{tpu_custom_call.1} parent=1 // pred_region
      %3923 = dma.done [#allocation9], 384
    $region77: #{tpu_custom_call.1} parent=1 // pred_fallthru
      _
    %3924 = vsyncpa [#allocation8], 1
    %3925 = vsyncpa [#allocation11], 1
    %3926 = vsyncpa [#allocation14], 1
    %3927 = vsyncpa [#allocation17], 1
    %3928 = vsyncpa [#allocation9], 1

</llo_original>
